<compile_context>
chip_gen: v7x
topology: tpu7x:2x2x1
jax: 0.10.0
libtpu: 0.0.40
codegen_flags: <defaults>
</compile_context>

<pallas_src>
import jax
import jax.numpy as jnp
from jax.experimental import pallas as pl
from jax.experimental.pallas import tpu as pltpu

# ----------------------------- model config ---------------------------------
ARGS = dict(
    dropout_input=0.1,
    number_of_characters=16,   # small, synthetic
    max_length=64,             # small, synthetic
    batch_size=2,
)
NUM_CLASSES = 2
HIDDEN = 1024
CONV_CH = 256
FC_TILE = 256                  # fc1-output / fc2-K chunk streamed per grid step
KT = HIDDEN // FC_TILE
OUT_PAD = 128                  # classifier padded to a full lane group


def _conv_out_len(max_length: int) -> tuple[int, int, int]:
    l1 = (max_length - 7 + 1) // 3          # conv1 (k=7) + maxpool(3)
    l2 = (l1 - 7 + 1) // 3                  # conv2 (k=7) + maxpool(3)
    l3 = l2 - 3 + 1                         # conv3 (k=3)
    return l1, l2, l3


# ------------------------------- kernel --------------------------------------
def cnn_kernel(patch_ref, w1_ref, b1_ref, w2_ref, b2_ref, w3_ref, b3_ref,
               wf1_ref, bf1_ref, wf2_ref, bf2_ref, wf3_ref, bf3_ref,
               out_ref, y3_ref, h2_ref):
    k = pl.program_id(0)
    n_b = out_ref.shape[0]

    def maxpool3(y):                       # (B, L, C) -> (B, L//3, C)
        b, l, c = y.shape
        p = l // 3
        yp = y[:, :3 * p, :].reshape(b * p, 3, c)
        return jnp.max(yp, axis=1).reshape(b, p, c)

    def conv_relu(y, w_ref, b_ref):        # per-tap batched matmuls, f32 accumulate
        b, lin, cin = y.shape
        ksz, _, cout = w_ref.shape
        lout = lin - ksz + 1
        yb = y.astype(jnp.bfloat16)
        acc = jnp.dot(yb[:, 0:lout, :].reshape(b * lout, cin), w_ref[0],
                      preferred_element_type=jnp.float32)
        for t in range(1, ksz):
            acc = acc + jnp.dot(yb[:, t:t + lout, :].reshape(b * lout, cin),
                                w_ref[t], preferred_element_type=jnp.float32)
        acc = jnp.maximum(acc + b_ref[...], 0.0)
        return acc.reshape(b, lout, cout)

    # Conv stage runs once; later wf1/wf2 chunk DMAs overlap this compute.
    @pl.when(k == 0)
    def _():
        c_out = w1_ref.shape[1]
        l1 = patch_ref.shape[0] // n_b
        # conv1 as a single im2col matmul (patches built in the wrapper).
        y = jnp.dot(patch_ref[...], w1_ref[...],
                    preferred_element_type=jnp.float32)
        y = jnp.maximum(y + b1_ref[...], 0.0)            # (B*L1, 256)
        y = maxpool3(y.reshape(n_b, l1, c_out))          # (B, P1, 256)
        y = maxpool3(conv_relu(y, w2_ref, b2_ref))       # (B, P2, 256)
        y = conv_relu(y, w3_ref, b3_ref)                 # (B, L3, 256)
        y3_ref[...] = y.astype(jnp.bfloat16)
        h2_ref[...] = jnp.zeros_like(h2_ref)

    # Every grid step: fc1 output-chunk k and its fc2 K-partial product.
    y3 = y3_ref[...]                                     # (B, L3, 256) bf16
    h1 = jnp.dot(y3[:, 0, :], wf1_ref[0, 0], preferred_element_type=jnp.float32)
    for l in range(1, y3.shape[1]):
        h1 = h1 + jnp.dot(y3[:, l, :], wf1_ref[0, l],
                          preferred_element_type=jnp.float32)
    h1 = jnp.maximum(h1 + bf1_ref[0], 0.0)               # (B, 256)
    h2_ref[...] += jnp.dot(h1.astype(jnp.bfloat16), wf2_ref[0],
                           preferred_element_type=jnp.float32)

    @pl.when(k == pl.num_programs(0) - 1)
    def _():
        h2 = jnp.maximum(h2_ref[...] + bf2_ref[...], 0.0).astype(jnp.bfloat16)
        out_ref[...] = (jnp.dot(h2, wf3_ref[...],
                                preferred_element_type=jnp.float32)
                        + bf3_ref[...])                  # lane-dense (B, 128) store


# ------------------------------- wrapper --------------------------------------
@jax.jit
def char_cnn_forward(x, kparams):
    (w1k, b1k, w2k, b2k, w3k, b3k,
     wf1k, bf1k, wf2k, bf2k, wf3k, bf3k) = kparams
    bsz, l0, nc = x.shape
    ksz1 = 7
    l1 = l0 - ksz1 + 1
    l3 = wf1k.shape[1]
    kt = wf2k.shape[0]

    # im2col for conv1 in the wrapper: pure layout plumbing (~30 KB bf16) vs the
    # ~4.6 MB of streamed weights; lane order is (tap * Cin + c).
    xb = x.astype(jnp.bfloat16)
    patches = jnp.concatenate([xb[:, t:t + l1, :] for t in range(ksz1)], axis=-1)
    patches = patches.reshape(bsz * l1, ksz1 * nc)

    call_args = (patches, w1k, b1k, w2k, b2k, w3k, b3k,
                 wf1k, bf1k, wf2k, bf2k, wf3k, bf3k)

    def resident(shape):
        nd = len(shape)
        return pl.BlockSpec(shape, lambda k, _nd=nd: (0,) * _nd)

    in_specs = [
        resident(patches.shape),
        resident(w1k.shape), resident(b1k.shape),
        resident(w2k.shape), resident(b2k.shape),
        resident(w3k.shape), resident(b3k.shape),
        # fc1 / fc2 chunks stream in while the conv stage computes.
        pl.BlockSpec((1,) + wf1k.shape[1:], lambda k: (k, 0, 0, 0)),
        pl.BlockSpec((1,) + bf1k.shape[1:], lambda k: (k, 0, 0)),
        pl.BlockSpec((1,) + wf2k.shape[1:], lambda k: (k, 0, 0)),
        resident(bf2k.shape),
        resident(wf3k.shape), resident(bf3k.shape),
    ]

    grid_spec = pltpu.PrefetchScalarGridSpec(
        num_scalar_prefetch=0,
        grid=(kt,),
        in_specs=in_specs,
        out_specs=pl.BlockSpec((bsz, OUT_PAD), lambda k: (0, 0)),
        scratch_shapes=[
            pltpu.VMEM((bsz, l3, CONV_CH), jnp.bfloat16),   # conv3 output
            pltpu.VMEM((bsz, HIDDEN), jnp.float32),         # fc2 accumulator
        ],
    )
    out = pl.pallas_call(
        cnn_kernel,
        out_shape=jax.ShapeDtypeStruct((bsz, OUT_PAD), jnp.float32),
        grid_spec=grid_spec,
        compiler_params=pltpu.CompilerParams(
            dimension_semantics=("arbitrary",),
            vmem_limit_bytes=24 * 1024 * 1024,
        ),
    )(*call_args)
    return out[:, :NUM_CLASSES]


# --------------------------- parameter setup ---------------------------------
def init_params(key, n_chars, l3):
    """Deterministic synthetic params, PyTorch shape conventions."""
    d = CONV_CH * l3
    ks = jax.random.split(key, 12)

    def normal(k, shape):
        return jax.random.normal(k, shape, jnp.float32) * 0.05

    def bias(k, shape):
        return jax.random.uniform(k, shape, jnp.float32, -0.05, 0.05)

    w1 = normal(ks[0], (CONV_CH, n_chars, 7));   b1 = bias(ks[1], (CONV_CH,))
    w2 = normal(ks[2], (CONV_CH, CONV_CH, 7));   b2 = bias(ks[3], (CONV_CH,))
    w3 = normal(ks[4], (CONV_CH, CONV_CH, 3));   b3 = bias(ks[5], (CONV_CH,))
    wf1 = normal(ks[6], (HIDDEN, d));            bf1 = bias(ks[7], (HIDDEN,))
    wf2 = normal(ks[8], (HIDDEN, HIDDEN));       bf2 = bias(ks[9], (HIDDEN,))
    wf3 = normal(ks[10], (NUM_CLASSES, HIDDEN)); bf3 = bias(ks[11], (NUM_CLASSES,))
    return (w1, b1, w2, b2, w3, b3, wf1, bf1, wf2, bf2, wf3, bf3)


def to_kernel_params(params, l3):
    """Re-layout + bf16-cast PyTorch-convention params for the kernel."""
    w1, b1, w2, b2, w3, b3, wf1, bf1, wf2, bf2, wf3, bf3 = params
    bf16 = jnp.bfloat16
    # Conv1d weight (Cout, Cin, K) -> (K, Cin, Cout); conv1 flattened to
    # (K*Cin, Cout) matching the wrapper's im2col lane order (t*Cin + c).
    w1k = jnp.transpose(w1, (2, 1, 0)).reshape(-1, CONV_CH).astype(bf16)
    w2k = jnp.transpose(w2, (2, 1, 0)).astype(bf16)
    w3k = jnp.transpose(w3, (2, 1, 0)).astype(bf16)
    # fc1: torch flatten index is channel-major (c*l3 + l). Re-layout so that
    # wf1k[j, l, c, o'] = wf1[j*FC_TILE + o', c*l3 + l]  (j = output chunk).
    wf1k = (wf1.T.reshape(CONV_CH, l3, HIDDEN)          # (c, l, o)
            .transpose(1, 0, 2)                         # (l, c, o)
            .reshape(l3, CONV_CH, KT, FC_TILE)
            .transpose(2, 0, 1, 3)                      # (j, l, c, o')
            .astype(bf16))
    bf1k = bf1.reshape(KT, 1, FC_TILE)
    # fc2: (out, in) -> (in, out), chunked along the contraction (in) dim.
    wf2k = wf2.T.reshape(KT, FC_TILE, HIDDEN).astype(bf16)
    bf2k = bf2.reshape(1, HIDDEN)
    # fc3: (out, in) -> (in, out), zero-padded to a lane-dense 128-wide output.
    wf3k = jnp.zeros((HIDDEN, OUT_PAD), jnp.float32)
    wf3k = wf3k.at[:, :NUM_CLASSES].set(wf3.T).astype(bf16)
    bf3k = jnp.zeros((1, OUT_PAD), jnp.float32).at[0, :NUM_CLASSES].set(bf3)
    return (w1k, b1.reshape(1, -1), w2k, b2.reshape(1, -1),
            w3k, b3.reshape(1, -1),
            wf1k, bf1k, wf2k, bf2k, wf3k, bf3k)


# ----------------------- plain-JAX reference (torch semantics) ---------------
def reference_forward(x, params):
    w1, b1, w2, b2, w3, b3, wf1, bf1, wf2, bf2, wf3, bf3 = params
    h = jnp.transpose(x, (0, 2, 1))  # (B, C, L) like torch after transpose(1,2)

    def conv1d(h, w, b):            # w: (Cout, Cin, K)
        k_size = w.shape[2]
        l_out = h.shape[2] - k_size + 1
        out = jnp.zeros((h.shape[0], w.shape[0], l_out), jnp.float32)
        for k in range(k_size):
            out = out + jnp.einsum('bcl,oc->bol', h[:, :, k:k + l_out], w[:, :, k])
        return out + b[None, :, None]

    def pool3(h):
        p = h.shape[2] // 3
        return h[:, :, :3 * p].reshape(h.shape[0], h.shape[1], p, 3).max(axis=-1)

    h = pool3(jax.nn.relu(conv1d(h, w1, b1)))
    h = pool3(jax.nn.relu(conv1d(h, w2, b2)))
    h = jax.nn.relu(conv1d(h, w3, b3))
    h = h.reshape(h.shape[0], -1)                       # channel-major flatten
    h = jax.nn.relu(h @ wf1.T + bf1)
    h = jax.nn.relu(h @ wf2.T + bf2)
    return h @ wf3.T + bf3


# ---------------------------------- main --------------------------------------
if __name__ == "__main__":
    key = jax.random.PRNGKey(0)
    k_x, k_p = jax.random.split(key)

    B = ARGS['batch_size']
    L0 = ARGS['max_length']
    NC = ARGS['number_of_characters']
    _, _, L3 = _conv_out_len(L0)

    # Input as fed to the PyTorch module: (batch, max_length, number_of_characters)
    x = jax.random.uniform(k_x, (B, L0, NC), jnp.float32)

    params = init_params(k_p, NC, L3)
    kparams = to_kernel_params(params, L3)

    out = jax.block_until_ready(char_cnn_forward(x, kparams))
    ref = reference_forward(x, params)

    assert out.shape == (B, NUM_CLASSES), out.shape
    # bf16 weights/activations vs f32 reference -> slightly looser tolerance.
    if not jnp.allclose(out, ref, rtol=5e-2, atol=5e-2):
        raise AssertionError(
            f"Pallas output mismatch, max abs diff = {jnp.max(jnp.abs(out - ref))}")

    print("KERNEL_OK")
</pallas_src>

<mosaic_0001>
module attributes {stable_mosaic.version = 11 : i64} {
  func.func @cnn_kernel(%arg0: i32, %arg1: memref<116x112xbf16, #tpu.memory_space<vmem>>, %arg2: memref<112x256xbf16, #tpu.memory_space<vmem>>, %arg3: memref<1x256xf32, #tpu.memory_space<vmem>>, %arg4: memref<7x256x256xbf16, #tpu.memory_space<vmem>>, %arg5: memref<1x256xf32, #tpu.memory_space<vmem>>, %arg6: memref<3x256x256xbf16, #tpu.memory_space<vmem>>, %arg7: memref<1x256xf32, #tpu.memory_space<vmem>>, %arg8: memref<1x2x256x256xbf16, #tpu.memory_space<vmem>>, %arg9: memref<1x1x256xf32, #tpu.memory_space<vmem>>, %arg10: memref<1x256x1024xbf16, #tpu.memory_space<vmem>>, %arg11: memref<1x1024xf32, #tpu.memory_space<vmem>>, %arg12: memref<1024x128xbf16, #tpu.memory_space<vmem>>, %arg13: memref<1x128xf32, #tpu.memory_space<vmem>>, %arg14: memref<2x128xf32, #tpu.memory_space<vmem>>, %arg15: memref<2x2x256xbf16, #tpu.memory_space<vmem>>, %arg16: memref<2x1024xf32, #tpu.memory_space<vmem>>) attributes {dimension_semantics = [#tpu.dimension_semantics<arbitrary>], iteration_bounds = array<i64: 4>, scalar_prefetch = 0 : i64, scratch_operands = 2 : i64, tpu.core_type = #tpu.core_type<tc>, window_params = [{pipeline_mode = #tpu.pipeline_mode<synchronous>, transform_indices = @transform_0, window_bounds = array<i64: 116, 112>}, {pipeline_mode = #tpu.pipeline_mode<synchronous>, transform_indices = @transform_1, window_bounds = array<i64: 112, 256>}, {pipeline_mode = #tpu.pipeline_mode<synchronous>, transform_indices = @transform_2, window_bounds = array<i64: 1, 256>}, {pipeline_mode = #tpu.pipeline_mode<synchronous>, transform_indices = @transform_3, window_bounds = array<i64: 7, 256, 256>}, {pipeline_mode = #tpu.pipeline_mode<synchronous>, transform_indices = @transform_4, window_bounds = array<i64: 1, 256>}, {pipeline_mode = #tpu.pipeline_mode<synchronous>, transform_indices = @transform_5, window_bounds = array<i64: 3, 256, 256>}, {pipeline_mode = #tpu.pipeline_mode<synchronous>, transform_indices = @transform_6, window_bounds = array<i64: 1, 256>}, {transform_indices = @transform_7, window_bounds = array<i64: 1, 2, 256, 256>}, {transform_indices = @transform_8, window_bounds = array<i64: 1, 1, 256>}, {transform_indices = @transform_9, window_bounds = array<i64: 1, 256, 1024>}, {pipeline_mode = #tpu.pipeline_mode<synchronous>, transform_indices = @transform_10, window_bounds = array<i64: 1, 1024>}, {pipeline_mode = #tpu.pipeline_mode<synchronous>, transform_indices = @transform_11, window_bounds = array<i64: 1024, 128>}, {pipeline_mode = #tpu.pipeline_mode<synchronous>, transform_indices = @transform_12, window_bounds = array<i64: 1, 128>}, {pipeline_mode = #tpu.pipeline_mode<synchronous>, transform_indices = @transform_13, window_bounds = array<i64: 2, 128>}]} {
    %c0_i32 = arith.constant 0 : i32
    %0 = arith.cmpi eq, %arg0, %c0_i32 : i32
    %1 = arith.extui %0 : i1 to i32
    %c0_i32_0 = arith.constant 0 : i32
    %2 = arith.cmpi ne, %1, %c0_i32_0 : i32
    scf.if %2 {
      %c0_24 = arith.constant 0 : index
      %c0_25 = arith.constant 0 : index
      %31 = vector.load %arg1[%c0_24, %c0_25] : memref<116x112xbf16, #tpu.memory_space<vmem>>, vector<116x112xbf16>
      %c0_26 = arith.constant 0 : index
      %c0_27 = arith.constant 0 : index
      %32 = vector.load %arg2[%c0_26, %c0_27] : memref<112x256xbf16, #tpu.memory_space<vmem>>, vector<112x256xbf16>
      %cst_28 = arith.constant dense<0.000000e+00> : vector<116x256xf32>
      %33 = tpu.matmul %31, %32, %cst_28 {dimension_numbers = #tpu.dot_dimension_numbers<[1], [0], [0], [1], [0, 0, 1, 1], [], []>} : vector<116x112xbf16>, vector<112x256xbf16>, vector<116x256xf32> -> vector<116x256xf32>
      %c0_29 = arith.constant 0 : index
      %c0_30 = arith.constant 0 : index
      %34 = vector.load %arg3[%c0_29, %c0_30] : memref<1x256xf32, #tpu.memory_space<vmem>>, vector<1x256xf32>
      %35 = vector.broadcast %34 : vector<1x256xf32> to vector<116x256xf32>
      %36 = arith.addf %33, %35 : vector<116x256xf32>
      %cst_31 = arith.constant 0.000000e+00 : f32
      %37 = vector.broadcast %cst_31 : f32 to vector<116x256xf32>
      %38 = arith.maximumf %36, %37 : vector<116x256xf32>
      %39 = vector.shape_cast %38 : vector<116x256xf32> to vector<2x58x256xf32>
      %40 = vector.extract_strided_slice %39 {offsets = [0, 0, 0], sizes = [2, 57, 256], strides = [1, 1, 1]} : vector<2x58x256xf32> to vector<2x57x256xf32>
      %41 = vector.shape_cast %40 : vector<2x57x256xf32> to vector<38x3x256xf32>
      %cst_32 = arith.constant dense<0xFF800000> : vector<38x256xf32>
      %42 = vector.multi_reduction <maximumf>, %41, %cst_32 [1] : vector<38x3x256xf32> to vector<38x256xf32>
      %43 = vector.shape_cast %42 : vector<38x256xf32> to vector<2x19x256xf32>
      %44 = arith.truncf %43 : vector<2x19x256xf32> to vector<2x19x256xbf16>
      %45 = vector.extract_strided_slice %44 {offsets = [0, 0, 0], sizes = [2, 13, 256], strides = [1, 1, 1]} : vector<2x19x256xbf16> to vector<2x13x256xbf16>
      %46 = vector.shape_cast %45 : vector<2x13x256xbf16> to vector<26x256xbf16>
      %c0_33 = arith.constant 0 : index
      %c0_34 = arith.constant 0 : index
      %c0_35 = arith.constant 0 : index
      %47 = vector.load %arg4[%c0_33, %c0_34, %c0_35] : memref<7x256x256xbf16, #tpu.memory_space<vmem>>, vector<1x256x256xbf16>
      %48 = vector.shape_cast %47 : vector<1x256x256xbf16> to vector<256x256xbf16>
      %cst_36 = arith.constant dense<0.000000e+00> : vector<26x256xf32>
      %49 = tpu.matmul %46, %48, %cst_36 {dimension_numbers = #tpu.dot_dimension_numbers<[1], [0], [0], [1], [0, 0, 1, 1], [], []>} : vector<26x256xbf16>, vector<256x256xbf16>, vector<26x256xf32> -> vector<26x256xf32>
      %50 = vector.extract_strided_slice %44 {offsets = [0, 1, 0], sizes = [2, 13, 256], strides = [1, 1, 1]} : vector<2x19x256xbf16> to vector<2x13x256xbf16>
      %51 = vector.shape_cast %50 : vector<2x13x256xbf16> to vector<26x256xbf16>
      %c1_37 = arith.constant 1 : index
      %c0_38 = arith.constant 0 : index
      %c0_39 = arith.constant 0 : index
      %52 = vector.load %arg4[%c1_37, %c0_38, %c0_39] : memref<7x256x256xbf16, #tpu.memory_space<vmem>>, vector<1x256x256xbf16>
      %53 = vector.shape_cast %52 : vector<1x256x256xbf16> to vector<256x256xbf16>
      %cst_40 = arith.constant dense<0.000000e+00> : vector<26x256xf32>
      %54 = tpu.matmul %51, %53, %cst_40 {dimension_numbers = #tpu.dot_dimension_numbers<[1], [0], [0], [1], [0, 0, 1, 1], [], []>} : vector<26x256xbf16>, vector<256x256xbf16>, vector<26x256xf32> -> vector<26x256xf32>
      %55 = arith.addf %49, %54 : vector<26x256xf32>
      %56 = vector.extract_strided_slice %44 {offsets = [0, 2, 0], sizes = [2, 13, 256], strides = [1, 1, 1]} : vector<2x19x256xbf16> to vector<2x13x256xbf16>
      %57 = vector.shape_cast %56 : vector<2x13x256xbf16> to vector<26x256xbf16>
      %c2 = arith.constant 2 : index
      %c0_41 = arith.constant 0 : index
      %c0_42 = arith.constant 0 : index
      %58 = vector.load %arg4[%c2, %c0_41, %c0_42] : memref<7x256x256xbf16, #tpu.memory_space<vmem>>, vector<1x256x256xbf16>
      %59 = vector.shape_cast %58 : vector<1x256x256xbf16> to vector<256x256xbf16>
      %cst_43 = arith.constant dense<0.000000e+00> : vector<26x256xf32>
      %60 = tpu.matmul %57, %59, %cst_43 {dimension_numbers = #tpu.dot_dimension_numbers<[1], [0], [0], [1], [0, 0, 1, 1], [], []>} : vector<26x256xbf16>, vector<256x256xbf16>, vector<26x256xf32> -> vector<26x256xf32>
      %61 = arith.addf %55, %60 : vector<26x256xf32>
      %62 = vector.extract_strided_slice %44 {offsets = [0, 3, 0], sizes = [2, 13, 256], strides = [1, 1, 1]} : vector<2x19x256xbf16> to vector<2x13x256xbf16>
      %63 = vector.shape_cast %62 : vector<2x13x256xbf16> to vector<26x256xbf16>
      %c3 = arith.constant 3 : index
      %c0_44 = arith.constant 0 : index
      %c0_45 = arith.constant 0 : index
      %64 = vector.load %arg4[%c3, %c0_44, %c0_45] : memref<7x256x256xbf16, #tpu.memory_space<vmem>>, vector<1x256x256xbf16>
      %65 = vector.shape_cast %64 : vector<1x256x256xbf16> to vector<256x256xbf16>
      %cst_46 = arith.constant dense<0.000000e+00> : vector<26x256xf32>
      %66 = tpu.matmul %63, %65, %cst_46 {dimension_numbers = #tpu.dot_dimension_numbers<[1], [0], [0], [1], [0, 0, 1, 1], [], []>} : vector<26x256xbf16>, vector<256x256xbf16>, vector<26x256xf32> -> vector<26x256xf32>
      %67 = arith.addf %61, %66 : vector<26x256xf32>
      %68 = vector.extract_strided_slice %44 {offsets = [0, 4, 0], sizes = [2, 13, 256], strides = [1, 1, 1]} : vector<2x19x256xbf16> to vector<2x13x256xbf16>
      %69 = vector.shape_cast %68 : vector<2x13x256xbf16> to vector<26x256xbf16>
      %c4 = arith.constant 4 : index
      %c0_47 = arith.constant 0 : index
      %c0_48 = arith.constant 0 : index
      %70 = vector.load %arg4[%c4, %c0_47, %c0_48] : memref<7x256x256xbf16, #tpu.memory_space<vmem>>, vector<1x256x256xbf16>
      %71 = vector.shape_cast %70 : vector<1x256x256xbf16> to vector<256x256xbf16>
      %cst_49 = arith.constant dense<0.000000e+00> : vector<26x256xf32>
      %72 = tpu.matmul %69, %71, %cst_49 {dimension_numbers = #tpu.dot_dimension_numbers<[1], [0], [0], [1], [0, 0, 1, 1], [], []>} : vector<26x256xbf16>, vector<256x256xbf16>, vector<26x256xf32> -> vector<26x256xf32>
      %73 = arith.addf %67, %72 : vector<26x256xf32>
      %74 = vector.extract_strided_slice %44 {offsets = [0, 5, 0], sizes = [2, 13, 256], strides = [1, 1, 1]} : vector<2x19x256xbf16> to vector<2x13x256xbf16>
      %75 = vector.shape_cast %74 : vector<2x13x256xbf16> to vector<26x256xbf16>
      %c5 = arith.constant 5 : index
      %c0_50 = arith.constant 0 : index
      %c0_51 = arith.constant 0 : index
      %76 = vector.load %arg4[%c5, %c0_50, %c0_51] : memref<7x256x256xbf16, #tpu.memory_space<vmem>>, vector<1x256x256xbf16>
      %77 = vector.shape_cast %76 : vector<1x256x256xbf16> to vector<256x256xbf16>
      %cst_52 = arith.constant dense<0.000000e+00> : vector<26x256xf32>
      %78 = tpu.matmul %75, %77, %cst_52 {dimension_numbers = #tpu.dot_dimension_numbers<[1], [0], [0], [1], [0, 0, 1, 1], [], []>} : vector<26x256xbf16>, vector<256x256xbf16>, vector<26x256xf32> -> vector<26x256xf32>
      %79 = arith.addf %73, %78 : vector<26x256xf32>
      %80 = vector.extract_strided_slice %44 {offsets = [0, 6, 0], sizes = [2, 13, 256], strides = [1, 1, 1]} : vector<2x19x256xbf16> to vector<2x13x256xbf16>
      %81 = vector.shape_cast %80 : vector<2x13x256xbf16> to vector<26x256xbf16>
      %c6 = arith.constant 6 : index
      %c0_53 = arith.constant 0 : index
      %c0_54 = arith.constant 0 : index
      %82 = vector.load %arg4[%c6, %c0_53, %c0_54] : memref<7x256x256xbf16, #tpu.memory_space<vmem>>, vector<1x256x256xbf16>
      %83 = vector.shape_cast %82 : vector<1x256x256xbf16> to vector<256x256xbf16>
      %cst_55 = arith.constant dense<0.000000e+00> : vector<26x256xf32>
      %84 = tpu.matmul %81, %83, %cst_55 {dimension_numbers = #tpu.dot_dimension_numbers<[1], [0], [0], [1], [0, 0, 1, 1], [], []>} : vector<26x256xbf16>, vector<256x256xbf16>, vector<26x256xf32> -> vector<26x256xf32>
      %85 = arith.addf %79, %84 : vector<26x256xf32>
      %c0_56 = arith.constant 0 : index
      %c0_57 = arith.constant 0 : index
      %86 = vector.load %arg5[%c0_56, %c0_57] : memref<1x256xf32, #tpu.memory_space<vmem>>, vector<1x256xf32>
      %87 = vector.broadcast %86 : vector<1x256xf32> to vector<26x256xf32>
      %88 = arith.addf %85, %87 : vector<26x256xf32>
      %cst_58 = arith.constant 0.000000e+00 : f32
      %89 = vector.broadcast %cst_58 : f32 to vector<26x256xf32>
      %90 = arith.maximumf %88, %89 : vector<26x256xf32>
      %91 = vector.shape_cast %90 : vector<26x256xf32> to vector<2x13x256xf32>
      %92 = vector.extract_strided_slice %91 {offsets = [0, 0, 0], sizes = [2, 12, 256], strides = [1, 1, 1]} : vector<2x13x256xf32> to vector<2x12x256xf32>
      %93 = vector.shape_cast %92 : vector<2x12x256xf32> to vector<8x3x256xf32>
      %cst_59 = arith.constant dense<0xFF800000> : vector<8x256xf32>
      %94 = vector.multi_reduction <maximumf>, %93, %cst_59 [1] : vector<8x3x256xf32> to vector<8x256xf32>
      %95 = vector.shape_cast %94 : vector<8x256xf32> to vector<2x4x256xf32>
      %96 = arith.truncf %95 : vector<2x4x256xf32> to vector<2x4x256xbf16>
      %97 = vector.extract_strided_slice %96 {offsets = [0, 0, 0], sizes = [2, 2, 256], strides = [1, 1, 1]} : vector<2x4x256xbf16> to vector<2x2x256xbf16>
      %98 = vector.shape_cast %97 : vector<2x2x256xbf16> to vector<4x256xbf16>
      %c0_60 = arith.constant 0 : index
      %c0_61 = arith.constant 0 : index
      %c0_62 = arith.constant 0 : index
      %99 = vector.load %arg6[%c0_60, %c0_61, %c0_62] : memref<3x256x256xbf16, #tpu.memory_space<vmem>>, vector<1x256x256xbf16>
      %100 = vector.shape_cast %99 : vector<1x256x256xbf16> to vector<256x256xbf16>
      %cst_63 = arith.constant dense<0.000000e+00> : vector<4x256xf32>
      %101 = tpu.matmul %98, %100, %cst_63 {dimension_numbers = #tpu.dot_dimension_numbers<[1], [0], [0], [1], [0, 0, 1, 1], [], []>} : vector<4x256xbf16>, vector<256x256xbf16>, vector<4x256xf32> -> vector<4x256xf32>
      %102 = vector.extract_strided_slice %96 {offsets = [0, 1, 0], sizes = [2, 2, 256], strides = [1, 1, 1]} : vector<2x4x256xbf16> to vector<2x2x256xbf16>
      %103 = vector.shape_cast %102 : vector<2x2x256xbf16> to vector<4x256xbf16>
      %c1_64 = arith.constant 1 : index
      %c0_65 = arith.constant 0 : index
      %c0_66 = arith.constant 0 : index
      %104 = vector.load %arg6[%c1_64, %c0_65, %c0_66] : memref<3x256x256xbf16, #tpu.memory_space<vmem>>, vector<1x256x256xbf16>
      %105 = vector.shape_cast %104 : vector<1x256x256xbf16> to vector<256x256xbf16>
      %cst_67 = arith.constant dense<0.000000e+00> : vector<4x256xf32>
      %106 = tpu.matmul %103, %105, %cst_67 {dimension_numbers = #tpu.dot_dimension_numbers<[1], [0], [0], [1], [0, 0, 1, 1], [], []>} : vector<4x256xbf16>, vector<256x256xbf16>, vector<4x256xf32> -> vector<4x256xf32>
      %107 = arith.addf %101, %106 : vector<4x256xf32>
      %108 = vector.extract_strided_slice %96 {offsets = [0, 2, 0], sizes = [2, 2, 256], strides = [1, 1, 1]} : vector<2x4x256xbf16> to vector<2x2x256xbf16>
      %109 = vector.shape_cast %108 : vector<2x2x256xbf16> to vector<4x256xbf16>
      %c2_68 = arith.constant 2 : index
      %c0_69 = arith.constant 0 : index
      %c0_70 = arith.constant 0 : index
      %110 = vector.load %arg6[%c2_68, %c0_69, %c0_70] : memref<3x256x256xbf16, #tpu.memory_space<vmem>>, vector<1x256x256xbf16>
      %111 = vector.shape_cast %110 : vector<1x256x256xbf16> to vector<256x256xbf16>
      %cst_71 = arith.constant dense<0.000000e+00> : vector<4x256xf32>
      %112 = tpu.matmul %109, %111, %cst_71 {dimension_numbers = #tpu.dot_dimension_numbers<[1], [0], [0], [1], [0, 0, 1, 1], [], []>} : vector<4x256xbf16>, vector<256x256xbf16>, vector<4x256xf32> -> vector<4x256xf32>
      %113 = arith.addf %107, %112 : vector<4x256xf32>
      %c0_72 = arith.constant 0 : index
      %c0_73 = arith.constant 0 : index
      %114 = vector.load %arg7[%c0_72, %c0_73] : memref<1x256xf32, #tpu.memory_space<vmem>>, vector<1x256xf32>
      %115 = vector.broadcast %114 : vector<1x256xf32> to vector<4x256xf32>
      %116 = arith.addf %113, %115 : vector<4x256xf32>
      %cst_74 = arith.constant 0.000000e+00 : f32
      %117 = vector.broadcast %cst_74 : f32 to vector<4x256xf32>
      %118 = arith.maximumf %116, %117 : vector<4x256xf32>
      %119 = vector.shape_cast %118 : vector<4x256xf32> to vector<2x2x256xf32>
      %120 = arith.truncf %119 : vector<2x2x256xf32> to vector<2x2x256xbf16>
      %c0_75 = arith.constant 0 : index
      %c0_76 = arith.constant 0 : index
      %c0_77 = arith.constant 0 : index
      %121 = vector.load %arg15[%c0_75, %c0_76, %c0_77] : memref<2x2x256xbf16, #tpu.memory_space<vmem>>, vector<2x2x256xbf16>
      tpu.vector_store %arg15[%c0_75, %c0_76, %c0_77], %120 {strides = array<i32>} : memref<2x2x256xbf16, #tpu.memory_space<vmem>>, vector<2x2x256xbf16>,
      %cst_78 = arith.constant 0.000000e+00 : f32
      %122 = vector.broadcast %cst_78 : f32 to vector<2x1024xf32>
      %c0_79 = arith.constant 0 : index
      %c0_80 = arith.constant 0 : index
      %123 = vector.load %arg16[%c0_79, %c0_80] : memref<2x1024xf32, #tpu.memory_space<vmem>>, vector<2x1024xf32>
      tpu.vector_store %arg16[%c0_79, %c0_80], %122 {strides = array<i32>} : memref<2x1024xf32, #tpu.memory_space<vmem>>, vector<2x1024xf32>,
    } else {
    }
    %c0 = arith.constant 0 : index
    %c0_1 = arith.constant 0 : index
    %c0_2 = arith.constant 0 : index
    %3 = vector.load %arg15[%c0, %c0_1, %c0_2] : memref<2x2x256xbf16, #tpu.memory_space<vmem>>, vector<2x2x256xbf16>
    %4 = vector.extract_strided_slice %3 {offsets = [0, 0, 0], sizes = [2, 1, 256], strides = [1, 1, 1]} : vector<2x2x256xbf16> to vector<2x1x256xbf16>
    %5 = vector.shape_cast %4 : vector<2x1x256xbf16> to vector<2x256xbf16>
    %c0_3 = arith.constant 0 : index
    %c0_4 = arith.constant 0 : index
    %c0_5 = arith.constant 0 : index
    %c0_6 = arith.constant 0 : index
    %6 = vector.load %arg8[%c0_3, %c0_4, %c0_5, %c0_6] : memref<1x2x256x256xbf16, #tpu.memory_space<vmem>>, vector<1x1x256x256xbf16>
    %7 = vector.shape_cast %6 : vector<1x1x256x256xbf16> to vector<256x256xbf16>
    %cst = arith.constant dense<0.000000e+00> : vector<2x256xf32>
    %8 = tpu.matmul %5, %7, %cst {dimension_numbers = #tpu.dot_dimension_numbers<[1], [0], [0], [1], [0, 0, 1, 1], [], []>} : vector<2x256xbf16>, vector<256x256xbf16>, vector<2x256xf32> -> vector<2x256xf32>
    %9 = vector.extract_strided_slice %3 {offsets = [0, 1, 0], sizes = [2, 1, 256], strides = [1, 1, 1]} : vector<2x2x256xbf16> to vector<2x1x256xbf16>
    %10 = vector.shape_cast %9 : vector<2x1x256xbf16> to vector<2x256xbf16>
    %c0_7 = arith.constant 0 : index
    %c1 = arith.constant 1 : index
    %c0_8 = arith.constant 0 : index
    %c0_9 = arith.constant 0 : index
    %11 = vector.load %arg8[%c0_7, %c1, %c0_8, %c0_9] : memref<1x2x256x256xbf16, #tpu.memory_space<vmem>>, vector<1x1x256x256xbf16>
    %12 = vector.shape_cast %11 : vector<1x1x256x256xbf16> to vector<256x256xbf16>
    %cst_10 = arith.constant dense<0.000000e+00> : vector<2x256xf32>
    %13 = tpu.matmul %10, %12, %cst_10 {dimension_numbers = #tpu.dot_dimension_numbers<[1], [0], [0], [1], [0, 0, 1, 1], [], []>} : vector<2x256xbf16>, vector<256x256xbf16>, vector<2x256xf32> -> vector<2x256xf32>
    %14 = arith.addf %8, %13 : vector<2x256xf32>
    %c0_11 = arith.constant 0 : index
    %c0_12 = arith.constant 0 : index
    %c0_13 = arith.constant 0 : index
    %15 = vector.load %arg9[%c0_11, %c0_12, %c0_13] : memref<1x1x256xf32, #tpu.memory_space<vmem>>, vector<1x1x256xf32>
    %16 = vector.shape_cast %15 : vector<1x1x256xf32> to vector<1x256xf32>
    %17 = vector.broadcast %16 : vector<1x256xf32> to vector<2x256xf32>
    %18 = arith.addf %14, %17 : vector<2x256xf32>
    %cst_14 = arith.constant 0.000000e+00 : f32
    %19 = vector.broadcast %cst_14 : f32 to vector<2x256xf32>
    %20 = arith.maximumf %18, %19 : vector<2x256xf32>
    %c0_15 = arith.constant 0 : index
    %c0_16 = arith.constant 0 : index
    %21 = vector.load %arg16[%c0_15, %c0_16] : memref<2x1024xf32, #tpu.memory_space<vmem>>, vector<2x1024xf32>
    %22 = arith.truncf %20 : vector<2x256xf32> to vector<2x256xbf16>
    %c0_17 = arith.constant 0 : index
    %c0_18 = arith.constant 0 : index
    %c0_19 = arith.constant 0 : index
    %23 = vector.load %arg10[%c0_17, %c0_18, %c0_19] : memref<1x256x1024xbf16, #tpu.memory_space<vmem>>, vector<1x256x1024xbf16>
    %24 = vector.shape_cast %23 : vector<1x256x1024xbf16> to vector<256x1024xbf16>
    %cst_20 = arith.constant dense<0.000000e+00> : vector<2x1024xf32>
    %25 = tpu.matmul %22, %24, %cst_20 {dimension_numbers = #tpu.dot_dimension_numbers<[1], [0], [0], [1], [0, 0, 1, 1], [], []>} : vector<2x256xbf16>, vector<256x1024xbf16>, vector<2x1024xf32> -> vector<2x1024xf32>
    %26 = arith.addf %21, %25 : vector<2x1024xf32>
    %c0_21 = arith.constant 0 : index
    %c0_22 = arith.constant 0 : index
    %27 = vector.load %arg16[%c0_21, %c0_22] : memref<2x1024xf32, #tpu.memory_space<vmem>>, vector<2x1024xf32>
    tpu.vector_store %arg16[%c0_21, %c0_22], %26 {strides = array<i32>} : memref<2x1024xf32, #tpu.memory_space<vmem>>, vector<2x1024xf32>,
    %c3_i32 = arith.constant 3 : i32
    %28 = arith.cmpi eq, %arg0, %c3_i32 : i32
    %29 = arith.extui %28 : i1 to i32
    %c0_i32_23 = arith.constant 0 : i32
    %30 = arith.cmpi ne, %29, %c0_i32_23 : i32
    scf.if %30 {
      %c0_24 = arith.constant 0 : index
      %c0_25 = arith.constant 0 : index
      %31 = vector.load %arg16[%c0_24, %c0_25] : memref<2x1024xf32, #tpu.memory_space<vmem>>, vector<2x1024xf32>
      %c0_26 = arith.constant 0 : index
      %c0_27 = arith.constant 0 : index
      %32 = vector.load %arg11[%c0_26, %c0_27] : memref<1x1024xf32, #tpu.memory_space<vmem>>, vector<1x1024xf32>
      %33 = vector.broadcast %32 : vector<1x1024xf32> to vector<2x1024xf32>
      %34 = arith.addf %31, %33 : vector<2x1024xf32>
      %cst_28 = arith.constant 0.000000e+00 : f32
      %35 = vector.broadcast %cst_28 : f32 to vector<2x1024xf32>
      %36 = arith.maximumf %34, %35 : vector<2x1024xf32>
      %37 = arith.truncf %36 : vector<2x1024xf32> to vector<2x1024xbf16>
      %c0_29 = arith.constant 0 : index
      %c0_30 = arith.constant 0 : index
      %38 = vector.load %arg12[%c0_29, %c0_30] : memref<1024x128xbf16, #tpu.memory_space<vmem>>, vector<1024x128xbf16>
      %cst_31 = arith.constant dense<0.000000e+00> : vector<2x128xf32>
      %39 = tpu.matmul %37, %38, %cst_31 {dimension_numbers = #tpu.dot_dimension_numbers<[1], [0], [0], [1], [0, 0, 1, 1], [], []>} : vector<2x1024xbf16>, vector<1024x128xbf16>, vector<2x128xf32> -> vector<2x128xf32>
      %c0_32 = arith.constant 0 : index
      %c0_33 = arith.constant 0 : index
      %40 = vector.load %arg13[%c0_32, %c0_33] : memref<1x128xf32, #tpu.memory_space<vmem>>, vector<1x128xf32>
      %41 = vector.broadcast %40 : vector<1x128xf32> to vector<2x128xf32>
      %42 = arith.addf %39, %41 : vector<2x128xf32>
      %c0_34 = arith.constant 0 : index
      %c0_35 = arith.constant 0 : index
      %43 = vector.load %arg14[%c0_34, %c0_35] : memref<2x128xf32, #tpu.memory_space<vmem>>, vector<2x128xf32>
      tpu.vector_store %arg14[%c0_34, %c0_35], %42 {strides = array<i32>} : memref<2x128xf32, #tpu.memory_space<vmem>>, vector<2x128xf32>,
    } else {
    }
    return
  }
  func.func @transform_0(%arg0: i32) -> (i32, i32) {
    %c0_i32 = arith.constant 0 : i32
    %c0_i32_0 = arith.constant 0 : i32
    %c0_i32_1 = arith.constant 0 : i32
    return %c0_i32, %c0_i32_0 : i32, i32
  }
  func.func @transform_1(%arg0: i32) -> (i32, i32) {
    %c0_i32 = arith.constant 0 : i32
    %c0_i32_0 = arith.constant 0 : i32
    %c0_i32_1 = arith.constant 0 : i32
    return %c0_i32, %c0_i32_0 : i32, i32
  }
  func.func @transform_2(%arg0: i32) -> (i32, i32) {
    %c0_i32 = arith.constant 0 : i32
    %c0_i32_0 = arith.constant 0 : i32
    %c0_i32_1 = arith.constant 0 : i32
    return %c0_i32, %c0_i32_0 : i32, i32
  }
  func.func @transform_3(%arg0: i32) -> (i32, i32, i32) {
    %c0_i32 = arith.constant 0 : i32
    %c0_i32_0 = arith.constant 0 : i32
    %c0_i32_1 = arith.constant 0 : i32
    %c0_i32_2 = arith.constant 0 : i32
    return %c0_i32, %c0_i32_0, %c0_i32_1 : i32, i32, i32
  }
  func.func @transform_4(%arg0: i32) -> (i32, i32) {
    %c0_i32 = arith.constant 0 : i32
    %c0_i32_0 = arith.constant 0 : i32
    %c0_i32_1 = arith.constant 0 : i32
    return %c0_i32, %c0_i32_0 : i32, i32
  }
  func.func @transform_5(%arg0: i32) -> (i32, i32, i32) {
    %c0_i32 = arith.constant 0 : i32
    %c0_i32_0 = arith.constant 0 : i32
    %c0_i32_1 = arith.constant 0 : i32
    %c0_i32_2 = arith.constant 0 : i32
    return %c0_i32, %c0_i32_0, %c0_i32_1 : i32, i32, i32
  }
  func.func @transform_6(%arg0: i32) -> (i32, i32) {
    %c0_i32 = arith.constant 0 : i32
    %c0_i32_0 = arith.constant 0 : i32
    %c0_i32_1 = arith.constant 0 : i32
    return %c0_i32, %c0_i32_0 : i32, i32
  }
  func.func @transform_7(%arg0: i32) -> (i32, i32, i32, i32) {
    %c0_i32 = arith.constant 0 : i32
    %c0_i32_0 = arith.constant 0 : i32
    %c0_i32_1 = arith.constant 0 : i32
    %c0_i32_2 = arith.constant 0 : i32
    return %arg0, %c0_i32, %c0_i32_0, %c0_i32_1 : i32, i32, i32, i32
  }
  func.func @transform_8(%arg0: i32) -> (i32, i32, i32) {
    %c0_i32 = arith.constant 0 : i32
    %c0_i32_0 = arith.constant 0 : i32
    %c0_i32_1 = arith.constant 0 : i32
    return %arg0, %c0_i32, %c0_i32_0 : i32, i32, i32
  }
  func.func @transform_9(%arg0: i32) -> (i32, i32, i32) {
    %c0_i32 = arith.constant 0 : i32
    %c0_i32_0 = arith.constant 0 : i32
    %c0_i32_1 = arith.constant 0 : i32
    return %arg0, %c0_i32, %c0_i32_0 : i32, i32, i32
  }
  func.func @transform_10(%arg0: i32) -> (i32, i32) {
    %c0_i32 = arith.constant 0 : i32
    %c0_i32_0 = arith.constant 0 : i32
    %c0_i32_1 = arith.constant 0 : i32
    return %c0_i32, %c0_i32_0 : i32, i32
  }
  func.func @transform_11(%arg0: i32) -> (i32, i32) {
    %c0_i32 = arith.constant 0 : i32
    %c0_i32_0 = arith.constant 0 : i32
    %c0_i32_1 = arith.constant 0 : i32
    return %c0_i32, %c0_i32_0 : i32, i32
  }
  func.func @transform_12(%arg0: i32) -> (i32, i32) {
    %c0_i32 = arith.constant 0 : i32
    %c0_i32_0 = arith.constant 0 : i32
    %c0_i32_1 = arith.constant 0 : i32
    return %c0_i32, %c0_i32_0 : i32, i32
  }
  func.func @transform_13(%arg0: i32) -> (i32, i32) {
    %c0_i32 = arith.constant 0 : i32
    %c0_i32_0 = arith.constant 0 : i32
    %c0_i32_1 = arith.constant 0 : i32
    return %c0_i32, %c0_i32_0 : i32, i32
  }
}

</mosaic_0001>

<llo_original>
// kernel: char_cnn_forward.1
$region0: #{char_cnn_forward.1}
  #allocation0 [shape = 'u32[]', space=smem, size = 0x4, offset = 0x4, fixed_abs, tag = 'smem constant byte address 0x4 - core index']
  #allocation1 [shape = 'u32[144,128]{1,0:T(1,128)}', space=vmem, size = 0x12000, scoped, tag = 'internal scratch']
  #allocation2 [shape = 'bf16[2,2,256]{2,1,0:T(2,128)(2,1)}', space=vmem, size = 0x800, scoped, tag = 'scratch operand']
  #allocation3 [shape = 'f32[2,1024]{1,0:T(2,128)}', space=vmem, size = 0x2000, scoped, tag = 'scratch operand']
  %s0 = inlined_call_operand.vmem [shape: bf16[116,112], index: 0, kind: input, shape index: {}]
  %s1 = inlined_call_operand.hbm [shape: bf16[112,256], index: 1, kind: input, shape index: {}]
  %s2 = inlined_call_operand.hbm [shape: f32[1,256], index: 2, kind: input, shape index: {}]
  %s3 = inlined_call_operand.hbm [shape: bf16[7,256,256], index: 3, kind: input, shape index: {}]
  %s4 = inlined_call_operand.hbm [shape: f32[1,256], index: 4, kind: input, shape index: {}]
  %s5 = inlined_call_operand.hbm [shape: bf16[3,256,256], index: 5, kind: input, shape index: {}]
  %s6 = inlined_call_operand.hbm [shape: f32[1,256], index: 6, kind: input, shape index: {}]
  %s7 = inlined_call_operand.hbm [shape: bf16[4,2,256,256], index: 7, kind: input, shape index: {}]
  %s8 = inlined_call_operand.hbm [shape: f32[4,1,256], index: 8, kind: input, shape index: {}]
  %s9 = inlined_call_operand.hbm [shape: bf16[4,256,1024], index: 9, kind: input, shape index: {}]
  %s10 = inlined_call_operand.hbm [shape: f32[1,1024], index: 10, kind: input, shape index: {}]
  %s11 = inlined_call_operand.hbm [shape: bf16[1024,128], index: 11, kind: input, shape index: {}]
  %s12 = inlined_call_operand.hbm [shape: f32[1,128], index: 12, kind: input, shape index: {}]
  %s13 = inlined_call_operand.hbm [shape: f32[2,128], index: 13, kind: output, shape index: {}]
  %s14 = sld [smem:[#allocation0]]
  $region141: #{char_cnn_forward.1} parent=0
    _
  %s16 = ssub.s32 1, %s14
  %s17 = scalar_select 0, %s16, %s14
  $region1: #{char_cnn_forward.1} parent=0
    #allocation4 [shape = 'u8[57344]{0}', space=vmem, size = 0xe000, scoped, tag = 'input window, operand 1, single buffered']
    #allocation5 [shape = 's32[2]{0}', space=sflag, size = 0x8, scoped, tag = 'scoped memory for char_cnn_forward.1']
    #allocation6 [shape = 's32[2]{0}', space=sflag, size = 0x8, scoped, tag = 'scoped memory for char_cnn_forward.1']
    #allocation7 [shape = 'u8[1024]{0}', space=vmem, size = 0x400, scoped, tag = 'input window, operand 2, single buffered']
    #allocation8 [shape = 's32[1]{0}', space=sflag, size = 0x4, scoped, tag = 'scoped memory for char_cnn_forward.1']
    #allocation9 [shape = 'u8[917504]{0}', space=vmem, size = 0xe0000, scoped, tag = 'input window, operand 3, single buffered']
    #allocation10 [shape = 'u8[1024]{0}', space=vmem, size = 0x400, scoped, tag = 'input window, operand 4, single buffered']
    #allocation11 [shape = 's32[1]{0}', space=sflag, size = 0x4, scoped, tag = 'scoped memory for char_cnn_forward.1']
    #allocation12 [shape = 'u8[393216]{0}', space=vmem, size = 0x60000, scoped, tag = 'input window, operand 5, single buffered']
    #allocation13 [shape = 'u8[1024]{0}', space=vmem, size = 0x400, scoped, tag = 'input window, operand 6, single buffered']
    #allocation14 [shape = 's32[1]{0}', space=sflag, size = 0x4, scoped, tag = 'scoped memory for char_cnn_forward.1']
    #allocation15 [shape = 'u8[524288]{0}', space=vmem, size = 0x80000, scoped, tag = 'input window, operand 7']
    #allocation16 [shape = 'u8[2048]{0}', space=vmem, size = 0x800, scoped, tag = 'input window, operand 8']
    #allocation17 [shape = 'u8[1048576]{0}', space=vmem, size = 0x100000, scoped, tag = 'input window, operand 9']
    #allocation18 [shape = 'u8[4096]{0}', space=vmem, size = 0x1000, scoped, tag = 'input window, operand 10, single buffered']
    #allocation19 [shape = 'u8[262144]{0}', space=vmem, size = 0x40000, scoped, tag = 'input window, operand 11, single buffered']
    #allocation20 [shape = 'u8[512]{0}', space=vmem, size = 0x400, scoped, tag = 'input window, operand 12, single buffered']
    #allocation21 [shape = 'u8[1024]{0}', space=vmem, size = 0x400, scoped, tag = 'output window, operand 0, single buffered']
    %18 = vsyncpa [#allocation5], 0
    %19 = vsyncpa [#allocation8], 0
    %20 = vsyncpa [#allocation11], 0
    %21 = vsyncpa [#allocation14], 0
    %22 = vsyncpa [#allocation6], 0
    loop: start=0, step=1, limit=6
    $region2: #{char_cnn_forward.1} parent=1 // loop_pre_header
      _
    $region3: #{char_cnn_forward.1} parent=1 // loop_header
      %s24 = sphi 0, %s28
      %p25 = scmp.ge.s32.totalorder %s24, 6
      %s32 = sphi 0, %s32
      %s34 = sphi 0, %s32
      %s35 = sphi 0, %s34
      %s49 = sphi 0, %s35
      %s53 = sphi 0, %s53
      %s55 = sphi 0, %s53
      %s56 = sphi 0, %s55
      %s70 = sphi 0, %s56
      %s74 = sphi 0, %s74
      %s76 = sphi 0, %s74
      %s77 = sphi 0, %s76
      %s91 = sphi 0, %s77
      %s95 = sphi 0, %s95
      %s97 = sphi 0, %s95
      %s98 = sphi 0, %s97
      %s112 = sphi 0, %s98
      %s116 = sphi 0, %s116
      %s118 = sphi 0, %s116
      %s119 = sphi 0, %s118
      %s133 = sphi 0, %s119
      %s137 = sphi 0, %s137
      %s139 = sphi 0, %s137
      %s140 = sphi 0, %s139
      %s154 = sphi 0, %s140
      %s158 = sphi 0, %s158
      %s160 = sphi 0, %s158
      %s161 = sphi 0, %s160
      %s175 = sphi 0, %s161
      %s181 = sphi 0, %s183
      %s184 = sphi 0, %s181
      %s185 = sphi 0, %s184
      %s201 = sphi 0, %s185
      %s207 = sphi 0, %s209
      %s210 = sphi 0, %s207
      %s211 = sphi 0, %s210
      %s227 = sphi 0, %s211
      %s233 = sphi 0, %s235
      %s236 = sphi 0, %s233
      %s237 = sphi 0, %s236
      %s253 = sphi 0, %s237
      %s257 = sphi 0, %s257
      %s259 = sphi 0, %s257
      %s260 = sphi 0, %s259
      %s274 = sphi 0, %s260
      %s278 = sphi 0, %s278
      %s280 = sphi 0, %s278
      %s281 = sphi 0, %s280
      %s295 = sphi 0, %s281
      %s299 = sphi 0, %s299
      %s301 = sphi 0, %s299
      %s302 = sphi 0, %s301
      %s316 = sphi 0, %s302
      %s320 = sphi 0, %s320
      %s322 = sphi 0, %s320
      %s323 = sphi 0, %s322
      %s337 = sphi 0, %s323
    $region4: #{char_cnn_forward.1} parent=1 // loop_header_branch
      %27 = sbr.rel (%p25) target = $region8
    $region5: #{char_cnn_forward.1} parent=1 // loop_body
      %s29 = ssub.s32 %s24, 1
      %s30 = ssub.s32 %s24, 2
      %s31 = sadd.s32 %s24, 1
      %s33 = sadd.s32 %s32, 1
      %p36 = scmp.eq.s32.totalorder %s24, 3
      %p37 = scmp.ne.s32.totalorder %s32, %s34
      %p38 = scmp.eq.s32.totalorder %s24, 0
      %p39 = por %p37, %p38
      %p40 = scmp.ne.s32.totalorder %s32, %s34
      %p41 = scmp.eq.s32.totalorder %s29, 3
      %p42 = por %p40, %p41
      %p43 = scmp.ne.s32.totalorder %s34, %s35
      %p44 = scmp.eq.s32.totalorder %s29, 0
      %p45 = por %p43, %p44
      %p46 = scmp.ne.s32.totalorder %s34, %s35
      %p47 = scmp.eq.s32.totalorder %s30, 3
      %p48 = por %p46, %p47
      %p50 = scmp.ne.s32.totalorder %s35, %s49
      %p51 = scmp.eq.s32.totalorder %s30, 0
      %p52 = por %p50, %p51
      %s54 = sadd.s32 %s53, 1
      %p57 = scmp.eq.s32.totalorder %s24, 3
      %p58 = scmp.ne.s32.totalorder %s53, %s55
      %p59 = scmp.eq.s32.totalorder %s24, 0
      %p60 = por %p58, %p59
      %p61 = scmp.ne.s32.totalorder %s53, %s55
      %p62 = scmp.eq.s32.totalorder %s29, 3
      %p63 = por %p61, %p62
      %p64 = scmp.ne.s32.totalorder %s55, %s56
      %p65 = scmp.eq.s32.totalorder %s29, 0
      %p66 = por %p64, %p65
      %p67 = scmp.ne.s32.totalorder %s55, %s56
      %p68 = scmp.eq.s32.totalorder %s30, 3
      %p69 = por %p67, %p68
      %p71 = scmp.ne.s32.totalorder %s56, %s70
      %p72 = scmp.eq.s32.totalorder %s30, 0
      %p73 = por %p71, %p72
      %s75 = sadd.s32 %s74, 1
      %p78 = scmp.eq.s32.totalorder %s24, 3
      %p79 = scmp.ne.s32.totalorder %s74, %s76
      %p80 = scmp.eq.s32.totalorder %s24, 0
      %p81 = por %p79, %p80
      %p82 = scmp.ne.s32.totalorder %s74, %s76
      %p83 = scmp.eq.s32.totalorder %s29, 3
      %p84 = por %p82, %p83
      %p85 = scmp.ne.s32.totalorder %s76, %s77
      %p86 = scmp.eq.s32.totalorder %s29, 0
      %p87 = por %p85, %p86
      %p88 = scmp.ne.s32.totalorder %s76, %s77
      %p89 = scmp.eq.s32.totalorder %s30, 3
      %p90 = por %p88, %p89
      %p92 = scmp.ne.s32.totalorder %s77, %s91
      %p93 = scmp.eq.s32.totalorder %s30, 0
      %p94 = por %p92, %p93
      %s96 = sadd.s32 %s95, 1
      %p99 = scmp.eq.s32.totalorder %s24, 3
      %p100 = scmp.ne.s32.totalorder %s95, %s97
      %p101 = scmp.eq.s32.totalorder %s24, 0
      %p102 = por %p100, %p101
      %p103 = scmp.ne.s32.totalorder %s95, %s97
      %p104 = scmp.eq.s32.totalorder %s29, 3
      %p105 = por %p103, %p104
      %p106 = scmp.ne.s32.totalorder %s97, %s98
      %p107 = scmp.eq.s32.totalorder %s29, 0
      %p108 = por %p106, %p107
      %p109 = scmp.ne.s32.totalorder %s97, %s98
      %p110 = scmp.eq.s32.totalorder %s30, 3
      %p111 = por %p109, %p110
      %p113 = scmp.ne.s32.totalorder %s98, %s112
      %p114 = scmp.eq.s32.totalorder %s30, 0
      %p115 = por %p113, %p114
      %s117 = sadd.s32 %s116, 1
      %p120 = scmp.eq.s32.totalorder %s24, 3
      %p121 = scmp.ne.s32.totalorder %s116, %s118
      %p122 = scmp.eq.s32.totalorder %s24, 0
      %p123 = por %p121, %p122
      %p124 = scmp.ne.s32.totalorder %s116, %s118
      %p125 = scmp.eq.s32.totalorder %s29, 3
      %p126 = por %p124, %p125
      %p127 = scmp.ne.s32.totalorder %s118, %s119
      %p128 = scmp.eq.s32.totalorder %s29, 0
      %p129 = por %p127, %p128
      %p130 = scmp.ne.s32.totalorder %s118, %s119
      %p131 = scmp.eq.s32.totalorder %s30, 3
      %p132 = por %p130, %p131
      %p134 = scmp.ne.s32.totalorder %s119, %s133
      %p135 = scmp.eq.s32.totalorder %s30, 0
      %p136 = por %p134, %p135
      %s138 = sadd.s32 %s137, 1
      %p141 = scmp.eq.s32.totalorder %s24, 3
      %p142 = scmp.ne.s32.totalorder %s137, %s139
      %p143 = scmp.eq.s32.totalorder %s24, 0
      %p144 = por %p142, %p143
      %p145 = scmp.ne.s32.totalorder %s137, %s139
      %p146 = scmp.eq.s32.totalorder %s29, 3
      %p147 = por %p145, %p146
      %p148 = scmp.ne.s32.totalorder %s139, %s140
      %p149 = scmp.eq.s32.totalorder %s29, 0
      %p150 = por %p148, %p149
      %p151 = scmp.ne.s32.totalorder %s139, %s140
      %p152 = scmp.eq.s32.totalorder %s30, 3
      %p153 = por %p151, %p152
      %p155 = scmp.ne.s32.totalorder %s140, %s154
      %p156 = scmp.eq.s32.totalorder %s30, 0
      %p157 = por %p155, %p156
      %s159 = sadd.s32 %s158, 1
      %p162 = scmp.eq.s32.totalorder %s24, 3
      %p163 = scmp.ne.s32.totalorder %s158, %s160
      %p164 = scmp.eq.s32.totalorder %s24, 0
      %p165 = por %p163, %p164
      %p166 = scmp.ne.s32.totalorder %s158, %s160
      %p167 = scmp.eq.s32.totalorder %s29, 3
      %p168 = por %p166, %p167
      %p169 = scmp.ne.s32.totalorder %s160, %s161
      %p170 = scmp.eq.s32.totalorder %s29, 0
      %p171 = por %p169, %p170
      %p172 = scmp.ne.s32.totalorder %s160, %s161
      %p173 = scmp.eq.s32.totalorder %s30, 3
      %p174 = por %p172, %p173
      %p176 = scmp.ne.s32.totalorder %s161, %s175
      %p177 = scmp.eq.s32.totalorder %s30, 0
      %p178 = por %p176, %p177
      %s179 = ssub.s32 %s24, %s31
      %p180 = scmp.eq.s32.totalorder %s179, 0
      %s182 = sadd.s32 %s181, 1
      %s183 = scalar_select %p180, %s181, %s182
      %p186 = pneg %p180
      %p187 = scmp.eq.s32.totalorder %s24, 3
      %p188 = por %p186, %p187
      %p189 = scmp.ne.s32.totalorder %s181, %s184
      %p190 = scmp.eq.s32.totalorder %s24, 0
      %p191 = por %p189, %p190
      %p192 = scmp.ne.s32.totalorder %s181, %s184
      %p193 = scmp.eq.s32.totalorder %s29, 3
      %p194 = por %p192, %p193
      %p195 = scmp.ne.s32.totalorder %s184, %s185
      %p196 = scmp.eq.s32.totalorder %s29, 0
      %p197 = por %p195, %p196
      %p198 = scmp.ne.s32.totalorder %s184, %s185
      %p199 = scmp.eq.s32.totalorder %s30, 3
      %p200 = por %p198, %p199
      %p202 = scmp.ne.s32.totalorder %s185, %s201
      %p203 = scmp.eq.s32.totalorder %s30, 0
      %p204 = por %p202, %p203
      %s205 = ssub.s32 %s24, %s31
      %p206 = scmp.eq.s32.totalorder %s205, 0
      %s208 = sadd.s32 %s207, 1
      %s209 = scalar_select %p206, %s207, %s208
      %p212 = pneg %p206
      %p213 = scmp.eq.s32.totalorder %s24, 3
      %p214 = por %p212, %p213
      %p215 = scmp.ne.s32.totalorder %s207, %s210
      %p216 = scmp.eq.s32.totalorder %s24, 0
      %p217 = por %p215, %p216
      %p218 = scmp.ne.s32.totalorder %s207, %s210
      %p219 = scmp.eq.s32.totalorder %s29, 3
      %p220 = por %p218, %p219
      %p221 = scmp.ne.s32.totalorder %s210, %s211
      %p222 = scmp.eq.s32.totalorder %s29, 0
      %p223 = por %p221, %p222
      %p224 = scmp.ne.s32.totalorder %s210, %s211
      %p225 = scmp.eq.s32.totalorder %s30, 3
      %p226 = por %p224, %p225
      %p228 = scmp.ne.s32.totalorder %s211, %s227
      %p229 = scmp.eq.s32.totalorder %s30, 0
      %p230 = por %p228, %p229
      %s231 = ssub.s32 %s24, %s31
      %p232 = scmp.eq.s32.totalorder %s231, 0
      %s234 = sadd.s32 %s233, 1
      %s235 = scalar_select %p232, %s233, %s234
      %p238 = pneg %p232
      %p239 = scmp.eq.s32.totalorder %s24, 3
      %p240 = por %p238, %p239
      %p241 = scmp.ne.s32.totalorder %s233, %s236
      %p242 = scmp.eq.s32.totalorder %s24, 0
      %p243 = por %p241, %p242
      %p244 = scmp.ne.s32.totalorder %s233, %s236
      %p245 = scmp.eq.s32.totalorder %s29, 3
      %p246 = por %p244, %p245
      %p247 = scmp.ne.s32.totalorder %s236, %s237
      %p248 = scmp.eq.s32.totalorder %s29, 0
      %p249 = por %p247, %p248
      %p250 = scmp.ne.s32.totalorder %s236, %s237
      %p251 = scmp.eq.s32.totalorder %s30, 3
      %p252 = por %p250, %p251
      %p254 = scmp.ne.s32.totalorder %s237, %s253
      %p255 = scmp.eq.s32.totalorder %s30, 0
      %p256 = por %p254, %p255
      %s258 = sadd.s32 %s257, 1
      %p261 = scmp.eq.s32.totalorder %s24, 3
      %p262 = scmp.ne.s32.totalorder %s257, %s259
      %p263 = scmp.eq.s32.totalorder %s24, 0
      %p264 = por %p262, %p263
      %p265 = scmp.ne.s32.totalorder %s257, %s259
      %p266 = scmp.eq.s32.totalorder %s29, 3
      %p267 = por %p265, %p266
      %p268 = scmp.ne.s32.totalorder %s259, %s260
      %p269 = scmp.eq.s32.totalorder %s29, 0
      %p270 = por %p268, %p269
      %p271 = scmp.ne.s32.totalorder %s259, %s260
      %p272 = scmp.eq.s32.totalorder %s30, 3
      %p273 = por %p271, %p272
      %p275 = scmp.ne.s32.totalorder %s260, %s274
      %p276 = scmp.eq.s32.totalorder %s30, 0
      %p277 = por %p275, %p276
      %s279 = sadd.s32 %s278, 1
      %p282 = scmp.eq.s32.totalorder %s24, 3
      %p283 = scmp.ne.s32.totalorder %s278, %s280
      %p284 = scmp.eq.s32.totalorder %s24, 0
      %p285 = por %p283, %p284
      %p286 = scmp.ne.s32.totalorder %s278, %s280
      %p287 = scmp.eq.s32.totalorder %s29, 3
      %p288 = por %p286, %p287
      %p289 = scmp.ne.s32.totalorder %s280, %s281
      %p290 = scmp.eq.s32.totalorder %s29, 0
      %p291 = por %p289, %p290
      %p292 = scmp.ne.s32.totalorder %s280, %s281
      %p293 = scmp.eq.s32.totalorder %s30, 3
      %p294 = por %p292, %p293
      %p296 = scmp.ne.s32.totalorder %s281, %s295
      %p297 = scmp.eq.s32.totalorder %s30, 0
      %p298 = por %p296, %p297
      %s300 = sadd.s32 %s299, 1
      %p303 = scmp.eq.s32.totalorder %s24, 3
      %p304 = scmp.ne.s32.totalorder %s299, %s301
      %p305 = scmp.eq.s32.totalorder %s24, 0
      %p306 = por %p304, %p305
      %p307 = scmp.ne.s32.totalorder %s299, %s301
      %p308 = scmp.eq.s32.totalorder %s29, 3
      %p309 = por %p307, %p308
      %p310 = scmp.ne.s32.totalorder %s301, %s302
      %p311 = scmp.eq.s32.totalorder %s29, 0
      %p312 = por %p310, %p311
      %p313 = scmp.ne.s32.totalorder %s301, %s302
      %p314 = scmp.eq.s32.totalorder %s30, 3
      %p315 = por %p313, %p314
      %p317 = scmp.ne.s32.totalorder %s302, %s316
      %p318 = scmp.eq.s32.totalorder %s30, 0
      %p319 = por %p317, %p318
      %s321 = sadd.s32 %s320, 1
      %p324 = scmp.eq.s32.totalorder %s24, 3
      %p325 = scmp.ne.s32.totalorder %s320, %s322
      %p326 = scmp.eq.s32.totalorder %s24, 0
      %p327 = por %p325, %p326
      %p328 = scmp.ne.s32.totalorder %s320, %s322
      %p329 = scmp.eq.s32.totalorder %s29, 3
      %p330 = por %p328, %p329
      %p331 = scmp.ne.s32.totalorder %s322, %s323
      %p332 = scmp.eq.s32.totalorder %s29, 0
      %p333 = por %p331, %p332
      %p334 = scmp.ne.s32.totalorder %s322, %s323
      %p335 = scmp.eq.s32.totalorder %s30, 3
      %p336 = por %p334, %p335
      %p338 = scmp.ne.s32.totalorder %s323, %s337
      %p339 = scmp.eq.s32.totalorder %s30, 0
      %p340 = por %p338, %p339
      %p341 = scmp.le.s32.totalorder 1, %s24
      %p342 = scmp.lt.s32.totalorder %s24, 5
      %p343 = pnand %p341, %p342
      %p344 = pneg %p343
      // Predicated region
      $region9: #{char_cnn_forward.1} parent=5 // pred_check
        _
      $region10: #{char_cnn_forward.1} parent=5 // pred_check_branch
        %346 = sbr.rel (%p343) target = $region12
      $region11: #{char_cnn_forward.1} parent=5 // pred_region
        %s347 = ssub.s32 %s24, 1
        // Predicated region
        $region13: #{char_cnn_forward.1} parent=11 // pred_check
          %p348 = pneg %p45
        $region14: #{char_cnn_forward.1} parent=11 // pred_check_branch
          %350 = sbr.rel (%p348) target = $region16
        $region15: #{char_cnn_forward.1} parent=11 // pred_region
          _
        $region16: #{char_cnn_forward.1} parent=11 // pred_fallthru
          _
        // Predicated region
        $region17: #{char_cnn_forward.1} parent=11 // pred_check
          %p351 = pneg %p66
        $region18: #{char_cnn_forward.1} parent=11 // pred_check_branch
          %353 = sbr.rel (%p351) target = $region20
        $region19: #{char_cnn_forward.1} parent=11 // pred_region
          %s355 = ssub.s32 1792, 1792
          %356 = vsyncadd [#allocation5], %s355
          %s357 = sshll.u32 [#allocation4], 4
          %s358 = int_to_ptr.vmem [resolvable:$true] %s357
          %363 = dma.hbm_to_vmem [thread:$0]  %s1, 1792, %s358, [#allocation5], 128, 128, 8
        $region20: #{char_cnn_forward.1} parent=11 // pred_fallthru
          _
        // Predicated region
        $region21: #{char_cnn_forward.1} parent=11 // pred_check
          %p364 = pneg %p87
        $region22: #{char_cnn_forward.1} parent=11 // pred_check_branch
          %366 = sbr.rel (%p364) target = $region24
        $region23: #{char_cnn_forward.1} parent=11 // pred_region
          %s368 = ssub.s32 32, 32
          %369 = vsyncadd [#allocation8], %s368
          %s371 = sshll.u32 [#allocation7], 4
          %s372 = int_to_ptr.vmem [resolvable:$true] %s371
          %374 = dma.hbm_to_vmem [thread:$0]  %s2, 32, %s372, [#allocation8]
        $region24: #{char_cnn_forward.1} parent=11 // pred_fallthru
          _
        // Predicated region
        $region25: #{char_cnn_forward.1} parent=11 // pred_check
          %p375 = pneg %p108
        $region26: #{char_cnn_forward.1} parent=11 // pred_check_branch
          %377 = sbr.rel (%p375) target = $region28
        $region27: #{char_cnn_forward.1} parent=11 // pred_region
          %s379 = ssub.s32 28672, 28672
          %380 = vsyncadd [#allocation8], %s379
          %s381 = sshll.u32 [#allocation9], 4
          %s382 = int_to_ptr.vmem [resolvable:$true] %s381
          %387 = dma.hbm_to_vmem [thread:$0]  %s3, 28672, %s382, [#allocation8], 128, 128, 8
        $region28: #{char_cnn_forward.1} parent=11 // pred_fallthru
          _
        // Predicated region
        $region29: #{char_cnn_forward.1} parent=11 // pred_check
          %p388 = pneg %p129
        $region30: #{char_cnn_forward.1} parent=11 // pred_check_branch
          %390 = sbr.rel (%p388) target = $region32
        $region31: #{char_cnn_forward.1} parent=11 // pred_region
          %s392 = ssub.s32 32, 32
          %393 = vsyncadd [#allocation11], %s392
          %s395 = sshll.u32 [#allocation10], 4
          %s396 = int_to_ptr.vmem [resolvable:$true] %s395
          %398 = dma.hbm_to_vmem [thread:$0]  %s4, 32, %s396, [#allocation11]
        $region32: #{char_cnn_forward.1} parent=11 // pred_fallthru
          _
        // Predicated region
        $region33: #{char_cnn_forward.1} parent=11 // pred_check
          %p399 = pneg %p150
        $region34: #{char_cnn_forward.1} parent=11 // pred_check_branch
          %401 = sbr.rel (%p399) target = $region36
        $region35: #{char_cnn_forward.1} parent=11 // pred_region
          %s403 = ssub.s32 12288, 12288
          %404 = vsyncadd [#allocation11], %s403
          %s405 = sshll.u32 [#allocation12], 4
          %s406 = int_to_ptr.vmem [resolvable:$true] %s405
          %411 = dma.hbm_to_vmem [thread:$0]  %s5, 12288, %s406, [#allocation11], 128, 128, 8
        $region36: #{char_cnn_forward.1} parent=11 // pred_fallthru
          _
        // Predicated region
        $region37: #{char_cnn_forward.1} parent=11 // pred_check
          %p412 = pneg %p171
        $region38: #{char_cnn_forward.1} parent=11 // pred_check_branch
          %414 = sbr.rel (%p412) target = $region40
        $region39: #{char_cnn_forward.1} parent=11 // pred_region
          %s416 = ssub.s32 32, 32
          %417 = vsyncadd [#allocation14], %s416
          %s419 = sshll.u32 [#allocation13], 4
          %s420 = int_to_ptr.vmem [resolvable:$true] %s419
          %422 = dma.hbm_to_vmem [thread:$0]  %s6, 32, %s420, [#allocation14]
        $region40: #{char_cnn_forward.1} parent=11 // pred_fallthru
          _
        // Predicated region
        $region41: #{char_cnn_forward.1} parent=11 // pred_check
          %p423 = pneg %p270
        $region42: #{char_cnn_forward.1} parent=11 // pred_check_branch
          %425 = sbr.rel (%p423) target = $region44
        $region43: #{char_cnn_forward.1} parent=11 // pred_region
          %s427 = ssub.s32 128, 128
          %428 = vsyncadd [#allocation8], %s427
          %s430 = sshll.u32 [#allocation18], 4
          %s431 = int_to_ptr.vmem [resolvable:$true] %s430
          %433 = dma.hbm_to_vmem [thread:$0]  %s10, 128, %s431, [#allocation8]
        $region44: #{char_cnn_forward.1} parent=11 // pred_fallthru
          _
        // Predicated region
        $region45: #{char_cnn_forward.1} parent=11 // pred_check
          %p434 = pneg %p291
        $region46: #{char_cnn_forward.1} parent=11 // pred_check_branch
          %436 = sbr.rel (%p434) target = $region48
        $region47: #{char_cnn_forward.1} parent=11 // pred_region
          %s438 = ssub.s32 8192, 8192
          %439 = vsyncadd [#allocation11], %s438
          %s440 = sshll.u32 [#allocation19], 4
          %s441 = int_to_ptr.vmem [resolvable:$true] %s440
          %446 = dma.hbm_to_vmem [thread:$0]  %s11, 8192, %s441, [#allocation11], 64, 64, 4
        $region48: #{char_cnn_forward.1} parent=11 // pred_fallthru
          _
        // Predicated region
        $region49: #{char_cnn_forward.1} parent=11 // pred_check
          %p447 = pneg %p312
        $region50: #{char_cnn_forward.1} parent=11 // pred_check_branch
          %449 = sbr.rel (%p447) target = $region52
        $region51: #{char_cnn_forward.1} parent=11 // pred_region
          %s451 = ssub.s32 16, 16
          %452 = vsyncadd [#allocation14], %s451
          %s454 = sshll.u32 [#allocation20], 4
          %s455 = int_to_ptr.vmem [resolvable:$true] %s454
          %457 = dma.hbm_to_vmem [thread:$0]  %s12, 16, %s455, [#allocation14]
        $region52: #{char_cnn_forward.1} parent=11 // pred_fallthru
          _
      $region12: #{char_cnn_forward.1} parent=5 // pred_fallthru
        _
      %p458 = scmp.lt.s32.totalorder %s24, 4
      // Predicated region
      $region53: #{char_cnn_forward.1} parent=5 // pred_check
        %p459 = pneg %p458
      $region54: #{char_cnn_forward.1} parent=5 // pred_check_branch
        %461 = sbr.rel (%p459) target = $region56
      $region55: #{char_cnn_forward.1} parent=5 // pred_region
        // Predicated region
        $region57: #{char_cnn_forward.1} parent=55 // pred_check
          %p462 = pneg %p191
        $region58: #{char_cnn_forward.1} parent=55 // pred_check_branch
          %464 = sbr.rel (%p462) target = $region60
        $region59: #{char_cnn_forward.1} parent=55 // pred_region
          %s465 = sand.u32 %s24, 1
          %s466 = scalar_lea.sflag [#allocation5], %s465
          %s467 = sand.u32 %s181, 1
          %s468 = smul.addr %s467, 512
          %s469 = scalar_lea.vmem [#allocation15], %s468
          %s471 = ssub.s32 8192, 8192
          %472 = vsyncadd %s466, %s471
          %s473 = smul.addr %s24, 128
          %s474 = smul.addr %s473, 64
          %s475 = scalar_lea.hbm %s7, %s474
          %s476 = sshll.u32 %s469, 4
          %s477 = int_to_ptr.vmem [resolvable:$true] %s476
          %482 = dma.hbm_to_vmem [thread:$0]  %s475, 8192, %s477, %s466, 128, 128, 8
        $region60: #{char_cnn_forward.1} parent=55 // pred_fallthru
          _
        // Predicated region
        $region61: #{char_cnn_forward.1} parent=55 // pred_check
          %p483 = pneg %p217
        $region62: #{char_cnn_forward.1} parent=55 // pred_check_branch
          %485 = sbr.rel (%p483) target = $region64
        $region63: #{char_cnn_forward.1} parent=55 // pred_region
          %s486 = sand.u32 %s24, 1
          %s487 = scalar_lea.sflag [#allocation5], %s486
          %s488 = sand.u32 %s207, 1
          %s489 = smul.addr %s488, 2
          %s490 = scalar_lea.vmem [#allocation16], %s489
          %s492 = ssub.s32 32, 32
          %493 = vsyncadd %s487, %s492
          %s494 = smul.addr %s24, 2
          %s495 = smul.addr %s494, 16
          %s496 = scalar_lea.hbm %s8, %s495
          %s498 = sshll.u32 %s490, 4
          %s499 = int_to_ptr.vmem [resolvable:$true] %s498
          %501 = dma.hbm_to_vmem [thread:$0]  %s496, 32, %s499, %s487
        $region64: #{char_cnn_forward.1} parent=55 // pred_fallthru
          _
        // Predicated region
        $region65: #{char_cnn_forward.1} parent=55 // pred_check
          %p502 = pneg %p243
        $region66: #{char_cnn_forward.1} parent=55 // pred_check_branch
          %504 = sbr.rel (%p502) target = $region68
        $region67: #{char_cnn_forward.1} parent=55 // pred_region
          %s505 = sand.u32 %s24, 1
          %s506 = scalar_lea.sflag [#allocation5], %s505
          %s507 = sand.u32 %s233, 1
          %s508 = smul.addr %s507, 1024
          %s509 = scalar_lea.vmem [#allocation17], %s508
          %s511 = ssub.s32 16384, 16384
          %512 = vsyncadd %s506, %s511
          %s513 = smul.addr %s24, 256
          %s514 = smul.addr %s513, 64
          %s515 = scalar_lea.hbm %s9, %s514
          %s516 = sshll.u32 %s509, 4
          %s517 = int_to_ptr.vmem [resolvable:$true] %s516
          %522 = dma.hbm_to_vmem [thread:$0]  %s515, 16384, %s517, %s506, 512, 512, 32
        $region68: #{char_cnn_forward.1} parent=55 // pred_fallthru
          _
      $region56: #{char_cnn_forward.1} parent=5 // pred_fallthru
        _
      %p523 = scmp.le.s32.totalorder 1, %s24
      %p524 = scmp.lt.s32.totalorder %s24, 5
      %p525 = pnand %p523, %p524
      %p526 = pneg %p525
      // Predicated region
      $region69: #{char_cnn_forward.1} parent=5 // pred_check
        _
      $region70: #{char_cnn_forward.1} parent=5 // pred_check_branch
        %528 = sbr.rel (%p525) target = $region72
      $region71: #{char_cnn_forward.1} parent=5 // pred_region
        %s529 = ssub.s32 %s24, 1
        // Predicated region
        $region73: #{char_cnn_forward.1} parent=71 // pred_check
          %p530 = pneg %p66
        $region74: #{char_cnn_forward.1} parent=71 // pred_check_branch
          %532 = sbr.rel (%p530) target = $region76
        $region75: #{char_cnn_forward.1} parent=71 // pred_region
          %533 = dma.done [#allocation5], 1792
        $region76: #{char_cnn_forward.1} parent=71 // pred_fallthru
          _
        // Predicated region
        $region77: #{char_cnn_forward.1} parent=71 // pred_check
          %p534 = pneg %p87
        $region78: #{char_cnn_forward.1} parent=71 // pred_check_branch
          %536 = sbr.rel (%p534) target = $region80
        $region79: #{char_cnn_forward.1} parent=71 // pred_region
          %537 = dma.done [#allocation8], 32
        $region80: #{char_cnn_forward.1} parent=71 // pred_fallthru
          _
        // Predicated region
        $region81: #{char_cnn_forward.1} parent=71 // pred_check
          %p538 = pneg %p108
        $region82: #{char_cnn_forward.1} parent=71 // pred_check_branch
          %540 = sbr.rel (%p538) target = $region84
        $region83: #{char_cnn_forward.1} parent=71 // pred_region
          %541 = dma.done [#allocation8], 28672
        $region84: #{char_cnn_forward.1} parent=71 // pred_fallthru
          _
        // Predicated region
        $region85: #{char_cnn_forward.1} parent=71 // pred_check
          %p542 = pneg %p129
        $region86: #{char_cnn_forward.1} parent=71 // pred_check_branch
          %544 = sbr.rel (%p542) target = $region88
        $region87: #{char_cnn_forward.1} parent=71 // pred_region
          %545 = dma.done [#allocation11], 32
        $region88: #{char_cnn_forward.1} parent=71 // pred_fallthru
          _
        // Predicated region
        $region89: #{char_cnn_forward.1} parent=71 // pred_check
          %p546 = pneg %p150
        $region90: #{char_cnn_forward.1} parent=71 // pred_check_branch
          %548 = sbr.rel (%p546) target = $region92
        $region91: #{char_cnn_forward.1} parent=71 // pred_region
          %549 = dma.done [#allocation11], 12288
        $region92: #{char_cnn_forward.1} parent=71 // pred_fallthru
          _
        // Predicated region
        $region93: #{char_cnn_forward.1} parent=71 // pred_check
          %p550 = pneg %p171
        $region94: #{char_cnn_forward.1} parent=71 // pred_check_branch
          %552 = sbr.rel (%p550) target = $region96
        $region95: #{char_cnn_forward.1} parent=71 // pred_region
          %553 = dma.done [#allocation14], 32
        $region96: #{char_cnn_forward.1} parent=71 // pred_fallthru
          _
        %s554 = sand.u32 %s29, 1
        %s555 = scalar_lea.sflag [#allocation5], %s554
        %s556 = sand.u32 %s184, 1
        %s557 = smul.addr %s556, 512
        %s558 = scalar_lea.vmem [#allocation15], %s557
        // Predicated region
        $region97: #{char_cnn_forward.1} parent=71 // pred_check
          %p559 = pneg %p197
        $region98: #{char_cnn_forward.1} parent=71 // pred_check_branch
          %561 = sbr.rel (%p559) target = $region100
        $region99: #{char_cnn_forward.1} parent=71 // pred_region
          %562 = dma.done %s555, 8192
        $region100: #{char_cnn_forward.1} parent=71 // pred_fallthru
          _
        %s563 = sand.u32 %s29, 1
        %s564 = scalar_lea.sflag [#allocation5], %s563
        %s565 = sand.u32 %s210, 1
        %s566 = smul.addr %s565, 2
        %s567 = scalar_lea.vmem [#allocation16], %s566
        // Predicated region
        $region101: #{char_cnn_forward.1} parent=71 // pred_check
          %p568 = pneg %p223
        $region102: #{char_cnn_forward.1} parent=71 // pred_check_branch
          %570 = sbr.rel (%p568) target = $region104
        $region103: #{char_cnn_forward.1} parent=71 // pred_region
          %571 = dma.done %s564, 32
        $region104: #{char_cnn_forward.1} parent=71 // pred_fallthru
          _
        %s572 = sand.u32 %s29, 1
        %s573 = scalar_lea.sflag [#allocation5], %s572
        %s574 = sand.u32 %s236, 1
        %s575 = smul.addr %s574, 1024
        %s576 = scalar_lea.vmem [#allocation17], %s575
        // Predicated region
        $region105: #{char_cnn_forward.1} parent=71 // pred_check
          %p577 = pneg %p249
        $region106: #{char_cnn_forward.1} parent=71 // pred_check_branch
          %579 = sbr.rel (%p577) target = $region108
        $region107: #{char_cnn_forward.1} parent=71 // pred_region
          %580 = dma.done %s573, 16384
        $region108: #{char_cnn_forward.1} parent=71 // pred_fallthru
          _
        // Predicated region
        $region109: #{char_cnn_forward.1} parent=71 // pred_check
          %p581 = pneg %p270
        $region110: #{char_cnn_forward.1} parent=71 // pred_check_branch
          %583 = sbr.rel (%p581) target = $region112
        $region111: #{char_cnn_forward.1} parent=71 // pred_region
          %584 = dma.done [#allocation8], 128
        $region112: #{char_cnn_forward.1} parent=71 // pred_fallthru
          _
        // Predicated region
        $region113: #{char_cnn_forward.1} parent=71 // pred_check
          %p585 = pneg %p291
        $region114: #{char_cnn_forward.1} parent=71 // pred_check_branch
          %587 = sbr.rel (%p585) target = $region116
        $region115: #{char_cnn_forward.1} parent=71 // pred_region
          %588 = dma.done [#allocation11], 8192
        $region116: #{char_cnn_forward.1} parent=71 // pred_fallthru
          _
        // Predicated region
        $region117: #{char_cnn_forward.1} parent=71 // pred_check
          %p589 = pneg %p312
        $region118: #{char_cnn_forward.1} parent=71 // pred_check_branch
          %591 = sbr.rel (%p589) target = $region120
        $region119: #{char_cnn_forward.1} parent=71 // pred_region
          %592 = dma.done [#allocation14], 16
        $region120: #{char_cnn_forward.1} parent=71 // pred_fallthru
          _
        %p593 = pneg %p45
        %p594 = pneg %p42
        %p595 = pneg %p66
        %p596 = pneg %p63
        %p597 = pneg %p87
        %p598 = pneg %p84
        %p599 = pneg %p108
        %p600 = pneg %p105
        %p601 = pneg %p129
        %p602 = pneg %p126
        %p603 = pneg %p150
        %p604 = pneg %p147
        %p605 = pneg %p171
        %p606 = pneg %p168
        %s607 = sand.u32 %s29, 1
        %s608 = scalar_lea.sflag [#allocation5], %s607
        %s609 = sand.u32 %s184, 1
        %s610 = smul.addr %s609, 512
        %s611 = scalar_lea.vmem [#allocation15], %s610
        %p612 = pneg %p197
        %p613 = pneg %p194
        %s614 = sand.u32 %s29, 1
        %s615 = scalar_lea.sflag [#allocation5], %s614
        %s616 = sand.u32 %s210, 1
        %s617 = smul.addr %s616, 2
        %s618 = scalar_lea.vmem [#allocation16], %s617
        %p619 = pneg %p223
        %p620 = pneg %p220
        %s621 = sand.u32 %s29, 1
        %s622 = scalar_lea.sflag [#allocation5], %s621
        %s623 = sand.u32 %s236, 1
        %s624 = smul.addr %s623, 1024
        %s625 = scalar_lea.vmem [#allocation17], %s624
        %p626 = pneg %p249
        %p627 = pneg %p246
        %p628 = pneg %p270
        %p629 = pneg %p267
        %p630 = pneg %p291
        %p631 = pneg %p288
        %p632 = pneg %p312
        %p633 = pneg %p309
        %p634 = pneg %p333
        %p635 = pneg %p330
        %p637 = scmp.eq.s32.totalorder %s29, 0
        // Predicated region
        $region121: #{char_cnn_forward.1} parent=71 // pred_check
          %p638 = pneg %p637
        $region122: #{char_cnn_forward.1} parent=71 // pred_check_branch
          %640 = sbr.rel (%p638) target = $region124
        $region123: #{char_cnn_forward.1} parent=71 // pred_region
          %v641 = vld [vmem:[%s0] sm:$0xf]
          %v642 = vld [vmem:[%s0 + $0x4] sm:$0xf]
          %v643 = vld [vmem:[%s0 + $0x8] sm:$0xf]
          %v644 = vld [vmem:[%s0 + $0xc] sm:$0xf]
          %v645 = vld [vmem:[%s0 + $0x10] sm:$0xf]
          %v646 = vld [vmem:[%s0 + $0x14] sm:$0xf]
          %v647 = vld [vmem:[%s0 + $0x18] sm:$0xf]
          %v648 = vld [vmem:[%s0 + $0x1c] sm:$0xf]
          %v649 = vld [vmem:[%s0 + $0x20] sm:$0xf]
          %v650 = vld [vmem:[%s0 + $0x24] sm:$0xf]
          %v651 = vld [vmem:[%s0 + $0x28] sm:$0xf]
          %v652 = vld [vmem:[%s0 + $0x2c] sm:$0xf]
          %v653 = vld [vmem:[%s0 + $0x30] sm:$0xf]
          %v654 = vld [vmem:[%s0 + $0x34] sm:$0xf]
          %v655 = vld [vmem:[%s0 + $0x38] sm:$0x3]
          %v656 = vld [vmem:[#allocation4] sm:$0xff]
          %v657 = vld [vmem:[#allocation4 + $0x8] sm:$0xff]
          %v658 = vld [vmem:[#allocation4 + $0x10] sm:$0xff]
          %v659 = vld [vmem:[#allocation4 + $0x18] sm:$0xff]
          %v660 = vld [vmem:[#allocation4 + $0x20] sm:$0xff]
          %v661 = vld [vmem:[#allocation4 + $0x28] sm:$0xff]
          %v662 = vld [vmem:[#allocation4 + $0x30] sm:$0xff]
          %v663 = vld [vmem:[#allocation4 + $0x38] sm:$0xff]
          %v664 = vld [vmem:[#allocation4 + $0x40] sm:$0xff]
          %v665 = vld [vmem:[#allocation4 + $0x48] sm:$0xff]
          %v666 = vld [vmem:[#allocation4 + $0x50] sm:$0xff]
          %v667 = vld [vmem:[#allocation4 + $0x58] sm:$0xff]
          %v668 = vld [vmem:[#allocation4 + $0x60] sm:$0xff]
          %v669 = vld [vmem:[#allocation4 + $0x68] sm:$0xff]
          %v670 = vld [vmem:[#allocation7] sm:$0x3]
          %v672 = vlaneseq
          %v673 = vshrl.u32 %v672, 7
          %v674 = vsub.s32 0, %v673
          %v675 = vrot.slane %v670, %v674
          %v676 = vlaneseq
          %v677 = vshrl.u32 %v676, 7
          %v678 = vsub.s32 1, %v677
          %v679 = vrot.slane %v670, %v678
          %v697 = vunpack.c.l.b16 %v641
          %v698 = vunpack.c.l.b16 %v642
          %v699 = vunpack.c.l.b16 %v643
          %v700 = vunpack.c.l.b16 %v644
          %v701 = vunpack.c.l.b16 %v645
          %v702 = vunpack.c.l.b16 %v646
          %v703 = vunpack.c.l.b16 %v647
          %v704 = vunpack.c.l.b16 %v648
          %v705 = vunpack.c.l.b16 %v649
          %v706 = vunpack.c.l.b16 %v650
          %v707 = vunpack.c.l.b16 %v651
          %v708 = vunpack.c.l.b16 %v652
          %v709 = vunpack.c.l.b16 %v653
          %v710 = vunpack.c.l.b16 %v654
          %v711 = vunpack.c.l.b16 %v655
          %v712 = vpack.c.b16 %v698, %v697
          %v713 = vpack.c.b16 %v700, %v699
          %v714 = vpack.c.b16 %v702, %v701
          %v715 = vpack.c.b16 %v704, %v703
          %v716 = vpack.c.b16 %v706, %v705
          %v717 = vpack.c.b16 %v708, %v707
          %v718 = vpack.c.b16 %v710, %v709
          %v719 = vpack.c.b16 %v711, %v711
          %v734 = vunpack.c.l.b16 %v656
          %v735 = vunpack.c.h.b16 %v656
          %v736 = vunpack.c.l.b16 %v657
          %v737 = vunpack.c.h.b16 %v657
          %v738 = vunpack.c.l.b16 %v658
          %v739 = vunpack.c.h.b16 %v658
          %v740 = vunpack.c.l.b16 %v659
          %v741 = vunpack.c.h.b16 %v659
          %v742 = vunpack.c.l.b16 %v660
          %v743 = vunpack.c.h.b16 %v660
          %v744 = vunpack.c.l.b16 %v661
          %v745 = vunpack.c.h.b16 %v661
          %v746 = vunpack.c.l.b16 %v662
          %v747 = vunpack.c.h.b16 %v662
          %v748 = vunpack.c.l.b16 %v663
          %v749 = vunpack.c.h.b16 %v663
          %v750 = vunpack.c.l.b16 %v664
          %v751 = vunpack.c.h.b16 %v664
          %v752 = vunpack.c.l.b16 %v665
          %v753 = vunpack.c.h.b16 %v665
          %v754 = vunpack.c.l.b16 %v666
          %v755 = vunpack.c.h.b16 %v666
          %v756 = vunpack.c.l.b16 %v667
          %v757 = vunpack.c.h.b16 %v667
          %v758 = vunpack.c.l.b16 %v668
          %v759 = vunpack.c.h.b16 %v668
          %v760 = vunpack.c.l.b16 %v669
          %v761 = vunpack.c.h.b16 %v669
          %v762 = vpack.c.b16 %v736, %v734
          %v763 = vpack.c.b16 %v737, %v735
          %v764 = vpack.c.b16 %v740, %v738
          %v765 = vpack.c.b16 %v741, %v739
          %v766 = vpack.c.b16 %v744, %v742
          %v767 = vpack.c.b16 %v745, %v743
          %v768 = vpack.c.b16 %v748, %v746
          %v769 = vpack.c.b16 %v749, %v747
          %v770 = vpack.c.b16 %v752, %v750
          %v771 = vpack.c.b16 %v753, %v751
          %v772 = vpack.c.b16 %v756, %v754
          %v773 = vpack.c.b16 %v757, %v755
          %v774 = vpack.c.b16 %v760, %v758
          %v775 = vpack.c.b16 %v761, %v759
          %vm790 = vcmask 916480
          %v792 = vsel %vm790, %v712, 0
          %v795 = vsel %vm790, %v713, 0
          %v798 = vsel %vm790, %v714, 0
          %v801 = vsel %vm790, %v715, 0
          %v804 = vsel %vm790, %v716, 0
          %v807 = vsel %vm790, %v717, 0
          %v810 = vsel %vm790, %v718, 0
          %v813 = vsel %vm790, %v719, 0
          %815 = vmatprep.subr.bf16.mxu0 %v763
          %816 = vmatpush1.bf16.msra.mxu0 %v762
          %817 = vmatprep.subr.bf16.mxu0 %v765
          %818 = vmatpush1.bf16.msra.mxu0 %v764
          %819 = vmatprep.subr.bf16.mxu0 %v767
          %820 = vmatpush1.bf16.msra.mxu0 %v766
          %821 = vmatprep.subr.bf16.mxu0 %v769
          %822 = vmatpush1.bf16.msra.mxu0 %v768
          %823 = vmatprep.subr.bf16.mxu0 %v771
          %824 = vmatpush1.bf16.msra.mxu0 %v770
          %825 = vmatprep.subr.bf16.mxu0 %v773
          %826 = vmatpush1.bf16.msra.mxu0 %v772
          %827 = vmatprep.subr.bf16.mxu0 %v775
          %828 = vmatpush1.bf16.msra.mxu0 %v774
          %829 = vmatprep.subr.bf16.mxu0 0
          %830 = vmatpush1.bf16.msra.mxu0 0
          %831 = vmatprep.subr.bf16.mxu0 0
          %832 = vmatpush1.bf16.msra.mxu0 0
          %833 = vmatprep.subr.bf16.mxu0 0
          %834 = vmatpush1.bf16.msra.mxu0 0
          %835 = vmatprep.subr.bf16.mxu0 0
          %836 = vmatpush1.bf16.msra.mxu0 0
          %837 = vmatprep.subr.bf16.mxu0 0
          %838 = vmatpush1.bf16.msra.mxu0 0
          %839 = vmatprep.subr.bf16.mxu0 0
          %840 = vmatpush1.bf16.msra.mxu0 0
          %841 = vmatprep.subr.bf16.mxu0 0
          %842 = vmatpush1.bf16.msra.mxu0 0
          %843 = vmatprep.subr.bf16.mxu0 0
          %844 = vmatpush1.bf16.msra.mxu0 0
          %845 = vmatprep.subr.bf16.mxu0 0
          %846 = vmatpush1.bf16.msra.mxu0 0
          %847 = vmatprep.mubr.bf16.mxu0 0
          %848 = vmatmul.mubr.bf16.gmra.mrb[0].mxu0 %v792
          %v849 = vpop.f32.mrb[0].mxu0
          %v850 = vadd.f32 %v675, %v849
          %v851 = vpop.f32.mrb[0].mxu0
          %v852 = vadd.f32 %v679, %v851
          %v853 = vpop.f32.mrb[0].mxu0
          %v854 = vadd.f32 %v675, %v853
          %v855 = vpop.f32.mrb[0].mxu0
          %v856 = vadd.f32 %v679, %v855
          %857 = vmatprep.mubr.bf16.mxu0 0
          %858 = vmatmul.mubr.bf16.gmra.mrb[0].mxu0 %v795
          %v859 = vpop.f32.mrb[0].mxu0
          %v860 = vadd.f32 %v675, %v859
          %v861 = vpop.f32.mrb[0].mxu0
          %v862 = vadd.f32 %v679, %v861
          %v863 = vpop.f32.mrb[0].mxu0
          %v864 = vadd.f32 %v675, %v863
          %v865 = vpop.f32.mrb[0].mxu0
          %v866 = vadd.f32 %v679, %v865
          %867 = vmatprep.mubr.bf16.mxu0 0
          %868 = vmatmul.mubr.bf16.gmra.mrb[0].mxu0 %v798
          %v869 = vpop.f32.mrb[0].mxu0
          %v870 = vadd.f32 %v675, %v869
          %v871 = vpop.f32.mrb[0].mxu0
          %v872 = vadd.f32 %v679, %v871
          %v873 = vpop.f32.mrb[0].mxu0
          %v874 = vadd.f32 %v675, %v873
          %v875 = vpop.f32.mrb[0].mxu0
          %v876 = vadd.f32 %v679, %v875
          %877 = vmatprep.mubr.bf16.mxu0 0
          %878 = vmatmul.mubr.bf16.gmra.mrb[0].mxu0 %v801
          %v879 = vpop.f32.mrb[0].mxu0
          %v880 = vadd.f32 %v675, %v879
          %v881 = vpop.f32.mrb[0].mxu0
          %v882 = vadd.f32 %v679, %v881
          %v883 = vpop.f32.mrb[0].mxu0
          %v884 = vadd.f32 %v675, %v883
          %v885 = vpop.f32.mrb[0].mxu0
          %v886 = vadd.f32 %v679, %v885
          %887 = vmatprep.mubr.bf16.mxu0 0
          %888 = vmatmul.mubr.bf16.gmra.mrb[0].mxu0 %v804
          %v889 = vpop.f32.mrb[0].mxu0
          %v890 = vadd.f32 %v675, %v889
          %v891 = vpop.f32.mrb[0].mxu0
          %v892 = vadd.f32 %v679, %v891
          %v893 = vpop.f32.mrb[0].mxu0
          %v894 = vadd.f32 %v675, %v893
          %v895 = vpop.f32.mrb[0].mxu0
          %v896 = vadd.f32 %v679, %v895
          %897 = vmatprep.mubr.bf16.mxu0 0
          %898 = vmatmul.mubr.bf16.gmra.mrb[0].mxu0 %v807
          %v899 = vpop.f32.mrb[0].mxu0
          %v900 = vadd.f32 %v675, %v899
          %v901 = vpop.f32.mrb[0].mxu0
          %v902 = vadd.f32 %v679, %v901
          %v903 = vpop.f32.mrb[0].mxu0
          %v904 = vadd.f32 %v675, %v903
          %v905 = vpop.f32.mrb[0].mxu0
          %v906 = vadd.f32 %v679, %v905
          %907 = vmatprep.mubr.bf16.mxu0 0
          %908 = vmatmul.mubr.bf16.gmra.mrb[0].mxu0 %v810
          %v909 = vpop.f32.mrb[0].mxu0
          %v910 = vadd.f32 %v675, %v909
          %v911 = vpop.f32.mrb[0].mxu0
          %v912 = vadd.f32 %v679, %v911
          %v913 = vpop.f32.mrb[0].mxu0
          %v914 = vadd.f32 %v675, %v913
          %v915 = vpop.f32.mrb[0].mxu0
          %v916 = vadd.f32 %v679, %v915
          %917 = vmatprep.mubr.bf16.mxu0 0
          %918 = vmatmul.mubr.bf16.gmra.mrb[0].mxu0 %v813
          %v919 = vpop.f32.mrb[0].mxu0
          %v920 = vadd.f32 %v675, %v919
          %v921 = vpop.f32.mrb[0].mxu0
          %v922 = vadd.f32 %v679, %v921
          %v923 = vpop.f32.mrb[0].mxu0
          %v924 = vpop.f32.mrb[0].mxu0
          %925 = vdwg.mxu0
          %v926 = vmax.f32 %v850, 0.0
          %v927 = vmax.f32 %v852, 0.0
          %v928 = vmax.f32 %v854, 0.0
          %v929 = vmax.f32 %v856, 0.0
          %v930 = vmax.f32 %v860, 0.0
          %v931 = vmax.f32 %v862, 0.0
          %v932 = vmax.f32 %v864, 0.0
          %v933 = vmax.f32 %v866, 0.0
          %v934 = vmax.f32 %v870, 0.0
          %v935 = vmax.f32 %v872, 0.0
          %v936 = vmax.f32 %v874, 0.0
          %v937 = vmax.f32 %v876, 0.0
          %v938 = vmax.f32 %v880, 0.0
          %v939 = vmax.f32 %v882, 0.0
          %v940 = vmax.f32 %v884, 0.0
          %v941 = vmax.f32 %v886, 0.0
          %v942 = vmax.f32 %v890, 0.0
          %v943 = vmax.f32 %v892, 0.0
          %v944 = vmax.f32 %v894, 0.0
          %v945 = vmax.f32 %v896, 0.0
          %v946 = vmax.f32 %v900, 0.0
          %v947 = vmax.f32 %v902, 0.0
          %v948 = vmax.f32 %v904, 0.0
          %v949 = vmax.f32 %v906, 0.0
          %v950 = vmax.f32 %v910, 0.0
          %v951 = vmax.f32 %v912, 0.0
          %v952 = vmax.f32 %v914, 0.0
          %v953 = vmax.f32 %v916, 0.0
          %v954 = vmax.f32 %v920, 0.0
          %v955 = vmax.f32 %v922, 0.0
          %v986 = vcombine.low %v926, %v927
          %v987 = vcombine.high %v926, %v927
          %v989 = vunpack.c.l.s4 1983009808
          %v990 = vunpack.c.0.s8 %v989
          %v991 = vlaneseq
          %v992 = vshrl.u32 %v991, 7
          %v993 = vsub.s32 %v990, %v992
          %v994 = vrot.slane %v986, %v993
          %v996 = vunpack.c.l.s4 1983009808
          %v997 = vunpack.c.0.s8 %v996
          %v998 = vlaneseq
          %v999 = vshrl.u32 %v998, 7
          %v1000 = vsub.s32 %v997, %v999
          %v1001 = vrot.slane %v987, %v1000
          %v1002 = vcombine.high %v994, %v994
          %v1003 = vcombine.high %v1001, %v1001
          %v1004 = vcombine.low %v928, %v929
          %v1005 = vcombine.high %v928, %v929
          %v1007 = vunpack.c.l.s4 1983009808
          %v1008 = vunpack.c.0.s8 %v1007
          %v1009 = vlaneseq
          %v1010 = vshrl.u32 %v1009, 7
          %v1011 = vsub.s32 %v1008, %v1010
          %v1012 = vrot.slane %v1004, %v1011
          %v1014 = vunpack.c.l.s4 1983009808
          %v1015 = vunpack.c.0.s8 %v1014
          %v1016 = vlaneseq
          %v1017 = vshrl.u32 %v1016, 7
          %v1018 = vsub.s32 %v1015, %v1017
          %v1019 = vrot.slane %v1005, %v1018
          %v1020 = vcombine.high %v1012, %v1012
          %v1021 = vcombine.high %v1019, %v1019
          %v1022 = vcombine.low %v930, %v931
          %v1023 = vcombine.high %v930, %v931
          %v1025 = vunpack.c.l.s4 1983009808
          %v1026 = vunpack.c.0.s8 %v1025
          %v1027 = vlaneseq
          %v1028 = vshrl.u32 %v1027, 7
          %v1029 = vsub.s32 %v1026, %v1028
          %v1030 = vrot.slane %v1022, %v1029
          %v1032 = vunpack.c.l.s4 1983009808
          %v1033 = vunpack.c.0.s8 %v1032
          %v1034 = vlaneseq
          %v1035 = vshrl.u32 %v1034, 7
          %v1036 = vsub.s32 %v1033, %v1035
          %v1037 = vrot.slane %v1023, %v1036
          %v1038 = vcombine.high %v1030, %v1030
          %v1039 = vcombine.high %v1037, %v1037
          %v1040 = vcombine.low %v932, %v933
          %v1041 = vcombine.high %v932, %v933
          %v1043 = vunpack.c.l.s4 1983009808
          %v1044 = vunpack.c.0.s8 %v1043
          %v1045 = vlaneseq
          %v1046 = vshrl.u32 %v1045, 7
          %v1047 = vsub.s32 %v1044, %v1046
          %v1048 = vrot.slane %v1040, %v1047
          %v1050 = vunpack.c.l.s4 1983009808
          %v1051 = vunpack.c.0.s8 %v1050
          %v1052 = vlaneseq
          %v1053 = vshrl.u32 %v1052, 7
          %v1054 = vsub.s32 %v1051, %v1053
          %v1055 = vrot.slane %v1041, %v1054
          %v1056 = vcombine.high %v1048, %v1048
          %v1057 = vcombine.high %v1055, %v1055
          %v1058 = vcombine.low %v934, %v935
          %v1059 = vcombine.high %v934, %v935
          %v1061 = vunpack.c.l.s4 1983009808
          %v1062 = vunpack.c.0.s8 %v1061
          %v1063 = vlaneseq
          %v1064 = vshrl.u32 %v1063, 7
          %v1065 = vsub.s32 %v1062, %v1064
          %v1066 = vrot.slane %v1058, %v1065
          %v1068 = vunpack.c.l.s4 1983009808
          %v1069 = vunpack.c.0.s8 %v1068
          %v1070 = vlaneseq
          %v1071 = vshrl.u32 %v1070, 7
          %v1072 = vsub.s32 %v1069, %v1071
          %v1073 = vrot.slane %v1059, %v1072
          %v1074 = vcombine.high %v1066, %v1066
          %v1075 = vcombine.high %v1073, %v1073
          %v1076 = vcombine.low %v936, %v937
          %v1077 = vcombine.high %v936, %v937
          %v1079 = vunpack.c.l.s4 1983009808
          %v1080 = vunpack.c.0.s8 %v1079
          %v1081 = vlaneseq
          %v1082 = vshrl.u32 %v1081, 7
          %v1083 = vsub.s32 %v1080, %v1082
          %v1084 = vrot.slane %v1076, %v1083
          %v1086 = vunpack.c.l.s4 1983009808
          %v1087 = vunpack.c.0.s8 %v1086
          %v1088 = vlaneseq
          %v1089 = vshrl.u32 %v1088, 7
          %v1090 = vsub.s32 %v1087, %v1089
          %v1091 = vrot.slane %v1077, %v1090
          %v1092 = vcombine.high %v1084, %v1084
          %v1093 = vcombine.high %v1091, %v1091
          %v1094 = vcombine.low %v938, %v939
          %v1095 = vcombine.high %v938, %v939
          %v1097 = vunpack.c.l.s4 1983009808
          %v1098 = vunpack.c.0.s8 %v1097
          %v1099 = vlaneseq
          %v1100 = vshrl.u32 %v1099, 7
          %v1101 = vsub.s32 %v1098, %v1100
          %v1102 = vrot.slane %v1094, %v1101
          %v1104 = vunpack.c.l.s4 1983009808
          %v1105 = vunpack.c.0.s8 %v1104
          %v1106 = vlaneseq
          %v1107 = vshrl.u32 %v1106, 7
          %v1108 = vsub.s32 %v1105, %v1107
          %v1109 = vrot.slane %v1095, %v1108
          %v1110 = vcombine.high %v1102, %v1102
          %v1111 = vcombine.high %v1109, %v1109
          %v1112 = vcombine.low %v940, %v941
          %v1113 = vcombine.high %v940, %v941
          %v1115 = vunpack.c.l.s4 1983009808
          %v1116 = vunpack.c.0.s8 %v1115
          %v1117 = vlaneseq
          %v1118 = vshrl.u32 %v1117, 7
          %v1119 = vsub.s32 %v1116, %v1118
          %v1120 = vrot.slane %v1112, %v1119
          %v1122 = vunpack.c.l.s4 1983009808
          %v1123 = vunpack.c.0.s8 %v1122
          %v1124 = vlaneseq
          %v1125 = vshrl.u32 %v1124, 7
          %v1126 = vsub.s32 %v1123, %v1125
          %v1127 = vrot.slane %v1113, %v1126
          %v1128 = vcombine.high %v1120, %v1120
          %v1129 = vcombine.high %v1127, %v1127
          %v1130 = vcombine.low %v942, %v943
          %v1131 = vcombine.high %v942, %v943
          %v1133 = vunpack.c.l.s4 1983009808
          %v1134 = vunpack.c.0.s8 %v1133
          %v1135 = vlaneseq
          %v1136 = vshrl.u32 %v1135, 7
          %v1137 = vsub.s32 %v1134, %v1136
          %v1138 = vrot.slane %v1130, %v1137
          %v1140 = vunpack.c.l.s4 1983009808
          %v1141 = vunpack.c.0.s8 %v1140
          %v1142 = vlaneseq
          %v1143 = vshrl.u32 %v1142, 7
          %v1144 = vsub.s32 %v1141, %v1143
          %v1145 = vrot.slane %v1131, %v1144
          %v1146 = vcombine.high %v1138, %v1138
          %v1147 = vcombine.high %v1145, %v1145
          %v1148 = vcombine.low %v944, %v945
          %v1149 = vcombine.high %v944, %v945
          %v1151 = vunpack.c.l.s4 1983009808
          %v1152 = vunpack.c.0.s8 %v1151
          %v1153 = vlaneseq
          %v1154 = vshrl.u32 %v1153, 7
          %v1155 = vsub.s32 %v1152, %v1154
          %v1156 = vrot.slane %v1148, %v1155
          %v1158 = vunpack.c.l.s4 1983009808
          %v1159 = vunpack.c.0.s8 %v1158
          %v1160 = vlaneseq
          %v1161 = vshrl.u32 %v1160, 7
          %v1162 = vsub.s32 %v1159, %v1161
          %v1163 = vrot.slane %v1149, %v1162
          %v1164 = vcombine.high %v1156, %v1156
          %v1165 = vcombine.high %v1163, %v1163
          %v1166 = vcombine.low %v946, %v947
          %v1167 = vcombine.high %v946, %v947
          %v1169 = vunpack.c.l.s4 1983009808
          %v1170 = vunpack.c.0.s8 %v1169
          %v1171 = vlaneseq
          %v1172 = vshrl.u32 %v1171, 7
          %v1173 = vsub.s32 %v1170, %v1172
          %v1174 = vrot.slane %v1166, %v1173
          %v1176 = vunpack.c.l.s4 1983009808
          %v1177 = vunpack.c.0.s8 %v1176
          %v1178 = vlaneseq
          %v1179 = vshrl.u32 %v1178, 7
          %v1180 = vsub.s32 %v1177, %v1179
          %v1181 = vrot.slane %v1167, %v1180
          %v1182 = vcombine.high %v1174, %v1174
          %v1183 = vcombine.high %v1181, %v1181
          %v1184 = vcombine.low %v948, %v949
          %v1185 = vcombine.high %v948, %v949
          %v1187 = vunpack.c.l.s4 1983009808
          %v1188 = vunpack.c.0.s8 %v1187
          %v1189 = vlaneseq
          %v1190 = vshrl.u32 %v1189, 7
          %v1191 = vsub.s32 %v1188, %v1190
          %v1192 = vrot.slane %v1184, %v1191
          %v1194 = vunpack.c.l.s4 1983009808
          %v1195 = vunpack.c.0.s8 %v1194
          %v1196 = vlaneseq
          %v1197 = vshrl.u32 %v1196, 7
          %v1198 = vsub.s32 %v1195, %v1197
          %v1199 = vrot.slane %v1185, %v1198
          %v1200 = vcombine.high %v1192, %v1192
          %v1201 = vcombine.high %v1199, %v1199
          %v1202 = vcombine.low %v950, %v951
          %v1203 = vcombine.high %v950, %v951
          %v1205 = vunpack.c.l.s4 1983009808
          %v1206 = vunpack.c.0.s8 %v1205
          %v1207 = vlaneseq
          %v1208 = vshrl.u32 %v1207, 7
          %v1209 = vsub.s32 %v1206, %v1208
          %v1210 = vrot.slane %v1202, %v1209
          %v1212 = vunpack.c.l.s4 1983009808
          %v1213 = vunpack.c.0.s8 %v1212
          %v1214 = vlaneseq
          %v1215 = vshrl.u32 %v1214, 7
          %v1216 = vsub.s32 %v1213, %v1215
          %v1217 = vrot.slane %v1203, %v1216
          %v1218 = vcombine.high %v1210, %v1210
          %v1219 = vcombine.high %v1217, %v1217
          %v1220 = vcombine.low %v952, %v953
          %v1221 = vcombine.high %v952, %v953
          %v1223 = vunpack.c.l.s4 1983009808
          %v1224 = vunpack.c.0.s8 %v1223
          %v1225 = vlaneseq
          %v1226 = vshrl.u32 %v1225, 7
          %v1227 = vsub.s32 %v1224, %v1226
          %v1228 = vrot.slane %v1220, %v1227
          %v1230 = vunpack.c.l.s4 1983009808
          %v1231 = vunpack.c.0.s8 %v1230
          %v1232 = vlaneseq
          %v1233 = vshrl.u32 %v1232, 7
          %v1234 = vsub.s32 %v1231, %v1233
          %v1235 = vrot.slane %v1221, %v1234
          %v1236 = vcombine.high %v1228, %v1228
          %v1237 = vcombine.high %v1235, %v1235
          %v1238 = vcombine.low %v954, %v955
          %v1240 = vunpack.c.l.s4 1983009808
          %v1241 = vunpack.c.0.s8 %v1240
          %v1242 = vlaneseq
          %v1243 = vshrl.u32 %v1242, 7
          %v1244 = vsub.s32 %v1241, %v1243
          %v1245 = vrot.slane %v1238, %v1244
          %v1246 = vcombine.high %v1245, %v1245
          %v1248 = vunpack.c.l.s4 1966171168
          %v1249 = vunpack.c.0.s8 %v1248
          %v1250 = vlaneseq
          %v1251 = vshrl.u32 %v1250, 7
          %v1252 = vsub.s32 %v1249, %v1251
          %v1253 = vrot.slane %v994, %v1252
          %v1254 = vcombine.high %v1253, %v1253
          %v1256 = vunpack.c.l.s4 1966171168
          %v1257 = vunpack.c.0.s8 %v1256
          %v1258 = vlaneseq
          %v1259 = vshrl.u32 %v1258, 7
          %v1260 = vsub.s32 %v1257, %v1259
          %v1261 = vrot.slane %v1002, %v1260
          %v1262 = vcombine.high %v1261, %v1261
          %v1264 = vunpack.c.l.s4 1966171168
          %v1265 = vunpack.c.0.s8 %v1264
          %v1266 = vlaneseq
          %v1267 = vshrl.u32 %v1266, 7
          %v1268 = vsub.s32 %v1265, %v1267
          %v1269 = vrot.slane %v1001, %v1268
          %v1270 = vcombine.high %v1269, %v1269
          %v1272 = vunpack.c.l.s4 1966171168
          %v1273 = vunpack.c.0.s8 %v1272
          %v1274 = vlaneseq
          %v1275 = vshrl.u32 %v1274, 7
          %v1276 = vsub.s32 %v1273, %v1275
          %v1277 = vrot.slane %v1003, %v1276
          %v1278 = vcombine.high %v1277, %v1277
          %v1280 = vunpack.c.l.s4 1966171168
          %v1281 = vunpack.c.0.s8 %v1280
          %v1282 = vlaneseq
          %v1283 = vshrl.u32 %v1282, 7
          %v1284 = vsub.s32 %v1281, %v1283
          %v1285 = vrot.slane %v1012, %v1284
          %v1286 = vcombine.high %v1285, %v1285
          %v1288 = vunpack.c.l.s4 1966171168
          %v1289 = vunpack.c.0.s8 %v1288
          %v1290 = vlaneseq
          %v1291 = vshrl.u32 %v1290, 7
          %v1292 = vsub.s32 %v1289, %v1291
          %v1293 = vrot.slane %v1020, %v1292
          %v1294 = vcombine.high %v1293, %v1293
          %v1296 = vunpack.c.l.s4 1966171168
          %v1297 = vunpack.c.0.s8 %v1296
          %v1298 = vlaneseq
          %v1299 = vshrl.u32 %v1298, 7
          %v1300 = vsub.s32 %v1297, %v1299
          %v1301 = vrot.slane %v1019, %v1300
          %v1302 = vcombine.high %v1301, %v1301
          %v1304 = vunpack.c.l.s4 1966171168
          %v1305 = vunpack.c.0.s8 %v1304
          %v1306 = vlaneseq
          %v1307 = vshrl.u32 %v1306, 7
          %v1308 = vsub.s32 %v1305, %v1307
          %v1309 = vrot.slane %v1021, %v1308
          %v1310 = vcombine.high %v1309, %v1309
          %v1312 = vunpack.c.l.s4 1966171168
          %v1313 = vunpack.c.0.s8 %v1312
          %v1314 = vlaneseq
          %v1315 = vshrl.u32 %v1314, 7
          %v1316 = vsub.s32 %v1313, %v1315
          %v1317 = vrot.slane %v1030, %v1316
          %v1318 = vcombine.high %v1317, %v1317
          %v1320 = vunpack.c.l.s4 1966171168
          %v1321 = vunpack.c.0.s8 %v1320
          %v1322 = vlaneseq
          %v1323 = vshrl.u32 %v1322, 7
          %v1324 = vsub.s32 %v1321, %v1323
          %v1325 = vrot.slane %v1038, %v1324
          %v1326 = vcombine.high %v1325, %v1325
          %v1328 = vunpack.c.l.s4 1966171168
          %v1329 = vunpack.c.0.s8 %v1328
          %v1330 = vlaneseq
          %v1331 = vshrl.u32 %v1330, 7
          %v1332 = vsub.s32 %v1329, %v1331
          %v1333 = vrot.slane %v1037, %v1332
          %v1334 = vcombine.high %v1333, %v1333
          %v1336 = vunpack.c.l.s4 1966171168
          %v1337 = vunpack.c.0.s8 %v1336
          %v1338 = vlaneseq
          %v1339 = vshrl.u32 %v1338, 7
          %v1340 = vsub.s32 %v1337, %v1339
          %v1341 = vrot.slane %v1039, %v1340
          %v1342 = vcombine.high %v1341, %v1341
          %v1344 = vunpack.c.l.s4 1966171168
          %v1345 = vunpack.c.0.s8 %v1344
          %v1346 = vlaneseq
          %v1347 = vshrl.u32 %v1346, 7
          %v1348 = vsub.s32 %v1345, %v1347
          %v1349 = vrot.slane %v1048, %v1348
          %v1350 = vcombine.high %v1349, %v1349
          %v1352 = vunpack.c.l.s4 1966171168
          %v1353 = vunpack.c.0.s8 %v1352
          %v1354 = vlaneseq
          %v1355 = vshrl.u32 %v1354, 7
          %v1356 = vsub.s32 %v1353, %v1355
          %v1357 = vrot.slane %v1056, %v1356
          %v1358 = vcombine.high %v1357, %v1357
          %v1360 = vunpack.c.l.s4 1966171168
          %v1361 = vunpack.c.0.s8 %v1360
          %v1362 = vlaneseq
          %v1363 = vshrl.u32 %v1362, 7
          %v1364 = vsub.s32 %v1361, %v1363
          %v1365 = vrot.slane %v1055, %v1364
          %v1366 = vcombine.high %v1365, %v1365
          %v1368 = vunpack.c.l.s4 1966171168
          %v1369 = vunpack.c.0.s8 %v1368
          %v1370 = vlaneseq
          %v1371 = vshrl.u32 %v1370, 7
          %v1372 = vsub.s32 %v1369, %v1371
          %v1373 = vrot.slane %v1057, %v1372
          %v1374 = vcombine.high %v1373, %v1373
          %v1376 = vunpack.c.l.s4 1966171168
          %v1377 = vunpack.c.0.s8 %v1376
          %v1378 = vlaneseq
          %v1379 = vshrl.u32 %v1378, 7
          %v1380 = vsub.s32 %v1377, %v1379
          %v1381 = vrot.slane %v1066, %v1380
          %v1382 = vcombine.high %v1381, %v1381
          %v1384 = vunpack.c.l.s4 1966171168
          %v1385 = vunpack.c.0.s8 %v1384
          %v1386 = vlaneseq
          %v1387 = vshrl.u32 %v1386, 7
          %v1388 = vsub.s32 %v1385, %v1387
          %v1389 = vrot.slane %v1074, %v1388
          %v1390 = vcombine.high %v1389, %v1389
          %v1392 = vunpack.c.l.s4 1966171168
          %v1393 = vunpack.c.0.s8 %v1392
          %v1394 = vlaneseq
          %v1395 = vshrl.u32 %v1394, 7
          %v1396 = vsub.s32 %v1393, %v1395
          %v1397 = vrot.slane %v1073, %v1396
          %v1398 = vcombine.high %v1397, %v1397
          %v1400 = vunpack.c.l.s4 1966171168
          %v1401 = vunpack.c.0.s8 %v1400
          %v1402 = vlaneseq
          %v1403 = vshrl.u32 %v1402, 7
          %v1404 = vsub.s32 %v1401, %v1403
          %v1405 = vrot.slane %v1075, %v1404
          %v1406 = vcombine.high %v1405, %v1405
          %v1408 = vunpack.c.l.s4 1966171168
          %v1409 = vunpack.c.0.s8 %v1408
          %v1410 = vlaneseq
          %v1411 = vshrl.u32 %v1410, 7
          %v1412 = vsub.s32 %v1409, %v1411
          %v1413 = vrot.slane %v1084, %v1412
          %v1414 = vcombine.high %v1413, %v1413
          %v1416 = vunpack.c.l.s4 1966171168
          %v1417 = vunpack.c.0.s8 %v1416
          %v1418 = vlaneseq
          %v1419 = vshrl.u32 %v1418, 7
          %v1420 = vsub.s32 %v1417, %v1419
          %v1421 = vrot.slane %v1092, %v1420
          %v1422 = vcombine.high %v1421, %v1421
          %v1424 = vunpack.c.l.s4 1966171168
          %v1425 = vunpack.c.0.s8 %v1424
          %v1426 = vlaneseq
          %v1427 = vshrl.u32 %v1426, 7
          %v1428 = vsub.s32 %v1425, %v1427
          %v1429 = vrot.slane %v1091, %v1428
          %v1430 = vcombine.high %v1429, %v1429
          %v1432 = vunpack.c.l.s4 1966171168
          %v1433 = vunpack.c.0.s8 %v1432
          %v1434 = vlaneseq
          %v1435 = vshrl.u32 %v1434, 7
          %v1436 = vsub.s32 %v1433, %v1435
          %v1437 = vrot.slane %v1093, %v1436
          %v1438 = vcombine.high %v1437, %v1437
          %v1440 = vunpack.c.l.s4 1966171168
          %v1441 = vunpack.c.0.s8 %v1440
          %v1442 = vlaneseq
          %v1443 = vshrl.u32 %v1442, 7
          %v1444 = vsub.s32 %v1441, %v1443
          %v1445 = vrot.slane %v1102, %v1444
          %v1446 = vcombine.high %v1445, %v1445
          %v1448 = vunpack.c.l.s4 1966171168
          %v1449 = vunpack.c.0.s8 %v1448
          %v1450 = vlaneseq
          %v1451 = vshrl.u32 %v1450, 7
          %v1452 = vsub.s32 %v1449, %v1451
          %v1453 = vrot.slane %v1110, %v1452
          %v1454 = vcombine.high %v1453, %v1453
          %v1456 = vunpack.c.l.s4 1966171168
          %v1457 = vunpack.c.0.s8 %v1456
          %v1458 = vlaneseq
          %v1459 = vshrl.u32 %v1458, 7
          %v1460 = vsub.s32 %v1457, %v1459
          %v1461 = vrot.slane %v1109, %v1460
          %v1462 = vcombine.high %v1461, %v1461
          %v1464 = vunpack.c.l.s4 1966171168
          %v1465 = vunpack.c.0.s8 %v1464
          %v1466 = vlaneseq
          %v1467 = vshrl.u32 %v1466, 7
          %v1468 = vsub.s32 %v1465, %v1467
          %v1469 = vrot.slane %v1111, %v1468
          %v1470 = vcombine.high %v1469, %v1469
          %v1472 = vunpack.c.l.s4 1966171168
          %v1473 = vunpack.c.0.s8 %v1472
          %v1474 = vlaneseq
          %v1475 = vshrl.u32 %v1474, 7
          %v1476 = vsub.s32 %v1473, %v1475
          %v1477 = vrot.slane %v1120, %v1476
          %v1479 = vunpack.c.l.s4 1966171168
          %v1480 = vunpack.c.0.s8 %v1479
          %v1481 = vlaneseq
          %v1482 = vshrl.u32 %v1481, 7
          %v1483 = vsub.s32 %v1480, %v1482
          %v1484 = vrot.slane %v1128, %v1483
          %v1485 = vcombine.high %v1484, %v1484
          %v1487 = vunpack.c.l.s4 1966171168
          %v1488 = vunpack.c.0.s8 %v1487
          %v1489 = vlaneseq
          %v1490 = vshrl.u32 %v1489, 7
          %v1491 = vsub.s32 %v1488, %v1490
          %v1492 = vrot.slane %v1127, %v1491
          %v1493 = vcombine.high %v1492, %v1492
          %v1495 = vunpack.c.l.s4 1966171168
          %v1496 = vunpack.c.0.s8 %v1495
          %v1497 = vlaneseq
          %v1498 = vshrl.u32 %v1497, 7
          %v1499 = vsub.s32 %v1496, %v1498
          %v1500 = vrot.slane %v1129, %v1499
          %v1501 = vcombine.high %v1500, %v1500
          %v1503 = vunpack.c.l.s4 1966171168
          %v1504 = vunpack.c.0.s8 %v1503
          %v1505 = vlaneseq
          %v1506 = vshrl.u32 %v1505, 7
          %v1507 = vsub.s32 %v1504, %v1506
          %v1508 = vrot.slane %v1138, %v1507
          %v1509 = vcombine.high %v1508, %v1508
          %v1511 = vunpack.c.l.s4 1966171168
          %v1512 = vunpack.c.0.s8 %v1511
          %v1513 = vlaneseq
          %v1514 = vshrl.u32 %v1513, 7
          %v1515 = vsub.s32 %v1512, %v1514
          %v1516 = vrot.slane %v1146, %v1515
          %v1517 = vcombine.high %v1516, %v1516
          %v1519 = vunpack.c.l.s4 1966171168
          %v1520 = vunpack.c.0.s8 %v1519
          %v1521 = vlaneseq
          %v1522 = vshrl.u32 %v1521, 7
          %v1523 = vsub.s32 %v1520, %v1522
          %v1524 = vrot.slane %v1145, %v1523
          %v1525 = vcombine.high %v1524, %v1524
          %v1527 = vunpack.c.l.s4 1966171168
          %v1528 = vunpack.c.0.s8 %v1527
          %v1529 = vlaneseq
          %v1530 = vshrl.u32 %v1529, 7
          %v1531 = vsub.s32 %v1528, %v1530
          %v1532 = vrot.slane %v1147, %v1531
          %v1533 = vcombine.high %v1532, %v1532
          %v1535 = vunpack.c.l.s4 1966171168
          %v1536 = vunpack.c.0.s8 %v1535
          %v1537 = vlaneseq
          %v1538 = vshrl.u32 %v1537, 7
          %v1539 = vsub.s32 %v1536, %v1538
          %v1540 = vrot.slane %v1156, %v1539
          %v1541 = vcombine.high %v1540, %v1540
          %v1543 = vunpack.c.l.s4 1966171168
          %v1544 = vunpack.c.0.s8 %v1543
          %v1545 = vlaneseq
          %v1546 = vshrl.u32 %v1545, 7
          %v1547 = vsub.s32 %v1544, %v1546
          %v1548 = vrot.slane %v1164, %v1547
          %v1549 = vcombine.high %v1548, %v1548
          %v1551 = vunpack.c.l.s4 1966171168
          %v1552 = vunpack.c.0.s8 %v1551
          %v1553 = vlaneseq
          %v1554 = vshrl.u32 %v1553, 7
          %v1555 = vsub.s32 %v1552, %v1554
          %v1556 = vrot.slane %v1163, %v1555
          %v1557 = vcombine.high %v1556, %v1556
          %v1559 = vunpack.c.l.s4 1966171168
          %v1560 = vunpack.c.0.s8 %v1559
          %v1561 = vlaneseq
          %v1562 = vshrl.u32 %v1561, 7
          %v1563 = vsub.s32 %v1560, %v1562
          %v1564 = vrot.slane %v1165, %v1563
          %v1565 = vcombine.high %v1564, %v1564
          %v1567 = vunpack.c.l.s4 1966171168
          %v1568 = vunpack.c.0.s8 %v1567
          %v1569 = vlaneseq
          %v1570 = vshrl.u32 %v1569, 7
          %v1571 = vsub.s32 %v1568, %v1570
          %v1572 = vrot.slane %v1174, %v1571
          %v1573 = vcombine.high %v1572, %v1572
          %v1575 = vunpack.c.l.s4 1966171168
          %v1576 = vunpack.c.0.s8 %v1575
          %v1577 = vlaneseq
          %v1578 = vshrl.u32 %v1577, 7
          %v1579 = vsub.s32 %v1576, %v1578
          %v1580 = vrot.slane %v1182, %v1579
          %v1581 = vcombine.high %v1580, %v1580
          %v1583 = vunpack.c.l.s4 1966171168
          %v1584 = vunpack.c.0.s8 %v1583
          %v1585 = vlaneseq
          %v1586 = vshrl.u32 %v1585, 7
          %v1587 = vsub.s32 %v1584, %v1586
          %v1588 = vrot.slane %v1181, %v1587
          %v1589 = vcombine.high %v1588, %v1588
          %v1591 = vunpack.c.l.s4 1966171168
          %v1592 = vunpack.c.0.s8 %v1591
          %v1593 = vlaneseq
          %v1594 = vshrl.u32 %v1593, 7
          %v1595 = vsub.s32 %v1592, %v1594
          %v1596 = vrot.slane %v1183, %v1595
          %v1597 = vcombine.high %v1596, %v1596
          %v1599 = vunpack.c.l.s4 1966171168
          %v1600 = vunpack.c.0.s8 %v1599
          %v1601 = vlaneseq
          %v1602 = vshrl.u32 %v1601, 7
          %v1603 = vsub.s32 %v1600, %v1602
          %v1604 = vrot.slane %v1192, %v1603
          %v1605 = vcombine.high %v1604, %v1604
          %v1607 = vunpack.c.l.s4 1966171168
          %v1608 = vunpack.c.0.s8 %v1607
          %v1609 = vlaneseq
          %v1610 = vshrl.u32 %v1609, 7
          %v1611 = vsub.s32 %v1608, %v1610
          %v1612 = vrot.slane %v1200, %v1611
          %v1613 = vcombine.high %v1612, %v1612
          %v1615 = vunpack.c.l.s4 1966171168
          %v1616 = vunpack.c.0.s8 %v1615
          %v1617 = vlaneseq
          %v1618 = vshrl.u32 %v1617, 7
          %v1619 = vsub.s32 %v1616, %v1618
          %v1620 = vrot.slane %v1199, %v1619
          %v1621 = vcombine.high %v1620, %v1620
          %v1623 = vunpack.c.l.s4 1966171168
          %v1624 = vunpack.c.0.s8 %v1623
          %v1625 = vlaneseq
          %v1626 = vshrl.u32 %v1625, 7
          %v1627 = vsub.s32 %v1624, %v1626
          %v1628 = vrot.slane %v1201, %v1627
          %v1629 = vcombine.high %v1628, %v1628
          %v1631 = vunpack.c.l.s4 1966171168
          %v1632 = vunpack.c.0.s8 %v1631
          %v1633 = vlaneseq
          %v1634 = vshrl.u32 %v1633, 7
          %v1635 = vsub.s32 %v1632, %v1634
          %v1636 = vrot.slane %v1210, %v1635
          %v1637 = vcombine.high %v1636, %v1636
          %v1639 = vunpack.c.l.s4 1966171168
          %v1640 = vunpack.c.0.s8 %v1639
          %v1641 = vlaneseq
          %v1642 = vshrl.u32 %v1641, 7
          %v1643 = vsub.s32 %v1640, %v1642
          %v1644 = vrot.slane %v1218, %v1643
          %v1645 = vcombine.high %v1644, %v1644
          %v1647 = vunpack.c.l.s4 1966171168
          %v1648 = vunpack.c.0.s8 %v1647
          %v1649 = vlaneseq
          %v1650 = vshrl.u32 %v1649, 7
          %v1651 = vsub.s32 %v1648, %v1650
          %v1652 = vrot.slane %v1217, %v1651
          %v1653 = vcombine.high %v1652, %v1652
          %v1655 = vunpack.c.l.s4 1966171168
          %v1656 = vunpack.c.0.s8 %v1655
          %v1657 = vlaneseq
          %v1658 = vshrl.u32 %v1657, 7
          %v1659 = vsub.s32 %v1656, %v1658
          %v1660 = vrot.slane %v1219, %v1659
          %v1661 = vcombine.high %v1660, %v1660
          %v1663 = vunpack.c.l.s4 1966171168
          %v1664 = vunpack.c.0.s8 %v1663
          %v1665 = vlaneseq
          %v1666 = vshrl.u32 %v1665, 7
          %v1667 = vsub.s32 %v1664, %v1666
          %v1668 = vrot.slane %v1228, %v1667
          %v1669 = vcombine.high %v1668, %v1668
          %v1671 = vunpack.c.l.s4 1966171168
          %v1672 = vunpack.c.0.s8 %v1671
          %v1673 = vlaneseq
          %v1674 = vshrl.u32 %v1673, 7
          %v1675 = vsub.s32 %v1672, %v1674
          %v1676 = vrot.slane %v1236, %v1675
          %v1677 = vcombine.high %v1676, %v1676
          %v1679 = vunpack.c.l.s4 1966171168
          %v1680 = vunpack.c.0.s8 %v1679
          %v1681 = vlaneseq
          %v1682 = vshrl.u32 %v1681, 7
          %v1683 = vsub.s32 %v1680, %v1682
          %v1684 = vrot.slane %v1235, %v1683
          %v1685 = vcombine.high %v1684, %v1684
          %v1687 = vunpack.c.l.s4 1966171168
          %v1688 = vunpack.c.0.s8 %v1687
          %v1689 = vlaneseq
          %v1690 = vshrl.u32 %v1689, 7
          %v1691 = vsub.s32 %v1688, %v1690
          %v1692 = vrot.slane %v1237, %v1691
          %v1693 = vcombine.high %v1692, %v1692
          %v1695 = vunpack.c.l.s4 1966171168
          %v1696 = vunpack.c.0.s8 %v1695
          %v1697 = vlaneseq
          %v1698 = vshrl.u32 %v1697, 7
          %v1699 = vsub.s32 %v1696, %v1698
          %v1700 = vrot.slane %v1245, %v1699
          %v1701 = vcombine.high %v1700, %v1700
          %v1703 = vunpack.c.l.s4 1966171168
          %v1704 = vunpack.c.0.s8 %v1703
          %v1705 = vlaneseq
          %v1706 = vshrl.u32 %v1705, 7
          %v1707 = vsub.s32 %v1704, %v1706
          %v1708 = vrot.slane %v1246, %v1707
          %v1709 = vcombine.low %v1253, %v1254
          %v1711 = vunpack.c.l.s4 1966171168
          %v1712 = vunpack.c.0.s8 %v1711
          %v1713 = vlaneseq
          %v1714 = vshrl.u32 %v1713, 7
          %v1715 = vsub.s32 %v1712, %v1714
          %v1716 = vrot.slane %v1709, %v1715
          %v1718 = vunpack.c.l.s4 1966171168
          %v1719 = vunpack.c.0.s8 %v1718
          %v1720 = vlaneseq
          %v1721 = vshrl.u32 %v1720, 7
          %v1722 = vsub.s32 %v1719, %v1721
          %v1723 = vrot.slane %v1261, %v1722
          %v1724 = vcombine.low %v1716, %v1723
          %v1725 = vcombine.high %v1716, %v1723
          %v1727 = vunpack.c.l.s4 1966171168
          %v1728 = vunpack.c.0.s8 %v1727
          %v1729 = vlaneseq
          %v1730 = vshrl.u32 %v1729, 7
          %v1731 = vsub.s32 %v1728, %v1730
          %v1732 = vrot.slane %v1724, %v1731
          %v1734 = vunpack.c.l.s4 1966171168
          %v1735 = vunpack.c.0.s8 %v1734
          %v1736 = vlaneseq
          %v1737 = vshrl.u32 %v1736, 7
          %v1738 = vsub.s32 %v1735, %v1737
          %v1739 = vrot.slane %v1725, %v1738
          %v1740 = vcombine.low %v1262, %v1269
          %v1742 = vunpack.c.l.s4 1966171168
          %v1743 = vunpack.c.0.s8 %v1742
          %v1744 = vlaneseq
          %v1745 = vshrl.u32 %v1744, 7
          %v1746 = vsub.s32 %v1743, %v1745
          %v1747 = vrot.slane %v1740, %v1746
          %v1749 = vunpack.c.l.s4 1966171168
          %v1750 = vunpack.c.0.s8 %v1749
          %v1751 = vlaneseq
          %v1752 = vshrl.u32 %v1751, 7
          %v1753 = vsub.s32 %v1750, %v1752
          %v1754 = vrot.slane %v1270, %v1753
          %v1755 = vcombine.low %v1747, %v1754
          %v1756 = vcombine.high %v1747, %v1754
          %v1758 = vunpack.c.l.s4 1966171168
          %v1759 = vunpack.c.0.s8 %v1758
          %v1760 = vlaneseq
          %v1761 = vshrl.u32 %v1760, 7
          %v1762 = vsub.s32 %v1759, %v1761
          %v1763 = vrot.slane %v1755, %v1762
          %v1765 = vunpack.c.l.s4 1966171168
          %v1766 = vunpack.c.0.s8 %v1765
          %v1767 = vlaneseq
          %v1768 = vshrl.u32 %v1767, 7
          %v1769 = vsub.s32 %v1766, %v1768
          %v1770 = vrot.slane %v1756, %v1769
          %v1771 = vcombine.low %v1277, %v1278
          %v1773 = vunpack.c.l.s4 1966171168
          %v1774 = vunpack.c.0.s8 %v1773
          %v1775 = vlaneseq
          %v1776 = vshrl.u32 %v1775, 7
          %v1777 = vsub.s32 %v1774, %v1776
          %v1778 = vrot.slane %v1771, %v1777
          %v1780 = vunpack.c.l.s4 1966171168
          %v1781 = vunpack.c.0.s8 %v1780
          %v1782 = vlaneseq
          %v1783 = vshrl.u32 %v1782, 7
          %v1784 = vsub.s32 %v1781, %v1783
          %v1785 = vrot.slane %v1285, %v1784
          %v1786 = vcombine.low %v1778, %v1785
          %v1787 = vcombine.high %v1778, %v1785
          %v1789 = vunpack.c.l.s4 1966171168
          %v1790 = vunpack.c.0.s8 %v1789
          %v1791 = vlaneseq
          %v1792 = vshrl.u32 %v1791, 7
          %v1793 = vsub.s32 %v1790, %v1792
          %v1794 = vrot.slane %v1786, %v1793
          %v1796 = vunpack.c.l.s4 1966171168
          %v1797 = vunpack.c.0.s8 %v1796
          %v1798 = vlaneseq
          %v1799 = vshrl.u32 %v1798, 7
          %v1800 = vsub.s32 %v1797, %v1799
          %v1801 = vrot.slane %v1787, %v1800
          %v1802 = vcombine.low %v1286, %v1293
          %v1804 = vunpack.c.l.s4 1966171168
          %v1805 = vunpack.c.0.s8 %v1804
          %v1806 = vlaneseq
          %v1807 = vshrl.u32 %v1806, 7
          %v1808 = vsub.s32 %v1805, %v1807
          %v1809 = vrot.slane %v1802, %v1808
          %v1811 = vunpack.c.l.s4 1966171168
          %v1812 = vunpack.c.0.s8 %v1811
          %v1813 = vlaneseq
          %v1814 = vshrl.u32 %v1813, 7
          %v1815 = vsub.s32 %v1812, %v1814
          %v1816 = vrot.slane %v1294, %v1815
          %v1817 = vcombine.low %v1809, %v1816
          %v1818 = vcombine.high %v1809, %v1816
          %v1820 = vunpack.c.l.s4 1966171168
          %v1821 = vunpack.c.0.s8 %v1820
          %v1822 = vlaneseq
          %v1823 = vshrl.u32 %v1822, 7
          %v1824 = vsub.s32 %v1821, %v1823
          %v1825 = vrot.slane %v1817, %v1824
          %v1827 = vunpack.c.l.s4 1966171168
          %v1828 = vunpack.c.0.s8 %v1827
          %v1829 = vlaneseq
          %v1830 = vshrl.u32 %v1829, 7
          %v1831 = vsub.s32 %v1828, %v1830
          %v1832 = vrot.slane %v1818, %v1831
          %v1833 = vcombine.low %v1301, %v1302
          %v1835 = vunpack.c.l.s4 1966171168
          %v1836 = vunpack.c.0.s8 %v1835
          %v1837 = vlaneseq
          %v1838 = vshrl.u32 %v1837, 7
          %v1839 = vsub.s32 %v1836, %v1838
          %v1840 = vrot.slane %v1833, %v1839
          %v1842 = vunpack.c.l.s4 1966171168
          %v1843 = vunpack.c.0.s8 %v1842
          %v1844 = vlaneseq
          %v1845 = vshrl.u32 %v1844, 7
          %v1846 = vsub.s32 %v1843, %v1845
          %v1847 = vrot.slane %v1309, %v1846
          %v1848 = vcombine.low %v1840, %v1847
          %v1849 = vcombine.high %v1840, %v1847
          %v1851 = vunpack.c.l.s4 1966171168
          %v1852 = vunpack.c.0.s8 %v1851
          %v1853 = vlaneseq
          %v1854 = vshrl.u32 %v1853, 7
          %v1855 = vsub.s32 %v1852, %v1854
          %v1856 = vrot.slane %v1848, %v1855
          %v1858 = vunpack.c.l.s4 1966171168
          %v1859 = vunpack.c.0.s8 %v1858
          %v1860 = vlaneseq
          %v1861 = vshrl.u32 %v1860, 7
          %v1862 = vsub.s32 %v1859, %v1861
          %v1863 = vrot.slane %v1849, %v1862
          %v1864 = vcombine.low %v1310, %v1317
          %v1866 = vunpack.c.l.s4 1966171168
          %v1867 = vunpack.c.0.s8 %v1866
          %v1868 = vlaneseq
          %v1869 = vshrl.u32 %v1868, 7
          %v1870 = vsub.s32 %v1867, %v1869
          %v1871 = vrot.slane %v1864, %v1870
          %v1873 = vunpack.c.l.s4 1966171168
          %v1874 = vunpack.c.0.s8 %v1873
          %v1875 = vlaneseq
          %v1876 = vshrl.u32 %v1875, 7
          %v1877 = vsub.s32 %v1874, %v1876
          %v1878 = vrot.slane %v1318, %v1877
          %v1879 = vcombine.low %v1871, %v1878
          %v1880 = vcombine.high %v1871, %v1878
          %v1882 = vunpack.c.l.s4 1966171168
          %v1883 = vunpack.c.0.s8 %v1882
          %v1884 = vlaneseq
          %v1885 = vshrl.u32 %v1884, 7
          %v1886 = vsub.s32 %v1883, %v1885
          %v1887 = vrot.slane %v1879, %v1886
          %v1889 = vunpack.c.l.s4 1966171168
          %v1890 = vunpack.c.0.s8 %v1889
          %v1891 = vlaneseq
          %v1892 = vshrl.u32 %v1891, 7
          %v1893 = vsub.s32 %v1890, %v1892
          %v1894 = vrot.slane %v1880, %v1893
          %v1895 = vcombine.low %v1325, %v1326
          %v1897 = vunpack.c.l.s4 1966171168
          %v1898 = vunpack.c.0.s8 %v1897
          %v1899 = vlaneseq
          %v1900 = vshrl.u32 %v1899, 7
          %v1901 = vsub.s32 %v1898, %v1900
          %v1902 = vrot.slane %v1895, %v1901
          %v1904 = vunpack.c.l.s4 1966171168
          %v1905 = vunpack.c.0.s8 %v1904
          %v1906 = vlaneseq
          %v1907 = vshrl.u32 %v1906, 7
          %v1908 = vsub.s32 %v1905, %v1907
          %v1909 = vrot.slane %v1333, %v1908
          %v1910 = vcombine.low %v1902, %v1909
          %v1911 = vcombine.high %v1902, %v1909
          %v1913 = vunpack.c.l.s4 1966171168
          %v1914 = vunpack.c.0.s8 %v1913
          %v1915 = vlaneseq
          %v1916 = vshrl.u32 %v1915, 7
          %v1917 = vsub.s32 %v1914, %v1916
          %v1918 = vrot.slane %v1910, %v1917
          %v1920 = vunpack.c.l.s4 1966171168
          %v1921 = vunpack.c.0.s8 %v1920
          %v1922 = vlaneseq
          %v1923 = vshrl.u32 %v1922, 7
          %v1924 = vsub.s32 %v1921, %v1923
          %v1925 = vrot.slane %v1911, %v1924
          %v1926 = vcombine.low %v1334, %v1341
          %v1928 = vunpack.c.l.s4 1966171168
          %v1929 = vunpack.c.0.s8 %v1928
          %v1930 = vlaneseq
          %v1931 = vshrl.u32 %v1930, 7
          %v1932 = vsub.s32 %v1929, %v1931
          %v1933 = vrot.slane %v1926, %v1932
          %v1935 = vunpack.c.l.s4 1966171168
          %v1936 = vunpack.c.0.s8 %v1935
          %v1937 = vlaneseq
          %v1938 = vshrl.u32 %v1937, 7
          %v1939 = vsub.s32 %v1936, %v1938
          %v1940 = vrot.slane %v1342, %v1939
          %v1941 = vcombine.low %v1933, %v1940
          %v1942 = vcombine.high %v1933, %v1940
          %v1944 = vunpack.c.l.s4 1966171168
          %v1945 = vunpack.c.0.s8 %v1944
          %v1946 = vlaneseq
          %v1947 = vshrl.u32 %v1946, 7
          %v1948 = vsub.s32 %v1945, %v1947
          %v1949 = vrot.slane %v1941, %v1948
          %v1951 = vunpack.c.l.s4 1966171168
          %v1952 = vunpack.c.0.s8 %v1951
          %v1953 = vlaneseq
          %v1954 = vshrl.u32 %v1953, 7
          %v1955 = vsub.s32 %v1952, %v1954
          %v1956 = vrot.slane %v1942, %v1955
          %v1957 = vcombine.low %v1349, %v1350
          %v1959 = vunpack.c.l.s4 1966171168
          %v1960 = vunpack.c.0.s8 %v1959
          %v1961 = vlaneseq
          %v1962 = vshrl.u32 %v1961, 7
          %v1963 = vsub.s32 %v1960, %v1962
          %v1964 = vrot.slane %v1957, %v1963
          %v1966 = vunpack.c.l.s4 1966171168
          %v1967 = vunpack.c.0.s8 %v1966
          %v1968 = vlaneseq
          %v1969 = vshrl.u32 %v1968, 7
          %v1970 = vsub.s32 %v1967, %v1969
          %v1971 = vrot.slane %v1357, %v1970
          %v1972 = vcombine.low %v1964, %v1971
          %v1973 = vcombine.high %v1964, %v1971
          %v1975 = vunpack.c.l.s4 1966171168
          %v1976 = vunpack.c.0.s8 %v1975
          %v1977 = vlaneseq
          %v1978 = vshrl.u32 %v1977, 7
          %v1979 = vsub.s32 %v1976, %v1978
          %v1980 = vrot.slane %v1972, %v1979
          %v1982 = vunpack.c.l.s4 1966171168
          %v1983 = vunpack.c.0.s8 %v1982
          %v1984 = vlaneseq
          %v1985 = vshrl.u32 %v1984, 7
          %v1986 = vsub.s32 %v1983, %v1985
          %v1987 = vrot.slane %v1973, %v1986
          %v1988 = vcombine.low %v1358, %v1365
          %v1990 = vunpack.c.l.s4 1966171168
          %v1991 = vunpack.c.0.s8 %v1990
          %v1992 = vlaneseq
          %v1993 = vshrl.u32 %v1992, 7
          %v1994 = vsub.s32 %v1991, %v1993
          %v1995 = vrot.slane %v1988, %v1994
          %v1997 = vunpack.c.l.s4 1966171168
          %v1998 = vunpack.c.0.s8 %v1997
          %v1999 = vlaneseq
          %v2000 = vshrl.u32 %v1999, 7
          %v2001 = vsub.s32 %v1998, %v2000
          %v2002 = vrot.slane %v1366, %v2001
          %v2003 = vcombine.low %v1995, %v2002
          %v2004 = vcombine.high %v1995, %v2002
          %v2006 = vunpack.c.l.s4 1966171168
          %v2007 = vunpack.c.0.s8 %v2006
          %v2008 = vlaneseq
          %v2009 = vshrl.u32 %v2008, 7
          %v2010 = vsub.s32 %v2007, %v2009
          %v2011 = vrot.slane %v2003, %v2010
          %v2013 = vunpack.c.l.s4 1966171168
          %v2014 = vunpack.c.0.s8 %v2013
          %v2015 = vlaneseq
          %v2016 = vshrl.u32 %v2015, 7
          %v2017 = vsub.s32 %v2014, %v2016
          %v2018 = vrot.slane %v2004, %v2017
          %v2019 = vcombine.low %v1373, %v1374
          %v2021 = vunpack.c.l.s4 1966171168
          %v2022 = vunpack.c.0.s8 %v2021
          %v2023 = vlaneseq
          %v2024 = vshrl.u32 %v2023, 7
          %v2025 = vsub.s32 %v2022, %v2024
          %v2026 = vrot.slane %v2019, %v2025
          %v2028 = vunpack.c.l.s4 1966171168
          %v2029 = vunpack.c.0.s8 %v2028
          %v2030 = vlaneseq
          %v2031 = vshrl.u32 %v2030, 7
          %v2032 = vsub.s32 %v2029, %v2031
          %v2033 = vrot.slane %v1381, %v2032
          %v2034 = vcombine.low %v2026, %v2033
          %v2035 = vcombine.high %v2026, %v2033
          %v2037 = vunpack.c.l.s4 1966171168
          %v2038 = vunpack.c.0.s8 %v2037
          %v2039 = vlaneseq
          %v2040 = vshrl.u32 %v2039, 7
          %v2041 = vsub.s32 %v2038, %v2040
          %v2042 = vrot.slane %v2034, %v2041
          %v2044 = vunpack.c.l.s4 1966171168
          %v2045 = vunpack.c.0.s8 %v2044
          %v2046 = vlaneseq
          %v2047 = vshrl.u32 %v2046, 7
          %v2048 = vsub.s32 %v2045, %v2047
          %v2049 = vrot.slane %v2035, %v2048
          %v2050 = vcombine.low %v1382, %v1389
          %v2052 = vunpack.c.l.s4 1966171168
          %v2053 = vunpack.c.0.s8 %v2052
          %v2054 = vlaneseq
          %v2055 = vshrl.u32 %v2054, 7
          %v2056 = vsub.s32 %v2053, %v2055
          %v2057 = vrot.slane %v2050, %v2056
          %v2059 = vunpack.c.l.s4 1966171168
          %v2060 = vunpack.c.0.s8 %v2059
          %v2061 = vlaneseq
          %v2062 = vshrl.u32 %v2061, 7
          %v2063 = vsub.s32 %v2060, %v2062
          %v2064 = vrot.slane %v1390, %v2063
          %v2065 = vcombine.low %v2057, %v2064
          %v2066 = vcombine.high %v2057, %v2064
          %v2068 = vunpack.c.l.s4 1966171168
          %v2069 = vunpack.c.0.s8 %v2068
          %v2070 = vlaneseq
          %v2071 = vshrl.u32 %v2070, 7
          %v2072 = vsub.s32 %v2069, %v2071
          %v2073 = vrot.slane %v2065, %v2072
          %v2075 = vunpack.c.l.s4 1966171168
          %v2076 = vunpack.c.0.s8 %v2075
          %v2077 = vlaneseq
          %v2078 = vshrl.u32 %v2077, 7
          %v2079 = vsub.s32 %v2076, %v2078
          %v2080 = vrot.slane %v2066, %v2079
          %v2081 = vcombine.low %v1397, %v1398
          %v2083 = vunpack.c.l.s4 1966171168
          %v2084 = vunpack.c.0.s8 %v2083
          %v2085 = vlaneseq
          %v2086 = vshrl.u32 %v2085, 7
          %v2087 = vsub.s32 %v2084, %v2086
          %v2088 = vrot.slane %v2081, %v2087
          %v2090 = vunpack.c.l.s4 1966171168
          %v2091 = vunpack.c.0.s8 %v2090
          %v2092 = vlaneseq
          %v2093 = vshrl.u32 %v2092, 7
          %v2094 = vsub.s32 %v2091, %v2093
          %v2095 = vrot.slane %v1405, %v2094
          %v2096 = vcombine.low %v2088, %v2095
          %v2097 = vcombine.high %v2088, %v2095
          %v2099 = vunpack.c.l.s4 1966171168
          %v2100 = vunpack.c.0.s8 %v2099
          %v2101 = vlaneseq
          %v2102 = vshrl.u32 %v2101, 7
          %v2103 = vsub.s32 %v2100, %v2102
          %v2104 = vrot.slane %v2096, %v2103
          %v2106 = vunpack.c.l.s4 1966171168
          %v2107 = vunpack.c.0.s8 %v2106
          %v2108 = vlaneseq
          %v2109 = vshrl.u32 %v2108, 7
          %v2110 = vsub.s32 %v2107, %v2109
          %v2111 = vrot.slane %v2097, %v2110
          %v2112 = vcombine.low %v1406, %v1413
          %v2114 = vunpack.c.l.s4 1966171168
          %v2115 = vunpack.c.0.s8 %v2114
          %v2116 = vlaneseq
          %v2117 = vshrl.u32 %v2116, 7
          %v2118 = vsub.s32 %v2115, %v2117
          %v2119 = vrot.slane %v2112, %v2118
          %v2121 = vunpack.c.l.s4 1966171168
          %v2122 = vunpack.c.0.s8 %v2121
          %v2123 = vlaneseq
          %v2124 = vshrl.u32 %v2123, 7
          %v2125 = vsub.s32 %v2122, %v2124
          %v2126 = vrot.slane %v1414, %v2125
          %v2127 = vcombine.low %v2119, %v2126
          %v2128 = vcombine.high %v2119, %v2126
          %v2130 = vunpack.c.l.s4 1966171168
          %v2131 = vunpack.c.0.s8 %v2130
          %v2132 = vlaneseq
          %v2133 = vshrl.u32 %v2132, 7
          %v2134 = vsub.s32 %v2131, %v2133
          %v2135 = vrot.slane %v2127, %v2134
          %v2137 = vunpack.c.l.s4 1966171168
          %v2138 = vunpack.c.0.s8 %v2137
          %v2139 = vlaneseq
          %v2140 = vshrl.u32 %v2139, 7
          %v2141 = vsub.s32 %v2138, %v2140
          %v2142 = vrot.slane %v2128, %v2141
          %v2143 = vcombine.low %v1421, %v1422
          %v2145 = vunpack.c.l.s4 1966171168
          %v2146 = vunpack.c.0.s8 %v2145
          %v2147 = vlaneseq
          %v2148 = vshrl.u32 %v2147, 7
          %v2149 = vsub.s32 %v2146, %v2148
          %v2150 = vrot.slane %v2143, %v2149
          %v2152 = vunpack.c.l.s4 1966171168
          %v2153 = vunpack.c.0.s8 %v2152
          %v2154 = vlaneseq
          %v2155 = vshrl.u32 %v2154, 7
          %v2156 = vsub.s32 %v2153, %v2155
          %v2157 = vrot.slane %v1429, %v2156
          %v2158 = vcombine.low %v2150, %v2157
          %v2159 = vcombine.high %v2150, %v2157
          %v2161 = vunpack.c.l.s4 1966171168
          %v2162 = vunpack.c.0.s8 %v2161
          %v2163 = vlaneseq
          %v2164 = vshrl.u32 %v2163, 7
          %v2165 = vsub.s32 %v2162, %v2164
          %v2166 = vrot.slane %v2158, %v2165
          %v2168 = vunpack.c.l.s4 1966171168
          %v2169 = vunpack.c.0.s8 %v2168
          %v2170 = vlaneseq
          %v2171 = vshrl.u32 %v2170, 7
          %v2172 = vsub.s32 %v2169, %v2171
          %v2173 = vrot.slane %v2159, %v2172
          %v2174 = vcombine.low %v1430, %v1437
          %v2176 = vunpack.c.l.s4 1966171168
          %v2177 = vunpack.c.0.s8 %v2176
          %v2178 = vlaneseq
          %v2179 = vshrl.u32 %v2178, 7
          %v2180 = vsub.s32 %v2177, %v2179
          %v2181 = vrot.slane %v2174, %v2180
          %v2183 = vunpack.c.l.s4 1966171168
          %v2184 = vunpack.c.0.s8 %v2183
          %v2185 = vlaneseq
          %v2186 = vshrl.u32 %v2185, 7
          %v2187 = vsub.s32 %v2184, %v2186
          %v2188 = vrot.slane %v1438, %v2187
          %v2189 = vcombine.low %v2181, %v2188
          %v2190 = vcombine.high %v2181, %v2188
          %v2192 = vunpack.c.l.s4 1966171168
          %v2193 = vunpack.c.0.s8 %v2192
          %v2194 = vlaneseq
          %v2195 = vshrl.u32 %v2194, 7
          %v2196 = vsub.s32 %v2193, %v2195
          %v2197 = vrot.slane %v2189, %v2196
          %v2199 = vunpack.c.l.s4 1966171168
          %v2200 = vunpack.c.0.s8 %v2199
          %v2201 = vlaneseq
          %v2202 = vshrl.u32 %v2201, 7
          %v2203 = vsub.s32 %v2200, %v2202
          %v2204 = vrot.slane %v2190, %v2203
          %v2205 = vcombine.low %v1445, %v1446
          %v2207 = vunpack.c.l.s4 1966171168
          %v2208 = vunpack.c.0.s8 %v2207
          %v2209 = vlaneseq
          %v2210 = vshrl.u32 %v2209, 7
          %v2211 = vsub.s32 %v2208, %v2210
          %v2212 = vrot.slane %v2205, %v2211
          %v2214 = vunpack.c.l.s4 1966171168
          %v2215 = vunpack.c.0.s8 %v2214
          %v2216 = vlaneseq
          %v2217 = vshrl.u32 %v2216, 7
          %v2218 = vsub.s32 %v2215, %v2217
          %v2219 = vrot.slane %v1453, %v2218
          %v2220 = vcombine.low %v2212, %v2219
          %v2221 = vcombine.high %v2212, %v2219
          %v2223 = vunpack.c.l.s4 1966171168
          %v2224 = vunpack.c.0.s8 %v2223
          %v2225 = vlaneseq
          %v2226 = vshrl.u32 %v2225, 7
          %v2227 = vsub.s32 %v2224, %v2226
          %v2228 = vrot.slane %v2220, %v2227
          %v2230 = vunpack.c.l.s4 1966171168
          %v2231 = vunpack.c.0.s8 %v2230
          %v2232 = vlaneseq
          %v2233 = vshrl.u32 %v2232, 7
          %v2234 = vsub.s32 %v2231, %v2233
          %v2235 = vrot.slane %v2221, %v2234
          %v2236 = vcombine.low %v1454, %v1461
          %v2238 = vunpack.c.l.s4 1966171168
          %v2239 = vunpack.c.0.s8 %v2238
          %v2240 = vlaneseq
          %v2241 = vshrl.u32 %v2240, 7
          %v2242 = vsub.s32 %v2239, %v2241
          %v2243 = vrot.slane %v2236, %v2242
          %v2245 = vunpack.c.l.s4 1966171168
          %v2246 = vunpack.c.0.s8 %v2245
          %v2247 = vlaneseq
          %v2248 = vshrl.u32 %v2247, 7
          %v2249 = vsub.s32 %v2246, %v2248
          %v2250 = vrot.slane %v1462, %v2249
          %v2251 = vcombine.low %v2243, %v2250
          %v2252 = vcombine.high %v2243, %v2250
          %v2254 = vunpack.c.l.s4 1966171168
          %v2255 = vunpack.c.0.s8 %v2254
          %v2256 = vlaneseq
          %v2257 = vshrl.u32 %v2256, 7
          %v2258 = vsub.s32 %v2255, %v2257
          %v2259 = vrot.slane %v2251, %v2258
          %v2261 = vunpack.c.l.s4 1966171168
          %v2262 = vunpack.c.0.s8 %v2261
          %v2263 = vlaneseq
          %v2264 = vshrl.u32 %v2263, 7
          %v2265 = vsub.s32 %v2262, %v2264
          %v2266 = vrot.slane %v2252, %v2265
          %v2267 = vcombine.low %v1469, %v1470
          %v2269 = vunpack.c.l.s4 1966171168
          %v2270 = vunpack.c.0.s8 %v2269
          %v2271 = vlaneseq
          %v2272 = vshrl.u32 %v2271, 7
          %v2273 = vsub.s32 %v2270, %v2272
          %v2274 = vrot.slane %v2267, %v2273
          %v2276 = vunpack.c.l.s4 1966171168
          %v2277 = vunpack.c.0.s8 %v2276
          %v2278 = vlaneseq
          %v2279 = vshrl.u32 %v2278, 7
          %v2280 = vsub.s32 %v2277, %v2279
          %v2281 = vrot.slane %v1477, %v2280
          %v2282 = vcombine.low %v2274, %v2281
          %v2283 = vcombine.high %v2274, %v2281
          %v2285 = vunpack.c.l.s4 1966171168
          %v2286 = vunpack.c.0.s8 %v2285
          %v2287 = vlaneseq
          %v2288 = vshrl.u32 %v2287, 7
          %v2289 = vsub.s32 %v2286, %v2288
          %v2290 = vrot.slane %v2282, %v2289
          %v2292 = vunpack.c.l.s4 1966171168
          %v2293 = vunpack.c.0.s8 %v2292
          %v2294 = vlaneseq
          %v2295 = vshrl.u32 %v2294, 7
          %v2296 = vsub.s32 %v2293, %v2295
          %v2297 = vrot.slane %v2283, %v2296
          %v2298 = vcombine.low %v1484, %v1485
          %v2300 = vunpack.c.l.s4 1966171168
          %v2301 = vunpack.c.0.s8 %v2300
          %v2302 = vlaneseq
          %v2303 = vshrl.u32 %v2302, 7
          %v2304 = vsub.s32 %v2301, %v2303
          %v2305 = vrot.slane %v2298, %v2304
          %v2307 = vunpack.c.l.s4 1966171168
          %v2308 = vunpack.c.0.s8 %v2307
          %v2309 = vlaneseq
          %v2310 = vshrl.u32 %v2309, 7
          %v2311 = vsub.s32 %v2308, %v2310
          %v2312 = vrot.slane %v1492, %v2311
          %v2313 = vcombine.low %v2305, %v2312
          %v2314 = vcombine.high %v2305, %v2312
          %v2316 = vunpack.c.l.s4 1966171168
          %v2317 = vunpack.c.0.s8 %v2316
          %v2318 = vlaneseq
          %v2319 = vshrl.u32 %v2318, 7
          %v2320 = vsub.s32 %v2317, %v2319
          %v2321 = vrot.slane %v2313, %v2320
          %v2323 = vunpack.c.l.s4 1966171168
          %v2324 = vunpack.c.0.s8 %v2323
          %v2325 = vlaneseq
          %v2326 = vshrl.u32 %v2325, 7
          %v2327 = vsub.s32 %v2324, %v2326
          %v2328 = vrot.slane %v2314, %v2327
          %v2329 = vcombine.low %v1493, %v1500
          %v2331 = vunpack.c.l.s4 1966171168
          %v2332 = vunpack.c.0.s8 %v2331
          %v2333 = vlaneseq
          %v2334 = vshrl.u32 %v2333, 7
          %v2335 = vsub.s32 %v2332, %v2334
          %v2336 = vrot.slane %v2329, %v2335
          %v2338 = vunpack.c.l.s4 1966171168
          %v2339 = vunpack.c.0.s8 %v2338
          %v2340 = vlaneseq
          %v2341 = vshrl.u32 %v2340, 7
          %v2342 = vsub.s32 %v2339, %v2341
          %v2343 = vrot.slane %v1501, %v2342
          %v2344 = vcombine.low %v2336, %v2343
          %v2345 = vcombine.high %v2336, %v2343
          %v2347 = vunpack.c.l.s4 1966171168
          %v2348 = vunpack.c.0.s8 %v2347
          %v2349 = vlaneseq
          %v2350 = vshrl.u32 %v2349, 7
          %v2351 = vsub.s32 %v2348, %v2350
          %v2352 = vrot.slane %v2344, %v2351
          %v2354 = vunpack.c.l.s4 1966171168
          %v2355 = vunpack.c.0.s8 %v2354
          %v2356 = vlaneseq
          %v2357 = vshrl.u32 %v2356, 7
          %v2358 = vsub.s32 %v2355, %v2357
          %v2359 = vrot.slane %v2345, %v2358
          %v2360 = vcombine.low %v1508, %v1509
          %v2362 = vunpack.c.l.s4 1966171168
          %v2363 = vunpack.c.0.s8 %v2362
          %v2364 = vlaneseq
          %v2365 = vshrl.u32 %v2364, 7
          %v2366 = vsub.s32 %v2363, %v2365
          %v2367 = vrot.slane %v2360, %v2366
          %v2369 = vunpack.c.l.s4 1966171168
          %v2370 = vunpack.c.0.s8 %v2369
          %v2371 = vlaneseq
          %v2372 = vshrl.u32 %v2371, 7
          %v2373 = vsub.s32 %v2370, %v2372
          %v2374 = vrot.slane %v1516, %v2373
          %v2375 = vcombine.low %v2367, %v2374
          %v2376 = vcombine.high %v2367, %v2374
          %v2378 = vunpack.c.l.s4 1966171168
          %v2379 = vunpack.c.0.s8 %v2378
          %v2380 = vlaneseq
          %v2381 = vshrl.u32 %v2380, 7
          %v2382 = vsub.s32 %v2379, %v2381
          %v2383 = vrot.slane %v2375, %v2382
          %v2385 = vunpack.c.l.s4 1966171168
          %v2386 = vunpack.c.0.s8 %v2385
          %v2387 = vlaneseq
          %v2388 = vshrl.u32 %v2387, 7
          %v2389 = vsub.s32 %v2386, %v2388
          %v2390 = vrot.slane %v2376, %v2389
          %v2391 = vcombine.low %v1517, %v1524
          %v2393 = vunpack.c.l.s4 1966171168
          %v2394 = vunpack.c.0.s8 %v2393
          %v2395 = vlaneseq
          %v2396 = vshrl.u32 %v2395, 7
          %v2397 = vsub.s32 %v2394, %v2396
          %v2398 = vrot.slane %v2391, %v2397
          %v2400 = vunpack.c.l.s4 1966171168
          %v2401 = vunpack.c.0.s8 %v2400
          %v2402 = vlaneseq
          %v2403 = vshrl.u32 %v2402, 7
          %v2404 = vsub.s32 %v2401, %v2403
          %v2405 = vrot.slane %v1525, %v2404
          %v2406 = vcombine.low %v2398, %v2405
          %v2407 = vcombine.high %v2398, %v2405
          %v2409 = vunpack.c.l.s4 1966171168
          %v2410 = vunpack.c.0.s8 %v2409
          %v2411 = vlaneseq
          %v2412 = vshrl.u32 %v2411, 7
          %v2413 = vsub.s32 %v2410, %v2412
          %v2414 = vrot.slane %v2406, %v2413
          %v2416 = vunpack.c.l.s4 1966171168
          %v2417 = vunpack.c.0.s8 %v2416
          %v2418 = vlaneseq
          %v2419 = vshrl.u32 %v2418, 7
          %v2420 = vsub.s32 %v2417, %v2419
          %v2421 = vrot.slane %v2407, %v2420
          %v2422 = vcombine.low %v1532, %v1533
          %v2424 = vunpack.c.l.s4 1966171168
          %v2425 = vunpack.c.0.s8 %v2424
          %v2426 = vlaneseq
          %v2427 = vshrl.u32 %v2426, 7
          %v2428 = vsub.s32 %v2425, %v2427
          %v2429 = vrot.slane %v2422, %v2428
          %v2431 = vunpack.c.l.s4 1966171168
          %v2432 = vunpack.c.0.s8 %v2431
          %v2433 = vlaneseq
          %v2434 = vshrl.u32 %v2433, 7
          %v2435 = vsub.s32 %v2432, %v2434
          %v2436 = vrot.slane %v1540, %v2435
          %v2437 = vcombine.low %v2429, %v2436
          %v2438 = vcombine.high %v2429, %v2436
          %v2440 = vunpack.c.l.s4 1966171168
          %v2441 = vunpack.c.0.s8 %v2440
          %v2442 = vlaneseq
          %v2443 = vshrl.u32 %v2442, 7
          %v2444 = vsub.s32 %v2441, %v2443
          %v2445 = vrot.slane %v2437, %v2444
          %v2447 = vunpack.c.l.s4 1966171168
          %v2448 = vunpack.c.0.s8 %v2447
          %v2449 = vlaneseq
          %v2450 = vshrl.u32 %v2449, 7
          %v2451 = vsub.s32 %v2448, %v2450
          %v2452 = vrot.slane %v2438, %v2451
          %v2453 = vcombine.low %v1541, %v1548
          %v2455 = vunpack.c.l.s4 1966171168
          %v2456 = vunpack.c.0.s8 %v2455
          %v2457 = vlaneseq
          %v2458 = vshrl.u32 %v2457, 7
          %v2459 = vsub.s32 %v2456, %v2458
          %v2460 = vrot.slane %v2453, %v2459
          %v2462 = vunpack.c.l.s4 1966171168
          %v2463 = vunpack.c.0.s8 %v2462
          %v2464 = vlaneseq
          %v2465 = vshrl.u32 %v2464, 7
          %v2466 = vsub.s32 %v2463, %v2465
          %v2467 = vrot.slane %v1549, %v2466
          %v2468 = vcombine.low %v2460, %v2467
          %v2469 = vcombine.high %v2460, %v2467
          %v2471 = vunpack.c.l.s4 1966171168
          %v2472 = vunpack.c.0.s8 %v2471
          %v2473 = vlaneseq
          %v2474 = vshrl.u32 %v2473, 7
          %v2475 = vsub.s32 %v2472, %v2474
          %v2476 = vrot.slane %v2468, %v2475
          %v2478 = vunpack.c.l.s4 1966171168
          %v2479 = vunpack.c.0.s8 %v2478
          %v2480 = vlaneseq
          %v2481 = vshrl.u32 %v2480, 7
          %v2482 = vsub.s32 %v2479, %v2481
          %v2483 = vrot.slane %v2469, %v2482
          %v2484 = vcombine.low %v1556, %v1557
          %v2486 = vunpack.c.l.s4 1966171168
          %v2487 = vunpack.c.0.s8 %v2486
          %v2488 = vlaneseq
          %v2489 = vshrl.u32 %v2488, 7
          %v2490 = vsub.s32 %v2487, %v2489
          %v2491 = vrot.slane %v2484, %v2490
          %v2493 = vunpack.c.l.s4 1966171168
          %v2494 = vunpack.c.0.s8 %v2493
          %v2495 = vlaneseq
          %v2496 = vshrl.u32 %v2495, 7
          %v2497 = vsub.s32 %v2494, %v2496
          %v2498 = vrot.slane %v1564, %v2497
          %v2499 = vcombine.low %v2491, %v2498
          %v2500 = vcombine.high %v2491, %v2498
          %v2502 = vunpack.c.l.s4 1966171168
          %v2503 = vunpack.c.0.s8 %v2502
          %v2504 = vlaneseq
          %v2505 = vshrl.u32 %v2504, 7
          %v2506 = vsub.s32 %v2503, %v2505
          %v2507 = vrot.slane %v2499, %v2506
          %v2509 = vunpack.c.l.s4 1966171168
          %v2510 = vunpack.c.0.s8 %v2509
          %v2511 = vlaneseq
          %v2512 = vshrl.u32 %v2511, 7
          %v2513 = vsub.s32 %v2510, %v2512
          %v2514 = vrot.slane %v2500, %v2513
          %v2515 = vcombine.low %v1565, %v1572
          %v2517 = vunpack.c.l.s4 1966171168
          %v2518 = vunpack.c.0.s8 %v2517
          %v2519 = vlaneseq
          %v2520 = vshrl.u32 %v2519, 7
          %v2521 = vsub.s32 %v2518, %v2520
          %v2522 = vrot.slane %v2515, %v2521
          %v2524 = vunpack.c.l.s4 1966171168
          %v2525 = vunpack.c.0.s8 %v2524
          %v2526 = vlaneseq
          %v2527 = vshrl.u32 %v2526, 7
          %v2528 = vsub.s32 %v2525, %v2527
          %v2529 = vrot.slane %v1573, %v2528
          %v2530 = vcombine.low %v2522, %v2529
          %v2531 = vcombine.high %v2522, %v2529
          %v2533 = vunpack.c.l.s4 1966171168
          %v2534 = vunpack.c.0.s8 %v2533
          %v2535 = vlaneseq
          %v2536 = vshrl.u32 %v2535, 7
          %v2537 = vsub.s32 %v2534, %v2536
          %v2538 = vrot.slane %v2530, %v2537
          %v2540 = vunpack.c.l.s4 1966171168
          %v2541 = vunpack.c.0.s8 %v2540
          %v2542 = vlaneseq
          %v2543 = vshrl.u32 %v2542, 7
          %v2544 = vsub.s32 %v2541, %v2543
          %v2545 = vrot.slane %v2531, %v2544
          %v2546 = vcombine.low %v1580, %v1581
          %v2548 = vunpack.c.l.s4 1966171168
          %v2549 = vunpack.c.0.s8 %v2548
          %v2550 = vlaneseq
          %v2551 = vshrl.u32 %v2550, 7
          %v2552 = vsub.s32 %v2549, %v2551
          %v2553 = vrot.slane %v2546, %v2552
          %v2555 = vunpack.c.l.s4 1966171168
          %v2556 = vunpack.c.0.s8 %v2555
          %v2557 = vlaneseq
          %v2558 = vshrl.u32 %v2557, 7
          %v2559 = vsub.s32 %v2556, %v2558
          %v2560 = vrot.slane %v1588, %v2559
          %v2561 = vcombine.low %v2553, %v2560
          %v2562 = vcombine.high %v2553, %v2560
          %v2564 = vunpack.c.l.s4 1966171168
          %v2565 = vunpack.c.0.s8 %v2564
          %v2566 = vlaneseq
          %v2567 = vshrl.u32 %v2566, 7
          %v2568 = vsub.s32 %v2565, %v2567
          %v2569 = vrot.slane %v2561, %v2568
          %v2571 = vunpack.c.l.s4 1966171168
          %v2572 = vunpack.c.0.s8 %v2571
          %v2573 = vlaneseq
          %v2574 = vshrl.u32 %v2573, 7
          %v2575 = vsub.s32 %v2572, %v2574
          %v2576 = vrot.slane %v2562, %v2575
          %v2577 = vcombine.low %v1589, %v1596
          %v2579 = vunpack.c.l.s4 1966171168
          %v2580 = vunpack.c.0.s8 %v2579
          %v2581 = vlaneseq
          %v2582 = vshrl.u32 %v2581, 7
          %v2583 = vsub.s32 %v2580, %v2582
          %v2584 = vrot.slane %v2577, %v2583
          %v2586 = vunpack.c.l.s4 1966171168
          %v2587 = vunpack.c.0.s8 %v2586
          %v2588 = vlaneseq
          %v2589 = vshrl.u32 %v2588, 7
          %v2590 = vsub.s32 %v2587, %v2589
          %v2591 = vrot.slane %v1597, %v2590
          %v2592 = vcombine.low %v2584, %v2591
          %v2593 = vcombine.high %v2584, %v2591
          %v2595 = vunpack.c.l.s4 1966171168
          %v2596 = vunpack.c.0.s8 %v2595
          %v2597 = vlaneseq
          %v2598 = vshrl.u32 %v2597, 7
          %v2599 = vsub.s32 %v2596, %v2598
          %v2600 = vrot.slane %v2592, %v2599
          %v2602 = vunpack.c.l.s4 1966171168
          %v2603 = vunpack.c.0.s8 %v2602
          %v2604 = vlaneseq
          %v2605 = vshrl.u32 %v2604, 7
          %v2606 = vsub.s32 %v2603, %v2605
          %v2607 = vrot.slane %v2593, %v2606
          %v2608 = vcombine.low %v1604, %v1605
          %v2610 = vunpack.c.l.s4 1966171168
          %v2611 = vunpack.c.0.s8 %v2610
          %v2612 = vlaneseq
          %v2613 = vshrl.u32 %v2612, 7
          %v2614 = vsub.s32 %v2611, %v2613
          %v2615 = vrot.slane %v2608, %v2614
          %v2617 = vunpack.c.l.s4 1966171168
          %v2618 = vunpack.c.0.s8 %v2617
          %v2619 = vlaneseq
          %v2620 = vshrl.u32 %v2619, 7
          %v2621 = vsub.s32 %v2618, %v2620
          %v2622 = vrot.slane %v1612, %v2621
          %v2623 = vcombine.low %v2615, %v2622
          %v2624 = vcombine.high %v2615, %v2622
          %v2626 = vunpack.c.l.s4 1966171168
          %v2627 = vunpack.c.0.s8 %v2626
          %v2628 = vlaneseq
          %v2629 = vshrl.u32 %v2628, 7
          %v2630 = vsub.s32 %v2627, %v2629
          %v2631 = vrot.slane %v2623, %v2630
          %v2633 = vunpack.c.l.s4 1966171168
          %v2634 = vunpack.c.0.s8 %v2633
          %v2635 = vlaneseq
          %v2636 = vshrl.u32 %v2635, 7
          %v2637 = vsub.s32 %v2634, %v2636
          %v2638 = vrot.slane %v2624, %v2637
          %v2639 = vcombine.low %v1613, %v1620
          %v2641 = vunpack.c.l.s4 1966171168
          %v2642 = vunpack.c.0.s8 %v2641
          %v2643 = vlaneseq
          %v2644 = vshrl.u32 %v2643, 7
          %v2645 = vsub.s32 %v2642, %v2644
          %v2646 = vrot.slane %v2639, %v2645
          %v2648 = vunpack.c.l.s4 1966171168
          %v2649 = vunpack.c.0.s8 %v2648
          %v2650 = vlaneseq
          %v2651 = vshrl.u32 %v2650, 7
          %v2652 = vsub.s32 %v2649, %v2651
          %v2653 = vrot.slane %v1621, %v2652
          %v2654 = vcombine.low %v2646, %v2653
          %v2655 = vcombine.high %v2646, %v2653
          %v2657 = vunpack.c.l.s4 1966171168
          %v2658 = vunpack.c.0.s8 %v2657
          %v2659 = vlaneseq
          %v2660 = vshrl.u32 %v2659, 7
          %v2661 = vsub.s32 %v2658, %v2660
          %v2662 = vrot.slane %v2654, %v2661
          %v2664 = vunpack.c.l.s4 1966171168
          %v2665 = vunpack.c.0.s8 %v2664
          %v2666 = vlaneseq
          %v2667 = vshrl.u32 %v2666, 7
          %v2668 = vsub.s32 %v2665, %v2667
          %v2669 = vrot.slane %v2655, %v2668
          %v2670 = vcombine.low %v1628, %v1629
          %v2672 = vunpack.c.l.s4 1966171168
          %v2673 = vunpack.c.0.s8 %v2672
          %v2674 = vlaneseq
          %v2675 = vshrl.u32 %v2674, 7
          %v2676 = vsub.s32 %v2673, %v2675
          %v2677 = vrot.slane %v2670, %v2676
          %v2679 = vunpack.c.l.s4 1966171168
          %v2680 = vunpack.c.0.s8 %v2679
          %v2681 = vlaneseq
          %v2682 = vshrl.u32 %v2681, 7
          %v2683 = vsub.s32 %v2680, %v2682
          %v2684 = vrot.slane %v1636, %v2683
          %v2685 = vcombine.low %v2677, %v2684
          %v2686 = vcombine.high %v2677, %v2684
          %v2688 = vunpack.c.l.s4 1966171168
          %v2689 = vunpack.c.0.s8 %v2688
          %v2690 = vlaneseq
          %v2691 = vshrl.u32 %v2690, 7
          %v2692 = vsub.s32 %v2689, %v2691
          %v2693 = vrot.slane %v2685, %v2692
          %v2695 = vunpack.c.l.s4 1966171168
          %v2696 = vunpack.c.0.s8 %v2695
          %v2697 = vlaneseq
          %v2698 = vshrl.u32 %v2697, 7
          %v2699 = vsub.s32 %v2696, %v2698
          %v2700 = vrot.slane %v2686, %v2699
          %v2701 = vcombine.low %v1637, %v1644
          %v2703 = vunpack.c.l.s4 1966171168
          %v2704 = vunpack.c.0.s8 %v2703
          %v2705 = vlaneseq
          %v2706 = vshrl.u32 %v2705, 7
          %v2707 = vsub.s32 %v2704, %v2706
          %v2708 = vrot.slane %v2701, %v2707
          %v2710 = vunpack.c.l.s4 1966171168
          %v2711 = vunpack.c.0.s8 %v2710
          %v2712 = vlaneseq
          %v2713 = vshrl.u32 %v2712, 7
          %v2714 = vsub.s32 %v2711, %v2713
          %v2715 = vrot.slane %v1645, %v2714
          %v2716 = vcombine.low %v2708, %v2715
          %v2717 = vcombine.high %v2708, %v2715
          %v2719 = vunpack.c.l.s4 1966171168
          %v2720 = vunpack.c.0.s8 %v2719
          %v2721 = vlaneseq
          %v2722 = vshrl.u32 %v2721, 7
          %v2723 = vsub.s32 %v2720, %v2722
          %v2724 = vrot.slane %v2716, %v2723
          %v2726 = vunpack.c.l.s4 1966171168
          %v2727 = vunpack.c.0.s8 %v2726
          %v2728 = vlaneseq
          %v2729 = vshrl.u32 %v2728, 7
          %v2730 = vsub.s32 %v2727, %v2729
          %v2731 = vrot.slane %v2717, %v2730
          %v2732 = vcombine.low %v1652, %v1653
          %v2734 = vunpack.c.l.s4 1966171168
          %v2735 = vunpack.c.0.s8 %v2734
          %v2736 = vlaneseq
          %v2737 = vshrl.u32 %v2736, 7
          %v2738 = vsub.s32 %v2735, %v2737
          %v2739 = vrot.slane %v2732, %v2738
          %v2741 = vunpack.c.l.s4 1966171168
          %v2742 = vunpack.c.0.s8 %v2741
          %v2743 = vlaneseq
          %v2744 = vshrl.u32 %v2743, 7
          %v2745 = vsub.s32 %v2742, %v2744
          %v2746 = vrot.slane %v1660, %v2745
          %v2747 = vcombine.low %v2739, %v2746
          %v2748 = vcombine.high %v2739, %v2746
          %v2750 = vunpack.c.l.s4 1966171168
          %v2751 = vunpack.c.0.s8 %v2750
          %v2752 = vlaneseq
          %v2753 = vshrl.u32 %v2752, 7
          %v2754 = vsub.s32 %v2751, %v2753
          %v2755 = vrot.slane %v2747, %v2754
          %v2757 = vunpack.c.l.s4 1966171168
          %v2758 = vunpack.c.0.s8 %v2757
          %v2759 = vlaneseq
          %v2760 = vshrl.u32 %v2759, 7
          %v2761 = vsub.s32 %v2758, %v2760
          %v2762 = vrot.slane %v2748, %v2761
          %v2763 = vcombine.low %v1661, %v1668
          %v2765 = vunpack.c.l.s4 1966171168
          %v2766 = vunpack.c.0.s8 %v2765
          %v2767 = vlaneseq
          %v2768 = vshrl.u32 %v2767, 7
          %v2769 = vsub.s32 %v2766, %v2768
          %v2770 = vrot.slane %v2763, %v2769
          %v2772 = vunpack.c.l.s4 1966171168
          %v2773 = vunpack.c.0.s8 %v2772
          %v2774 = vlaneseq
          %v2775 = vshrl.u32 %v2774, 7
          %v2776 = vsub.s32 %v2773, %v2775
          %v2777 = vrot.slane %v1669, %v2776
          %v2778 = vcombine.low %v2770, %v2777
          %v2779 = vcombine.high %v2770, %v2777
          %v2781 = vunpack.c.l.s4 1966171168
          %v2782 = vunpack.c.0.s8 %v2781
          %v2783 = vlaneseq
          %v2784 = vshrl.u32 %v2783, 7
          %v2785 = vsub.s32 %v2782, %v2784
          %v2786 = vrot.slane %v2778, %v2785
          %v2788 = vunpack.c.l.s4 1966171168
          %v2789 = vunpack.c.0.s8 %v2788
          %v2790 = vlaneseq
          %v2791 = vshrl.u32 %v2790, 7
          %v2792 = vsub.s32 %v2789, %v2791
          %v2793 = vrot.slane %v2779, %v2792
          %v2794 = vcombine.low %v1676, %v1677
          %v2796 = vunpack.c.l.s4 1966171168
          %v2797 = vunpack.c.0.s8 %v2796
          %v2798 = vlaneseq
          %v2799 = vshrl.u32 %v2798, 7
          %v2800 = vsub.s32 %v2797, %v2799
          %v2801 = vrot.slane %v2794, %v2800
          %v2803 = vunpack.c.l.s4 1966171168
          %v2804 = vunpack.c.0.s8 %v2803
          %v2805 = vlaneseq
          %v2806 = vshrl.u32 %v2805, 7
          %v2807 = vsub.s32 %v2804, %v2806
          %v2808 = vrot.slane %v1684, %v2807
          %v2809 = vcombine.low %v2801, %v2808
          %v2810 = vcombine.high %v2801, %v2808
          %v2812 = vunpack.c.l.s4 1966171168
          %v2813 = vunpack.c.0.s8 %v2812
          %v2814 = vlaneseq
          %v2815 = vshrl.u32 %v2814, 7
          %v2816 = vsub.s32 %v2813, %v2815
          %v2817 = vrot.slane %v2809, %v2816
          %v2819 = vunpack.c.l.s4 1966171168
          %v2820 = vunpack.c.0.s8 %v2819
          %v2821 = vlaneseq
          %v2822 = vshrl.u32 %v2821, 7
          %v2823 = vsub.s32 %v2820, %v2822
          %v2824 = vrot.slane %v2810, %v2823
          %v2825 = vcombine.low %v1685, %v1692
          %v2827 = vunpack.c.l.s4 1966171168
          %v2828 = vunpack.c.0.s8 %v2827
          %v2829 = vlaneseq
          %v2830 = vshrl.u32 %v2829, 7
          %v2831 = vsub.s32 %v2828, %v2830
          %v2832 = vrot.slane %v2825, %v2831
          %v2834 = vunpack.c.l.s4 1966171168
          %v2835 = vunpack.c.0.s8 %v2834
          %v2836 = vlaneseq
          %v2837 = vshrl.u32 %v2836, 7
          %v2838 = vsub.s32 %v2835, %v2837
          %v2839 = vrot.slane %v1693, %v2838
          %v2840 = vcombine.low %v2832, %v2839
          %v2841 = vcombine.high %v2832, %v2839
          %v2843 = vunpack.c.l.s4 1966171168
          %v2844 = vunpack.c.0.s8 %v2843
          %v2845 = vlaneseq
          %v2846 = vshrl.u32 %v2845, 7
          %v2847 = vsub.s32 %v2844, %v2846
          %v2848 = vrot.slane %v2840, %v2847
          %v2850 = vunpack.c.l.s4 1966171168
          %v2851 = vunpack.c.0.s8 %v2850
          %v2852 = vlaneseq
          %v2853 = vshrl.u32 %v2852, 7
          %v2854 = vsub.s32 %v2851, %v2853
          %v2855 = vrot.slane %v2841, %v2854
          %v2856 = vcombine.low %v1700, %v1701
          %v2858 = vunpack.c.l.s4 1966171168
          %v2859 = vunpack.c.0.s8 %v2858
          %v2860 = vlaneseq
          %v2861 = vshrl.u32 %v2860, 7
          %v2862 = vsub.s32 %v2859, %v2861
          %v2863 = vrot.slane %v2856, %v2862
          %v2865 = vunpack.c.l.s4 1966171168
          %v2866 = vunpack.c.0.s8 %v2865
          %v2867 = vlaneseq
          %v2868 = vshrl.u32 %v2867, 7
          %v2869 = vsub.s32 %v2866, %v2868
          %v2870 = vrot.slane %v1708, %v2869
          %v2871 = vcombine.low %v2863, %v2870
          %v2872 = vcombine.high %v2863, %v2870
          %v2874 = vunpack.c.l.s4 1966171168
          %v2875 = vunpack.c.0.s8 %v2874
          %v2876 = vlaneseq
          %v2877 = vshrl.u32 %v2876, 7
          %v2878 = vsub.s32 %v2875, %v2877
          %v2879 = vrot.slane %v2871, %v2878
          %v2881 = vunpack.c.l.s4 1966171168
          %v2882 = vunpack.c.0.s8 %v2881
          %v2883 = vlaneseq
          %v2884 = vshrl.u32 %v2883, 7
          %v2885 = vsub.s32 %v2882, %v2884
          %v2886 = vrot.slane %v2872, %v2885
          %vm2963 = vcmask 1042432
          %v2964 = vsel %vm2963, %v1732, -inf
          %v2965 = vrot.slane %v2964, 4
          %v2966 = vmax.f32 %v2964, %v2965
          %v2967 = vrot.slane %v2966, 2
          %v2968 = vmax.f32 %v2966, %v2967
          %v2969 = vrot.slane %v2968, 1
          %v2970 = vmax.f32 %v2968, %v2969
          %v2971 = vsel %vm2963, %v1739, -inf
          %v2972 = vrot.slane %v2971, 4
          %v2973 = vmax.f32 %v2971, %v2972
          %v2974 = vrot.slane %v2973, 2
          %v2975 = vmax.f32 %v2973, %v2974
          %v2976 = vrot.slane %v2975, 1
          %v2977 = vmax.f32 %v2975, %v2976
          %v2978 = vsel %vm2963, %v1763, -inf
          %v2979 = vrot.slane %v2978, 4
          %v2980 = vmax.f32 %v2978, %v2979
          %v2981 = vrot.slane %v2980, 2
          %v2982 = vmax.f32 %v2980, %v2981
          %v2983 = vrot.slane %v2982, 1
          %v2984 = vmax.f32 %v2982, %v2983
          %v2985 = vsel %vm2963, %v1770, -inf
          %v2986 = vrot.slane %v2985, 4
          %v2987 = vmax.f32 %v2985, %v2986
          %v2988 = vrot.slane %v2987, 2
          %v2989 = vmax.f32 %v2987, %v2988
          %v2990 = vrot.slane %v2989, 1
          %v2991 = vmax.f32 %v2989, %v2990
          %v2992 = vsel %vm2963, %v1794, -inf
          %v2993 = vrot.slane %v2992, 4
          %v2994 = vmax.f32 %v2992, %v2993
          %v2995 = vrot.slane %v2994, 2
          %v2996 = vmax.f32 %v2994, %v2995
          %v2997 = vrot.slane %v2996, 1
          %v2998 = vmax.f32 %v2996, %v2997
          %v2999 = vsel %vm2963, %v1801, -inf
          %v3000 = vrot.slane %v2999, 4
          %v3001 = vmax.f32 %v2999, %v3000
          %v3002 = vrot.slane %v3001, 2
          %v3003 = vmax.f32 %v3001, %v3002
          %v3004 = vrot.slane %v3003, 1
          %v3005 = vmax.f32 %v3003, %v3004
          %v3006 = vsel %vm2963, %v1825, -inf
          %v3007 = vrot.slane %v3006, 4
          %v3008 = vmax.f32 %v3006, %v3007
          %v3009 = vrot.slane %v3008, 2
          %v3010 = vmax.f32 %v3008, %v3009
          %v3011 = vrot.slane %v3010, 1
          %v3012 = vmax.f32 %v3010, %v3011
          %v3013 = vsel %vm2963, %v1832, -inf
          %v3014 = vrot.slane %v3013, 4
          %v3015 = vmax.f32 %v3013, %v3014
          %v3016 = vrot.slane %v3015, 2
          %v3017 = vmax.f32 %v3015, %v3016
          %v3018 = vrot.slane %v3017, 1
          %v3019 = vmax.f32 %v3017, %v3018
          %v3020 = vsel %vm2963, %v1856, -inf
          %v3021 = vrot.slane %v3020, 4
          %v3022 = vmax.f32 %v3020, %v3021
          %v3023 = vrot.slane %v3022, 2
          %v3024 = vmax.f32 %v3022, %v3023
          %v3025 = vrot.slane %v3024, 1
          %v3026 = vmax.f32 %v3024, %v3025
          %v3027 = vsel %vm2963, %v1863, -inf
          %v3028 = vrot.slane %v3027, 4
          %v3029 = vmax.f32 %v3027, %v3028
          %v3030 = vrot.slane %v3029, 2
          %v3031 = vmax.f32 %v3029, %v3030
          %v3032 = vrot.slane %v3031, 1
          %v3033 = vmax.f32 %v3031, %v3032
          %v3034 = vsel %vm2963, %v1887, -inf
          %v3035 = vrot.slane %v3034, 4
          %v3036 = vmax.f32 %v3034, %v3035
          %v3037 = vrot.slane %v3036, 2
          %v3038 = vmax.f32 %v3036, %v3037
          %v3039 = vrot.slane %v3038, 1
          %v3040 = vmax.f32 %v3038, %v3039
          %v3041 = vsel %vm2963, %v1894, -inf
          %v3042 = vrot.slane %v3041, 4
          %v3043 = vmax.f32 %v3041, %v3042
          %v3044 = vrot.slane %v3043, 2
          %v3045 = vmax.f32 %v3043, %v3044
          %v3046 = vrot.slane %v3045, 1
          %v3047 = vmax.f32 %v3045, %v3046
          %v3048 = vsel %vm2963, %v1918, -inf
          %v3049 = vrot.slane %v3048, 4
          %v3050 = vmax.f32 %v3048, %v3049
          %v3051 = vrot.slane %v3050, 2
          %v3052 = vmax.f32 %v3050, %v3051
          %v3053 = vrot.slane %v3052, 1
          %v3054 = vmax.f32 %v3052, %v3053
          %v3055 = vsel %vm2963, %v1925, -inf
          %v3056 = vrot.slane %v3055, 4
          %v3057 = vmax.f32 %v3055, %v3056
          %v3058 = vrot.slane %v3057, 2
          %v3059 = vmax.f32 %v3057, %v3058
          %v3060 = vrot.slane %v3059, 1
          %v3061 = vmax.f32 %v3059, %v3060
          %v3062 = vsel %vm2963, %v1949, -inf
          %v3063 = vrot.slane %v3062, 4
          %v3064 = vmax.f32 %v3062, %v3063
          %v3065 = vrot.slane %v3064, 2
          %v3066 = vmax.f32 %v3064, %v3065
          %v3067 = vrot.slane %v3066, 1
          %v3068 = vmax.f32 %v3066, %v3067
          %v3069 = vsel %vm2963, %v1956, -inf
          %v3070 = vrot.slane %v3069, 4
          %v3071 = vmax.f32 %v3069, %v3070
          %v3072 = vrot.slane %v3071, 2
          %v3073 = vmax.f32 %v3071, %v3072
          %v3074 = vrot.slane %v3073, 1
          %v3075 = vmax.f32 %v3073, %v3074
          %v3076 = vsel %vm2963, %v1980, -inf
          %v3077 = vrot.slane %v3076, 4
          %v3078 = vmax.f32 %v3076, %v3077
          %v3079 = vrot.slane %v3078, 2
          %v3080 = vmax.f32 %v3078, %v3079
          %v3081 = vrot.slane %v3080, 1
          %v3082 = vmax.f32 %v3080, %v3081
          %v3083 = vsel %vm2963, %v1987, -inf
          %v3084 = vrot.slane %v3083, 4
          %v3085 = vmax.f32 %v3083, %v3084
          %v3086 = vrot.slane %v3085, 2
          %v3087 = vmax.f32 %v3085, %v3086
          %v3088 = vrot.slane %v3087, 1
          %v3089 = vmax.f32 %v3087, %v3088
          %v3090 = vsel %vm2963, %v2011, -inf
          %v3091 = vrot.slane %v3090, 4
          %v3092 = vmax.f32 %v3090, %v3091
          %v3093 = vrot.slane %v3092, 2
          %v3094 = vmax.f32 %v3092, %v3093
          %v3095 = vrot.slane %v3094, 1
          %v3096 = vmax.f32 %v3094, %v3095
          %v3097 = vsel %vm2963, %v2018, -inf
          %v3098 = vrot.slane %v3097, 4
          %v3099 = vmax.f32 %v3097, %v3098
          %v3100 = vrot.slane %v3099, 2
          %v3101 = vmax.f32 %v3099, %v3100
          %v3102 = vrot.slane %v3101, 1
          %v3103 = vmax.f32 %v3101, %v3102
          %v3104 = vsel %vm2963, %v2042, -inf
          %v3105 = vrot.slane %v3104, 4
          %v3106 = vmax.f32 %v3104, %v3105
          %v3107 = vrot.slane %v3106, 2
          %v3108 = vmax.f32 %v3106, %v3107
          %v3109 = vrot.slane %v3108, 1
          %v3110 = vmax.f32 %v3108, %v3109
          %v3111 = vsel %vm2963, %v2049, -inf
          %v3112 = vrot.slane %v3111, 4
          %v3113 = vmax.f32 %v3111, %v3112
          %v3114 = vrot.slane %v3113, 2
          %v3115 = vmax.f32 %v3113, %v3114
          %v3116 = vrot.slane %v3115, 1
          %v3117 = vmax.f32 %v3115, %v3116
          %v3118 = vsel %vm2963, %v2073, -inf
          %v3119 = vrot.slane %v3118, 4
          %v3120 = vmax.f32 %v3118, %v3119
          %v3121 = vrot.slane %v3120, 2
          %v3122 = vmax.f32 %v3120, %v3121
          %v3123 = vrot.slane %v3122, 1
          %v3124 = vmax.f32 %v3122, %v3123
          %v3125 = vsel %vm2963, %v2080, -inf
          %v3126 = vrot.slane %v3125, 4
          %v3127 = vmax.f32 %v3125, %v3126
          %v3128 = vrot.slane %v3127, 2
          %v3129 = vmax.f32 %v3127, %v3128
          %v3130 = vrot.slane %v3129, 1
          %v3131 = vmax.f32 %v3129, %v3130
          %v3132 = vsel %vm2963, %v2104, -inf
          %v3133 = vrot.slane %v3132, 4
          %v3134 = vmax.f32 %v3132, %v3133
          %v3135 = vrot.slane %v3134, 2
          %v3136 = vmax.f32 %v3134, %v3135
          %v3137 = vrot.slane %v3136, 1
          %v3138 = vmax.f32 %v3136, %v3137
          %v3139 = vsel %vm2963, %v2111, -inf
          %v3140 = vrot.slane %v3139, 4
          %v3141 = vmax.f32 %v3139, %v3140
          %v3142 = vrot.slane %v3141, 2
          %v3143 = vmax.f32 %v3141, %v3142
          %v3144 = vrot.slane %v3143, 1
          %v3145 = vmax.f32 %v3143, %v3144
          %v3146 = vsel %vm2963, %v2135, -inf
          %v3147 = vrot.slane %v3146, 4
          %v3148 = vmax.f32 %v3146, %v3147
          %v3149 = vrot.slane %v3148, 2
          %v3150 = vmax.f32 %v3148, %v3149
          %v3151 = vrot.slane %v3150, 1
          %v3152 = vmax.f32 %v3150, %v3151
          %v3153 = vsel %vm2963, %v2142, -inf
          %v3154 = vrot.slane %v3153, 4
          %v3155 = vmax.f32 %v3153, %v3154
          %v3156 = vrot.slane %v3155, 2
          %v3157 = vmax.f32 %v3155, %v3156
          %v3158 = vrot.slane %v3157, 1
          %v3159 = vmax.f32 %v3157, %v3158
          %v3160 = vsel %vm2963, %v2166, -inf
          %v3161 = vrot.slane %v3160, 4
          %v3162 = vmax.f32 %v3160, %v3161
          %v3163 = vrot.slane %v3162, 2
          %v3164 = vmax.f32 %v3162, %v3163
          %v3165 = vrot.slane %v3164, 1
          %v3166 = vmax.f32 %v3164, %v3165
          %v3167 = vsel %vm2963, %v2173, -inf
          %v3168 = vrot.slane %v3167, 4
          %v3169 = vmax.f32 %v3167, %v3168
          %v3170 = vrot.slane %v3169, 2
          %v3171 = vmax.f32 %v3169, %v3170
          %v3172 = vrot.slane %v3171, 1
          %v3173 = vmax.f32 %v3171, %v3172
          %v3174 = vsel %vm2963, %v2197, -inf
          %v3175 = vrot.slane %v3174, 4
          %v3176 = vmax.f32 %v3174, %v3175
          %v3177 = vrot.slane %v3176, 2
          %v3178 = vmax.f32 %v3176, %v3177
          %v3179 = vrot.slane %v3178, 1
          %v3180 = vmax.f32 %v3178, %v3179
          %v3181 = vsel %vm2963, %v2204, -inf
          %v3182 = vrot.slane %v3181, 4
          %v3183 = vmax.f32 %v3181, %v3182
          %v3184 = vrot.slane %v3183, 2
          %v3185 = vmax.f32 %v3183, %v3184
          %v3186 = vrot.slane %v3185, 1
          %v3187 = vmax.f32 %v3185, %v3186
          %v3188 = vsel %vm2963, %v2228, -inf
          %v3189 = vrot.slane %v3188, 4
          %v3190 = vmax.f32 %v3188, %v3189
          %v3191 = vrot.slane %v3190, 2
          %v3192 = vmax.f32 %v3190, %v3191
          %v3193 = vrot.slane %v3192, 1
          %v3194 = vmax.f32 %v3192, %v3193
          %v3195 = vsel %vm2963, %v2235, -inf
          %v3196 = vrot.slane %v3195, 4
          %v3197 = vmax.f32 %v3195, %v3196
          %v3198 = vrot.slane %v3197, 2
          %v3199 = vmax.f32 %v3197, %v3198
          %v3200 = vrot.slane %v3199, 1
          %v3201 = vmax.f32 %v3199, %v3200
          %v3202 = vsel %vm2963, %v2259, -inf
          %v3203 = vrot.slane %v3202, 4
          %v3204 = vmax.f32 %v3202, %v3203
          %v3205 = vrot.slane %v3204, 2
          %v3206 = vmax.f32 %v3204, %v3205
          %v3207 = vrot.slane %v3206, 1
          %v3208 = vmax.f32 %v3206, %v3207
          %v3209 = vsel %vm2963, %v2266, -inf
          %v3210 = vrot.slane %v3209, 4
          %v3211 = vmax.f32 %v3209, %v3210
          %v3212 = vrot.slane %v3211, 2
          %v3213 = vmax.f32 %v3211, %v3212
          %v3214 = vrot.slane %v3213, 1
          %v3215 = vmax.f32 %v3213, %v3214
          %v3216 = vsel %vm2963, %v2290, -inf
          %v3217 = vrot.slane %v3216, 4
          %v3218 = vmax.f32 %v3216, %v3217
          %v3219 = vrot.slane %v3218, 2
          %v3220 = vmax.f32 %v3218, %v3219
          %v3221 = vrot.slane %v3220, 1
          %v3222 = vmax.f32 %v3220, %v3221
          %v3223 = vsel %vm2963, %v2297, -inf
          %v3224 = vrot.slane %v3223, 4
          %v3225 = vmax.f32 %v3223, %v3224
          %v3226 = vrot.slane %v3225, 2
          %v3227 = vmax.f32 %v3225, %v3226
          %v3228 = vrot.slane %v3227, 1
          %v3229 = vmax.f32 %v3227, %v3228
          %v3230 = vsel %vm2963, %v2321, -inf
          %v3231 = vrot.slane %v3230, 4
          %v3232 = vmax.f32 %v3230, %v3231
          %v3233 = vrot.slane %v3232, 2
          %v3234 = vmax.f32 %v3232, %v3233
          %v3235 = vrot.slane %v3234, 1
          %v3236 = vmax.f32 %v3234, %v3235
          %v3237 = vsel %vm2963, %v2328, -inf
          %v3238 = vrot.slane %v3237, 4
          %v3239 = vmax.f32 %v3237, %v3238
          %v3240 = vrot.slane %v3239, 2
          %v3241 = vmax.f32 %v3239, %v3240
          %v3242 = vrot.slane %v3241, 1
          %v3243 = vmax.f32 %v3241, %v3242
          %v3244 = vsel %vm2963, %v2352, -inf
          %v3245 = vrot.slane %v3244, 4
          %v3246 = vmax.f32 %v3244, %v3245
          %v3247 = vrot.slane %v3246, 2
          %v3248 = vmax.f32 %v3246, %v3247
          %v3249 = vrot.slane %v3248, 1
          %v3250 = vmax.f32 %v3248, %v3249
          %v3251 = vsel %vm2963, %v2359, -inf
          %v3252 = vrot.slane %v3251, 4
          %v3253 = vmax.f32 %v3251, %v3252
          %v3254 = vrot.slane %v3253, 2
          %v3255 = vmax.f32 %v3253, %v3254
          %v3256 = vrot.slane %v3255, 1
          %v3257 = vmax.f32 %v3255, %v3256
          %v3258 = vsel %vm2963, %v2383, -inf
          %v3259 = vrot.slane %v3258, 4
          %v3260 = vmax.f32 %v3258, %v3259
          %v3261 = vrot.slane %v3260, 2
          %v3262 = vmax.f32 %v3260, %v3261
          %v3263 = vrot.slane %v3262, 1
          %v3264 = vmax.f32 %v3262, %v3263
          %v3265 = vsel %vm2963, %v2390, -inf
          %v3266 = vrot.slane %v3265, 4
          %v3267 = vmax.f32 %v3265, %v3266
          %v3268 = vrot.slane %v3267, 2
          %v3269 = vmax.f32 %v3267, %v3268
          %v3270 = vrot.slane %v3269, 1
          %v3271 = vmax.f32 %v3269, %v3270
          %v3272 = vsel %vm2963, %v2414, -inf
          %v3273 = vrot.slane %v3272, 4
          %v3274 = vmax.f32 %v3272, %v3273
          %v3275 = vrot.slane %v3274, 2
          %v3276 = vmax.f32 %v3274, %v3275
          %v3277 = vrot.slane %v3276, 1
          %v3278 = vmax.f32 %v3276, %v3277
          %v3279 = vsel %vm2963, %v2421, -inf
          %v3280 = vrot.slane %v3279, 4
          %v3281 = vmax.f32 %v3279, %v3280
          %v3282 = vrot.slane %v3281, 2
          %v3283 = vmax.f32 %v3281, %v3282
          %v3284 = vrot.slane %v3283, 1
          %v3285 = vmax.f32 %v3283, %v3284
          %v3286 = vsel %vm2963, %v2445, -inf
          %v3287 = vrot.slane %v3286, 4
          %v3288 = vmax.f32 %v3286, %v3287
          %v3289 = vrot.slane %v3288, 2
          %v3290 = vmax.f32 %v3288, %v3289
          %v3291 = vrot.slane %v3290, 1
          %v3292 = vmax.f32 %v3290, %v3291
          %v3293 = vsel %vm2963, %v2452, -inf
          %v3294 = vrot.slane %v3293, 4
          %v3295 = vmax.f32 %v3293, %v3294
          %v3296 = vrot.slane %v3295, 2
          %v3297 = vmax.f32 %v3295, %v3296
          %v3298 = vrot.slane %v3297, 1
          %v3299 = vmax.f32 %v3297, %v3298
          %v3300 = vsel %vm2963, %v2476, -inf
          %v3301 = vrot.slane %v3300, 4
          %v3302 = vmax.f32 %v3300, %v3301
          %v3303 = vrot.slane %v3302, 2
          %v3304 = vmax.f32 %v3302, %v3303
          %v3305 = vrot.slane %v3304, 1
          %v3306 = vmax.f32 %v3304, %v3305
          %v3307 = vsel %vm2963, %v2483, -inf
          %v3308 = vrot.slane %v3307, 4
          %v3309 = vmax.f32 %v3307, %v3308
          %v3310 = vrot.slane %v3309, 2
          %v3311 = vmax.f32 %v3309, %v3310
          %v3312 = vrot.slane %v3311, 1
          %v3313 = vmax.f32 %v3311, %v3312
          %v3314 = vsel %vm2963, %v2507, -inf
          %v3315 = vrot.slane %v3314, 4
          %v3316 = vmax.f32 %v3314, %v3315
          %v3317 = vrot.slane %v3316, 2
          %v3318 = vmax.f32 %v3316, %v3317
          %v3319 = vrot.slane %v3318, 1
          %v3320 = vmax.f32 %v3318, %v3319
          %v3321 = vsel %vm2963, %v2514, -inf
          %v3322 = vrot.slane %v3321, 4
          %v3323 = vmax.f32 %v3321, %v3322
          %v3324 = vrot.slane %v3323, 2
          %v3325 = vmax.f32 %v3323, %v3324
          %v3326 = vrot.slane %v3325, 1
          %v3327 = vmax.f32 %v3325, %v3326
          %v3328 = vsel %vm2963, %v2538, -inf
          %v3329 = vrot.slane %v3328, 4
          %v3330 = vmax.f32 %v3328, %v3329
          %v3331 = vrot.slane %v3330, 2
          %v3332 = vmax.f32 %v3330, %v3331
          %v3333 = vrot.slane %v3332, 1
          %v3334 = vmax.f32 %v3332, %v3333
          %v3335 = vsel %vm2963, %v2545, -inf
          %v3336 = vrot.slane %v3335, 4
          %v3337 = vmax.f32 %v3335, %v3336
          %v3338 = vrot.slane %v3337, 2
          %v3339 = vmax.f32 %v3337, %v3338
          %v3340 = vrot.slane %v3339, 1
          %v3341 = vmax.f32 %v3339, %v3340
          %v3342 = vsel %vm2963, %v2569, -inf
          %v3343 = vrot.slane %v3342, 4
          %v3344 = vmax.f32 %v3342, %v3343
          %v3345 = vrot.slane %v3344, 2
          %v3346 = vmax.f32 %v3344, %v3345
          %v3347 = vrot.slane %v3346, 1
          %v3348 = vmax.f32 %v3346, %v3347
          %v3349 = vsel %vm2963, %v2576, -inf
          %v3350 = vrot.slane %v3349, 4
          %v3351 = vmax.f32 %v3349, %v3350
          %v3352 = vrot.slane %v3351, 2
          %v3353 = vmax.f32 %v3351, %v3352
          %v3354 = vrot.slane %v3353, 1
          %v3355 = vmax.f32 %v3353, %v3354
          %v3356 = vsel %vm2963, %v2600, -inf
          %v3357 = vrot.slane %v3356, 4
          %v3358 = vmax.f32 %v3356, %v3357
          %v3359 = vrot.slane %v3358, 2
          %v3360 = vmax.f32 %v3358, %v3359
          %v3361 = vrot.slane %v3360, 1
          %v3362 = vmax.f32 %v3360, %v3361
          %v3363 = vsel %vm2963, %v2607, -inf
          %v3364 = vrot.slane %v3363, 4
          %v3365 = vmax.f32 %v3363, %v3364
          %v3366 = vrot.slane %v3365, 2
          %v3367 = vmax.f32 %v3365, %v3366
          %v3368 = vrot.slane %v3367, 1
          %v3369 = vmax.f32 %v3367, %v3368
          %v3370 = vsel %vm2963, %v2631, -inf
          %v3371 = vrot.slane %v3370, 4
          %v3372 = vmax.f32 %v3370, %v3371
          %v3373 = vrot.slane %v3372, 2
          %v3374 = vmax.f32 %v3372, %v3373
          %v3375 = vrot.slane %v3374, 1
          %v3376 = vmax.f32 %v3374, %v3375
          %v3377 = vsel %vm2963, %v2638, -inf
          %v3378 = vrot.slane %v3377, 4
          %v3379 = vmax.f32 %v3377, %v3378
          %v3380 = vrot.slane %v3379, 2
          %v3381 = vmax.f32 %v3379, %v3380
          %v3382 = vrot.slane %v3381, 1
          %v3383 = vmax.f32 %v3381, %v3382
          %v3384 = vsel %vm2963, %v2662, -inf
          %v3385 = vrot.slane %v3384, 4
          %v3386 = vmax.f32 %v3384, %v3385
          %v3387 = vrot.slane %v3386, 2
          %v3388 = vmax.f32 %v3386, %v3387
          %v3389 = vrot.slane %v3388, 1
          %v3390 = vmax.f32 %v3388, %v3389
          %v3391 = vsel %vm2963, %v2669, -inf
          %v3392 = vrot.slane %v3391, 4
          %v3393 = vmax.f32 %v3391, %v3392
          %v3394 = vrot.slane %v3393, 2
          %v3395 = vmax.f32 %v3393, %v3394
          %v3396 = vrot.slane %v3395, 1
          %v3397 = vmax.f32 %v3395, %v3396
          %v3398 = vsel %vm2963, %v2693, -inf
          %v3399 = vrot.slane %v3398, 4
          %v3400 = vmax.f32 %v3398, %v3399
          %v3401 = vrot.slane %v3400, 2
          %v3402 = vmax.f32 %v3400, %v3401
          %v3403 = vrot.slane %v3402, 1
          %v3404 = vmax.f32 %v3402, %v3403
          %v3405 = vsel %vm2963, %v2700, -inf
          %v3406 = vrot.slane %v3405, 4
          %v3407 = vmax.f32 %v3405, %v3406
          %v3408 = vrot.slane %v3407, 2
          %v3409 = vmax.f32 %v3407, %v3408
          %v3410 = vrot.slane %v3409, 1
          %v3411 = vmax.f32 %v3409, %v3410
          %v3412 = vsel %vm2963, %v2724, -inf
          %v3413 = vrot.slane %v3412, 4
          %v3414 = vmax.f32 %v3412, %v3413
          %v3415 = vrot.slane %v3414, 2
          %v3416 = vmax.f32 %v3414, %v3415
          %v3417 = vrot.slane %v3416, 1
          %v3418 = vmax.f32 %v3416, %v3417
          %v3419 = vsel %vm2963, %v2731, -inf
          %v3420 = vrot.slane %v3419, 4
          %v3421 = vmax.f32 %v3419, %v3420
          %v3422 = vrot.slane %v3421, 2
          %v3423 = vmax.f32 %v3421, %v3422
          %v3424 = vrot.slane %v3423, 1
          %v3425 = vmax.f32 %v3423, %v3424
          %v3426 = vsel %vm2963, %v2755, -inf
          %v3427 = vrot.slane %v3426, 4
          %v3428 = vmax.f32 %v3426, %v3427
          %v3429 = vrot.slane %v3428, 2
          %v3430 = vmax.f32 %v3428, %v3429
          %v3431 = vrot.slane %v3430, 1
          %v3432 = vmax.f32 %v3430, %v3431
          %v3433 = vsel %vm2963, %v2762, -inf
          %v3434 = vrot.slane %v3433, 4
          %v3435 = vmax.f32 %v3433, %v3434
          %v3436 = vrot.slane %v3435, 2
          %v3437 = vmax.f32 %v3435, %v3436
          %v3438 = vrot.slane %v3437, 1
          %v3439 = vmax.f32 %v3437, %v3438
          %v3440 = vsel %vm2963, %v2786, -inf
          %v3441 = vrot.slane %v3440, 4
          %v3442 = vmax.f32 %v3440, %v3441
          %v3443 = vrot.slane %v3442, 2
          %v3444 = vmax.f32 %v3442, %v3443
          %v3445 = vrot.slane %v3444, 1
          %v3446 = vmax.f32 %v3444, %v3445
          %v3447 = vsel %vm2963, %v2793, -inf
          %v3448 = vrot.slane %v3447, 4
          %v3449 = vmax.f32 %v3447, %v3448
          %v3450 = vrot.slane %v3449, 2
          %v3451 = vmax.f32 %v3449, %v3450
          %v3452 = vrot.slane %v3451, 1
          %v3453 = vmax.f32 %v3451, %v3452
          %v3454 = vsel %vm2963, %v2817, -inf
          %v3455 = vrot.slane %v3454, 4
          %v3456 = vmax.f32 %v3454, %v3455
          %v3457 = vrot.slane %v3456, 2
          %v3458 = vmax.f32 %v3456, %v3457
          %v3459 = vrot.slane %v3458, 1
          %v3460 = vmax.f32 %v3458, %v3459
          %v3461 = vsel %vm2963, %v2824, -inf
          %v3462 = vrot.slane %v3461, 4
          %v3463 = vmax.f32 %v3461, %v3462
          %v3464 = vrot.slane %v3463, 2
          %v3465 = vmax.f32 %v3463, %v3464
          %v3466 = vrot.slane %v3465, 1
          %v3467 = vmax.f32 %v3465, %v3466
          %v3468 = vsel %vm2963, %v2848, -inf
          %v3469 = vrot.slane %v3468, 4
          %v3470 = vmax.f32 %v3468, %v3469
          %v3471 = vrot.slane %v3470, 2
          %v3472 = vmax.f32 %v3470, %v3471
          %v3473 = vrot.slane %v3472, 1
          %v3474 = vmax.f32 %v3472, %v3473
          %v3475 = vsel %vm2963, %v2855, -inf
          %v3476 = vrot.slane %v3475, 4
          %v3477 = vmax.f32 %v3475, %v3476
          %v3478 = vrot.slane %v3477, 2
          %v3479 = vmax.f32 %v3477, %v3478
          %v3480 = vrot.slane %v3479, 1
          %v3481 = vmax.f32 %v3479, %v3480
          %v3482 = vsel %vm2963, %v2879, -inf
          %v3483 = vrot.slane %v3482, 4
          %v3484 = vmax.f32 %v3482, %v3483
          %v3485 = vrot.slane %v3484, 2
          %v3486 = vmax.f32 %v3484, %v3485
          %v3487 = vrot.slane %v3486, 1
          %v3488 = vmax.f32 %v3486, %v3487
          %v3489 = vsel %vm2963, %v2886, -inf
          %v3490 = vrot.slane %v3489, 4
          %v3491 = vmax.f32 %v3489, %v3490
          %v3492 = vrot.slane %v3491, 2
          %v3493 = vmax.f32 %v3491, %v3492
          %v3494 = vrot.slane %v3493, 1
          %v3495 = vmax.f32 %v3493, %v3494
          %v3496 = vpack.c.bf16 %v2970, %v2970
          %v3497 = vpack.c.bf16 %v2977, %v2977
          %v3498 = vpack.c.bf16 %v2984, %v2984
          %v3499 = vpack.c.bf16 %v2991, %v2991
          %v3500 = vpack.c.bf16 %v2998, %v2998
          %v3501 = vpack.c.bf16 %v3005, %v3005
          %v3502 = vpack.c.bf16 %v3012, %v3012
          %v3503 = vpack.c.bf16 %v3019, %v3019
          %v3504 = vpack.c.bf16 %v3026, %v3026
          %v3505 = vpack.c.bf16 %v3033, %v3033
          %v3506 = vpack.c.bf16 %v3040, %v3040
          %v3507 = vpack.c.bf16 %v3047, %v3047
          %v3508 = vpack.c.bf16 %v3054, %v3054
          %v3509 = vpack.c.bf16 %v3061, %v3061
          %v3510 = vpack.c.bf16 %v3068, %v3068
          %v3511 = vpack.c.bf16 %v3075, %v3075
          %v3512 = vpack.c.bf16 %v3082, %v3082
          %v3513 = vpack.c.bf16 %v3089, %v3089
          %v3514 = vpack.c.bf16 %v3096, %v3096
          %v3515 = vpack.c.bf16 %v3103, %v3103
          %v3516 = vpack.c.bf16 %v3110, %v3110
          %v3517 = vpack.c.bf16 %v3117, %v3117
          %v3518 = vpack.c.bf16 %v3124, %v3124
          %v3519 = vpack.c.bf16 %v3131, %v3131
          %v3520 = vpack.c.bf16 %v3138, %v3138
          %v3521 = vpack.c.bf16 %v3145, %v3145
          %v3522 = vpack.c.bf16 %v3152, %v3152
          %v3523 = vpack.c.bf16 %v3159, %v3159
          %v3524 = vpack.c.bf16 %v3166, %v3166
          %v3525 = vpack.c.bf16 %v3173, %v3173
          %v3526 = vpack.c.bf16 %v3180, %v3180
          %v3527 = vpack.c.bf16 %v3187, %v3187
          %v3528 = vpack.c.bf16 %v3194, %v3194
          %v3529 = vpack.c.bf16 %v3201, %v3201
          %v3530 = vpack.c.bf16 %v3208, %v3208
          %v3531 = vpack.c.bf16 %v3215, %v3215
          %v3532 = vpack.c.bf16 %v3222, %v3222
          %v3533 = vpack.c.bf16 %v3229, %v3229
          %v3534 = vpack.c.bf16 %v3236, %v3236
          %v3535 = vpack.c.bf16 %v3243, %v3243
          %v3536 = vpack.c.bf16 %v3250, %v3250
          %v3537 = vpack.c.bf16 %v3257, %v3257
          %v3538 = vpack.c.bf16 %v3264, %v3264
          %v3539 = vpack.c.bf16 %v3271, %v3271
          %v3540 = vpack.c.bf16 %v3278, %v3278
          %v3541 = vpack.c.bf16 %v3285, %v3285
          %v3542 = vpack.c.bf16 %v3292, %v3292
          %v3543 = vpack.c.bf16 %v3299, %v3299
          %v3544 = vpack.c.bf16 %v3306, %v3306
          %v3545 = vpack.c.bf16 %v3313, %v3313
          %v3546 = vpack.c.bf16 %v3320, %v3320
          %v3547 = vpack.c.bf16 %v3327, %v3327
          %v3548 = vpack.c.bf16 %v3334, %v3334
          %v3549 = vpack.c.bf16 %v3341, %v3341
          %v3550 = vpack.c.bf16 %v3348, %v3348
          %v3551 = vpack.c.bf16 %v3355, %v3355
          %v3552 = vpack.c.bf16 %v3362, %v3362
          %v3553 = vpack.c.bf16 %v3369, %v3369
          %v3554 = vpack.c.bf16 %v3376, %v3376
          %v3555 = vpack.c.bf16 %v3383, %v3383
          %v3556 = vpack.c.bf16 %v3390, %v3390
          %v3557 = vpack.c.bf16 %v3397, %v3397
          %v3558 = vpack.c.bf16 %v3404, %v3404
          %v3559 = vpack.c.bf16 %v3411, %v3411
          %v3560 = vpack.c.bf16 %v3418, %v3418
          %v3561 = vpack.c.bf16 %v3425, %v3425
          %v3562 = vpack.c.bf16 %v3432, %v3432
          %v3563 = vpack.c.bf16 %v3439, %v3439
          %v3564 = vpack.c.bf16 %v3446, %v3446
          %v3565 = vpack.c.bf16 %v3453, %v3453
          %v3566 = vpack.c.bf16 %v3460, %v3460
          %v3567 = vpack.c.bf16 %v3467, %v3467
          %v3568 = vpack.c.bf16 %v3474, %v3474
          %v3569 = vpack.c.bf16 %v3481, %v3481
          %v3570 = vpack.c.bf16 %v3488, %v3488
          %v3571 = vpack.c.bf16 %v3495, %v3495
          %v3572 = vld [vmem:[#allocation9] sm:$0xff]
          %v3573 = vld [vmem:[#allocation9 + $0x8] sm:$0xff]
          %v3574 = vld [vmem:[#allocation9 + $0x10] sm:$0xff]
          %v3575 = vld [vmem:[#allocation9 + $0x18] sm:$0xff]
          %v3576 = vld [vmem:[#allocation9 + $0x20] sm:$0xff]
          %v3577 = vld [vmem:[#allocation9 + $0x28] sm:$0xff]
          %v3578 = vld [vmem:[#allocation9 + $0x30] sm:$0xff]
          %v3579 = vld [vmem:[#allocation9 + $0x38] sm:$0xff]
          %v3580 = vld [vmem:[#allocation9 + $0x40] sm:$0xff]
          %v3581 = vld [vmem:[#allocation9 + $0x48] sm:$0xff]
          %v3582 = vld [vmem:[#allocation9 + $0x50] sm:$0xff]
          %v3583 = vld [vmem:[#allocation9 + $0x58] sm:$0xff]
          %v3584 = vld [vmem:[#allocation9 + $0x60] sm:$0xff]
          %v3585 = vld [vmem:[#allocation9 + $0x68] sm:$0xff]
          %v3586 = vld [vmem:[#allocation9 + $0x70] sm:$0xff]
          %v3587 = vld [vmem:[#allocation9 + $0x78] sm:$0xff]
          %v3588 = vld [vmem:[#allocation9 + $0x80] sm:$0xff]
          %v3589 = vld [vmem:[#allocation9 + $0x88] sm:$0xff]
          %v3590 = vld [vmem:[#allocation9 + $0x90] sm:$0xff]
          %v3591 = vld [vmem:[#allocation9 + $0x98] sm:$0xff]
          %v3592 = vld [vmem:[#allocation9 + $0xa0] sm:$0xff]
          %v3593 = vld [vmem:[#allocation9 + $0xa8] sm:$0xff]
          %v3594 = vld [vmem:[#allocation9 + $0xb0] sm:$0xff]
          %v3595 = vld [vmem:[#allocation9 + $0xb8] sm:$0xff]
          %v3596 = vld [vmem:[#allocation9 + $0xc0] sm:$0xff]
          %v3597 = vld [vmem:[#allocation9 + $0xc8] sm:$0xff]
          %v3598 = vld [vmem:[#allocation9 + $0xd0] sm:$0xff]
          %v3599 = vld [vmem:[#allocation9 + $0xd8] sm:$0xff]
          %v3600 = vld [vmem:[#allocation9 + $0xe0] sm:$0xff]
          %v3601 = vld [vmem:[#allocation9 + $0xe8] sm:$0xff]
          %v3602 = vld [vmem:[#allocation9 + $0xf0] sm:$0xff]
          %v3603 = vld [vmem:[#allocation9 + $0xf8] sm:$0xff]
          %s3604 = scalar_lea.vmem [#allocation9], 256
          %v3605 = vld [vmem:[%s3604] sm:$0xff]
          %v3606 = vld [vmem:[%s3604 + $0x8] sm:$0xff]
          %v3607 = vld [vmem:[%s3604 + $0x10] sm:$0xff]
          %v3608 = vld [vmem:[%s3604 + $0x18] sm:$0xff]
          %v3609 = vld [vmem:[%s3604 + $0x20] sm:$0xff]
          %v3610 = vld [vmem:[%s3604 + $0x28] sm:$0xff]
          %v3611 = vld [vmem:[%s3604 + $0x30] sm:$0xff]
          %v3612 = vld [vmem:[%s3604 + $0x38] sm:$0xff]
          %v3613 = vld [vmem:[%s3604 + $0x40] sm:$0xff]
          %v3614 = vld [vmem:[%s3604 + $0x48] sm:$0xff]
          %v3615 = vld [vmem:[%s3604 + $0x50] sm:$0xff]
          %v3616 = vld [vmem:[%s3604 + $0x58] sm:$0xff]
          %v3617 = vld [vmem:[%s3604 + $0x60] sm:$0xff]
          %v3618 = vld [vmem:[%s3604 + $0x68] sm:$0xff]
          %v3619 = vld [vmem:[%s3604 + $0x70] sm:$0xff]
          %v3620 = vld [vmem:[%s3604 + $0x78] sm:$0xff]
          %v3621 = vld [vmem:[%s3604 + $0x80] sm:$0xff]
          %v3622 = vld [vmem:[%s3604 + $0x88] sm:$0xff]
          %v3623 = vld [vmem:[%s3604 + $0x90] sm:$0xff]
          %v3624 = vld [vmem:[%s3604 + $0x98] sm:$0xff]
          %v3625 = vld [vmem:[%s3604 + $0xa0] sm:$0xff]
          %v3626 = vld [vmem:[%s3604 + $0xa8] sm:$0xff]
          %v3627 = vld [vmem:[%s3604 + $0xb0] sm:$0xff]
          %v3628 = vld [vmem:[%s3604 + $0xb8] sm:$0xff]
          %v3629 = vld [vmem:[%s3604 + $0xc0] sm:$0xff]
          %v3630 = vld [vmem:[%s3604 + $0xc8] sm:$0xff]
          %v3631 = vld [vmem:[%s3604 + $0xd0] sm:$0xff]
          %v3632 = vld [vmem:[%s3604 + $0xd8] sm:$0xff]
          %v3633 = vld [vmem:[%s3604 + $0xe0] sm:$0xff]
          %v3634 = vld [vmem:[%s3604 + $0xe8] sm:$0xff]
          %v3635 = vld [vmem:[%s3604 + $0xf0] sm:$0xff]
          %v3636 = vld [vmem:[%s3604 + $0xf8] sm:$0xff]
          %v3689 = vunpack.c.l.b16 %v3498
          %v3690 = vunpack.c.l.b16 %v3499
          %v3691 = vunpack.c.l.b16 %v3500
          %v3692 = vunpack.c.l.b16 %v3501
          %v3693 = vunpack.c.l.b16 %v3502
          %v3694 = vunpack.c.l.b16 %v3503
          %v3695 = vunpack.c.l.b16 %v3504
          %v3696 = vunpack.c.l.b16 %v3505
          %v3697 = vunpack.c.l.b16 %v3506
          %v3698 = vunpack.c.l.b16 %v3507
          %v3699 = vunpack.c.l.b16 %v3508
          %v3700 = vunpack.c.l.b16 %v3509
          %v3701 = vunpack.c.l.b16 %v3510
          %v3702 = vunpack.c.l.b16 %v3511
          %v3703 = vunpack.c.l.b16 %v3512
          %v3704 = vunpack.c.l.b16 %v3513
          %v3705 = vunpack.c.l.b16 %v3514
          %v3706 = vunpack.c.l.b16 %v3515
          %v3707 = vunpack.c.l.b16 %v3516
          %v3708 = vunpack.c.l.b16 %v3517
          %v3709 = vunpack.c.l.b16 %v3518
          %v3710 = vunpack.c.l.b16 %v3519
          %v3711 = vunpack.c.l.b16 %v3520
          %v3712 = vunpack.c.l.b16 %v3521
          %v3713 = vunpack.c.l.b16 %v3522
          %v3714 = vunpack.c.l.b16 %v3523
          %v3715 = vunpack.c.l.b16 %v3536
          %v3716 = vunpack.c.l.b16 %v3537
          %v3717 = vunpack.c.l.b16 %v3538
          %v3718 = vunpack.c.l.b16 %v3539
          %v3719 = vunpack.c.l.b16 %v3540
          %v3720 = vunpack.c.l.b16 %v3541
          %v3721 = vunpack.c.l.b16 %v3542
          %v3722 = vunpack.c.l.b16 %v3543
          %v3723 = vunpack.c.l.b16 %v3544
          %v3724 = vunpack.c.l.b16 %v3545
          %v3725 = vunpack.c.l.b16 %v3546
          %v3726 = vunpack.c.l.b16 %v3547
          %v3727 = vunpack.c.l.b16 %v3548
          %v3728 = vunpack.c.l.b16 %v3549
          %v3729 = vunpack.c.l.b16 %v3550
          %v3730 = vunpack.c.l.b16 %v3551
          %v3731 = vunpack.c.l.b16 %v3552
          %v3732 = vunpack.c.l.b16 %v3553
          %v3733 = vunpack.c.l.b16 %v3554
          %v3734 = vunpack.c.l.b16 %v3555
          %v3735 = vunpack.c.l.b16 %v3556
          %v3736 = vunpack.c.l.b16 %v3557
          %v3737 = vunpack.c.l.b16 %v3558
          %v3738 = vunpack.c.l.b16 %v3559
          %v3739 = vunpack.c.l.b16 %v3560
          %v3740 = vunpack.c.l.b16 %v3561
          %vm3741 = vcmask 1041409
          %v3742 = vsel %vm3741, %v3691, %v3689
          %vm3743 = vcmask 1042434
          %v3744 = vsel %vm3743, %v3693, %v3742
          %vm3745 = vcmask 1043459
          %v3746 = vsel %vm3745, %v3695, %v3744
          %vm3747 = vcmask 1044484
          %v3748 = vsel %vm3747, %v3697, %v3746
          %vm3749 = vcmask 1045509
          %v3750 = vsel %vm3749, %v3699, %v3748
          %vm3751 = vcmask 1046534
          %v3752 = vsel %vm3751, %v3701, %v3750
          %vm3753 = vcmask 1047559
          %v3754 = vsel %vm3753, %v3703, %v3752
          %v3755 = vsel %vm3741, %v3692, %v3690
          %v3756 = vsel %vm3743, %v3694, %v3755
          %v3757 = vsel %vm3745, %v3696, %v3756
          %v3758 = vsel %vm3747, %v3698, %v3757
          %v3759 = vsel %vm3749, %v3700, %v3758
          %v3760 = vsel %vm3751, %v3702, %v3759
          %v3761 = vsel %vm3753, %v3704, %v3760
          %v3762 = vsel %vm3741, %v3707, %v3705
          %v3763 = vsel %vm3743, %v3709, %v3762
          %v3764 = vsel %vm3745, %v3711, %v3763
          %v3765 = vsel %vm3747, %v3713, %v3764
          %v3766 = vsel %vm3749, %v3715, %v3765
          %v3767 = vsel %vm3751, %v3717, %v3766
          %v3768 = vsel %vm3753, %v3719, %v3767
          %v3769 = vsel %vm3741, %v3708, %v3706
          %v3770 = vsel %vm3743, %v3710, %v3769
          %v3771 = vsel %vm3745, %v3712, %v3770
          %v3772 = vsel %vm3747, %v3714, %v3771
          %v3773 = vsel %vm3749, %v3716, %v3772
          %v3774 = vsel %vm3751, %v3718, %v3773
          %v3775 = vsel %vm3753, %v3720, %v3774
          %v3776 = vsel %vm3741, %v3723, %v3721
          %v3777 = vsel %vm3743, %v3725, %v3776
          %v3778 = vsel %vm3745, %v3727, %v3777
          %v3779 = vsel %vm3747, %v3729, %v3778
          %v3780 = vsel %vm3749, %v3731, %v3779
          %v3781 = vsel %vm3751, %v3733, %v3780
          %v3782 = vsel %vm3753, %v3735, %v3781
          %v3783 = vsel %vm3741, %v3724, %v3722
          %v3784 = vsel %vm3743, %v3726, %v3783
          %v3785 = vsel %vm3745, %v3728, %v3784
          %v3786 = vsel %vm3747, %v3730, %v3785
          %v3787 = vsel %vm3749, %v3732, %v3786
          %v3788 = vsel %vm3751, %v3734, %v3787
          %v3789 = vsel %vm3753, %v3736, %v3788
          %v3790 = vsel %vm3741, %v3739, %v3737
          %v3791 = vsel %vm3741, %v3740, %v3738
          %v3792 = vpack.c.b16 %v3768, %v3754
          %v3793 = vpack.c.b16 %v3775, %v3761
          %v3794 = vpack.c.b16 %v3790, %v3782
          %v3795 = vpack.c.b16 %v3791, %v3789
          %v3832 = vunpack.c.l.b16 %v3605
          %v3833 = vunpack.c.h.b16 %v3605
          %v3834 = vunpack.c.l.b16 %v3606
          %v3835 = vunpack.c.h.b16 %v3606
          %v3836 = vunpack.c.l.b16 %v3607
          %v3837 = vunpack.c.h.b16 %v3607
          %v3838 = vunpack.c.l.b16 %v3608
          %v3839 = vunpack.c.h.b16 %v3608
          %v3840 = vunpack.c.l.b16 %v3609
          %v3841 = vunpack.c.h.b16 %v3609
          %v3842 = vunpack.c.l.b16 %v3610
          %v3843 = vunpack.c.h.b16 %v3610
          %v3844 = vunpack.c.l.b16 %v3611
          %v3845 = vunpack.c.h.b16 %v3611
          %v3846 = vunpack.c.l.b16 %v3612
          %v3847 = vunpack.c.h.b16 %v3612
          %v3848 = vunpack.c.l.b16 %v3613
          %v3849 = vunpack.c.h.b16 %v3613
          %v3850 = vunpack.c.l.b16 %v3614
          %v3851 = vunpack.c.h.b16 %v3614
          %v3852 = vunpack.c.l.b16 %v3615
          %v3853 = vunpack.c.h.b16 %v3615
          %v3854 = vunpack.c.l.b16 %v3616
          %v3855 = vunpack.c.h.b16 %v3616
          %v3856 = vunpack.c.l.b16 %v3617
          %v3857 = vunpack.c.h.b16 %v3617
          %v3858 = vunpack.c.l.b16 %v3618
          %v3859 = vunpack.c.h.b16 %v3618
          %v3860 = vunpack.c.l.b16 %v3619
          %v3861 = vunpack.c.h.b16 %v3619
          %v3862 = vunpack.c.l.b16 %v3620
          %v3863 = vunpack.c.h.b16 %v3620
          %v3864 = vunpack.c.l.b16 %v3621
          %v3865 = vunpack.c.h.b16 %v3621
          %v3866 = vunpack.c.l.b16 %v3622
          %v3867 = vunpack.c.h.b16 %v3622
          %v3868 = vunpack.c.l.b16 %v3623
          %v3869 = vunpack.c.h.b16 %v3623
          %v3870 = vunpack.c.l.b16 %v3624
          %v3871 = vunpack.c.h.b16 %v3624
          %v3872 = vunpack.c.l.b16 %v3625
          %v3873 = vunpack.c.h.b16 %v3625
          %v3874 = vunpack.c.l.b16 %v3626
          %v3875 = vunpack.c.h.b16 %v3626
          %v3876 = vunpack.c.l.b16 %v3627
          %v3877 = vunpack.c.h.b16 %v3627
          %v3878 = vunpack.c.l.b16 %v3628
          %v3879 = vunpack.c.h.b16 %v3628
          %v3880 = vunpack.c.l.b16 %v3629
          %v3881 = vunpack.c.h.b16 %v3629
          %v3882 = vunpack.c.l.b16 %v3630
          %v3883 = vunpack.c.h.b16 %v3630
          %v3884 = vunpack.c.l.b16 %v3631
          %v3885 = vunpack.c.h.b16 %v3631
          %v3886 = vunpack.c.l.b16 %v3632
          %v3887 = vunpack.c.h.b16 %v3632
          %v3888 = vunpack.c.l.b16 %v3633
          %v3889 = vunpack.c.h.b16 %v3633
          %v3890 = vunpack.c.l.b16 %v3634
          %v3891 = vunpack.c.h.b16 %v3634
          %v3892 = vunpack.c.l.b16 %v3635
          %v3893 = vunpack.c.h.b16 %v3635
          %v3894 = vunpack.c.l.b16 %v3636
          %v3895 = vunpack.c.h.b16 %v3636
          %v3896 = vpack.c.b16 %v3834, %v3832
          %v3897 = vpack.c.b16 %v3835, %v3833
          %v3898 = vpack.c.b16 %v3838, %v3836
          %v3899 = vpack.c.b16 %v3839, %v3837
          %v3900 = vpack.c.b16 %v3842, %v3840
          %v3901 = vpack.c.b16 %v3843, %v3841
          %v3902 = vpack.c.b16 %v3846, %v3844
          %v3903 = vpack.c.b16 %v3847, %v3845
          %v3904 = vpack.c.b16 %v3850, %v3848
          %v3905 = vpack.c.b16 %v3851, %v3849
          %v3906 = vpack.c.b16 %v3854, %v3852
          %v3907 = vpack.c.b16 %v3855, %v3853
          %v3908 = vpack.c.b16 %v3858, %v3856
          %v3909 = vpack.c.b16 %v3859, %v3857
          %v3910 = vpack.c.b16 %v3862, %v3860
          %v3911 = vpack.c.b16 %v3863, %v3861
          %v3912 = vpack.c.b16 %v3866, %v3864
          %v3913 = vpack.c.b16 %v3867, %v3865
          %v3914 = vpack.c.b16 %v3870, %v3868
          %v3915 = vpack.c.b16 %v3871, %v3869
          %v3916 = vpack.c.b16 %v3874, %v3872
          %v3917 = vpack.c.b16 %v3875, %v3873
          %v3918 = vpack.c.b16 %v3878, %v3876
          %v3919 = vpack.c.b16 %v3879, %v3877
          %v3920 = vpack.c.b16 %v3882, %v3880
          %v3921 = vpack.c.b16 %v3883, %v3881
          %v3922 = vpack.c.b16 %v3886, %v3884
          %v3923 = vpack.c.b16 %v3887, %v3885
          %v3924 = vpack.c.b16 %v3890, %v3888
          %v3925 = vpack.c.b16 %v3891, %v3889
          %v3926 = vpack.c.b16 %v3894, %v3892
          %v3927 = vpack.c.b16 %v3895, %v3893
          %3960 = vmatprep.subr.bf16.mxu0 %v3897
          %3961 = vmatpush1.bf16.msra.mxu0 %v3896
          %3962 = vmatprep.subr.bf16.mxu0 %v3899
          %3963 = vmatpush1.bf16.msra.mxu0 %v3898
          %3964 = vmatprep.subr.bf16.mxu0 %v3901
          %3965 = vmatpush1.bf16.msra.mxu0 %v3900
          %3966 = vmatprep.subr.bf16.mxu0 %v3903
          %3967 = vmatpush1.bf16.msra.mxu0 %v3902
          %3968 = vmatprep.subr.bf16.mxu0 %v3905
          %3969 = vmatpush1.bf16.msra.mxu0 %v3904
          %3970 = vmatprep.subr.bf16.mxu0 %v3907
          %3971 = vmatpush1.bf16.msra.mxu0 %v3906
          %3972 = vmatprep.subr.bf16.mxu0 %v3909
          %3973 = vmatpush1.bf16.msra.mxu0 %v3908
          %3974 = vmatprep.subr.bf16.mxu0 %v3911
          %3975 = vmatpush1.bf16.msra.mxu0 %v3910
          %3976 = vmatprep.subr.bf16.mxu0 %v3913
          %3977 = vmatpush1.bf16.msra.mxu0 %v3912
          %3978 = vmatprep.subr.bf16.mxu0 %v3915
          %3979 = vmatpush1.bf16.msra.mxu0 %v3914
          %3980 = vmatprep.subr.bf16.mxu0 %v3917
          %3981 = vmatpush1.bf16.msra.mxu0 %v3916
          %3982 = vmatprep.subr.bf16.mxu0 %v3919
          %3983 = vmatpush1.bf16.msra.mxu0 %v3918
          %3984 = vmatprep.subr.bf16.mxu0 %v3921
          %3985 = vmatpush1.bf16.msra.mxu0 %v3920
          %3986 = vmatprep.subr.bf16.mxu0 %v3923
          %3987 = vmatpush1.bf16.msra.mxu0 %v3922
          %3988 = vmatprep.subr.bf16.mxu0 %v3925
          %3989 = vmatpush1.bf16.msra.mxu0 %v3924
          %3990 = vmatprep.subr.bf16.mxu0 %v3927
          %3991 = vmatpush1.bf16.msra.mxu0 %v3926
          %3992 = vmatprep.mubr.bf16.mxu0 %v3793
          %3993 = vmatmul.mubr.bf16.gmra.mrb[0].mxu0 %v3792
          %v3994 = vpop.f32.mrb[0].mxu0
          %v3995 = vadd.f32 0.0, %v3994
          %v3996 = vpop.f32.mrb[0].mxu0
          %v3997 = vadd.f32 0.0, %v3996
          %v3998 = vpop.f32.mrb[0].mxu0
          %v3999 = vadd.f32 0.0, %v3998
          %v4000 = vpop.f32.mrb[0].mxu0
          %v4001 = vadd.f32 0.0, %v4000
          %4002 = vmatprep.mubr.bf16.mxu0 %v3795
          %4003 = vmatmul.mubr.bf16.gmra.mrb[0].mxu0 %v3794
          %v4004 = vpop.f32.mrb[0].mxu0
          %v4005 = vadd.f32 0.0, %v4004
          %v4006 = vpop.f32.mrb[0].mxu0
          %v4007 = vadd.f32 0.0, %v4006
          %v4008 = vpop.f32.mrb[0].mxu0
          %v4009 = vadd.f32 0.0, %v4008
          %v4010 = vpop.f32.mrb[0].mxu0
          %v4011 = vadd.f32 0.0, %v4010
          %4012 = vdwg.mxu0
          %v4017 = vunpack.c.l.b16 %v3496
          %v4018 = vunpack.c.l.b16 %v3497
          %v4019 = vunpack.c.l.b16 %v3534
          %v4020 = vunpack.c.l.b16 %v3535
          %v4021 = vsel %vm3741, %v3689, %v4017
          %v4022 = vsel %vm3743, %v3691, %v4021
          %v4023 = vsel %vm3745, %v3693, %v4022
          %v4024 = vsel %vm3747, %v3695, %v4023
          %v4025 = vsel %vm3749, %v3697, %v4024
          %v4026 = vsel %vm3751, %v3699, %v4025
          %v4027 = vsel %vm3753, %v3701, %v4026
          %v4028 = vsel %vm3741, %v3690, %v4018
          %v4029 = vsel %vm3743, %v3692, %v4028
          %v4030 = vsel %vm3745, %v3694, %v4029
          %v4031 = vsel %vm3747, %v3696, %v4030
          %v4032 = vsel %vm3749, %v3698, %v4031
          %v4033 = vsel %vm3751, %v3700, %v4032
          %v4034 = vsel %vm3753, %v3702, %v4033
          %v4035 = vsel %vm3741, %v3705, %v3703
          %v4036 = vsel %vm3743, %v3707, %v4035
          %v4037 = vsel %vm3745, %v3709, %v4036
          %v4038 = vsel %vm3747, %v3711, %v4037
          %v4039 = vsel %vm3749, %v4019, %v4038
          %v4040 = vsel %vm3751, %v3715, %v4039
          %v4041 = vsel %vm3753, %v3717, %v4040
          %v4042 = vsel %vm3741, %v3706, %v3704
          %v4043 = vsel %vm3743, %v3708, %v4042
          %v4044 = vsel %vm3745, %v3710, %v4043
          %v4045 = vsel %vm3747, %v3712, %v4044
          %v4046 = vsel %vm3749, %v4020, %v4045
          %v4047 = vsel %vm3751, %v3716, %v4046
          %v4048 = vsel %vm3753, %v3718, %v4047
          %v4049 = vsel %vm3741, %v3721, %v3719
          %v4050 = vsel %vm3743, %v3723, %v4049
          %v4051 = vsel %vm3745, %v3725, %v4050
          %v4052 = vsel %vm3747, %v3727, %v4051
          %v4053 = vsel %vm3749, %v3729, %v4052
          %v4054 = vsel %vm3751, %v3731, %v4053
          %v4055 = vsel %vm3753, %v3733, %v4054
          %v4056 = vsel %vm3741, %v3722, %v3720
          %v4057 = vsel %vm3743, %v3724, %v4056
          %v4058 = vsel %vm3745, %v3726, %v4057
          %v4059 = vsel %vm3747, %v3728, %v4058
          %v4060 = vsel %vm3749, %v3730, %v4059
          %v4061 = vsel %vm3751, %v3732, %v4060
          %v4062 = vsel %vm3753, %v3734, %v4061
          %v4063 = vsel %vm3741, %v3737, %v3735
          %v4064 = vsel %vm3741, %v3738, %v3736
          %v4065 = vpack.c.b16 %v4041, %v4027
          %v4066 = vpack.c.b16 %v4048, %v4034
          %v4067 = vpack.c.b16 %v4063, %v4055
          %v4068 = vpack.c.b16 %v4064, %v4062
          %v4105 = vunpack.c.l.b16 %v3572
          %v4106 = vunpack.c.h.b16 %v3572
          %v4107 = vunpack.c.l.b16 %v3573
          %v4108 = vunpack.c.h.b16 %v3573
          %v4109 = vunpack.c.l.b16 %v3574
          %v4110 = vunpack.c.h.b16 %v3574
          %v4111 = vunpack.c.l.b16 %v3575
          %v4112 = vunpack.c.h.b16 %v3575
          %v4113 = vunpack.c.l.b16 %v3576
          %v4114 = vunpack.c.h.b16 %v3576
          %v4115 = vunpack.c.l.b16 %v3577
          %v4116 = vunpack.c.h.b16 %v3577
          %v4117 = vunpack.c.l.b16 %v3578
          %v4118 = vunpack.c.h.b16 %v3578
          %v4119 = vunpack.c.l.b16 %v3579
          %v4120 = vunpack.c.h.b16 %v3579
          %v4121 = vunpack.c.l.b16 %v3580
          %v4122 = vunpack.c.h.b16 %v3580
          %v4123 = vunpack.c.l.b16 %v3581
          %v4124 = vunpack.c.h.b16 %v3581
          %v4125 = vunpack.c.l.b16 %v3582
          %v4126 = vunpack.c.h.b16 %v3582
          %v4127 = vunpack.c.l.b16 %v3583
          %v4128 = vunpack.c.h.b16 %v3583
          %v4129 = vunpack.c.l.b16 %v3584
          %v4130 = vunpack.c.h.b16 %v3584
          %v4131 = vunpack.c.l.b16 %v3585
          %v4132 = vunpack.c.h.b16 %v3585
          %v4133 = vunpack.c.l.b16 %v3586
          %v4134 = vunpack.c.h.b16 %v3586
          %v4135 = vunpack.c.l.b16 %v3587
          %v4136 = vunpack.c.h.b16 %v3587
          %v4137 = vunpack.c.l.b16 %v3588
          %v4138 = vunpack.c.h.b16 %v3588
          %v4139 = vunpack.c.l.b16 %v3589
          %v4140 = vunpack.c.h.b16 %v3589
          %v4141 = vunpack.c.l.b16 %v3590
          %v4142 = vunpack.c.h.b16 %v3590
          %v4143 = vunpack.c.l.b16 %v3591
          %v4144 = vunpack.c.h.b16 %v3591
          %v4145 = vunpack.c.l.b16 %v3592
          %v4146 = vunpack.c.h.b16 %v3592
          %v4147 = vunpack.c.l.b16 %v3593
          %v4148 = vunpack.c.h.b16 %v3593
          %v4149 = vunpack.c.l.b16 %v3594
          %v4150 = vunpack.c.h.b16 %v3594
          %v4151 = vunpack.c.l.b16 %v3595
          %v4152 = vunpack.c.h.b16 %v3595
          %v4153 = vunpack.c.l.b16 %v3596
          %v4154 = vunpack.c.h.b16 %v3596
          %v4155 = vunpack.c.l.b16 %v3597
          %v4156 = vunpack.c.h.b16 %v3597
          %v4157 = vunpack.c.l.b16 %v3598
          %v4158 = vunpack.c.h.b16 %v3598
          %v4159 = vunpack.c.l.b16 %v3599
          %v4160 = vunpack.c.h.b16 %v3599
          %v4161 = vunpack.c.l.b16 %v3600
          %v4162 = vunpack.c.h.b16 %v3600
          %v4163 = vunpack.c.l.b16 %v3601
          %v4164 = vunpack.c.h.b16 %v3601
          %v4165 = vunpack.c.l.b16 %v3602
          %v4166 = vunpack.c.h.b16 %v3602
          %v4167 = vunpack.c.l.b16 %v3603
          %v4168 = vunpack.c.h.b16 %v3603
          %v4169 = vpack.c.b16 %v4107, %v4105
          %v4170 = vpack.c.b16 %v4108, %v4106
          %v4171 = vpack.c.b16 %v4111, %v4109
          %v4172 = vpack.c.b16 %v4112, %v4110
          %v4173 = vpack.c.b16 %v4115, %v4113
          %v4174 = vpack.c.b16 %v4116, %v4114
          %v4175 = vpack.c.b16 %v4119, %v4117
          %v4176 = vpack.c.b16 %v4120, %v4118
          %v4177 = vpack.c.b16 %v4123, %v4121
          %v4178 = vpack.c.b16 %v4124, %v4122
          %v4179 = vpack.c.b16 %v4127, %v4125
          %v4180 = vpack.c.b16 %v4128, %v4126
          %v4181 = vpack.c.b16 %v4131, %v4129
          %v4182 = vpack.c.b16 %v4132, %v4130
          %v4183 = vpack.c.b16 %v4135, %v4133
          %v4184 = vpack.c.b16 %v4136, %v4134
          %v4185 = vpack.c.b16 %v4139, %v4137
          %v4186 = vpack.c.b16 %v4140, %v4138
          %v4187 = vpack.c.b16 %v4143, %v4141
          %v4188 = vpack.c.b16 %v4144, %v4142
          %v4189 = vpack.c.b16 %v4147, %v4145
          %v4190 = vpack.c.b16 %v4148, %v4146
          %v4191 = vpack.c.b16 %v4151, %v4149
          %v4192 = vpack.c.b16 %v4152, %v4150
          %v4193 = vpack.c.b16 %v4155, %v4153
          %v4194 = vpack.c.b16 %v4156, %v4154
          %v4195 = vpack.c.b16 %v4159, %v4157
          %v4196 = vpack.c.b16 %v4160, %v4158
          %v4197 = vpack.c.b16 %v4163, %v4161
          %v4198 = vpack.c.b16 %v4164, %v4162
          %v4199 = vpack.c.b16 %v4167, %v4165
          %v4200 = vpack.c.b16 %v4168, %v4166
          %4233 = vmatprep.subr.bf16.mxu0 %v4170
          %4234 = vmatpush1.bf16.msra.mxu0 %v4169
          %4235 = vmatprep.subr.bf16.mxu0 %v4172
          %4236 = vmatpush1.bf16.msra.mxu0 %v4171
          %4237 = vmatprep.subr.bf16.mxu0 %v4174
          %4238 = vmatpush1.bf16.msra.mxu0 %v4173
          %4239 = vmatprep.subr.bf16.mxu0 %v4176
          %4240 = vmatpush1.bf16.msra.mxu0 %v4175
          %4241 = vmatprep.subr.bf16.mxu0 %v4178
          %4242 = vmatpush1.bf16.msra.mxu0 %v4177
          %4243 = vmatprep.subr.bf16.mxu0 %v4180
          %4244 = vmatpush1.bf16.msra.mxu0 %v4179
          %4245 = vmatprep.subr.bf16.mxu0 %v4182
          %4246 = vmatpush1.bf16.msra.mxu0 %v4181
          %4247 = vmatprep.subr.bf16.mxu0 %v4184
          %4248 = vmatpush1.bf16.msra.mxu0 %v4183
          %4249 = vmatprep.subr.bf16.mxu0 %v4186
          %4250 = vmatpush1.bf16.msra.mxu0 %v4185
          %4251 = vmatprep.subr.bf16.mxu0 %v4188
          %4252 = vmatpush1.bf16.msra.mxu0 %v4187
          %4253 = vmatprep.subr.bf16.mxu0 %v4190
          %4254 = vmatpush1.bf16.msra.mxu0 %v4189
          %4255 = vmatprep.subr.bf16.mxu0 %v4192
          %4256 = vmatpush1.bf16.msra.mxu0 %v4191
          %4257 = vmatprep.subr.bf16.mxu0 %v4194
          %4258 = vmatpush1.bf16.msra.mxu0 %v4193
          %4259 = vmatprep.subr.bf16.mxu0 %v4196
          %4260 = vmatpush1.bf16.msra.mxu0 %v4195
          %4261 = vmatprep.subr.bf16.mxu0 %v4198
          %4262 = vmatpush1.bf16.msra.mxu0 %v4197
          %4263 = vmatprep.subr.bf16.mxu0 %v4200
          %4264 = vmatpush1.bf16.msra.mxu0 %v4199
          %4265 = vmatprep.mubr.bf16.mxu0 %v4066
          %4266 = vmatmul.mubr.bf16.gmra.mrb[0].mxu0 %v4065
          %v4267 = vpop.f32.mrb[0].mxu0
          %v4268 = vadd.f32 %v3995, %v4267
          %v4269 = vpop.f32.mrb[0].mxu0
          %v4270 = vadd.f32 %v3997, %v4269
          %v4271 = vpop.f32.mrb[0].mxu0
          %v4272 = vadd.f32 %v3999, %v4271
          %v4273 = vpop.f32.mrb[0].mxu0
          %v4274 = vadd.f32 %v4001, %v4273
          %4275 = vmatprep.mubr.bf16.mxu0 %v4068
          %4276 = vmatmul.mubr.bf16.gmra.mrb[0].mxu0 %v4067
          %v4277 = vpop.f32.mrb[0].mxu0
          %v4278 = vadd.f32 %v4005, %v4277
          %v4279 = vpop.f32.mrb[0].mxu0
          %v4280 = vadd.f32 %v4007, %v4279
          %v4281 = vpop.f32.mrb[0].mxu0
          %v4282 = vadd.f32 %v4009, %v4281
          %v4283 = vpop.f32.mrb[0].mxu0
          %v4284 = vadd.f32 %v4011, %v4283
          %4285 = vdwg.mxu0
          %s4286 = scalar_lea.vmem [#allocation9], 512
          %v4287 = vld [vmem:[%s4286] sm:$0xff]
          %v4288 = vld [vmem:[%s4286 + $0x8] sm:$0xff]
          %v4289 = vld [vmem:[%s4286 + $0x10] sm:$0xff]
          %v4290 = vld [vmem:[%s4286 + $0x18] sm:$0xff]
          %v4291 = vld [vmem:[%s4286 + $0x20] sm:$0xff]
          %v4292 = vld [vmem:[%s4286 + $0x28] sm:$0xff]
          %v4293 = vld [vmem:[%s4286 + $0x30] sm:$0xff]
          %v4294 = vld [vmem:[%s4286 + $0x38] sm:$0xff]
          %v4295 = vld [vmem:[%s4286 + $0x40] sm:$0xff]
          %v4296 = vld [vmem:[%s4286 + $0x48] sm:$0xff]
          %v4297 = vld [vmem:[%s4286 + $0x50] sm:$0xff]
          %v4298 = vld [vmem:[%s4286 + $0x58] sm:$0xff]
          %v4299 = vld [vmem:[%s4286 + $0x60] sm:$0xff]
          %v4300 = vld [vmem:[%s4286 + $0x68] sm:$0xff]
          %v4301 = vld [vmem:[%s4286 + $0x70] sm:$0xff]
          %v4302 = vld [vmem:[%s4286 + $0x78] sm:$0xff]
          %v4303 = vld [vmem:[%s4286 + $0x80] sm:$0xff]
          %v4304 = vld [vmem:[%s4286 + $0x88] sm:$0xff]
          %v4305 = vld [vmem:[%s4286 + $0x90] sm:$0xff]
          %v4306 = vld [vmem:[%s4286 + $0x98] sm:$0xff]
          %v4307 = vld [vmem:[%s4286 + $0xa0] sm:$0xff]
          %v4308 = vld [vmem:[%s4286 + $0xa8] sm:$0xff]
          %v4309 = vld [vmem:[%s4286 + $0xb0] sm:$0xff]
          %v4310 = vld [vmem:[%s4286 + $0xb8] sm:$0xff]
          %v4311 = vld [vmem:[%s4286 + $0xc0] sm:$0xff]
          %v4312 = vld [vmem:[%s4286 + $0xc8] sm:$0xff]
          %v4313 = vld [vmem:[%s4286 + $0xd0] sm:$0xff]
          %v4314 = vld [vmem:[%s4286 + $0xd8] sm:$0xff]
          %v4315 = vld [vmem:[%s4286 + $0xe0] sm:$0xff]
          %v4316 = vld [vmem:[%s4286 + $0xe8] sm:$0xff]
          %v4317 = vld [vmem:[%s4286 + $0xf0] sm:$0xff]
          %v4318 = vld [vmem:[%s4286 + $0xf8] sm:$0xff]
          %v4323 = vunpack.c.l.b16 %v3524
          %v4324 = vunpack.c.l.b16 %v3525
          %v4325 = vunpack.c.l.b16 %v3562
          %v4326 = vunpack.c.l.b16 %v3563
          %v4327 = vsel %vm3741, %v3693, %v3691
          %v4328 = vsel %vm3743, %v3695, %v4327
          %v4329 = vsel %vm3745, %v3697, %v4328
          %v4330 = vsel %vm3747, %v3699, %v4329
          %v4331 = vsel %vm3749, %v3701, %v4330
          %v4332 = vsel %vm3751, %v3703, %v4331
          %v4333 = vsel %vm3753, %v3705, %v4332
          %v4334 = vsel %vm3741, %v3694, %v3692
          %v4335 = vsel %vm3743, %v3696, %v4334
          %v4336 = vsel %vm3745, %v3698, %v4335
          %v4337 = vsel %vm3747, %v3700, %v4336
          %v4338 = vsel %vm3749, %v3702, %v4337
          %v4339 = vsel %vm3751, %v3704, %v4338
          %v4340 = vsel %vm3753, %v3706, %v4339
          %v4341 = vsel %vm3741, %v3709, %v3707
          %v4342 = vsel %vm3743, %v3711, %v4341
          %v4343 = vsel %vm3745, %v3713, %v4342
          %v4344 = vsel %vm3747, %v4323, %v4343
          %v4345 = vsel %vm3749, %v3717, %v4344
          %v4346 = vsel %vm3751, %v3719, %v4345
          %v4347 = vsel %vm3753, %v3721, %v4346
          %v4348 = vsel %vm3741, %v3710, %v3708
          %v4349 = vsel %vm3743, %v3712, %v4348
          %v4350 = vsel %vm3745, %v3714, %v4349
          %v4351 = vsel %vm3747, %v4324, %v4350
          %v4352 = vsel %vm3749, %v3718, %v4351
          %v4353 = vsel %vm3751, %v3720, %v4352
          %v4354 = vsel %vm3753, %v3722, %v4353
          %v4355 = vsel %vm3741, %v3725, %v3723
          %v4356 = vsel %vm3743, %v3727, %v4355
          %v4357 = vsel %vm3745, %v3729, %v4356
          %v4358 = vsel %vm3747, %v3731, %v4357
          %v4359 = vsel %vm3749, %v3733, %v4358
          %v4360 = vsel %vm3751, %v3735, %v4359
          %v4361 = vsel %vm3753, %v3737, %v4360
          %v4362 = vsel %vm3741, %v3726, %v3724
          %v4363 = vsel %vm3743, %v3728, %v4362
          %v4364 = vsel %vm3745, %v3730, %v4363
          %v4365 = vsel %vm3747, %v3732, %v4364
          %v4366 = vsel %vm3749, %v3734, %v4365
          %v4367 = vsel %vm3751, %v3736, %v4366
          %v4368 = vsel %vm3753, %v3738, %v4367
          %v4369 = vsel %vm3741, %v4325, %v3739
          %v4370 = vsel %vm3741, %v4326, %v3740
          %v4371 = vpack.c.b16 %v4347, %v4333
          %v4372 = vpack.c.b16 %v4354, %v4340
          %v4373 = vpack.c.b16 %v4369, %v4361
          %v4374 = vpack.c.b16 %v4370, %v4368
          %v4411 = vunpack.c.l.b16 %v4287
          %v4412 = vunpack.c.h.b16 %v4287
          %v4413 = vunpack.c.l.b16 %v4288
          %v4414 = vunpack.c.h.b16 %v4288
          %v4415 = vunpack.c.l.b16 %v4289
          %v4416 = vunpack.c.h.b16 %v4289
          %v4417 = vunpack.c.l.b16 %v4290
          %v4418 = vunpack.c.h.b16 %v4290
          %v4419 = vunpack.c.l.b16 %v4291
          %v4420 = vunpack.c.h.b16 %v4291
          %v4421 = vunpack.c.l.b16 %v4292
          %v4422 = vunpack.c.h.b16 %v4292
          %v4423 = vunpack.c.l.b16 %v4293
          %v4424 = vunpack.c.h.b16 %v4293
          %v4425 = vunpack.c.l.b16 %v4294
          %v4426 = vunpack.c.h.b16 %v4294
          %v4427 = vunpack.c.l.b16 %v4295
          %v4428 = vunpack.c.h.b16 %v4295
          %v4429 = vunpack.c.l.b16 %v4296
          %v4430 = vunpack.c.h.b16 %v4296
          %v4431 = vunpack.c.l.b16 %v4297
          %v4432 = vunpack.c.h.b16 %v4297
          %v4433 = vunpack.c.l.b16 %v4298
          %v4434 = vunpack.c.h.b16 %v4298
          %v4435 = vunpack.c.l.b16 %v4299
          %v4436 = vunpack.c.h.b16 %v4299
          %v4437 = vunpack.c.l.b16 %v4300
          %v4438 = vunpack.c.h.b16 %v4300
          %v4439 = vunpack.c.l.b16 %v4301
          %v4440 = vunpack.c.h.b16 %v4301
          %v4441 = vunpack.c.l.b16 %v4302
          %v4442 = vunpack.c.h.b16 %v4302
          %v4443 = vunpack.c.l.b16 %v4303
          %v4444 = vunpack.c.h.b16 %v4303
          %v4445 = vunpack.c.l.b16 %v4304
          %v4446 = vunpack.c.h.b16 %v4304
          %v4447 = vunpack.c.l.b16 %v4305
          %v4448 = vunpack.c.h.b16 %v4305
          %v4449 = vunpack.c.l.b16 %v4306
          %v4450 = vunpack.c.h.b16 %v4306
          %v4451 = vunpack.c.l.b16 %v4307
          %v4452 = vunpack.c.h.b16 %v4307
          %v4453 = vunpack.c.l.b16 %v4308
          %v4454 = vunpack.c.h.b16 %v4308
          %v4455 = vunpack.c.l.b16 %v4309
          %v4456 = vunpack.c.h.b16 %v4309
          %v4457 = vunpack.c.l.b16 %v4310
          %v4458 = vunpack.c.h.b16 %v4310
          %v4459 = vunpack.c.l.b16 %v4311
          %v4460 = vunpack.c.h.b16 %v4311
          %v4461 = vunpack.c.l.b16 %v4312
          %v4462 = vunpack.c.h.b16 %v4312
          %v4463 = vunpack.c.l.b16 %v4313
          %v4464 = vunpack.c.h.b16 %v4313
          %v4465 = vunpack.c.l.b16 %v4314
          %v4466 = vunpack.c.h.b16 %v4314
          %v4467 = vunpack.c.l.b16 %v4315
          %v4468 = vunpack.c.h.b16 %v4315
          %v4469 = vunpack.c.l.b16 %v4316
          %v4470 = vunpack.c.h.b16 %v4316
          %v4471 = vunpack.c.l.b16 %v4317
          %v4472 = vunpack.c.h.b16 %v4317
          %v4473 = vunpack.c.l.b16 %v4318
          %v4474 = vunpack.c.h.b16 %v4318
          %v4475 = vpack.c.b16 %v4413, %v4411
          %v4476 = vpack.c.b16 %v4414, %v4412
          %v4477 = vpack.c.b16 %v4417, %v4415
          %v4478 = vpack.c.b16 %v4418, %v4416
          %v4479 = vpack.c.b16 %v4421, %v4419
          %v4480 = vpack.c.b16 %v4422, %v4420
          %v4481 = vpack.c.b16 %v4425, %v4423
          %v4482 = vpack.c.b16 %v4426, %v4424
          %v4483 = vpack.c.b16 %v4429, %v4427
          %v4484 = vpack.c.b16 %v4430, %v4428
          %v4485 = vpack.c.b16 %v4433, %v4431
          %v4486 = vpack.c.b16 %v4434, %v4432
          %v4487 = vpack.c.b16 %v4437, %v4435
          %v4488 = vpack.c.b16 %v4438, %v4436
          %v4489 = vpack.c.b16 %v4441, %v4439
          %v4490 = vpack.c.b16 %v4442, %v4440
          %v4491 = vpack.c.b16 %v4445, %v4443
          %v4492 = vpack.c.b16 %v4446, %v4444
          %v4493 = vpack.c.b16 %v4449, %v4447
          %v4494 = vpack.c.b16 %v4450, %v4448
          %v4495 = vpack.c.b16 %v4453, %v4451
          %v4496 = vpack.c.b16 %v4454, %v4452
          %v4497 = vpack.c.b16 %v4457, %v4455
          %v4498 = vpack.c.b16 %v4458, %v4456
          %v4499 = vpack.c.b16 %v4461, %v4459
          %v4500 = vpack.c.b16 %v4462, %v4460
          %v4501 = vpack.c.b16 %v4465, %v4463
          %v4502 = vpack.c.b16 %v4466, %v4464
          %v4503 = vpack.c.b16 %v4469, %v4467
          %v4504 = vpack.c.b16 %v4470, %v4468
          %v4505 = vpack.c.b16 %v4473, %v4471
          %v4506 = vpack.c.b16 %v4474, %v4472
          %4539 = vmatprep.subr.bf16.mxu0 %v4476
          %4540 = vmatpush1.bf16.msra.mxu0 %v4475
          %4541 = vmatprep.subr.bf16.mxu0 %v4478
          %4542 = vmatpush1.bf16.msra.mxu0 %v4477
          %4543 = vmatprep.subr.bf16.mxu0 %v4480
          %4544 = vmatpush1.bf16.msra.mxu0 %v4479
          %4545 = vmatprep.subr.bf16.mxu0 %v4482
          %4546 = vmatpush1.bf16.msra.mxu0 %v4481
          %4547 = vmatprep.subr.bf16.mxu0 %v4484
          %4548 = vmatpush1.bf16.msra.mxu0 %v4483
          %4549 = vmatprep.subr.bf16.mxu0 %v4486
          %4550 = vmatpush1.bf16.msra.mxu0 %v4485
          %4551 = vmatprep.subr.bf16.mxu0 %v4488
          %4552 = vmatpush1.bf16.msra.mxu0 %v4487
          %4553 = vmatprep.subr.bf16.mxu0 %v4490
          %4554 = vmatpush1.bf16.msra.mxu0 %v4489
          %4555 = vmatprep.subr.bf16.mxu0 %v4492
          %4556 = vmatpush1.bf16.msra.mxu0 %v4491
          %4557 = vmatprep.subr.bf16.mxu0 %v4494
          %4558 = vmatpush1.bf16.msra.mxu0 %v4493
          %4559 = vmatprep.subr.bf16.mxu0 %v4496
          %4560 = vmatpush1.bf16.msra.mxu0 %v4495
          %4561 = vmatprep.subr.bf16.mxu0 %v4498
          %4562 = vmatpush1.bf16.msra.mxu0 %v4497
          %4563 = vmatprep.subr.bf16.mxu0 %v4500
          %4564 = vmatpush1.bf16.msra.mxu0 %v4499
          %4565 = vmatprep.subr.bf16.mxu0 %v4502
          %4566 = vmatpush1.bf16.msra.mxu0 %v4501
          %4567 = vmatprep.subr.bf16.mxu0 %v4504
          %4568 = vmatpush1.bf16.msra.mxu0 %v4503
          %4569 = vmatprep.subr.bf16.mxu0 %v4506
          %4570 = vmatpush1.bf16.msra.mxu0 %v4505
          %4571 = vmatprep.mubr.bf16.mxu0 %v4372
          %4572 = vmatmul.mubr.bf16.gmra.mrb[0].mxu0 %v4371
          %v4573 = vpop.f32.mrb[0].mxu0
          %v4574 = vadd.f32 0.0, %v4573
          %v4575 = vpop.f32.mrb[0].mxu0
          %v4576 = vadd.f32 0.0, %v4575
          %v4577 = vpop.f32.mrb[0].mxu0
          %v4578 = vadd.f32 0.0, %v4577
          %v4579 = vpop.f32.mrb[0].mxu0
          %v4580 = vadd.f32 0.0, %v4579
          %4581 = vmatprep.mubr.bf16.mxu0 %v4374
          %4582 = vmatmul.mubr.bf16.gmra.mrb[0].mxu0 %v4373
          %v4583 = vpop.f32.mrb[0].mxu0
          %v4584 = vadd.f32 0.0, %v4583
          %v4585 = vpop.f32.mrb[0].mxu0
          %v4586 = vadd.f32 0.0, %v4585
          %v4587 = vpop.f32.mrb[0].mxu0
          %v4588 = vadd.f32 0.0, %v4587
          %v4589 = vpop.f32.mrb[0].mxu0
          %v4590 = vadd.f32 0.0, %v4589
          %4591 = vdwg.mxu0
          %v4592 = vadd.f32 %v4268, %v4574
          %v4593 = vadd.f32 %v4270, %v4576
          %v4594 = vadd.f32 %v4272, %v4578
          %v4595 = vadd.f32 %v4274, %v4580
          %v4596 = vadd.f32 %v4278, %v4584
          %v4597 = vadd.f32 %v4280, %v4586
          %v4598 = vadd.f32 %v4282, %v4588
          %v4599 = vadd.f32 %v4284, %v4590
          %s4600 = scalar_lea.vmem [#allocation9], 768
          %v4601 = vld [vmem:[%s4600] sm:$0xff]
          %v4602 = vld [vmem:[%s4600 + $0x8] sm:$0xff]
          %v4603 = vld [vmem:[%s4600 + $0x10] sm:$0xff]
          %v4604 = vld [vmem:[%s4600 + $0x18] sm:$0xff]
          %v4605 = vld [vmem:[%s4600 + $0x20] sm:$0xff]
          %v4606 = vld [vmem:[%s4600 + $0x28] sm:$0xff]
          %v4607 = vld [vmem:[%s4600 + $0x30] sm:$0xff]
          %v4608 = vld [vmem:[%s4600 + $0x38] sm:$0xff]
          %v4609 = vld [vmem:[%s4600 + $0x40] sm:$0xff]
          %v4610 = vld [vmem:[%s4600 + $0x48] sm:$0xff]
          %v4611 = vld [vmem:[%s4600 + $0x50] sm:$0xff]
          %v4612 = vld [vmem:[%s4600 + $0x58] sm:$0xff]
          %v4613 = vld [vmem:[%s4600 + $0x60] sm:$0xff]
          %v4614 = vld [vmem:[%s4600 + $0x68] sm:$0xff]
          %v4615 = vld [vmem:[%s4600 + $0x70] sm:$0xff]
          %v4616 = vld [vmem:[%s4600 + $0x78] sm:$0xff]
          %v4617 = vld [vmem:[%s4600 + $0x80] sm:$0xff]
          %v4618 = vld [vmem:[%s4600 + $0x88] sm:$0xff]
          %v4619 = vld [vmem:[%s4600 + $0x90] sm:$0xff]
          %v4620 = vld [vmem:[%s4600 + $0x98] sm:$0xff]
          %v4621 = vld [vmem:[%s4600 + $0xa0] sm:$0xff]
          %v4622 = vld [vmem:[%s4600 + $0xa8] sm:$0xff]
          %v4623 = vld [vmem:[%s4600 + $0xb0] sm:$0xff]
          %v4624 = vld [vmem:[%s4600 + $0xb8] sm:$0xff]
          %v4625 = vld [vmem:[%s4600 + $0xc0] sm:$0xff]
          %v4626 = vld [vmem:[%s4600 + $0xc8] sm:$0xff]
          %v4627 = vld [vmem:[%s4600 + $0xd0] sm:$0xff]
          %v4628 = vld [vmem:[%s4600 + $0xd8] sm:$0xff]
          %v4629 = vld [vmem:[%s4600 + $0xe0] sm:$0xff]
          %v4630 = vld [vmem:[%s4600 + $0xe8] sm:$0xff]
          %v4631 = vld [vmem:[%s4600 + $0xf0] sm:$0xff]
          %v4632 = vld [vmem:[%s4600 + $0xf8] sm:$0xff]
          %v4637 = vunpack.c.l.b16 %v3526
          %v4638 = vunpack.c.l.b16 %v3527
          %v4639 = vunpack.c.l.b16 %v3564
          %v4640 = vunpack.c.l.b16 %v3565
          %v4641 = vsel %vm3741, %v3695, %v3693
          %v4642 = vsel %vm3743, %v3697, %v4641
          %v4643 = vsel %vm3745, %v3699, %v4642
          %v4644 = vsel %vm3747, %v3701, %v4643
          %v4645 = vsel %vm3749, %v3703, %v4644
          %v4646 = vsel %vm3751, %v3705, %v4645
          %v4647 = vsel %vm3753, %v3707, %v4646
          %v4648 = vsel %vm3741, %v3696, %v3694
          %v4649 = vsel %vm3743, %v3698, %v4648
          %v4650 = vsel %vm3745, %v3700, %v4649
          %v4651 = vsel %vm3747, %v3702, %v4650
          %v4652 = vsel %vm3749, %v3704, %v4651
          %v4653 = vsel %vm3751, %v3706, %v4652
          %v4654 = vsel %vm3753, %v3708, %v4653
          %v4655 = vsel %vm3741, %v3711, %v3709
          %v4656 = vsel %vm3743, %v3713, %v4655
          %v4657 = vsel %vm3745, %v4323, %v4656
          %v4658 = vsel %vm3747, %v4637, %v4657
          %v4659 = vsel %vm3749, %v3719, %v4658
          %v4660 = vsel %vm3751, %v3721, %v4659
          %v4661 = vsel %vm3753, %v3723, %v4660
          %v4662 = vsel %vm3741, %v3712, %v3710
          %v4663 = vsel %vm3743, %v3714, %v4662
          %v4664 = vsel %vm3745, %v4324, %v4663
          %v4665 = vsel %vm3747, %v4638, %v4664
          %v4666 = vsel %vm3749, %v3720, %v4665
          %v4667 = vsel %vm3751, %v3722, %v4666
          %v4668 = vsel %vm3753, %v3724, %v4667
          %v4669 = vsel %vm3741, %v3727, %v3725
          %v4670 = vsel %vm3743, %v3729, %v4669
          %v4671 = vsel %vm3745, %v3731, %v4670
          %v4672 = vsel %vm3747, %v3733, %v4671
          %v4673 = vsel %vm3749, %v3735, %v4672
          %v4674 = vsel %vm3751, %v3737, %v4673
          %v4675 = vsel %vm3753, %v3739, %v4674
          %v4676 = vsel %vm3741, %v3728, %v3726
          %v4677 = vsel %vm3743, %v3730, %v4676
          %v4678 = vsel %vm3745, %v3732, %v4677
          %v4679 = vsel %vm3747, %v3734, %v4678
          %v4680 = vsel %vm3749, %v3736, %v4679
          %v4681 = vsel %vm3751, %v3738, %v4680
          %v4682 = vsel %vm3753, %v3740, %v4681
          %v4683 = vsel %vm3741, %v4639, %v4325
          %v4684 = vsel %vm3741, %v4640, %v4326
          %v4685 = vpack.c.b16 %v4661, %v4647
          %v4686 = vpack.c.b16 %v4668, %v4654
          %v4687 = vpack.c.b16 %v4683, %v4675
          %v4688 = vpack.c.b16 %v4684, %v4682
          %v4725 = vunpack.c.l.b16 %v4601
          %v4726 = vunpack.c.h.b16 %v4601
          %v4727 = vunpack.c.l.b16 %v4602
          %v4728 = vunpack.c.h.b16 %v4602
          %v4729 = vunpack.c.l.b16 %v4603
          %v4730 = vunpack.c.h.b16 %v4603
          %v4731 = vunpack.c.l.b16 %v4604
          %v4732 = vunpack.c.h.b16 %v4604
          %v4733 = vunpack.c.l.b16 %v4605
          %v4734 = vunpack.c.h.b16 %v4605
          %v4735 = vunpack.c.l.b16 %v4606
          %v4736 = vunpack.c.h.b16 %v4606
          %v4737 = vunpack.c.l.b16 %v4607
          %v4738 = vunpack.c.h.b16 %v4607
          %v4739 = vunpack.c.l.b16 %v4608
          %v4740 = vunpack.c.h.b16 %v4608
          %v4741 = vunpack.c.l.b16 %v4609
          %v4742 = vunpack.c.h.b16 %v4609
          %v4743 = vunpack.c.l.b16 %v4610
          %v4744 = vunpack.c.h.b16 %v4610
          %v4745 = vunpack.c.l.b16 %v4611
          %v4746 = vunpack.c.h.b16 %v4611
          %v4747 = vunpack.c.l.b16 %v4612
          %v4748 = vunpack.c.h.b16 %v4612
          %v4749 = vunpack.c.l.b16 %v4613
          %v4750 = vunpack.c.h.b16 %v4613
          %v4751 = vunpack.c.l.b16 %v4614
          %v4752 = vunpack.c.h.b16 %v4614
          %v4753 = vunpack.c.l.b16 %v4615
          %v4754 = vunpack.c.h.b16 %v4615
          %v4755 = vunpack.c.l.b16 %v4616
          %v4756 = vunpack.c.h.b16 %v4616
          %v4757 = vunpack.c.l.b16 %v4617
          %v4758 = vunpack.c.h.b16 %v4617
          %v4759 = vunpack.c.l.b16 %v4618
          %v4760 = vunpack.c.h.b16 %v4618
          %v4761 = vunpack.c.l.b16 %v4619
          %v4762 = vunpack.c.h.b16 %v4619
          %v4763 = vunpack.c.l.b16 %v4620
          %v4764 = vunpack.c.h.b16 %v4620
          %v4765 = vunpack.c.l.b16 %v4621
          %v4766 = vunpack.c.h.b16 %v4621
          %v4767 = vunpack.c.l.b16 %v4622
          %v4768 = vunpack.c.h.b16 %v4622
          %v4769 = vunpack.c.l.b16 %v4623
          %v4770 = vunpack.c.h.b16 %v4623
          %v4771 = vunpack.c.l.b16 %v4624
          %v4772 = vunpack.c.h.b16 %v4624
          %v4773 = vunpack.c.l.b16 %v4625
          %v4774 = vunpack.c.h.b16 %v4625
          %v4775 = vunpack.c.l.b16 %v4626
          %v4776 = vunpack.c.h.b16 %v4626
          %v4777 = vunpack.c.l.b16 %v4627
          %v4778 = vunpack.c.h.b16 %v4627
          %v4779 = vunpack.c.l.b16 %v4628
          %v4780 = vunpack.c.h.b16 %v4628
          %v4781 = vunpack.c.l.b16 %v4629
          %v4782 = vunpack.c.h.b16 %v4629
          %v4783 = vunpack.c.l.b16 %v4630
          %v4784 = vunpack.c.h.b16 %v4630
          %v4785 = vunpack.c.l.b16 %v4631
          %v4786 = vunpack.c.h.b16 %v4631
          %v4787 = vunpack.c.l.b16 %v4632
          %v4788 = vunpack.c.h.b16 %v4632
          %v4789 = vpack.c.b16 %v4727, %v4725
          %v4790 = vpack.c.b16 %v4728, %v4726
          %v4791 = vpack.c.b16 %v4731, %v4729
          %v4792 = vpack.c.b16 %v4732, %v4730
          %v4793 = vpack.c.b16 %v4735, %v4733
          %v4794 = vpack.c.b16 %v4736, %v4734
          %v4795 = vpack.c.b16 %v4739, %v4737
          %v4796 = vpack.c.b16 %v4740, %v4738
          %v4797 = vpack.c.b16 %v4743, %v4741
          %v4798 = vpack.c.b16 %v4744, %v4742
          %v4799 = vpack.c.b16 %v4747, %v4745
          %v4800 = vpack.c.b16 %v4748, %v4746
          %v4801 = vpack.c.b16 %v4751, %v4749
          %v4802 = vpack.c.b16 %v4752, %v4750
          %v4803 = vpack.c.b16 %v4755, %v4753
          %v4804 = vpack.c.b16 %v4756, %v4754
          %v4805 = vpack.c.b16 %v4759, %v4757
          %v4806 = vpack.c.b16 %v4760, %v4758
          %v4807 = vpack.c.b16 %v4763, %v4761
          %v4808 = vpack.c.b16 %v4764, %v4762
          %v4809 = vpack.c.b16 %v4767, %v4765
          %v4810 = vpack.c.b16 %v4768, %v4766
          %v4811 = vpack.c.b16 %v4771, %v4769
          %v4812 = vpack.c.b16 %v4772, %v4770
          %v4813 = vpack.c.b16 %v4775, %v4773
          %v4814 = vpack.c.b16 %v4776, %v4774
          %v4815 = vpack.c.b16 %v4779, %v4777
          %v4816 = vpack.c.b16 %v4780, %v4778
          %v4817 = vpack.c.b16 %v4783, %v4781
          %v4818 = vpack.c.b16 %v4784, %v4782
          %v4819 = vpack.c.b16 %v4787, %v4785
          %v4820 = vpack.c.b16 %v4788, %v4786
          %4853 = vmatprep.subr.bf16.mxu0 %v4790
          %4854 = vmatpush1.bf16.msra.mxu0 %v4789
          %4855 = vmatprep.subr.bf16.mxu0 %v4792
          %4856 = vmatpush1.bf16.msra.mxu0 %v4791
          %4857 = vmatprep.subr.bf16.mxu0 %v4794
          %4858 = vmatpush1.bf16.msra.mxu0 %v4793
          %4859 = vmatprep.subr.bf16.mxu0 %v4796
          %4860 = vmatpush1.bf16.msra.mxu0 %v4795
          %4861 = vmatprep.subr.bf16.mxu0 %v4798
          %4862 = vmatpush1.bf16.msra.mxu0 %v4797
          %4863 = vmatprep.subr.bf16.mxu0 %v4800
          %4864 = vmatpush1.bf16.msra.mxu0 %v4799
          %4865 = vmatprep.subr.bf16.mxu0 %v4802
          %4866 = vmatpush1.bf16.msra.mxu0 %v4801
          %4867 = vmatprep.subr.bf16.mxu0 %v4804
          %4868 = vmatpush1.bf16.msra.mxu0 %v4803
          %4869 = vmatprep.subr.bf16.mxu0 %v4806
          %4870 = vmatpush1.bf16.msra.mxu0 %v4805
          %4871 = vmatprep.subr.bf16.mxu0 %v4808
          %4872 = vmatpush1.bf16.msra.mxu0 %v4807
          %4873 = vmatprep.subr.bf16.mxu0 %v4810
          %4874 = vmatpush1.bf16.msra.mxu0 %v4809
          %4875 = vmatprep.subr.bf16.mxu0 %v4812
          %4876 = vmatpush1.bf16.msra.mxu0 %v4811
          %4877 = vmatprep.subr.bf16.mxu0 %v4814
          %4878 = vmatpush1.bf16.msra.mxu0 %v4813
          %4879 = vmatprep.subr.bf16.mxu0 %v4816
          %4880 = vmatpush1.bf16.msra.mxu0 %v4815
          %4881 = vmatprep.subr.bf16.mxu0 %v4818
          %4882 = vmatpush1.bf16.msra.mxu0 %v4817
          %4883 = vmatprep.subr.bf16.mxu0 %v4820
          %4884 = vmatpush1.bf16.msra.mxu0 %v4819
          %4885 = vmatprep.mubr.bf16.mxu0 %v4686
          %4886 = vmatmul.mubr.bf16.gmra.mrb[0].mxu0 %v4685
          %v4887 = vpop.f32.mrb[0].mxu0
          %v4888 = vadd.f32 0.0, %v4887
          %v4889 = vpop.f32.mrb[0].mxu0
          %v4890 = vadd.f32 0.0, %v4889
          %v4891 = vpop.f32.mrb[0].mxu0
          %v4892 = vadd.f32 0.0, %v4891
          %v4893 = vpop.f32.mrb[0].mxu0
          %v4894 = vadd.f32 0.0, %v4893
          %4895 = vmatprep.mubr.bf16.mxu0 %v4688
          %4896 = vmatmul.mubr.bf16.gmra.mrb[0].mxu0 %v4687
          %v4897 = vpop.f32.mrb[0].mxu0
          %v4898 = vadd.f32 0.0, %v4897
          %v4899 = vpop.f32.mrb[0].mxu0
          %v4900 = vadd.f32 0.0, %v4899
          %v4901 = vpop.f32.mrb[0].mxu0
          %v4902 = vadd.f32 0.0, %v4901
          %v4903 = vpop.f32.mrb[0].mxu0
          %v4904 = vadd.f32 0.0, %v4903
          %4905 = vdwg.mxu0
          %v4906 = vadd.f32 %v4592, %v4888
          %v4907 = vadd.f32 %v4593, %v4890
          %v4908 = vadd.f32 %v4594, %v4892
          %v4909 = vadd.f32 %v4595, %v4894
          %v4910 = vadd.f32 %v4596, %v4898
          %v4911 = vadd.f32 %v4597, %v4900
          %v4912 = vadd.f32 %v4598, %v4902
          %v4913 = vadd.f32 %v4599, %v4904
          %s4914 = scalar_lea.vmem [#allocation9], 1024
          %v4915 = vld [vmem:[%s4914] sm:$0xff]
          %v4916 = vld [vmem:[%s4914 + $0x8] sm:$0xff]
          %v4917 = vld [vmem:[%s4914 + $0x10] sm:$0xff]
          %v4918 = vld [vmem:[%s4914 + $0x18] sm:$0xff]
          %v4919 = vld [vmem:[%s4914 + $0x20] sm:$0xff]
          %v4920 = vld [vmem:[%s4914 + $0x28] sm:$0xff]
          %v4921 = vld [vmem:[%s4914 + $0x30] sm:$0xff]
          %v4922 = vld [vmem:[%s4914 + $0x38] sm:$0xff]
          %v4923 = vld [vmem:[%s4914 + $0x40] sm:$0xff]
          %v4924 = vld [vmem:[%s4914 + $0x48] sm:$0xff]
          %v4925 = vld [vmem:[%s4914 + $0x50] sm:$0xff]
          %v4926 = vld [vmem:[%s4914 + $0x58] sm:$0xff]
          %v4927 = vld [vmem:[%s4914 + $0x60] sm:$0xff]
          %v4928 = vld [vmem:[%s4914 + $0x68] sm:$0xff]
          %v4929 = vld [vmem:[%s4914 + $0x70] sm:$0xff]
          %v4930 = vld [vmem:[%s4914 + $0x78] sm:$0xff]
          %v4931 = vld [vmem:[%s4914 + $0x80] sm:$0xff]
          %v4932 = vld [vmem:[%s4914 + $0x88] sm:$0xff]
          %v4933 = vld [vmem:[%s4914 + $0x90] sm:$0xff]
          %v4934 = vld [vmem:[%s4914 + $0x98] sm:$0xff]
          %v4935 = vld [vmem:[%s4914 + $0xa0] sm:$0xff]
          %v4936 = vld [vmem:[%s4914 + $0xa8] sm:$0xff]
          %v4937 = vld [vmem:[%s4914 + $0xb0] sm:$0xff]
          %v4938 = vld [vmem:[%s4914 + $0xb8] sm:$0xff]
          %v4939 = vld [vmem:[%s4914 + $0xc0] sm:$0xff]
          %v4940 = vld [vmem:[%s4914 + $0xc8] sm:$0xff]
          %v4941 = vld [vmem:[%s4914 + $0xd0] sm:$0xff]
          %v4942 = vld [vmem:[%s4914 + $0xd8] sm:$0xff]
          %v4943 = vld [vmem:[%s4914 + $0xe0] sm:$0xff]
          %v4944 = vld [vmem:[%s4914 + $0xe8] sm:$0xff]
          %v4945 = vld [vmem:[%s4914 + $0xf0] sm:$0xff]
          %v4946 = vld [vmem:[%s4914 + $0xf8] sm:$0xff]
          %v4951 = vunpack.c.l.b16 %v3528
          %v4952 = vunpack.c.l.b16 %v3529
          %v4953 = vunpack.c.l.b16 %v3566
          %v4954 = vunpack.c.l.b16 %v3567
          %v4955 = vsel %vm3741, %v3697, %v3695
          %v4956 = vsel %vm3743, %v3699, %v4955
          %v4957 = vsel %vm3745, %v3701, %v4956
          %v4958 = vsel %vm3747, %v3703, %v4957
          %v4959 = vsel %vm3749, %v3705, %v4958
          %v4960 = vsel %vm3751, %v3707, %v4959
          %v4961 = vsel %vm3753, %v3709, %v4960
          %v4962 = vsel %vm3741, %v3698, %v3696
          %v4963 = vsel %vm3743, %v3700, %v4962
          %v4964 = vsel %vm3745, %v3702, %v4963
          %v4965 = vsel %vm3747, %v3704, %v4964
          %v4966 = vsel %vm3749, %v3706, %v4965
          %v4967 = vsel %vm3751, %v3708, %v4966
          %v4968 = vsel %vm3753, %v3710, %v4967
          %v4969 = vsel %vm3741, %v3713, %v3711
          %v4970 = vsel %vm3743, %v4323, %v4969
          %v4971 = vsel %vm3745, %v4637, %v4970
          %v4972 = vsel %vm3747, %v4951, %v4971
          %v4973 = vsel %vm3749, %v3721, %v4972
          %v4974 = vsel %vm3751, %v3723, %v4973
          %v4975 = vsel %vm3753, %v3725, %v4974
          %v4976 = vsel %vm3741, %v3714, %v3712
          %v4977 = vsel %vm3743, %v4324, %v4976
          %v4978 = vsel %vm3745, %v4638, %v4977
          %v4979 = vsel %vm3747, %v4952, %v4978
          %v4980 = vsel %vm3749, %v3722, %v4979
          %v4981 = vsel %vm3751, %v3724, %v4980
          %v4982 = vsel %vm3753, %v3726, %v4981
          %v4983 = vsel %vm3741, %v3729, %v3727
          %v4984 = vsel %vm3743, %v3731, %v4983
          %v4985 = vsel %vm3745, %v3733, %v4984
          %v4986 = vsel %vm3747, %v3735, %v4985
          %v4987 = vsel %vm3749, %v3737, %v4986
          %v4988 = vsel %vm3751, %v3739, %v4987
          %v4989 = vsel %vm3753, %v4325, %v4988
          %v4990 = vsel %vm3741, %v3730, %v3728
          %v4991 = vsel %vm3743, %v3732, %v4990
          %v4992 = vsel %vm3745, %v3734, %v4991
          %v4993 = vsel %vm3747, %v3736, %v4992
          %v4994 = vsel %vm3749, %v3738, %v4993
          %v4995 = vsel %vm3751, %v3740, %v4994
          %v4996 = vsel %vm3753, %v4326, %v4995
          %v4997 = vsel %vm3741, %v4953, %v4639
          %v4998 = vsel %vm3741, %v4954, %v4640
          %v4999 = vpack.c.b16 %v4975, %v4961
          %v5000 = vpack.c.b16 %v4982, %v4968
          %v5001 = vpack.c.b16 %v4997, %v4989
          %v5002 = vpack.c.b16 %v4998, %v4996
          %v5039 = vunpack.c.l.b16 %v4915
          %v5040 = vunpack.c.h.b16 %v4915
          %v5041 = vunpack.c.l.b16 %v4916
          %v5042 = vunpack.c.h.b16 %v4916
          %v5043 = vunpack.c.l.b16 %v4917
          %v5044 = vunpack.c.h.b16 %v4917
          %v5045 = vunpack.c.l.b16 %v4918
          %v5046 = vunpack.c.h.b16 %v4918
          %v5047 = vunpack.c.l.b16 %v4919
          %v5048 = vunpack.c.h.b16 %v4919
          %v5049 = vunpack.c.l.b16 %v4920
          %v5050 = vunpack.c.h.b16 %v4920
          %v5051 = vunpack.c.l.b16 %v4921
          %v5052 = vunpack.c.h.b16 %v4921
          %v5053 = vunpack.c.l.b16 %v4922
          %v5054 = vunpack.c.h.b16 %v4922
          %v5055 = vunpack.c.l.b16 %v4923
          %v5056 = vunpack.c.h.b16 %v4923
          %v5057 = vunpack.c.l.b16 %v4924
          %v5058 = vunpack.c.h.b16 %v4924
          %v5059 = vunpack.c.l.b16 %v4925
          %v5060 = vunpack.c.h.b16 %v4925
          %v5061 = vunpack.c.l.b16 %v4926
          %v5062 = vunpack.c.h.b16 %v4926
          %v5063 = vunpack.c.l.b16 %v4927
          %v5064 = vunpack.c.h.b16 %v4927
          %v5065 = vunpack.c.l.b16 %v4928
          %v5066 = vunpack.c.h.b16 %v4928
          %v5067 = vunpack.c.l.b16 %v4929
          %v5068 = vunpack.c.h.b16 %v4929
          %v5069 = vunpack.c.l.b16 %v4930
          %v5070 = vunpack.c.h.b16 %v4930
          %v5071 = vunpack.c.l.b16 %v4931
          %v5072 = vunpack.c.h.b16 %v4931
          %v5073 = vunpack.c.l.b16 %v4932
          %v5074 = vunpack.c.h.b16 %v4932
          %v5075 = vunpack.c.l.b16 %v4933
          %v5076 = vunpack.c.h.b16 %v4933
          %v5077 = vunpack.c.l.b16 %v4934
          %v5078 = vunpack.c.h.b16 %v4934
          %v5079 = vunpack.c.l.b16 %v4935
          %v5080 = vunpack.c.h.b16 %v4935
          %v5081 = vunpack.c.l.b16 %v4936
          %v5082 = vunpack.c.h.b16 %v4936
          %v5083 = vunpack.c.l.b16 %v4937
          %v5084 = vunpack.c.h.b16 %v4937
          %v5085 = vunpack.c.l.b16 %v4938
          %v5086 = vunpack.c.h.b16 %v4938
          %v5087 = vunpack.c.l.b16 %v4939
          %v5088 = vunpack.c.h.b16 %v4939
          %v5089 = vunpack.c.l.b16 %v4940
          %v5090 = vunpack.c.h.b16 %v4940
          %v5091 = vunpack.c.l.b16 %v4941
          %v5092 = vunpack.c.h.b16 %v4941
          %v5093 = vunpack.c.l.b16 %v4942
          %v5094 = vunpack.c.h.b16 %v4942
          %v5095 = vunpack.c.l.b16 %v4943
          %v5096 = vunpack.c.h.b16 %v4943
          %v5097 = vunpack.c.l.b16 %v4944
          %v5098 = vunpack.c.h.b16 %v4944
          %v5099 = vunpack.c.l.b16 %v4945
          %v5100 = vunpack.c.h.b16 %v4945
          %v5101 = vunpack.c.l.b16 %v4946
          %v5102 = vunpack.c.h.b16 %v4946
          %v5103 = vpack.c.b16 %v5041, %v5039
          %v5104 = vpack.c.b16 %v5042, %v5040
          %v5105 = vpack.c.b16 %v5045, %v5043
          %v5106 = vpack.c.b16 %v5046, %v5044
          %v5107 = vpack.c.b16 %v5049, %v5047
          %v5108 = vpack.c.b16 %v5050, %v5048
          %v5109 = vpack.c.b16 %v5053, %v5051
          %v5110 = vpack.c.b16 %v5054, %v5052
          %v5111 = vpack.c.b16 %v5057, %v5055
          %v5112 = vpack.c.b16 %v5058, %v5056
          %v5113 = vpack.c.b16 %v5061, %v5059
          %v5114 = vpack.c.b16 %v5062, %v5060
          %v5115 = vpack.c.b16 %v5065, %v5063
          %v5116 = vpack.c.b16 %v5066, %v5064
          %v5117 = vpack.c.b16 %v5069, %v5067
          %v5118 = vpack.c.b16 %v5070, %v5068
          %v5119 = vpack.c.b16 %v5073, %v5071
          %v5120 = vpack.c.b16 %v5074, %v5072
          %v5121 = vpack.c.b16 %v5077, %v5075
          %v5122 = vpack.c.b16 %v5078, %v5076
          %v5123 = vpack.c.b16 %v5081, %v5079
          %v5124 = vpack.c.b16 %v5082, %v5080
          %v5125 = vpack.c.b16 %v5085, %v5083
          %v5126 = vpack.c.b16 %v5086, %v5084
          %v5127 = vpack.c.b16 %v5089, %v5087
          %v5128 = vpack.c.b16 %v5090, %v5088
          %v5129 = vpack.c.b16 %v5093, %v5091
          %v5130 = vpack.c.b16 %v5094, %v5092
          %v5131 = vpack.c.b16 %v5097, %v5095
          %v5132 = vpack.c.b16 %v5098, %v5096
          %v5133 = vpack.c.b16 %v5101, %v5099
          %v5134 = vpack.c.b16 %v5102, %v5100
          %5167 = vmatprep.subr.bf16.mxu0 %v5104
          %5168 = vmatpush1.bf16.msra.mxu0 %v5103
          %5169 = vmatprep.subr.bf16.mxu0 %v5106
          %5170 = vmatpush1.bf16.msra.mxu0 %v5105
          %5171 = vmatprep.subr.bf16.mxu0 %v5108
          %5172 = vmatpush1.bf16.msra.mxu0 %v5107
          %5173 = vmatprep.subr.bf16.mxu0 %v5110
          %5174 = vmatpush1.bf16.msra.mxu0 %v5109
          %5175 = vmatprep.subr.bf16.mxu0 %v5112
          %5176 = vmatpush1.bf16.msra.mxu0 %v5111
          %5177 = vmatprep.subr.bf16.mxu0 %v5114
          %5178 = vmatpush1.bf16.msra.mxu0 %v5113
          %5179 = vmatprep.subr.bf16.mxu0 %v5116
          %5180 = vmatpush1.bf16.msra.mxu0 %v5115
          %5181 = vmatprep.subr.bf16.mxu0 %v5118
          %5182 = vmatpush1.bf16.msra.mxu0 %v5117
          %5183 = vmatprep.subr.bf16.mxu0 %v5120
          %5184 = vmatpush1.bf16.msra.mxu0 %v5119
          %5185 = vmatprep.subr.bf16.mxu0 %v5122
          %5186 = vmatpush1.bf16.msra.mxu0 %v5121
          %5187 = vmatprep.subr.bf16.mxu0 %v5124
          %5188 = vmatpush1.bf16.msra.mxu0 %v5123
          %5189 = vmatprep.subr.bf16.mxu0 %v5126
          %5190 = vmatpush1.bf16.msra.mxu0 %v5125
          %5191 = vmatprep.subr.bf16.mxu0 %v5128
          %5192 = vmatpush1.bf16.msra.mxu0 %v5127
          %5193 = vmatprep.subr.bf16.mxu0 %v5130
          %5194 = vmatpush1.bf16.msra.mxu0 %v5129
          %5195 = vmatprep.subr.bf16.mxu0 %v5132
          %5196 = vmatpush1.bf16.msra.mxu0 %v5131
          %5197 = vmatprep.subr.bf16.mxu0 %v5134
          %5198 = vmatpush1.bf16.msra.mxu0 %v5133
          %5199 = vmatprep.mubr.bf16.mxu0 %v5000
          %5200 = vmatmul.mubr.bf16.gmra.mrb[0].mxu0 %v4999
          %v5201 = vpop.f32.mrb[0].mxu0
          %v5202 = vadd.f32 0.0, %v5201
          %v5203 = vpop.f32.mrb[0].mxu0
          %v5204 = vadd.f32 0.0, %v5203
          %v5205 = vpop.f32.mrb[0].mxu0
          %v5206 = vadd.f32 0.0, %v5205
          %v5207 = vpop.f32.mrb[0].mxu0
          %v5208 = vadd.f32 0.0, %v5207
          %5209 = vmatprep.mubr.bf16.mxu0 %v5002
          %5210 = vmatmul.mubr.bf16.gmra.mrb[0].mxu0 %v5001
          %v5211 = vpop.f32.mrb[0].mxu0
          %v5212 = vadd.f32 0.0, %v5211
          %v5213 = vpop.f32.mrb[0].mxu0
          %v5214 = vadd.f32 0.0, %v5213
          %v5215 = vpop.f32.mrb[0].mxu0
          %v5216 = vadd.f32 0.0, %v5215
          %v5217 = vpop.f32.mrb[0].mxu0
          %v5218 = vadd.f32 0.0, %v5217
          %5219 = vdwg.mxu0
          %v5220 = vadd.f32 %v4906, %v5202
          %v5221 = vadd.f32 %v4907, %v5204
          %v5222 = vadd.f32 %v4908, %v5206
          %v5223 = vadd.f32 %v4909, %v5208
          %v5224 = vadd.f32 %v4910, %v5212
          %v5225 = vadd.f32 %v4911, %v5214
          %v5226 = vadd.f32 %v4912, %v5216
          %v5227 = vadd.f32 %v4913, %v5218
          %s5228 = scalar_lea.vmem [#allocation9], 1280
          %v5229 = vld [vmem:[%s5228] sm:$0xff]
          %v5230 = vld [vmem:[%s5228 + $0x8] sm:$0xff]
          %v5231 = vld [vmem:[%s5228 + $0x10] sm:$0xff]
          %v5232 = vld [vmem:[%s5228 + $0x18] sm:$0xff]
          %v5233 = vld [vmem:[%s5228 + $0x20] sm:$0xff]
          %v5234 = vld [vmem:[%s5228 + $0x28] sm:$0xff]
          %v5235 = vld [vmem:[%s5228 + $0x30] sm:$0xff]
          %v5236 = vld [vmem:[%s5228 + $0x38] sm:$0xff]
          %v5237 = vld [vmem:[%s5228 + $0x40] sm:$0xff]
          %v5238 = vld [vmem:[%s5228 + $0x48] sm:$0xff]
          %v5239 = vld [vmem:[%s5228 + $0x50] sm:$0xff]
          %v5240 = vld [vmem:[%s5228 + $0x58] sm:$0xff]
          %v5241 = vld [vmem:[%s5228 + $0x60] sm:$0xff]
          %v5242 = vld [vmem:[%s5228 + $0x68] sm:$0xff]
          %v5243 = vld [vmem:[%s5228 + $0x70] sm:$0xff]
          %v5244 = vld [vmem:[%s5228 + $0x78] sm:$0xff]
          %v5245 = vld [vmem:[%s5228 + $0x80] sm:$0xff]
          %v5246 = vld [vmem:[%s5228 + $0x88] sm:$0xff]
          %v5247 = vld [vmem:[%s5228 + $0x90] sm:$0xff]
          %v5248 = vld [vmem:[%s5228 + $0x98] sm:$0xff]
          %v5249 = vld [vmem:[%s5228 + $0xa0] sm:$0xff]
          %v5250 = vld [vmem:[%s5228 + $0xa8] sm:$0xff]
          %v5251 = vld [vmem:[%s5228 + $0xb0] sm:$0xff]
          %v5252 = vld [vmem:[%s5228 + $0xb8] sm:$0xff]
          %v5253 = vld [vmem:[%s5228 + $0xc0] sm:$0xff]
          %v5254 = vld [vmem:[%s5228 + $0xc8] sm:$0xff]
          %v5255 = vld [vmem:[%s5228 + $0xd0] sm:$0xff]
          %v5256 = vld [vmem:[%s5228 + $0xd8] sm:$0xff]
          %v5257 = vld [vmem:[%s5228 + $0xe0] sm:$0xff]
          %v5258 = vld [vmem:[%s5228 + $0xe8] sm:$0xff]
          %v5259 = vld [vmem:[%s5228 + $0xf0] sm:$0xff]
          %v5260 = vld [vmem:[%s5228 + $0xf8] sm:$0xff]
          %v5265 = vunpack.c.l.b16 %v3530
          %v5266 = vunpack.c.l.b16 %v3531
          %v5267 = vunpack.c.l.b16 %v3568
          %v5268 = vunpack.c.l.b16 %v3569
          %v5269 = vsel %vm3741, %v3699, %v3697
          %v5270 = vsel %vm3743, %v3701, %v5269
          %v5271 = vsel %vm3745, %v3703, %v5270
          %v5272 = vsel %vm3747, %v3705, %v5271
          %v5273 = vsel %vm3749, %v3707, %v5272
          %v5274 = vsel %vm3751, %v3709, %v5273
          %v5275 = vsel %vm3753, %v3711, %v5274
          %v5276 = vsel %vm3741, %v3700, %v3698
          %v5277 = vsel %vm3743, %v3702, %v5276
          %v5278 = vsel %vm3745, %v3704, %v5277
          %v5279 = vsel %vm3747, %v3706, %v5278
          %v5280 = vsel %vm3749, %v3708, %v5279
          %v5281 = vsel %vm3751, %v3710, %v5280
          %v5282 = vsel %vm3753, %v3712, %v5281
          %v5283 = vsel %vm3741, %v4323, %v3713
          %v5284 = vsel %vm3743, %v4637, %v5283
          %v5285 = vsel %vm3745, %v4951, %v5284
          %v5286 = vsel %vm3747, %v5265, %v5285
          %v5287 = vsel %vm3749, %v3723, %v5286
          %v5288 = vsel %vm3751, %v3725, %v5287
          %v5289 = vsel %vm3753, %v3727, %v5288
          %v5290 = vsel %vm3741, %v4324, %v3714
          %v5291 = vsel %vm3743, %v4638, %v5290
          %v5292 = vsel %vm3745, %v4952, %v5291
          %v5293 = vsel %vm3747, %v5266, %v5292
          %v5294 = vsel %vm3749, %v3724, %v5293
          %v5295 = vsel %vm3751, %v3726, %v5294
          %v5296 = vsel %vm3753, %v3728, %v5295
          %v5297 = vsel %vm3741, %v3731, %v3729
          %v5298 = vsel %vm3743, %v3733, %v5297
          %v5299 = vsel %vm3745, %v3735, %v5298
          %v5300 = vsel %vm3747, %v3737, %v5299
          %v5301 = vsel %vm3749, %v3739, %v5300
          %v5302 = vsel %vm3751, %v4325, %v5301
          %v5303 = vsel %vm3753, %v4639, %v5302
          %v5304 = vsel %vm3741, %v3732, %v3730
          %v5305 = vsel %vm3743, %v3734, %v5304
          %v5306 = vsel %vm3745, %v3736, %v5305
          %v5307 = vsel %vm3747, %v3738, %v5306
          %v5308 = vsel %vm3749, %v3740, %v5307
          %v5309 = vsel %vm3751, %v4326, %v5308
          %v5310 = vsel %vm3753, %v4640, %v5309
          %v5311 = vsel %vm3741, %v5267, %v4953
          %v5312 = vsel %vm3741, %v5268, %v4954
          %v5313 = vpack.c.b16 %v5289, %v5275
          %v5314 = vpack.c.b16 %v5296, %v5282
          %v5315 = vpack.c.b16 %v5311, %v5303
          %v5316 = vpack.c.b16 %v5312, %v5310
          %v5353 = vunpack.c.l.b16 %v5229
          %v5354 = vunpack.c.h.b16 %v5229
          %v5355 = vunpack.c.l.b16 %v5230
          %v5356 = vunpack.c.h.b16 %v5230
          %v5357 = vunpack.c.l.b16 %v5231
          %v5358 = vunpack.c.h.b16 %v5231
          %v5359 = vunpack.c.l.b16 %v5232
          %v5360 = vunpack.c.h.b16 %v5232
          %v5361 = vunpack.c.l.b16 %v5233
          %v5362 = vunpack.c.h.b16 %v5233
          %v5363 = vunpack.c.l.b16 %v5234
          %v5364 = vunpack.c.h.b16 %v5234
          %v5365 = vunpack.c.l.b16 %v5235
          %v5366 = vunpack.c.h.b16 %v5235
          %v5367 = vunpack.c.l.b16 %v5236
          %v5368 = vunpack.c.h.b16 %v5236
          %v5369 = vunpack.c.l.b16 %v5237
          %v5370 = vunpack.c.h.b16 %v5237
          %v5371 = vunpack.c.l.b16 %v5238
          %v5372 = vunpack.c.h.b16 %v5238
          %v5373 = vunpack.c.l.b16 %v5239
          %v5374 = vunpack.c.h.b16 %v5239
          %v5375 = vunpack.c.l.b16 %v5240
          %v5376 = vunpack.c.h.b16 %v5240
          %v5377 = vunpack.c.l.b16 %v5241
          %v5378 = vunpack.c.h.b16 %v5241
          %v5379 = vunpack.c.l.b16 %v5242
          %v5380 = vunpack.c.h.b16 %v5242
          %v5381 = vunpack.c.l.b16 %v5243
          %v5382 = vunpack.c.h.b16 %v5243
          %v5383 = vunpack.c.l.b16 %v5244
          %v5384 = vunpack.c.h.b16 %v5244
          %v5385 = vunpack.c.l.b16 %v5245
          %v5386 = vunpack.c.h.b16 %v5245
          %v5387 = vunpack.c.l.b16 %v5246
          %v5388 = vunpack.c.h.b16 %v5246
          %v5389 = vunpack.c.l.b16 %v5247
          %v5390 = vunpack.c.h.b16 %v5247
          %v5391 = vunpack.c.l.b16 %v5248
          %v5392 = vunpack.c.h.b16 %v5248
          %v5393 = vunpack.c.l.b16 %v5249
          %v5394 = vunpack.c.h.b16 %v5249
          %v5395 = vunpack.c.l.b16 %v5250
          %v5396 = vunpack.c.h.b16 %v5250
          %v5397 = vunpack.c.l.b16 %v5251
          %v5398 = vunpack.c.h.b16 %v5251
          %v5399 = vunpack.c.l.b16 %v5252
          %v5400 = vunpack.c.h.b16 %v5252
          %v5401 = vunpack.c.l.b16 %v5253
          %v5402 = vunpack.c.h.b16 %v5253
          %v5403 = vunpack.c.l.b16 %v5254
          %v5404 = vunpack.c.h.b16 %v5254
          %v5405 = vunpack.c.l.b16 %v5255
          %v5406 = vunpack.c.h.b16 %v5255
          %v5407 = vunpack.c.l.b16 %v5256
          %v5408 = vunpack.c.h.b16 %v5256
          %v5409 = vunpack.c.l.b16 %v5257
          %v5410 = vunpack.c.h.b16 %v5257
          %v5411 = vunpack.c.l.b16 %v5258
          %v5412 = vunpack.c.h.b16 %v5258
          %v5413 = vunpack.c.l.b16 %v5259
          %v5414 = vunpack.c.h.b16 %v5259
          %v5415 = vunpack.c.l.b16 %v5260
          %v5416 = vunpack.c.h.b16 %v5260
          %v5417 = vpack.c.b16 %v5355, %v5353
          %v5418 = vpack.c.b16 %v5356, %v5354
          %v5419 = vpack.c.b16 %v5359, %v5357
          %v5420 = vpack.c.b16 %v5360, %v5358
          %v5421 = vpack.c.b16 %v5363, %v5361
          %v5422 = vpack.c.b16 %v5364, %v5362
          %v5423 = vpack.c.b16 %v5367, %v5365
          %v5424 = vpack.c.b16 %v5368, %v5366
          %v5425 = vpack.c.b16 %v5371, %v5369
          %v5426 = vpack.c.b16 %v5372, %v5370
          %v5427 = vpack.c.b16 %v5375, %v5373
          %v5428 = vpack.c.b16 %v5376, %v5374
          %v5429 = vpack.c.b16 %v5379, %v5377
          %v5430 = vpack.c.b16 %v5380, %v5378
          %v5431 = vpack.c.b16 %v5383, %v5381
          %v5432 = vpack.c.b16 %v5384, %v5382
          %v5433 = vpack.c.b16 %v5387, %v5385
          %v5434 = vpack.c.b16 %v5388, %v5386
          %v5435 = vpack.c.b16 %v5391, %v5389
          %v5436 = vpack.c.b16 %v5392, %v5390
          %v5437 = vpack.c.b16 %v5395, %v5393
          %v5438 = vpack.c.b16 %v5396, %v5394
          %v5439 = vpack.c.b16 %v5399, %v5397
          %v5440 = vpack.c.b16 %v5400, %v5398
          %v5441 = vpack.c.b16 %v5403, %v5401
          %v5442 = vpack.c.b16 %v5404, %v5402
          %v5443 = vpack.c.b16 %v5407, %v5405
          %v5444 = vpack.c.b16 %v5408, %v5406
          %v5445 = vpack.c.b16 %v5411, %v5409
          %v5446 = vpack.c.b16 %v5412, %v5410
          %v5447 = vpack.c.b16 %v5415, %v5413
          %v5448 = vpack.c.b16 %v5416, %v5414
          %5481 = vmatprep.subr.bf16.mxu0 %v5418
          %5482 = vmatpush1.bf16.msra.mxu0 %v5417
          %5483 = vmatprep.subr.bf16.mxu0 %v5420
          %5484 = vmatpush1.bf16.msra.mxu0 %v5419
          %5485 = vmatprep.subr.bf16.mxu0 %v5422
          %5486 = vmatpush1.bf16.msra.mxu0 %v5421
          %5487 = vmatprep.subr.bf16.mxu0 %v5424
          %5488 = vmatpush1.bf16.msra.mxu0 %v5423
          %5489 = vmatprep.subr.bf16.mxu0 %v5426
          %5490 = vmatpush1.bf16.msra.mxu0 %v5425
          %5491 = vmatprep.subr.bf16.mxu0 %v5428
          %5492 = vmatpush1.bf16.msra.mxu0 %v5427
          %5493 = vmatprep.subr.bf16.mxu0 %v5430
          %5494 = vmatpush1.bf16.msra.mxu0 %v5429
          %5495 = vmatprep.subr.bf16.mxu0 %v5432
          %5496 = vmatpush1.bf16.msra.mxu0 %v5431
          %5497 = vmatprep.subr.bf16.mxu0 %v5434
          %5498 = vmatpush1.bf16.msra.mxu0 %v5433
          %5499 = vmatprep.subr.bf16.mxu0 %v5436
          %5500 = vmatpush1.bf16.msra.mxu0 %v5435
          %5501 = vmatprep.subr.bf16.mxu0 %v5438
          %5502 = vmatpush1.bf16.msra.mxu0 %v5437
          %5503 = vmatprep.subr.bf16.mxu0 %v5440
          %5504 = vmatpush1.bf16.msra.mxu0 %v5439
          %5505 = vmatprep.subr.bf16.mxu0 %v5442
          %5506 = vmatpush1.bf16.msra.mxu0 %v5441
          %5507 = vmatprep.subr.bf16.mxu0 %v5444
          %5508 = vmatpush1.bf16.msra.mxu0 %v5443
          %5509 = vmatprep.subr.bf16.mxu0 %v5446
          %5510 = vmatpush1.bf16.msra.mxu0 %v5445
          %5511 = vmatprep.subr.bf16.mxu0 %v5448
          %5512 = vmatpush1.bf16.msra.mxu0 %v5447
          %5513 = vmatprep.mubr.bf16.mxu0 %v5314
          %5514 = vmatmul.mubr.bf16.gmra.mrb[0].mxu0 %v5313
          %v5515 = vpop.f32.mrb[0].mxu0
          %v5516 = vadd.f32 0.0, %v5515
          %v5517 = vpop.f32.mrb[0].mxu0
          %v5518 = vadd.f32 0.0, %v5517
          %v5519 = vpop.f32.mrb[0].mxu0
          %v5520 = vadd.f32 0.0, %v5519
          %v5521 = vpop.f32.mrb[0].mxu0
          %v5522 = vadd.f32 0.0, %v5521
          %5523 = vmatprep.mubr.bf16.mxu0 %v5316
          %5524 = vmatmul.mubr.bf16.gmra.mrb[0].mxu0 %v5315
          %v5525 = vpop.f32.mrb[0].mxu0
          %v5526 = vadd.f32 0.0, %v5525
          %v5527 = vpop.f32.mrb[0].mxu0
          %v5528 = vadd.f32 0.0, %v5527
          %v5529 = vpop.f32.mrb[0].mxu0
          %v5530 = vadd.f32 0.0, %v5529
          %v5531 = vpop.f32.mrb[0].mxu0
          %v5532 = vadd.f32 0.0, %v5531
          %5533 = vdwg.mxu0
          %v5534 = vadd.f32 %v5220, %v5516
          %v5535 = vadd.f32 %v5221, %v5518
          %v5536 = vadd.f32 %v5222, %v5520
          %v5537 = vadd.f32 %v5223, %v5522
          %v5538 = vadd.f32 %v5224, %v5526
          %v5539 = vadd.f32 %v5225, %v5528
          %v5540 = vadd.f32 %v5226, %v5530
          %v5541 = vadd.f32 %v5227, %v5532
          %s5542 = scalar_lea.vmem [#allocation9], 1536
          %v5543 = vld [vmem:[%s5542] sm:$0xff]
          %v5544 = vld [vmem:[%s5542 + $0x8] sm:$0xff]
          %v5545 = vld [vmem:[%s5542 + $0x10] sm:$0xff]
          %v5546 = vld [vmem:[%s5542 + $0x18] sm:$0xff]
          %v5547 = vld [vmem:[%s5542 + $0x20] sm:$0xff]
          %v5548 = vld [vmem:[%s5542 + $0x28] sm:$0xff]
          %v5549 = vld [vmem:[%s5542 + $0x30] sm:$0xff]
          %v5550 = vld [vmem:[%s5542 + $0x38] sm:$0xff]
          %v5551 = vld [vmem:[%s5542 + $0x40] sm:$0xff]
          %v5552 = vld [vmem:[%s5542 + $0x48] sm:$0xff]
          %v5553 = vld [vmem:[%s5542 + $0x50] sm:$0xff]
          %v5554 = vld [vmem:[%s5542 + $0x58] sm:$0xff]
          %v5555 = vld [vmem:[%s5542 + $0x60] sm:$0xff]
          %v5556 = vld [vmem:[%s5542 + $0x68] sm:$0xff]
          %v5557 = vld [vmem:[%s5542 + $0x70] sm:$0xff]
          %v5558 = vld [vmem:[%s5542 + $0x78] sm:$0xff]
          %v5559 = vld [vmem:[%s5542 + $0x80] sm:$0xff]
          %v5560 = vld [vmem:[%s5542 + $0x88] sm:$0xff]
          %v5561 = vld [vmem:[%s5542 + $0x90] sm:$0xff]
          %v5562 = vld [vmem:[%s5542 + $0x98] sm:$0xff]
          %v5563 = vld [vmem:[%s5542 + $0xa0] sm:$0xff]
          %v5564 = vld [vmem:[%s5542 + $0xa8] sm:$0xff]
          %v5565 = vld [vmem:[%s5542 + $0xb0] sm:$0xff]
          %v5566 = vld [vmem:[%s5542 + $0xb8] sm:$0xff]
          %v5567 = vld [vmem:[%s5542 + $0xc0] sm:$0xff]
          %v5568 = vld [vmem:[%s5542 + $0xc8] sm:$0xff]
          %v5569 = vld [vmem:[%s5542 + $0xd0] sm:$0xff]
          %v5570 = vld [vmem:[%s5542 + $0xd8] sm:$0xff]
          %v5571 = vld [vmem:[%s5542 + $0xe0] sm:$0xff]
          %v5572 = vld [vmem:[%s5542 + $0xe8] sm:$0xff]
          %v5573 = vld [vmem:[%s5542 + $0xf0] sm:$0xff]
          %v5574 = vld [vmem:[%s5542 + $0xf8] sm:$0xff]
          %v5579 = vunpack.c.l.b16 %v3532
          %v5580 = vunpack.c.l.b16 %v3533
          %v5581 = vunpack.c.l.b16 %v3570
          %v5582 = vunpack.c.l.b16 %v3571
          %v5583 = vsel %vm3741, %v3701, %v3699
          %v5584 = vsel %vm3743, %v3703, %v5583
          %v5585 = vsel %vm3745, %v3705, %v5584
          %v5586 = vsel %vm3747, %v3707, %v5585
          %v5587 = vsel %vm3749, %v3709, %v5586
          %v5588 = vsel %vm3751, %v3711, %v5587
          %v5589 = vsel %vm3753, %v3713, %v5588
          %v5590 = vsel %vm3741, %v3702, %v3700
          %v5591 = vsel %vm3743, %v3704, %v5590
          %v5592 = vsel %vm3745, %v3706, %v5591
          %v5593 = vsel %vm3747, %v3708, %v5592
          %v5594 = vsel %vm3749, %v3710, %v5593
          %v5595 = vsel %vm3751, %v3712, %v5594
          %v5596 = vsel %vm3753, %v3714, %v5595
          %v5597 = vsel %vm3741, %v4637, %v4323
          %v5598 = vsel %vm3743, %v4951, %v5597
          %v5599 = vsel %vm3745, %v5265, %v5598
          %v5600 = vsel %vm3747, %v5579, %v5599
          %v5601 = vsel %vm3749, %v3725, %v5600
          %v5602 = vsel %vm3751, %v3727, %v5601
          %v5603 = vsel %vm3753, %v3729, %v5602
          %v5604 = vsel %vm3741, %v4638, %v4324
          %v5605 = vsel %vm3743, %v4952, %v5604
          %v5606 = vsel %vm3745, %v5266, %v5605
          %v5607 = vsel %vm3747, %v5580, %v5606
          %v5608 = vsel %vm3749, %v3726, %v5607
          %v5609 = vsel %vm3751, %v3728, %v5608
          %v5610 = vsel %vm3753, %v3730, %v5609
          %v5611 = vsel %vm3741, %v3733, %v3731
          %v5612 = vsel %vm3743, %v3735, %v5611
          %v5613 = vsel %vm3745, %v3737, %v5612
          %v5614 = vsel %vm3747, %v3739, %v5613
          %v5615 = vsel %vm3749, %v4325, %v5614
          %v5616 = vsel %vm3751, %v4639, %v5615
          %v5617 = vsel %vm3753, %v4953, %v5616
          %v5618 = vsel %vm3741, %v3734, %v3732
          %v5619 = vsel %vm3743, %v3736, %v5618
          %v5620 = vsel %vm3745, %v3738, %v5619
          %v5621 = vsel %vm3747, %v3740, %v5620
          %v5622 = vsel %vm3749, %v4326, %v5621
          %v5623 = vsel %vm3751, %v4640, %v5622
          %v5624 = vsel %vm3753, %v4954, %v5623
          %v5625 = vsel %vm3741, %v5581, %v5267
          %v5626 = vsel %vm3741, %v5582, %v5268
          %v5627 = vpack.c.b16 %v5603, %v5589
          %v5628 = vpack.c.b16 %v5610, %v5596
          %v5629 = vpack.c.b16 %v5625, %v5617
          %v5630 = vpack.c.b16 %v5626, %v5624
          %v5667 = vunpack.c.l.b16 %v5543
          %v5668 = vunpack.c.h.b16 %v5543
          %v5669 = vunpack.c.l.b16 %v5544
          %v5670 = vunpack.c.h.b16 %v5544
          %v5671 = vunpack.c.l.b16 %v5545
          %v5672 = vunpack.c.h.b16 %v5545
          %v5673 = vunpack.c.l.b16 %v5546
          %v5674 = vunpack.c.h.b16 %v5546
          %v5675 = vunpack.c.l.b16 %v5547
          %v5676 = vunpack.c.h.b16 %v5547
          %v5677 = vunpack.c.l.b16 %v5548
          %v5678 = vunpack.c.h.b16 %v5548
          %v5679 = vunpack.c.l.b16 %v5549
          %v5680 = vunpack.c.h.b16 %v5549
          %v5681 = vunpack.c.l.b16 %v5550
          %v5682 = vunpack.c.h.b16 %v5550
          %v5683 = vunpack.c.l.b16 %v5551
          %v5684 = vunpack.c.h.b16 %v5551
          %v5685 = vunpack.c.l.b16 %v5552
          %v5686 = vunpack.c.h.b16 %v5552
          %v5687 = vunpack.c.l.b16 %v5553
          %v5688 = vunpack.c.h.b16 %v5553
          %v5689 = vunpack.c.l.b16 %v5554
          %v5690 = vunpack.c.h.b16 %v5554
          %v5691 = vunpack.c.l.b16 %v5555
          %v5692 = vunpack.c.h.b16 %v5555
          %v5693 = vunpack.c.l.b16 %v5556
          %v5694 = vunpack.c.h.b16 %v5556
          %v5695 = vunpack.c.l.b16 %v5557
          %v5696 = vunpack.c.h.b16 %v5557
          %v5697 = vunpack.c.l.b16 %v5558
          %v5698 = vunpack.c.h.b16 %v5558
          %v5699 = vunpack.c.l.b16 %v5559
          %v5700 = vunpack.c.h.b16 %v5559
          %v5701 = vunpack.c.l.b16 %v5560
          %v5702 = vunpack.c.h.b16 %v5560
          %v5703 = vunpack.c.l.b16 %v5561
          %v5704 = vunpack.c.h.b16 %v5561
          %v5705 = vunpack.c.l.b16 %v5562
          %v5706 = vunpack.c.h.b16 %v5562
          %v5707 = vunpack.c.l.b16 %v5563
          %v5708 = vunpack.c.h.b16 %v5563
          %v5709 = vunpack.c.l.b16 %v5564
          %v5710 = vunpack.c.h.b16 %v5564
          %v5711 = vunpack.c.l.b16 %v5565
          %v5712 = vunpack.c.h.b16 %v5565
          %v5713 = vunpack.c.l.b16 %v5566
          %v5714 = vunpack.c.h.b16 %v5566
          %v5715 = vunpack.c.l.b16 %v5567
          %v5716 = vunpack.c.h.b16 %v5567
          %v5717 = vunpack.c.l.b16 %v5568
          %v5718 = vunpack.c.h.b16 %v5568
          %v5719 = vunpack.c.l.b16 %v5569
          %v5720 = vunpack.c.h.b16 %v5569
          %v5721 = vunpack.c.l.b16 %v5570
          %v5722 = vunpack.c.h.b16 %v5570
          %v5723 = vunpack.c.l.b16 %v5571
          %v5724 = vunpack.c.h.b16 %v5571
          %v5725 = vunpack.c.l.b16 %v5572
          %v5726 = vunpack.c.h.b16 %v5572
          %v5727 = vunpack.c.l.b16 %v5573
          %v5728 = vunpack.c.h.b16 %v5573
          %v5729 = vunpack.c.l.b16 %v5574
          %v5730 = vunpack.c.h.b16 %v5574
          %v5731 = vpack.c.b16 %v5669, %v5667
          %v5732 = vpack.c.b16 %v5670, %v5668
          %v5733 = vpack.c.b16 %v5673, %v5671
          %v5734 = vpack.c.b16 %v5674, %v5672
          %v5735 = vpack.c.b16 %v5677, %v5675
          %v5736 = vpack.c.b16 %v5678, %v5676
          %v5737 = vpack.c.b16 %v5681, %v5679
          %v5738 = vpack.c.b16 %v5682, %v5680
          %v5739 = vpack.c.b16 %v5685, %v5683
          %v5740 = vpack.c.b16 %v5686, %v5684
          %v5741 = vpack.c.b16 %v5689, %v5687
          %v5742 = vpack.c.b16 %v5690, %v5688
          %v5743 = vpack.c.b16 %v5693, %v5691
          %v5744 = vpack.c.b16 %v5694, %v5692
          %v5745 = vpack.c.b16 %v5697, %v5695
          %v5746 = vpack.c.b16 %v5698, %v5696
          %v5747 = vpack.c.b16 %v5701, %v5699
          %v5748 = vpack.c.b16 %v5702, %v5700
          %v5749 = vpack.c.b16 %v5705, %v5703
          %v5750 = vpack.c.b16 %v5706, %v5704
          %v5751 = vpack.c.b16 %v5709, %v5707
          %v5752 = vpack.c.b16 %v5710, %v5708
          %v5753 = vpack.c.b16 %v5713, %v5711
          %v5754 = vpack.c.b16 %v5714, %v5712
          %v5755 = vpack.c.b16 %v5717, %v5715
          %v5756 = vpack.c.b16 %v5718, %v5716
          %v5757 = vpack.c.b16 %v5721, %v5719
          %v5758 = vpack.c.b16 %v5722, %v5720
          %v5759 = vpack.c.b16 %v5725, %v5723
          %v5760 = vpack.c.b16 %v5726, %v5724
          %v5761 = vpack.c.b16 %v5729, %v5727
          %v5762 = vpack.c.b16 %v5730, %v5728
          %5795 = vmatprep.subr.bf16.mxu0 %v5732
          %5796 = vmatpush1.bf16.msra.mxu0 %v5731
          %5797 = vmatprep.subr.bf16.mxu0 %v5734
          %5798 = vmatpush1.bf16.msra.mxu0 %v5733
          %5799 = vmatprep.subr.bf16.mxu0 %v5736
          %5800 = vmatpush1.bf16.msra.mxu0 %v5735
          %5801 = vmatprep.subr.bf16.mxu0 %v5738
          %5802 = vmatpush1.bf16.msra.mxu0 %v5737
          %5803 = vmatprep.subr.bf16.mxu0 %v5740
          %5804 = vmatpush1.bf16.msra.mxu0 %v5739
          %5805 = vmatprep.subr.bf16.mxu0 %v5742
          %5806 = vmatpush1.bf16.msra.mxu0 %v5741
          %5807 = vmatprep.subr.bf16.mxu0 %v5744
          %5808 = vmatpush1.bf16.msra.mxu0 %v5743
          %5809 = vmatprep.subr.bf16.mxu0 %v5746
          %5810 = vmatpush1.bf16.msra.mxu0 %v5745
          %5811 = vmatprep.subr.bf16.mxu0 %v5748
          %5812 = vmatpush1.bf16.msra.mxu0 %v5747
          %5813 = vmatprep.subr.bf16.mxu0 %v5750
          %5814 = vmatpush1.bf16.msra.mxu0 %v5749
          %5815 = vmatprep.subr.bf16.mxu0 %v5752
          %5816 = vmatpush1.bf16.msra.mxu0 %v5751
          %5817 = vmatprep.subr.bf16.mxu0 %v5754
          %5818 = vmatpush1.bf16.msra.mxu0 %v5753
          %5819 = vmatprep.subr.bf16.mxu0 %v5756
          %5820 = vmatpush1.bf16.msra.mxu0 %v5755
          %5821 = vmatprep.subr.bf16.mxu0 %v5758
          %5822 = vmatpush1.bf16.msra.mxu0 %v5757
          %5823 = vmatprep.subr.bf16.mxu0 %v5760
          %5824 = vmatpush1.bf16.msra.mxu0 %v5759
          %5825 = vmatprep.subr.bf16.mxu0 %v5762
          %5826 = vmatpush1.bf16.msra.mxu0 %v5761
          %5827 = vmatprep.mubr.bf16.mxu0 %v5628
          %5828 = vmatmul.mubr.bf16.gmra.mrb[0].mxu0 %v5627
          %v5829 = vpop.f32.mrb[0].mxu0
          %v5830 = vadd.f32 0.0, %v5829
          %v5831 = vpop.f32.mrb[0].mxu0
          %v5832 = vadd.f32 0.0, %v5831
          %v5833 = vpop.f32.mrb[0].mxu0
          %v5834 = vadd.f32 0.0, %v5833
          %v5835 = vpop.f32.mrb[0].mxu0
          %v5836 = vadd.f32 0.0, %v5835
          %5837 = vmatprep.mubr.bf16.mxu0 %v5630
          %5838 = vmatmul.mubr.bf16.gmra.mrb[0].mxu0 %v5629
          %v5839 = vpop.f32.mrb[0].mxu0
          %v5840 = vadd.f32 0.0, %v5839
          %v5841 = vpop.f32.mrb[0].mxu0
          %v5842 = vadd.f32 0.0, %v5841
          %v5843 = vpop.f32.mrb[0].mxu0
          %v5844 = vadd.f32 0.0, %v5843
          %v5845 = vpop.f32.mrb[0].mxu0
          %v5846 = vadd.f32 0.0, %v5845
          %5847 = vdwg.mxu0
          %v5848 = vadd.f32 %v5534, %v5830
          %v5849 = vadd.f32 %v5535, %v5832
          %v5850 = vadd.f32 %v5536, %v5834
          %v5851 = vadd.f32 %v5537, %v5836
          %v5852 = vadd.f32 %v5538, %v5840
          %v5853 = vadd.f32 %v5539, %v5842
          %v5854 = vadd.f32 %v5540, %v5844
          %v5855 = vadd.f32 %v5541, %v5846
          %v5856 = vld [vmem:[#allocation10] sm:$0x3]
          %v5858 = vlaneseq
          %v5859 = vshrl.u32 %v5858, 7
          %v5860 = vsub.s32 0, %v5859
          %v5861 = vrot.slane %v5856, %v5860
          %v5862 = vlaneseq
          %v5863 = vshrl.u32 %v5862, 7
          %v5864 = vsub.s32 1, %v5863
          %v5865 = vrot.slane %v5856, %v5864
          %v5868 = vadd.f32 %v5848, %v5861
          %v5869 = vadd.f32 %v5849, %v5865
          %v5870 = vadd.f32 %v5850, %v5861
          %v5871 = vadd.f32 %v5851, %v5865
          %v5872 = vadd.f32 %v5852, %v5861
          %v5873 = vadd.f32 %v5853, %v5865
          %v5874 = vadd.f32 %v5854, %v5861
          %v5875 = vadd.f32 %v5855, %v5865
          %v5876 = vmax.f32 %v5868, 0.0
          %v5877 = vmax.f32 %v5869, 0.0
          %v5878 = vmax.f32 %v5870, 0.0
          %v5879 = vmax.f32 %v5871, 0.0
          %v5880 = vmax.f32 %v5872, 0.0
          %v5881 = vmax.f32 %v5873, 0.0
          %v5882 = vmax.f32 %v5874, 0.0
          %v5883 = vmax.f32 %v5875, 0.0
          %v5892 = vcombine.low %v5876, %v5877
          %v5893 = vcombine.high %v5876, %v5877
          %v5895 = vunpack.c.l.s4 1966171168
          %v5896 = vunpack.c.0.s8 %v5895
          %v5897 = vlaneseq
          %v5898 = vshrl.u32 %v5897, 7
          %v5899 = vsub.s32 %v5896, %v5898
          %v5900 = vrot.slane %v5892, %v5899
          %v5902 = vunpack.c.l.s4 1966171168
          %v5903 = vunpack.c.0.s8 %v5902
          %v5904 = vlaneseq
          %v5905 = vshrl.u32 %v5904, 7
          %v5906 = vsub.s32 %v5903, %v5905
          %v5907 = vrot.slane %v5893, %v5906
          %v5908 = vcombine.high %v5900, %v5900
          %v5909 = vcombine.high %v5907, %v5907
          %v5911 = vunpack.c.l.s4 1966171168
          %v5912 = vunpack.c.0.s8 %v5911
          %v5913 = vlaneseq
          %v5914 = vshrl.u32 %v5913, 7
          %v5915 = vsub.s32 %v5912, %v5914
          %v5916 = vrot.slane %v5900, %v5915
          %v5918 = vunpack.c.l.s4 1966171168
          %v5919 = vunpack.c.0.s8 %v5918
          %v5920 = vlaneseq
          %v5921 = vshrl.u32 %v5920, 7
          %v5922 = vsub.s32 %v5919, %v5921
          %v5923 = vrot.slane %v5907, %v5922
          %v5925 = vunpack.c.l.s4 1966171168
          %v5926 = vunpack.c.0.s8 %v5925
          %v5927 = vlaneseq
          %v5928 = vshrl.u32 %v5927, 7
          %v5929 = vsub.s32 %v5926, %v5928
          %v5930 = vrot.slane %v5908, %v5929
          %v5932 = vunpack.c.l.s4 1966171168
          %v5933 = vunpack.c.0.s8 %v5932
          %v5934 = vlaneseq
          %v5935 = vshrl.u32 %v5934, 7
          %v5936 = vsub.s32 %v5933, %v5935
          %v5937 = vrot.slane %v5909, %v5936
          %v5938 = vcombine.high %v5916, %v5916
          %v5939 = vcombine.high %v5923, %v5923
          %v5940 = vcombine.high %v5930, %v5930
          %v5941 = vcombine.high %v5937, %v5937
          %v5942 = vcombine.low %v5878, %v5879
          %v5943 = vcombine.high %v5878, %v5879
          %v5945 = vunpack.c.l.s4 1966171168
          %v5946 = vunpack.c.0.s8 %v5945
          %v5947 = vlaneseq
          %v5948 = vshrl.u32 %v5947, 7
          %v5949 = vsub.s32 %v5946, %v5948
          %v5950 = vrot.slane %v5942, %v5949
          %v5952 = vunpack.c.l.s4 1966171168
          %v5953 = vunpack.c.0.s8 %v5952
          %v5954 = vlaneseq
          %v5955 = vshrl.u32 %v5954, 7
          %v5956 = vsub.s32 %v5953, %v5955
          %v5957 = vrot.slane %v5943, %v5956
          %v5958 = vcombine.high %v5950, %v5950
          %v5959 = vcombine.high %v5957, %v5957
          %v5961 = vunpack.c.l.s4 1966171168
          %v5962 = vunpack.c.0.s8 %v5961
          %v5963 = vlaneseq
          %v5964 = vshrl.u32 %v5963, 7
          %v5965 = vsub.s32 %v5962, %v5964
          %v5966 = vrot.slane %v5950, %v5965
          %v5968 = vunpack.c.l.s4 1966171168
          %v5969 = vunpack.c.0.s8 %v5968
          %v5970 = vlaneseq
          %v5971 = vshrl.u32 %v5970, 7
          %v5972 = vsub.s32 %v5969, %v5971
          %v5973 = vrot.slane %v5957, %v5972
          %v5975 = vunpack.c.l.s4 1966171168
          %v5976 = vunpack.c.0.s8 %v5975
          %v5977 = vlaneseq
          %v5978 = vshrl.u32 %v5977, 7
          %v5979 = vsub.s32 %v5976, %v5978
          %v5980 = vrot.slane %v5958, %v5979
          %v5982 = vunpack.c.l.s4 1966171168
          %v5983 = vunpack.c.0.s8 %v5982
          %v5984 = vlaneseq
          %v5985 = vshrl.u32 %v5984, 7
          %v5986 = vsub.s32 %v5983, %v5985
          %v5987 = vrot.slane %v5959, %v5986
          %v5988 = vcombine.high %v5966, %v5966
          %v5989 = vcombine.high %v5973, %v5973
          %v5990 = vcombine.high %v5980, %v5980
          %v5991 = vcombine.high %v5987, %v5987
          %v5992 = vcombine.low %v5880, %v5881
          %v5993 = vcombine.high %v5880, %v5881
          %v5995 = vunpack.c.l.s4 1966171168
          %v5996 = vunpack.c.0.s8 %v5995
          %v5997 = vlaneseq
          %v5998 = vshrl.u32 %v5997, 7
          %v5999 = vsub.s32 %v5996, %v5998
          %v6000 = vrot.slane %v5992, %v5999
          %v6002 = vunpack.c.l.s4 1966171168
          %v6003 = vunpack.c.0.s8 %v6002
          %v6004 = vlaneseq
          %v6005 = vshrl.u32 %v6004, 7
          %v6006 = vsub.s32 %v6003, %v6005
          %v6007 = vrot.slane %v5993, %v6006
          %v6008 = vcombine.high %v6000, %v6000
          %v6009 = vcombine.high %v6007, %v6007
          %v6011 = vunpack.c.l.s4 1966171168
          %v6012 = vunpack.c.0.s8 %v6011
          %v6013 = vlaneseq
          %v6014 = vshrl.u32 %v6013, 7
          %v6015 = vsub.s32 %v6012, %v6014
          %v6016 = vrot.slane %v6000, %v6015
          %v6018 = vunpack.c.l.s4 1966171168
          %v6019 = vunpack.c.0.s8 %v6018
          %v6020 = vlaneseq
          %v6021 = vshrl.u32 %v6020, 7
          %v6022 = vsub.s32 %v6019, %v6021
          %v6023 = vrot.slane %v6007, %v6022
          %v6025 = vunpack.c.l.s4 1966171168
          %v6026 = vunpack.c.0.s8 %v6025
          %v6027 = vlaneseq
          %v6028 = vshrl.u32 %v6027, 7
          %v6029 = vsub.s32 %v6026, %v6028
          %v6030 = vrot.slane %v6008, %v6029
          %v6032 = vunpack.c.l.s4 1966171168
          %v6033 = vunpack.c.0.s8 %v6032
          %v6034 = vlaneseq
          %v6035 = vshrl.u32 %v6034, 7
          %v6036 = vsub.s32 %v6033, %v6035
          %v6037 = vrot.slane %v6009, %v6036
          %v6038 = vcombine.high %v6016, %v6016
          %v6039 = vcombine.high %v6023, %v6023
          %v6040 = vcombine.high %v6030, %v6030
          %v6041 = vcombine.high %v6037, %v6037
          %v6042 = vcombine.low %v5882, %v5883
          %v6044 = vunpack.c.l.s4 1966171168
          %v6045 = vunpack.c.0.s8 %v6044
          %v6046 = vlaneseq
          %v6047 = vshrl.u32 %v6046, 7
          %v6048 = vsub.s32 %v6045, %v6047
          %v6049 = vrot.slane %v6042, %v6048
          %v6051 = vunpack.c.l.s4 1966171168
          %v6052 = vunpack.c.0.s8 %v6051
          %v6053 = vlaneseq
          %v6054 = vshrl.u32 %v6053, 7
          %v6055 = vsub.s32 %v6052, %v6054
          %v6056 = vrot.slane %v6049, %v6055
          %v6057 = vcombine.low %v5916, %v5930
          %v6059 = vunpack.c.l.s4 1966171168
          %v6060 = vunpack.c.0.s8 %v6059
          %v6061 = vlaneseq
          %v6062 = vshrl.u32 %v6061, 7
          %v6063 = vsub.s32 %v6060, %v6062
          %v6064 = vrot.slane %v6057, %v6063
          %v6066 = vunpack.c.l.s4 1966171168
          %v6067 = vunpack.c.0.s8 %v6066
          %v6068 = vlaneseq
          %v6069 = vshrl.u32 %v6068, 7
          %v6070 = vsub.s32 %v6067, %v6069
          %v6071 = vrot.slane %v5938, %v6070
          %v6072 = vcombine.low %v6064, %v6071
          %v6073 = vcombine.high %v6064, %v6071
          %v6075 = vunpack.c.l.s4 1966171168
          %v6076 = vunpack.c.0.s8 %v6075
          %v6077 = vlaneseq
          %v6078 = vshrl.u32 %v6077, 7
          %v6079 = vsub.s32 %v6076, %v6078
          %v6080 = vrot.slane %v6072, %v6079
          %v6082 = vunpack.c.l.s4 1966171168
          %v6083 = vunpack.c.0.s8 %v6082
          %v6084 = vlaneseq
          %v6085 = vshrl.u32 %v6084, 7
          %v6086 = vsub.s32 %v6083, %v6085
          %v6087 = vrot.slane %v6073, %v6086
          %v6088 = vcombine.low %v5940, %v5923
          %v6090 = vunpack.c.l.s4 1966171168
          %v6091 = vunpack.c.0.s8 %v6090
          %v6092 = vlaneseq
          %v6093 = vshrl.u32 %v6092, 7
          %v6094 = vsub.s32 %v6091, %v6093
          %v6095 = vrot.slane %v6088, %v6094
          %v6097 = vunpack.c.l.s4 1966171168
          %v6098 = vunpack.c.0.s8 %v6097
          %v6099 = vlaneseq
          %v6100 = vshrl.u32 %v6099, 7
          %v6101 = vsub.s32 %v6098, %v6100
          %v6102 = vrot.slane %v5937, %v6101
          %v6103 = vcombine.low %v6095, %v6102
          %v6104 = vcombine.high %v6095, %v6102
          %v6106 = vunpack.c.l.s4 1966171168
          %v6107 = vunpack.c.0.s8 %v6106
          %v6108 = vlaneseq
          %v6109 = vshrl.u32 %v6108, 7
          %v6110 = vsub.s32 %v6107, %v6109
          %v6111 = vrot.slane %v6103, %v6110
          %v6113 = vunpack.c.l.s4 1966171168
          %v6114 = vunpack.c.0.s8 %v6113
          %v6115 = vlaneseq
          %v6116 = vshrl.u32 %v6115, 7
          %v6117 = vsub.s32 %v6114, %v6116
          %v6118 = vrot.slane %v6104, %v6117
          %v6119 = vcombine.low %v5939, %v5941
          %v6121 = vunpack.c.l.s4 1966171168
          %v6122 = vunpack.c.0.s8 %v6121
          %v6123 = vlaneseq
          %v6124 = vshrl.u32 %v6123, 7
          %v6125 = vsub.s32 %v6122, %v6124
          %v6126 = vrot.slane %v6119, %v6125
          %v6128 = vunpack.c.l.s4 1966171168
          %v6129 = vunpack.c.0.s8 %v6128
          %v6130 = vlaneseq
          %v6131 = vshrl.u32 %v6130, 7
          %v6132 = vsub.s32 %v6129, %v6131
          %v6133 = vrot.slane %v5966, %v6132
          %v6134 = vcombine.low %v6126, %v6133
          %v6135 = vcombine.high %v6126, %v6133
          %v6137 = vunpack.c.l.s4 1966171168
          %v6138 = vunpack.c.0.s8 %v6137
          %v6139 = vlaneseq
          %v6140 = vshrl.u32 %v6139, 7
          %v6141 = vsub.s32 %v6138, %v6140
          %v6142 = vrot.slane %v6134, %v6141
          %v6144 = vunpack.c.l.s4 1966171168
          %v6145 = vunpack.c.0.s8 %v6144
          %v6146 = vlaneseq
          %v6147 = vshrl.u32 %v6146, 7
          %v6148 = vsub.s32 %v6145, %v6147
          %v6149 = vrot.slane %v6135, %v6148
          %v6150 = vcombine.low %v5980, %v5988
          %v6152 = vunpack.c.l.s4 1966171168
          %v6153 = vunpack.c.0.s8 %v6152
          %v6154 = vlaneseq
          %v6155 = vshrl.u32 %v6154, 7
          %v6156 = vsub.s32 %v6153, %v6155
          %v6157 = vrot.slane %v6150, %v6156
          %v6159 = vunpack.c.l.s4 1966171168
          %v6160 = vunpack.c.0.s8 %v6159
          %v6161 = vlaneseq
          %v6162 = vshrl.u32 %v6161, 7
          %v6163 = vsub.s32 %v6160, %v6162
          %v6164 = vrot.slane %v5990, %v6163
          %v6165 = vcombine.low %v6157, %v6164
          %v6166 = vcombine.high %v6157, %v6164
          %v6168 = vunpack.c.l.s4 1966171168
          %v6169 = vunpack.c.0.s8 %v6168
          %v6170 = vlaneseq
          %v6171 = vshrl.u32 %v6170, 7
          %v6172 = vsub.s32 %v6169, %v6171
          %v6173 = vrot.slane %v6165, %v6172
          %v6175 = vunpack.c.l.s4 1966171168
          %v6176 = vunpack.c.0.s8 %v6175
          %v6177 = vlaneseq
          %v6178 = vshrl.u32 %v6177, 7
          %v6179 = vsub.s32 %v6176, %v6178
          %v6180 = vrot.slane %v6166, %v6179
          %v6181 = vcombine.low %v5987, %v5989
          %v6183 = vunpack.c.l.s4 1966171168
          %v6184 = vunpack.c.0.s8 %v6183
          %v6185 = vlaneseq
          %v6186 = vshrl.u32 %v6185, 7
          %v6187 = vsub.s32 %v6184, %v6186
          %v6188 = vrot.slane %v6181, %v6187
          %v6190 = vunpack.c.l.s4 1966171168
          %v6191 = vunpack.c.0.s8 %v6190
          %v6192 = vlaneseq
          %v6193 = vshrl.u32 %v6192, 7
          %v6194 = vsub.s32 %v6191, %v6193
          %v6195 = vrot.slane %v5991, %v6194
          %v6196 = vcombine.low %v6188, %v6195
          %v6197 = vcombine.high %v6188, %v6195
          %v6199 = vunpack.c.l.s4 1966171168
          %v6200 = vunpack.c.0.s8 %v6199
          %v6201 = vlaneseq
          %v6202 = vshrl.u32 %v6201, 7
          %v6203 = vsub.s32 %v6200, %v6202
          %v6204 = vrot.slane %v6196, %v6203
          %v6206 = vunpack.c.l.s4 1966171168
          %v6207 = vunpack.c.0.s8 %v6206
          %v6208 = vlaneseq
          %v6209 = vshrl.u32 %v6208, 7
          %v6210 = vsub.s32 %v6207, %v6209
          %v6211 = vrot.slane %v6197, %v6210
          %v6212 = vcombine.low %v6016, %v6030
          %v6214 = vunpack.c.l.s4 1966171168
          %v6215 = vunpack.c.0.s8 %v6214
          %v6216 = vlaneseq
          %v6217 = vshrl.u32 %v6216, 7
          %v6218 = vsub.s32 %v6215, %v6217
          %v6219 = vrot.slane %v6212, %v6218
          %v6221 = vunpack.c.l.s4 1966171168
          %v6222 = vunpack.c.0.s8 %v6221
          %v6223 = vlaneseq
          %v6224 = vshrl.u32 %v6223, 7
          %v6225 = vsub.s32 %v6222, %v6224
          %v6226 = vrot.slane %v6038, %v6225
          %v6227 = vcombine.low %v6219, %v6226
          %v6228 = vcombine.high %v6219, %v6226
          %v6230 = vunpack.c.l.s4 1966171168
          %v6231 = vunpack.c.0.s8 %v6230
          %v6232 = vlaneseq
          %v6233 = vshrl.u32 %v6232, 7
          %v6234 = vsub.s32 %v6231, %v6233
          %v6235 = vrot.slane %v6227, %v6234
          %v6237 = vunpack.c.l.s4 1966171168
          %v6238 = vunpack.c.0.s8 %v6237
          %v6239 = vlaneseq
          %v6240 = vshrl.u32 %v6239, 7
          %v6241 = vsub.s32 %v6238, %v6240
          %v6242 = vrot.slane %v6228, %v6241
          %v6243 = vcombine.low %v6040, %v6023
          %v6245 = vunpack.c.l.s4 1966171168
          %v6246 = vunpack.c.0.s8 %v6245
          %v6247 = vlaneseq
          %v6248 = vshrl.u32 %v6247, 7
          %v6249 = vsub.s32 %v6246, %v6248
          %v6250 = vrot.slane %v6243, %v6249
          %v6252 = vunpack.c.l.s4 1966171168
          %v6253 = vunpack.c.0.s8 %v6252
          %v6254 = vlaneseq
          %v6255 = vshrl.u32 %v6254, 7
          %v6256 = vsub.s32 %v6253, %v6255
          %v6257 = vrot.slane %v6037, %v6256
          %v6258 = vcombine.low %v6250, %v6257
          %v6259 = vcombine.high %v6250, %v6257
          %v6261 = vunpack.c.l.s4 1966171168
          %v6262 = vunpack.c.0.s8 %v6261
          %v6263 = vlaneseq
          %v6264 = vshrl.u32 %v6263, 7
          %v6265 = vsub.s32 %v6262, %v6264
          %v6266 = vrot.slane %v6258, %v6265
          %v6268 = vunpack.c.l.s4 1966171168
          %v6269 = vunpack.c.0.s8 %v6268
          %v6270 = vlaneseq
          %v6271 = vshrl.u32 %v6270, 7
          %v6272 = vsub.s32 %v6269, %v6271
          %v6273 = vrot.slane %v6259, %v6272
          %v6274 = vcombine.low %v6039, %v6041
          %v6276 = vunpack.c.l.s4 1966171168
          %v6277 = vunpack.c.0.s8 %v6276
          %v6278 = vlaneseq
          %v6279 = vshrl.u32 %v6278, 7
          %v6280 = vsub.s32 %v6277, %v6279
          %v6281 = vrot.slane %v6274, %v6280
          %v6283 = vunpack.c.l.s4 1966171168
          %v6284 = vunpack.c.0.s8 %v6283
          %v6285 = vlaneseq
          %v6286 = vshrl.u32 %v6285, 7
          %v6287 = vsub.s32 %v6284, %v6286
          %v6288 = vrot.slane %v6056, %v6287
          %v6289 = vcombine.low %v6281, %v6288
          %v6290 = vcombine.high %v6281, %v6288
          %v6292 = vunpack.c.l.s4 1966171168
          %v6293 = vunpack.c.0.s8 %v6292
          %v6294 = vlaneseq
          %v6295 = vshrl.u32 %v6294, 7
          %v6296 = vsub.s32 %v6293, %v6295
          %v6297 = vrot.slane %v6289, %v6296
          %v6299 = vunpack.c.l.s4 1966171168
          %v6300 = vunpack.c.0.s8 %v6299
          %v6301 = vlaneseq
          %v6302 = vshrl.u32 %v6301, 7
          %v6303 = vsub.s32 %v6300, %v6302
          %v6304 = vrot.slane %v6290, %v6303
          %v6321 = vsel %vm2963, %v6080, -inf
          %v6322 = vrot.slane %v6321, 4
          %v6323 = vmax.f32 %v6321, %v6322
          %v6324 = vrot.slane %v6323, 2
          %v6325 = vmax.f32 %v6323, %v6324
          %v6326 = vrot.slane %v6325, 1
          %v6327 = vmax.f32 %v6325, %v6326
          %v6328 = vsel %vm2963, %v6087, -inf
          %v6329 = vrot.slane %v6328, 4
          %v6330 = vmax.f32 %v6328, %v6329
          %v6331 = vrot.slane %v6330, 2
          %v6332 = vmax.f32 %v6330, %v6331
          %v6333 = vrot.slane %v6332, 1
          %v6334 = vmax.f32 %v6332, %v6333
          %v6335 = vsel %vm2963, %v6111, -inf
          %v6336 = vrot.slane %v6335, 4
          %v6337 = vmax.f32 %v6335, %v6336
          %v6338 = vrot.slane %v6337, 2
          %v6339 = vmax.f32 %v6337, %v6338
          %v6340 = vrot.slane %v6339, 1
          %v6341 = vmax.f32 %v6339, %v6340
          %v6342 = vsel %vm2963, %v6118, -inf
          %v6343 = vrot.slane %v6342, 4
          %v6344 = vmax.f32 %v6342, %v6343
          %v6345 = vrot.slane %v6344, 2
          %v6346 = vmax.f32 %v6344, %v6345
          %v6347 = vrot.slane %v6346, 1
          %v6348 = vmax.f32 %v6346, %v6347
          %v6349 = vsel %vm2963, %v6142, -inf
          %v6350 = vrot.slane %v6349, 4
          %v6351 = vmax.f32 %v6349, %v6350
          %v6352 = vrot.slane %v6351, 2
          %v6353 = vmax.f32 %v6351, %v6352
          %v6354 = vrot.slane %v6353, 1
          %v6355 = vmax.f32 %v6353, %v6354
          %v6356 = vsel %vm2963, %v6149, -inf
          %v6357 = vrot.slane %v6356, 4
          %v6358 = vmax.f32 %v6356, %v6357
          %v6359 = vrot.slane %v6358, 2
          %v6360 = vmax.f32 %v6358, %v6359
          %v6361 = vrot.slane %v6360, 1
          %v6362 = vmax.f32 %v6360, %v6361
          %v6363 = vsel %vm2963, %v6173, -inf
          %v6364 = vrot.slane %v6363, 4
          %v6365 = vmax.f32 %v6363, %v6364
          %v6366 = vrot.slane %v6365, 2
          %v6367 = vmax.f32 %v6365, %v6366
          %v6368 = vrot.slane %v6367, 1
          %v6369 = vmax.f32 %v6367, %v6368
          %v6370 = vsel %vm2963, %v6180, -inf
          %v6371 = vrot.slane %v6370, 4
          %v6372 = vmax.f32 %v6370, %v6371
          %v6373 = vrot.slane %v6372, 2
          %v6374 = vmax.f32 %v6372, %v6373
          %v6375 = vrot.slane %v6374, 1
          %v6376 = vmax.f32 %v6374, %v6375
          %v6377 = vsel %vm2963, %v6204, -inf
          %v6378 = vrot.slane %v6377, 4
          %v6379 = vmax.f32 %v6377, %v6378
          %v6380 = vrot.slane %v6379, 2
          %v6381 = vmax.f32 %v6379, %v6380
          %v6382 = vrot.slane %v6381, 1
          %v6383 = vmax.f32 %v6381, %v6382
          %v6384 = vsel %vm2963, %v6211, -inf
          %v6385 = vrot.slane %v6384, 4
          %v6386 = vmax.f32 %v6384, %v6385
          %v6387 = vrot.slane %v6386, 2
          %v6388 = vmax.f32 %v6386, %v6387
          %v6389 = vrot.slane %v6388, 1
          %v6390 = vmax.f32 %v6388, %v6389
          %v6391 = vsel %vm2963, %v6235, -inf
          %v6392 = vrot.slane %v6391, 4
          %v6393 = vmax.f32 %v6391, %v6392
          %v6394 = vrot.slane %v6393, 2
          %v6395 = vmax.f32 %v6393, %v6394
          %v6396 = vrot.slane %v6395, 1
          %v6397 = vmax.f32 %v6395, %v6396
          %v6398 = vsel %vm2963, %v6242, -inf
          %v6399 = vrot.slane %v6398, 4
          %v6400 = vmax.f32 %v6398, %v6399
          %v6401 = vrot.slane %v6400, 2
          %v6402 = vmax.f32 %v6400, %v6401
          %v6403 = vrot.slane %v6402, 1
          %v6404 = vmax.f32 %v6402, %v6403
          %v6405 = vsel %vm2963, %v6266, -inf
          %v6406 = vrot.slane %v6405, 4
          %v6407 = vmax.f32 %v6405, %v6406
          %v6408 = vrot.slane %v6407, 2
          %v6409 = vmax.f32 %v6407, %v6408
          %v6410 = vrot.slane %v6409, 1
          %v6411 = vmax.f32 %v6409, %v6410
          %v6412 = vsel %vm2963, %v6273, -inf
          %v6413 = vrot.slane %v6412, 4
          %v6414 = vmax.f32 %v6412, %v6413
          %v6415 = vrot.slane %v6414, 2
          %v6416 = vmax.f32 %v6414, %v6415
          %v6417 = vrot.slane %v6416, 1
          %v6418 = vmax.f32 %v6416, %v6417
          %v6419 = vsel %vm2963, %v6297, -inf
          %v6420 = vrot.slane %v6419, 4
          %v6421 = vmax.f32 %v6419, %v6420
          %v6422 = vrot.slane %v6421, 2
          %v6423 = vmax.f32 %v6421, %v6422
          %v6424 = vrot.slane %v6423, 1
          %v6425 = vmax.f32 %v6423, %v6424
          %v6426 = vsel %vm2963, %v6304, -inf
          %v6427 = vrot.slane %v6426, 4
          %v6428 = vmax.f32 %v6426, %v6427
          %v6429 = vrot.slane %v6428, 2
          %v6430 = vmax.f32 %v6428, %v6429
          %v6431 = vrot.slane %v6430, 1
          %v6432 = vmax.f32 %v6430, %v6431
          %v6433 = vpack.c.bf16 %v6327, %v6327
          %v6434 = vpack.c.bf16 %v6334, %v6334
          %v6435 = vpack.c.bf16 %v6341, %v6341
          %v6436 = vpack.c.bf16 %v6348, %v6348
          %v6437 = vpack.c.bf16 %v6355, %v6355
          %v6438 = vpack.c.bf16 %v6362, %v6362
          %v6439 = vpack.c.bf16 %v6369, %v6369
          %v6440 = vpack.c.bf16 %v6376, %v6376
          %v6441 = vpack.c.bf16 %v6383, %v6383
          %v6442 = vpack.c.bf16 %v6390, %v6390
          %v6443 = vpack.c.bf16 %v6397, %v6397
          %v6444 = vpack.c.bf16 %v6404, %v6404
          %v6445 = vpack.c.bf16 %v6411, %v6411
          %v6446 = vpack.c.bf16 %v6418, %v6418
          %v6447 = vpack.c.bf16 %v6425, %v6425
          %v6448 = vpack.c.bf16 %v6432, %v6432
          %v6449 = vld [vmem:[#allocation12] sm:$0xff]
          %v6450 = vld [vmem:[#allocation12 + $0x8] sm:$0xff]
          %v6451 = vld [vmem:[#allocation12 + $0x10] sm:$0xff]
          %v6452 = vld [vmem:[#allocation12 + $0x18] sm:$0xff]
          %v6453 = vld [vmem:[#allocation12 + $0x20] sm:$0xff]
          %v6454 = vld [vmem:[#allocation12 + $0x28] sm:$0xff]
          %v6455 = vld [vmem:[#allocation12 + $0x30] sm:$0xff]
          %v6456 = vld [vmem:[#allocation12 + $0x38] sm:$0xff]
          %v6457 = vld [vmem:[#allocation12 + $0x40] sm:$0xff]
          %v6458 = vld [vmem:[#allocation12 + $0x48] sm:$0xff]
          %v6459 = vld [vmem:[#allocation12 + $0x50] sm:$0xff]
          %v6460 = vld [vmem:[#allocation12 + $0x58] sm:$0xff]
          %v6461 = vld [vmem:[#allocation12 + $0x60] sm:$0xff]
          %v6462 = vld [vmem:[#allocation12 + $0x68] sm:$0xff]
          %v6463 = vld [vmem:[#allocation12 + $0x70] sm:$0xff]
          %v6464 = vld [vmem:[#allocation12 + $0x78] sm:$0xff]
          %v6465 = vld [vmem:[#allocation12 + $0x80] sm:$0xff]
          %v6466 = vld [vmem:[#allocation12 + $0x88] sm:$0xff]
          %v6467 = vld [vmem:[#allocation12 + $0x90] sm:$0xff]
          %v6468 = vld [vmem:[#allocation12 + $0x98] sm:$0xff]
          %v6469 = vld [vmem:[#allocation12 + $0xa0] sm:$0xff]
          %v6470 = vld [vmem:[#allocation12 + $0xa8] sm:$0xff]
          %v6471 = vld [vmem:[#allocation12 + $0xb0] sm:$0xff]
          %v6472 = vld [vmem:[#allocation12 + $0xb8] sm:$0xff]
          %v6473 = vld [vmem:[#allocation12 + $0xc0] sm:$0xff]
          %v6474 = vld [vmem:[#allocation12 + $0xc8] sm:$0xff]
          %v6475 = vld [vmem:[#allocation12 + $0xd0] sm:$0xff]
          %v6476 = vld [vmem:[#allocation12 + $0xd8] sm:$0xff]
          %v6477 = vld [vmem:[#allocation12 + $0xe0] sm:$0xff]
          %v6478 = vld [vmem:[#allocation12 + $0xe8] sm:$0xff]
          %v6479 = vld [vmem:[#allocation12 + $0xf0] sm:$0xff]
          %v6480 = vld [vmem:[#allocation12 + $0xf8] sm:$0xff]
          %s6481 = scalar_lea.vmem [#allocation12], 256
          %v6482 = vld [vmem:[%s6481] sm:$0xff]
          %v6483 = vld [vmem:[%s6481 + $0x8] sm:$0xff]
          %v6484 = vld [vmem:[%s6481 + $0x10] sm:$0xff]
          %v6485 = vld [vmem:[%s6481 + $0x18] sm:$0xff]
          %v6486 = vld [vmem:[%s6481 + $0x20] sm:$0xff]
          %v6487 = vld [vmem:[%s6481 + $0x28] sm:$0xff]
          %v6488 = vld [vmem:[%s6481 + $0x30] sm:$0xff]
          %v6489 = vld [vmem:[%s6481 + $0x38] sm:$0xff]
          %v6490 = vld [vmem:[%s6481 + $0x40] sm:$0xff]
          %v6491 = vld [vmem:[%s6481 + $0x48] sm:$0xff]
          %v6492 = vld [vmem:[%s6481 + $0x50] sm:$0xff]
          %v6493 = vld [vmem:[%s6481 + $0x58] sm:$0xff]
          %v6494 = vld [vmem:[%s6481 + $0x60] sm:$0xff]
          %v6495 = vld [vmem:[%s6481 + $0x68] sm:$0xff]
          %v6496 = vld [vmem:[%s6481 + $0x70] sm:$0xff]
          %v6497 = vld [vmem:[%s6481 + $0x78] sm:$0xff]
          %v6498 = vld [vmem:[%s6481 + $0x80] sm:$0xff]
          %v6499 = vld [vmem:[%s6481 + $0x88] sm:$0xff]
          %v6500 = vld [vmem:[%s6481 + $0x90] sm:$0xff]
          %v6501 = vld [vmem:[%s6481 + $0x98] sm:$0xff]
          %v6502 = vld [vmem:[%s6481 + $0xa0] sm:$0xff]
          %v6503 = vld [vmem:[%s6481 + $0xa8] sm:$0xff]
          %v6504 = vld [vmem:[%s6481 + $0xb0] sm:$0xff]
          %v6505 = vld [vmem:[%s6481 + $0xb8] sm:$0xff]
          %v6506 = vld [vmem:[%s6481 + $0xc0] sm:$0xff]
          %v6507 = vld [vmem:[%s6481 + $0xc8] sm:$0xff]
          %v6508 = vld [vmem:[%s6481 + $0xd0] sm:$0xff]
          %v6509 = vld [vmem:[%s6481 + $0xd8] sm:$0xff]
          %v6510 = vld [vmem:[%s6481 + $0xe0] sm:$0xff]
          %v6511 = vld [vmem:[%s6481 + $0xe8] sm:$0xff]
          %v6512 = vld [vmem:[%s6481 + $0xf0] sm:$0xff]
          %v6513 = vld [vmem:[%s6481 + $0xf8] sm:$0xff]
          %v6522 = vunpack.c.l.b16 %v6435
          %v6523 = vunpack.c.l.b16 %v6436
          %v6524 = vunpack.c.l.b16 %v6437
          %v6525 = vunpack.c.l.b16 %v6438
          %v6526 = vunpack.c.l.b16 %v6443
          %v6527 = vunpack.c.l.b16 %v6444
          %v6528 = vunpack.c.l.b16 %v6445
          %v6529 = vunpack.c.l.b16 %v6446
          %v6530 = vsel %vm3741, %v6524, %v6522
          %v6531 = vsel %vm3743, %v6526, %v6530
          %v6532 = vsel %vm3745, %v6528, %v6531
          %v6533 = vsel %vm3741, %v6525, %v6523
          %v6534 = vsel %vm3743, %v6527, %v6533
          %v6535 = vsel %vm3745, %v6529, %v6534
          %v6536 = vpack.c.b16 %v6532, %v6532
          %v6537 = vpack.c.b16 %v6535, %v6535
          %v6572 = vunpack.c.l.b16 %v6482
          %v6573 = vunpack.c.h.b16 %v6482
          %v6574 = vunpack.c.l.b16 %v6483
          %v6575 = vunpack.c.h.b16 %v6483
          %v6576 = vunpack.c.l.b16 %v6484
          %v6577 = vunpack.c.h.b16 %v6484
          %v6578 = vunpack.c.l.b16 %v6485
          %v6579 = vunpack.c.h.b16 %v6485
          %v6580 = vunpack.c.l.b16 %v6486
          %v6581 = vunpack.c.h.b16 %v6486
          %v6582 = vunpack.c.l.b16 %v6487
          %v6583 = vunpack.c.h.b16 %v6487
          %v6584 = vunpack.c.l.b16 %v6488
          %v6585 = vunpack.c.h.b16 %v6488
          %v6586 = vunpack.c.l.b16 %v6489
          %v6587 = vunpack.c.h.b16 %v6489
          %v6588 = vunpack.c.l.b16 %v6490
          %v6589 = vunpack.c.h.b16 %v6490
          %v6590 = vunpack.c.l.b16 %v6491
          %v6591 = vunpack.c.h.b16 %v6491
          %v6592 = vunpack.c.l.b16 %v6492
          %v6593 = vunpack.c.h.b16 %v6492
          %v6594 = vunpack.c.l.b16 %v6493
          %v6595 = vunpack.c.h.b16 %v6493
          %v6596 = vunpack.c.l.b16 %v6494
          %v6597 = vunpack.c.h.b16 %v6494
          %v6598 = vunpack.c.l.b16 %v6495
          %v6599 = vunpack.c.h.b16 %v6495
          %v6600 = vunpack.c.l.b16 %v6496
          %v6601 = vunpack.c.h.b16 %v6496
          %v6602 = vunpack.c.l.b16 %v6497
          %v6603 = vunpack.c.h.b16 %v6497
          %v6604 = vunpack.c.l.b16 %v6498
          %v6605 = vunpack.c.h.b16 %v6498
          %v6606 = vunpack.c.l.b16 %v6499
          %v6607 = vunpack.c.h.b16 %v6499
          %v6608 = vunpack.c.l.b16 %v6500
          %v6609 = vunpack.c.h.b16 %v6500
          %v6610 = vunpack.c.l.b16 %v6501
          %v6611 = vunpack.c.h.b16 %v6501
          %v6612 = vunpack.c.l.b16 %v6502
          %v6613 = vunpack.c.h.b16 %v6502
          %v6614 = vunpack.c.l.b16 %v6503
          %v6615 = vunpack.c.h.b16 %v6503
          %v6616 = vunpack.c.l.b16 %v6504
          %v6617 = vunpack.c.h.b16 %v6504
          %v6618 = vunpack.c.l.b16 %v6505
          %v6619 = vunpack.c.h.b16 %v6505
          %v6620 = vunpack.c.l.b16 %v6506
          %v6621 = vunpack.c.h.b16 %v6506
          %v6622 = vunpack.c.l.b16 %v6507
          %v6623 = vunpack.c.h.b16 %v6507
          %v6624 = vunpack.c.l.b16 %v6508
          %v6625 = vunpack.c.h.b16 %v6508
          %v6626 = vunpack.c.l.b16 %v6509
          %v6627 = vunpack.c.h.b16 %v6509
          %v6628 = vunpack.c.l.b16 %v6510
          %v6629 = vunpack.c.h.b16 %v6510
          %v6630 = vunpack.c.l.b16 %v6511
          %v6631 = vunpack.c.h.b16 %v6511
          %v6632 = vunpack.c.l.b16 %v6512
          %v6633 = vunpack.c.h.b16 %v6512
          %v6634 = vunpack.c.l.b16 %v6513
          %v6635 = vunpack.c.h.b16 %v6513
          %v6636 = vpack.c.b16 %v6574, %v6572
          %v6637 = vpack.c.b16 %v6575, %v6573
          %v6638 = vpack.c.b16 %v6578, %v6576
          %v6639 = vpack.c.b16 %v6579, %v6577
          %v6640 = vpack.c.b16 %v6582, %v6580
          %v6641 = vpack.c.b16 %v6583, %v6581
          %v6642 = vpack.c.b16 %v6586, %v6584
          %v6643 = vpack.c.b16 %v6587, %v6585
          %v6644 = vpack.c.b16 %v6590, %v6588
          %v6645 = vpack.c.b16 %v6591, %v6589
          %v6646 = vpack.c.b16 %v6594, %v6592
          %v6647 = vpack.c.b16 %v6595, %v6593
          %v6648 = vpack.c.b16 %v6598, %v6596
          %v6649 = vpack.c.b16 %v6599, %v6597
          %v6650 = vpack.c.b16 %v6602, %v6600
          %v6651 = vpack.c.b16 %v6603, %v6601
          %v6652 = vpack.c.b16 %v6606, %v6604
          %v6653 = vpack.c.b16 %v6607, %v6605
          %v6654 = vpack.c.b16 %v6610, %v6608
          %v6655 = vpack.c.b16 %v6611, %v6609
          %v6656 = vpack.c.b16 %v6614, %v6612
          %v6657 = vpack.c.b16 %v6615, %v6613
          %v6658 = vpack.c.b16 %v6618, %v6616
          %v6659 = vpack.c.b16 %v6619, %v6617
          %v6660 = vpack.c.b16 %v6622, %v6620
          %v6661 = vpack.c.b16 %v6623, %v6621
          %v6662 = vpack.c.b16 %v6626, %v6624
          %v6663 = vpack.c.b16 %v6627, %v6625
          %v6664 = vpack.c.b16 %v6630, %v6628
          %v6665 = vpack.c.b16 %v6631, %v6629
          %v6666 = vpack.c.b16 %v6634, %v6632
          %v6667 = vpack.c.b16 %v6635, %v6633
          %6700 = vmatprep.subr.bf16.mxu0 %v6637
          %6701 = vmatpush1.bf16.msra.mxu0 %v6636
          %6702 = vmatprep.subr.bf16.mxu0 %v6639
          %6703 = vmatpush1.bf16.msra.mxu0 %v6638
          %6704 = vmatprep.subr.bf16.mxu0 %v6641
          %6705 = vmatpush1.bf16.msra.mxu0 %v6640
          %6706 = vmatprep.subr.bf16.mxu0 %v6643
          %6707 = vmatpush1.bf16.msra.mxu0 %v6642
          %6708 = vmatprep.subr.bf16.mxu0 %v6645
          %6709 = vmatpush1.bf16.msra.mxu0 %v6644
          %6710 = vmatprep.subr.bf16.mxu0 %v6647
          %6711 = vmatpush1.bf16.msra.mxu0 %v6646
          %6712 = vmatprep.subr.bf16.mxu0 %v6649
          %6713 = vmatpush1.bf16.msra.mxu0 %v6648
          %6714 = vmatprep.subr.bf16.mxu0 %v6651
          %6715 = vmatpush1.bf16.msra.mxu0 %v6650
          %6716 = vmatprep.subr.bf16.mxu0 %v6653
          %6717 = vmatpush1.bf16.msra.mxu0 %v6652
          %6718 = vmatprep.subr.bf16.mxu0 %v6655
          %6719 = vmatpush1.bf16.msra.mxu0 %v6654
          %6720 = vmatprep.subr.bf16.mxu0 %v6657
          %6721 = vmatpush1.bf16.msra.mxu0 %v6656
          %6722 = vmatprep.subr.bf16.mxu0 %v6659
          %6723 = vmatpush1.bf16.msra.mxu0 %v6658
          %6724 = vmatprep.subr.bf16.mxu0 %v6661
          %6725 = vmatpush1.bf16.msra.mxu0 %v6660
          %6726 = vmatprep.subr.bf16.mxu0 %v6663
          %6727 = vmatpush1.bf16.msra.mxu0 %v6662
          %6728 = vmatprep.subr.bf16.mxu0 %v6665
          %6729 = vmatpush1.bf16.msra.mxu0 %v6664
          %6730 = vmatprep.subr.bf16.mxu0 %v6667
          %6731 = vmatpush1.bf16.msra.mxu0 %v6666
          %6732 = vmatprep.mubr.bf16.mxu0 %v6537
          %6733 = vmatmul.mubr.bf16.gmra.mrb[0].mxu0 %v6536
          %v6734 = vpop.f32.mrb[0].mxu0
          %v6735 = vadd.f32 0.0, %v6734
          %v6736 = vpop.f32.mrb[0].mxu0
          %v6737 = vadd.f32 0.0, %v6736
          %v6738 = vpop.f32.mrb[0].mxu0
          %v6739 = vpop.f32.mrb[0].mxu0
          %6740 = vdwg.mxu0
          %v6745 = vunpack.c.l.b16 %v6433
          %v6746 = vunpack.c.l.b16 %v6434
          %v6747 = vunpack.c.l.b16 %v6441
          %v6748 = vunpack.c.l.b16 %v6442
          %v6749 = vsel %vm3741, %v6522, %v6745
          %v6750 = vsel %vm3743, %v6747, %v6749
          %v6751 = vsel %vm3745, %v6526, %v6750
          %v6752 = vsel %vm3741, %v6523, %v6746
          %v6753 = vsel %vm3743, %v6748, %v6752
          %v6754 = vsel %vm3745, %v6527, %v6753
          %v6755 = vpack.c.b16 %v6751, %v6751
          %v6756 = vpack.c.b16 %v6754, %v6754
          %v6791 = vunpack.c.l.b16 %v6449
          %v6792 = vunpack.c.h.b16 %v6449
          %v6793 = vunpack.c.l.b16 %v6450
          %v6794 = vunpack.c.h.b16 %v6450
          %v6795 = vunpack.c.l.b16 %v6451
          %v6796 = vunpack.c.h.b16 %v6451
          %v6797 = vunpack.c.l.b16 %v6452
          %v6798 = vunpack.c.h.b16 %v6452
          %v6799 = vunpack.c.l.b16 %v6453
          %v6800 = vunpack.c.h.b16 %v6453
          %v6801 = vunpack.c.l.b16 %v6454
          %v6802 = vunpack.c.h.b16 %v6454
          %v6803 = vunpack.c.l.b16 %v6455
          %v6804 = vunpack.c.h.b16 %v6455
          %v6805 = vunpack.c.l.b16 %v6456
          %v6806 = vunpack.c.h.b16 %v6456
          %v6807 = vunpack.c.l.b16 %v6457
          %v6808 = vunpack.c.h.b16 %v6457
          %v6809 = vunpack.c.l.b16 %v6458
          %v6810 = vunpack.c.h.b16 %v6458
          %v6811 = vunpack.c.l.b16 %v6459
          %v6812 = vunpack.c.h.b16 %v6459
          %v6813 = vunpack.c.l.b16 %v6460
          %v6814 = vunpack.c.h.b16 %v6460
          %v6815 = vunpack.c.l.b16 %v6461
          %v6816 = vunpack.c.h.b16 %v6461
          %v6817 = vunpack.c.l.b16 %v6462
          %v6818 = vunpack.c.h.b16 %v6462
          %v6819 = vunpack.c.l.b16 %v6463
          %v6820 = vunpack.c.h.b16 %v6463
          %v6821 = vunpack.c.l.b16 %v6464
          %v6822 = vunpack.c.h.b16 %v6464
          %v6823 = vunpack.c.l.b16 %v6465
          %v6824 = vunpack.c.h.b16 %v6465
          %v6825 = vunpack.c.l.b16 %v6466
          %v6826 = vunpack.c.h.b16 %v6466
          %v6827 = vunpack.c.l.b16 %v6467
          %v6828 = vunpack.c.h.b16 %v6467
          %v6829 = vunpack.c.l.b16 %v6468
          %v6830 = vunpack.c.h.b16 %v6468
          %v6831 = vunpack.c.l.b16 %v6469
          %v6832 = vunpack.c.h.b16 %v6469
          %v6833 = vunpack.c.l.b16 %v6470
          %v6834 = vunpack.c.h.b16 %v6470
          %v6835 = vunpack.c.l.b16 %v6471
          %v6836 = vunpack.c.h.b16 %v6471
          %v6837 = vunpack.c.l.b16 %v6472
          %v6838 = vunpack.c.h.b16 %v6472
          %v6839 = vunpack.c.l.b16 %v6473
          %v6840 = vunpack.c.h.b16 %v6473
          %v6841 = vunpack.c.l.b16 %v6474
          %v6842 = vunpack.c.h.b16 %v6474
          %v6843 = vunpack.c.l.b16 %v6475
          %v6844 = vunpack.c.h.b16 %v6475
          %v6845 = vunpack.c.l.b16 %v6476
          %v6846 = vunpack.c.h.b16 %v6476
          %v6847 = vunpack.c.l.b16 %v6477
          %v6848 = vunpack.c.h.b16 %v6477
          %v6849 = vunpack.c.l.b16 %v6478
          %v6850 = vunpack.c.h.b16 %v6478
          %v6851 = vunpack.c.l.b16 %v6479
          %v6852 = vunpack.c.h.b16 %v6479
          %v6853 = vunpack.c.l.b16 %v6480
          %v6854 = vunpack.c.h.b16 %v6480
          %v6855 = vpack.c.b16 %v6793, %v6791
          %v6856 = vpack.c.b16 %v6794, %v6792
          %v6857 = vpack.c.b16 %v6797, %v6795
          %v6858 = vpack.c.b16 %v6798, %v6796
          %v6859 = vpack.c.b16 %v6801, %v6799
          %v6860 = vpack.c.b16 %v6802, %v6800
          %v6861 = vpack.c.b16 %v6805, %v6803
          %v6862 = vpack.c.b16 %v6806, %v6804
          %v6863 = vpack.c.b16 %v6809, %v6807
          %v6864 = vpack.c.b16 %v6810, %v6808
          %v6865 = vpack.c.b16 %v6813, %v6811
          %v6866 = vpack.c.b16 %v6814, %v6812
          %v6867 = vpack.c.b16 %v6817, %v6815
          %v6868 = vpack.c.b16 %v6818, %v6816
          %v6869 = vpack.c.b16 %v6821, %v6819
          %v6870 = vpack.c.b16 %v6822, %v6820
          %v6871 = vpack.c.b16 %v6825, %v6823
          %v6872 = vpack.c.b16 %v6826, %v6824
          %v6873 = vpack.c.b16 %v6829, %v6827
          %v6874 = vpack.c.b16 %v6830, %v6828
          %v6875 = vpack.c.b16 %v6833, %v6831
          %v6876 = vpack.c.b16 %v6834, %v6832
          %v6877 = vpack.c.b16 %v6837, %v6835
          %v6878 = vpack.c.b16 %v6838, %v6836
          %v6879 = vpack.c.b16 %v6841, %v6839
          %v6880 = vpack.c.b16 %v6842, %v6840
          %v6881 = vpack.c.b16 %v6845, %v6843
          %v6882 = vpack.c.b16 %v6846, %v6844
          %v6883 = vpack.c.b16 %v6849, %v6847
          %v6884 = vpack.c.b16 %v6850, %v6848
          %v6885 = vpack.c.b16 %v6853, %v6851
          %v6886 = vpack.c.b16 %v6854, %v6852
          %6919 = vmatprep.subr.bf16.mxu0 %v6856
          %6920 = vmatpush1.bf16.msra.mxu0 %v6855
          %6921 = vmatprep.subr.bf16.mxu0 %v6858
          %6922 = vmatpush1.bf16.msra.mxu0 %v6857
          %6923 = vmatprep.subr.bf16.mxu0 %v6860
          %6924 = vmatpush1.bf16.msra.mxu0 %v6859
          %6925 = vmatprep.subr.bf16.mxu0 %v6862
          %6926 = vmatpush1.bf16.msra.mxu0 %v6861
          %6927 = vmatprep.subr.bf16.mxu0 %v6864
          %6928 = vmatpush1.bf16.msra.mxu0 %v6863
          %6929 = vmatprep.subr.bf16.mxu0 %v6866
          %6930 = vmatpush1.bf16.msra.mxu0 %v6865
          %6931 = vmatprep.subr.bf16.mxu0 %v6868
          %6932 = vmatpush1.bf16.msra.mxu0 %v6867
          %6933 = vmatprep.subr.bf16.mxu0 %v6870
          %6934 = vmatpush1.bf16.msra.mxu0 %v6869
          %6935 = vmatprep.subr.bf16.mxu0 %v6872
          %6936 = vmatpush1.bf16.msra.mxu0 %v6871
          %6937 = vmatprep.subr.bf16.mxu0 %v6874
          %6938 = vmatpush1.bf16.msra.mxu0 %v6873
          %6939 = vmatprep.subr.bf16.mxu0 %v6876
          %6940 = vmatpush1.bf16.msra.mxu0 %v6875
          %6941 = vmatprep.subr.bf16.mxu0 %v6878
          %6942 = vmatpush1.bf16.msra.mxu0 %v6877
          %6943 = vmatprep.subr.bf16.mxu0 %v6880
          %6944 = vmatpush1.bf16.msra.mxu0 %v6879
          %6945 = vmatprep.subr.bf16.mxu0 %v6882
          %6946 = vmatpush1.bf16.msra.mxu0 %v6881
          %6947 = vmatprep.subr.bf16.mxu0 %v6884
          %6948 = vmatpush1.bf16.msra.mxu0 %v6883
          %6949 = vmatprep.subr.bf16.mxu0 %v6886
          %6950 = vmatpush1.bf16.msra.mxu0 %v6885
          %6951 = vmatprep.mubr.bf16.mxu0 %v6756
          %6952 = vmatmul.mubr.bf16.gmra.mrb[0].mxu0 %v6755
          %v6953 = vpop.f32.mrb[0].mxu0
          %v6954 = vadd.f32 %v6735, %v6953
          %v6955 = vpop.f32.mrb[0].mxu0
          %v6956 = vadd.f32 %v6737, %v6955
          %v6957 = vpop.f32.mrb[0].mxu0
          %v6958 = vpop.f32.mrb[0].mxu0
          %6959 = vdwg.mxu0
          %s6960 = scalar_lea.vmem [#allocation12], 512
          %v6961 = vld [vmem:[%s6960] sm:$0xff]
          %v6962 = vld [vmem:[%s6960 + $0x8] sm:$0xff]
          %v6963 = vld [vmem:[%s6960 + $0x10] sm:$0xff]
          %v6964 = vld [vmem:[%s6960 + $0x18] sm:$0xff]
          %v6965 = vld [vmem:[%s6960 + $0x20] sm:$0xff]
          %v6966 = vld [vmem:[%s6960 + $0x28] sm:$0xff]
          %v6967 = vld [vmem:[%s6960 + $0x30] sm:$0xff]
          %v6968 = vld [vmem:[%s6960 + $0x38] sm:$0xff]
          %v6969 = vld [vmem:[%s6960 + $0x40] sm:$0xff]
          %v6970 = vld [vmem:[%s6960 + $0x48] sm:$0xff]
          %v6971 = vld [vmem:[%s6960 + $0x50] sm:$0xff]
          %v6972 = vld [vmem:[%s6960 + $0x58] sm:$0xff]
          %v6973 = vld [vmem:[%s6960 + $0x60] sm:$0xff]
          %v6974 = vld [vmem:[%s6960 + $0x68] sm:$0xff]
          %v6975 = vld [vmem:[%s6960 + $0x70] sm:$0xff]
          %v6976 = vld [vmem:[%s6960 + $0x78] sm:$0xff]
          %v6977 = vld [vmem:[%s6960 + $0x80] sm:$0xff]
          %v6978 = vld [vmem:[%s6960 + $0x88] sm:$0xff]
          %v6979 = vld [vmem:[%s6960 + $0x90] sm:$0xff]
          %v6980 = vld [vmem:[%s6960 + $0x98] sm:$0xff]
          %v6981 = vld [vmem:[%s6960 + $0xa0] sm:$0xff]
          %v6982 = vld [vmem:[%s6960 + $0xa8] sm:$0xff]
          %v6983 = vld [vmem:[%s6960 + $0xb0] sm:$0xff]
          %v6984 = vld [vmem:[%s6960 + $0xb8] sm:$0xff]
          %v6985 = vld [vmem:[%s6960 + $0xc0] sm:$0xff]
          %v6986 = vld [vmem:[%s6960 + $0xc8] sm:$0xff]
          %v6987 = vld [vmem:[%s6960 + $0xd0] sm:$0xff]
          %v6988 = vld [vmem:[%s6960 + $0xd8] sm:$0xff]
          %v6989 = vld [vmem:[%s6960 + $0xe0] sm:$0xff]
          %v6990 = vld [vmem:[%s6960 + $0xe8] sm:$0xff]
          %v6991 = vld [vmem:[%s6960 + $0xf0] sm:$0xff]
          %v6992 = vld [vmem:[%s6960 + $0xf8] sm:$0xff]
          %v6997 = vunpack.c.l.b16 %v6439
          %v6998 = vunpack.c.l.b16 %v6440
          %v6999 = vunpack.c.l.b16 %v6447
          %v7000 = vunpack.c.l.b16 %v6448
          %v7001 = vsel %vm3741, %v6997, %v6524
          %v7002 = vsel %vm3743, %v6528, %v7001
          %v7003 = vsel %vm3745, %v6999, %v7002
          %v7004 = vsel %vm3741, %v6998, %v6525
          %v7005 = vsel %vm3743, %v6529, %v7004
          %v7006 = vsel %vm3745, %v7000, %v7005
          %v7007 = vpack.c.b16 %v7003, %v7003
          %v7008 = vpack.c.b16 %v7006, %v7006
          %v7043 = vunpack.c.l.b16 %v6961
          %v7044 = vunpack.c.h.b16 %v6961
          %v7045 = vunpack.c.l.b16 %v6962
          %v7046 = vunpack.c.h.b16 %v6962
          %v7047 = vunpack.c.l.b16 %v6963
          %v7048 = vunpack.c.h.b16 %v6963
          %v7049 = vunpack.c.l.b16 %v6964
          %v7050 = vunpack.c.h.b16 %v6964
          %v7051 = vunpack.c.l.b16 %v6965
          %v7052 = vunpack.c.h.b16 %v6965
          %v7053 = vunpack.c.l.b16 %v6966
          %v7054 = vunpack.c.h.b16 %v6966
          %v7055 = vunpack.c.l.b16 %v6967
          %v7056 = vunpack.c.h.b16 %v6967
          %v7057 = vunpack.c.l.b16 %v6968
          %v7058 = vunpack.c.h.b16 %v6968
          %v7059 = vunpack.c.l.b16 %v6969
          %v7060 = vunpack.c.h.b16 %v6969
          %v7061 = vunpack.c.l.b16 %v6970
          %v7062 = vunpack.c.h.b16 %v6970
          %v7063 = vunpack.c.l.b16 %v6971
          %v7064 = vunpack.c.h.b16 %v6971
          %v7065 = vunpack.c.l.b16 %v6972
          %v7066 = vunpack.c.h.b16 %v6972
          %v7067 = vunpack.c.l.b16 %v6973
          %v7068 = vunpack.c.h.b16 %v6973
          %v7069 = vunpack.c.l.b16 %v6974
          %v7070 = vunpack.c.h.b16 %v6974
          %v7071 = vunpack.c.l.b16 %v6975
          %v7072 = vunpack.c.h.b16 %v6975
          %v7073 = vunpack.c.l.b16 %v6976
          %v7074 = vunpack.c.h.b16 %v6976
          %v7075 = vunpack.c.l.b16 %v6977
          %v7076 = vunpack.c.h.b16 %v6977
          %v7077 = vunpack.c.l.b16 %v6978
          %v7078 = vunpack.c.h.b16 %v6978
          %v7079 = vunpack.c.l.b16 %v6979
          %v7080 = vunpack.c.h.b16 %v6979
          %v7081 = vunpack.c.l.b16 %v6980
          %v7082 = vunpack.c.h.b16 %v6980
          %v7083 = vunpack.c.l.b16 %v6981
          %v7084 = vunpack.c.h.b16 %v6981
          %v7085 = vunpack.c.l.b16 %v6982
          %v7086 = vunpack.c.h.b16 %v6982
          %v7087 = vunpack.c.l.b16 %v6983
          %v7088 = vunpack.c.h.b16 %v6983
          %v7089 = vunpack.c.l.b16 %v6984
          %v7090 = vunpack.c.h.b16 %v6984
          %v7091 = vunpack.c.l.b16 %v6985
          %v7092 = vunpack.c.h.b16 %v6985
          %v7093 = vunpack.c.l.b16 %v6986
          %v7094 = vunpack.c.h.b16 %v6986
          %v7095 = vunpack.c.l.b16 %v6987
          %v7096 = vunpack.c.h.b16 %v6987
          %v7097 = vunpack.c.l.b16 %v6988
          %v7098 = vunpack.c.h.b16 %v6988
          %v7099 = vunpack.c.l.b16 %v6989
          %v7100 = vunpack.c.h.b16 %v6989
          %v7101 = vunpack.c.l.b16 %v6990
          %v7102 = vunpack.c.h.b16 %v6990
          %v7103 = vunpack.c.l.b16 %v6991
          %v7104 = vunpack.c.h.b16 %v6991
          %v7105 = vunpack.c.l.b16 %v6992
          %v7106 = vunpack.c.h.b16 %v6992
          %v7107 = vpack.c.b16 %v7045, %v7043
          %v7108 = vpack.c.b16 %v7046, %v7044
          %v7109 = vpack.c.b16 %v7049, %v7047
          %v7110 = vpack.c.b16 %v7050, %v7048
          %v7111 = vpack.c.b16 %v7053, %v7051
          %v7112 = vpack.c.b16 %v7054, %v7052
          %v7113 = vpack.c.b16 %v7057, %v7055
          %v7114 = vpack.c.b16 %v7058, %v7056
          %v7115 = vpack.c.b16 %v7061, %v7059
          %v7116 = vpack.c.b16 %v7062, %v7060
          %v7117 = vpack.c.b16 %v7065, %v7063
          %v7118 = vpack.c.b16 %v7066, %v7064
          %v7119 = vpack.c.b16 %v7069, %v7067
          %v7120 = vpack.c.b16 %v7070, %v7068
          %v7121 = vpack.c.b16 %v7073, %v7071
          %v7122 = vpack.c.b16 %v7074, %v7072
          %v7123 = vpack.c.b16 %v7077, %v7075
          %v7124 = vpack.c.b16 %v7078, %v7076
          %v7125 = vpack.c.b16 %v7081, %v7079
          %v7126 = vpack.c.b16 %v7082, %v7080
          %v7127 = vpack.c.b16 %v7085, %v7083
          %v7128 = vpack.c.b16 %v7086, %v7084
          %v7129 = vpack.c.b16 %v7089, %v7087
          %v7130 = vpack.c.b16 %v7090, %v7088
          %v7131 = vpack.c.b16 %v7093, %v7091
          %v7132 = vpack.c.b16 %v7094, %v7092
          %v7133 = vpack.c.b16 %v7097, %v7095
          %v7134 = vpack.c.b16 %v7098, %v7096
          %v7135 = vpack.c.b16 %v7101, %v7099
          %v7136 = vpack.c.b16 %v7102, %v7100
          %v7137 = vpack.c.b16 %v7105, %v7103
          %v7138 = vpack.c.b16 %v7106, %v7104
          %7171 = vmatprep.subr.bf16.mxu0 %v7108
          %7172 = vmatpush1.bf16.msra.mxu0 %v7107
          %7173 = vmatprep.subr.bf16.mxu0 %v7110
          %7174 = vmatpush1.bf16.msra.mxu0 %v7109
          %7175 = vmatprep.subr.bf16.mxu0 %v7112
          %7176 = vmatpush1.bf16.msra.mxu0 %v7111
          %7177 = vmatprep.subr.bf16.mxu0 %v7114
          %7178 = vmatpush1.bf16.msra.mxu0 %v7113
          %7179 = vmatprep.subr.bf16.mxu0 %v7116
          %7180 = vmatpush1.bf16.msra.mxu0 %v7115
          %7181 = vmatprep.subr.bf16.mxu0 %v7118
          %7182 = vmatpush1.bf16.msra.mxu0 %v7117
          %7183 = vmatprep.subr.bf16.mxu0 %v7120
          %7184 = vmatpush1.bf16.msra.mxu0 %v7119
          %7185 = vmatprep.subr.bf16.mxu0 %v7122
          %7186 = vmatpush1.bf16.msra.mxu0 %v7121
          %7187 = vmatprep.subr.bf16.mxu0 %v7124
          %7188 = vmatpush1.bf16.msra.mxu0 %v7123
          %7189 = vmatprep.subr.bf16.mxu0 %v7126
          %7190 = vmatpush1.bf16.msra.mxu0 %v7125
          %7191 = vmatprep.subr.bf16.mxu0 %v7128
          %7192 = vmatpush1.bf16.msra.mxu0 %v7127
          %7193 = vmatprep.subr.bf16.mxu0 %v7130
          %7194 = vmatpush1.bf16.msra.mxu0 %v7129
          %7195 = vmatprep.subr.bf16.mxu0 %v7132
          %7196 = vmatpush1.bf16.msra.mxu0 %v7131
          %7197 = vmatprep.subr.bf16.mxu0 %v7134
          %7198 = vmatpush1.bf16.msra.mxu0 %v7133
          %7199 = vmatprep.subr.bf16.mxu0 %v7136
          %7200 = vmatpush1.bf16.msra.mxu0 %v7135
          %7201 = vmatprep.subr.bf16.mxu0 %v7138
          %7202 = vmatpush1.bf16.msra.mxu0 %v7137
          %7203 = vmatprep.mubr.bf16.mxu0 %v7008
          %7204 = vmatmul.mubr.bf16.gmra.mrb[0].mxu0 %v7007
          %v7205 = vpop.f32.mrb[0].mxu0
          %v7206 = vadd.f32 0.0, %v7205
          %v7207 = vpop.f32.mrb[0].mxu0
          %v7208 = vadd.f32 0.0, %v7207
          %v7209 = vpop.f32.mrb[0].mxu0
          %v7210 = vpop.f32.mrb[0].mxu0
          %7211 = vdwg.mxu0
          %v7212 = vadd.f32 %v6954, %v7206
          %v7213 = vadd.f32 %v6956, %v7208
          %v7214 = vld [vmem:[#allocation13] sm:$0x3]
          %v7216 = vlaneseq
          %v7217 = vshrl.u32 %v7216, 7
          %v7218 = vsub.s32 0, %v7217
          %v7219 = vrot.slane %v7214, %v7218
          %v7220 = vlaneseq
          %v7221 = vshrl.u32 %v7220, 7
          %v7222 = vsub.s32 1, %v7221
          %v7223 = vrot.slane %v7214, %v7222
          %v7226 = vadd.f32 %v7212, %v7219
          %v7227 = vadd.f32 %v7213, %v7223
          %v7228 = vmax.f32 %v7226, 0.0
          %v7229 = vmax.f32 %v7227, 0.0
          %v7232 = vcombine.low %v7228, %v7229
          %v7234 = vunpack.c.l.s4 1983009808
          %v7235 = vunpack.c.0.s8 %v7234
          %v7236 = vlaneseq
          %v7237 = vshrl.u32 %v7236, 7
          %v7238 = vsub.s32 %v7235, %v7237
          %v7239 = vrot.slane %v7232, %v7238
          %v7240 = vcombine.high %v7239, %v7239
          %v7242 = vunpack.c.l.s4 1983009808
          %v7243 = vunpack.c.0.s8 %v7242
          %v7244 = vlaneseq
          %v7245 = vshrl.u32 %v7244, 7
          %v7246 = vsub.s32 %v7243, %v7245
          %v7247 = vrot.slane %v7239, %v7246
          %v7248 = vcombine.high %v7247, %v7247
          %v7250 = vunpack.c.l.s4 1983009808
          %v7251 = vunpack.c.0.s8 %v7250
          %v7252 = vlaneseq
          %v7253 = vshrl.u32 %v7252, 7
          %v7254 = vsub.s32 %v7251, %v7253
          %v7255 = vrot.slane %v7240, %v7254
          %v7256 = vcombine.high %v7255, %v7255
          %v7261 = vpack.c.bf16 %v7247, %v7247
          %v7262 = vpack.c.bf16 %v7248, %v7248
          %v7263 = vpack.c.bf16 %v7255, %v7255
          %v7264 = vpack.c.bf16 %v7256, %v7256
          %v7269 = vcombine.low %v7261, %v7262
          %v7271 = vunpack.c.l.s4 1966171168
          %v7272 = vunpack.c.0.s8 %v7271
          %v7273 = vlaneseq
          %v7274 = vshrl.u32 %v7273, 7
          %v7275 = vsub.s32 %v7272, %v7274
          %v7276 = vrot.slane %v7269, %v7275
          %v7278 = vunpack.c.l.s4 1966171168
          %v7279 = vunpack.c.0.s8 %v7278
          %v7280 = vlaneseq
          %v7281 = vshrl.u32 %v7280, 7
          %v7282 = vsub.s32 %v7279, %v7281
          %v7283 = vrot.slane %v7276, %v7282
          %v7284 = vcombine.low %v7263, %v7264
          %v7286 = vunpack.c.l.s4 1966171168
          %v7287 = vunpack.c.0.s8 %v7286
          %v7288 = vlaneseq
          %v7289 = vshrl.u32 %v7288, 7
          %v7290 = vsub.s32 %v7287, %v7289
          %v7291 = vrot.slane %v7284, %v7290
          %v7293 = vunpack.c.l.s4 1966171168
          %v7294 = vunpack.c.0.s8 %v7293
          %v7295 = vlaneseq
          %v7296 = vshrl.u32 %v7295, 7
          %v7297 = vsub.s32 %v7294, %v7296
          %v7298 = vrot.slane %v7291, %v7297
          %7301 = vst [vmem:[#allocation2] sm:$0x3] %v7283
          %7302 = vst [vmem:[#allocation2 + $0x2] sm:$0x3] %v7298
          %7303 = vst [vmem:[#allocation3] sm:$0xff] 0.0
          %7304 = vst [vmem:[#allocation3 + $0x8] sm:$0xff] 0.0
        $region124: #{char_cnn_forward.1} parent=71 // pred_fallthru
          _
        %v7305 = vld [vmem:[#allocation2] sm:$0x3]
        %v7306 = vld [vmem:[#allocation2 + $0x2] sm:$0x3]
        %v7307 = vld [vmem:[%s558] sm:$0xff]
        %v7308 = vld [vmem:[%s558 + $0x8] sm:$0xff]
        %v7309 = vld [vmem:[%s558 + $0x10] sm:$0xff]
        %v7310 = vld [vmem:[%s558 + $0x18] sm:$0xff]
        %v7311 = vld [vmem:[%s558 + $0x20] sm:$0xff]
        %v7312 = vld [vmem:[%s558 + $0x28] sm:$0xff]
        %v7313 = vld [vmem:[%s558 + $0x30] sm:$0xff]
        %v7314 = vld [vmem:[%s558 + $0x38] sm:$0xff]
        %v7315 = vld [vmem:[%s558 + $0x40] sm:$0xff]
        %v7316 = vld [vmem:[%s558 + $0x48] sm:$0xff]
        %v7317 = vld [vmem:[%s558 + $0x50] sm:$0xff]
        %v7318 = vld [vmem:[%s558 + $0x58] sm:$0xff]
        %v7319 = vld [vmem:[%s558 + $0x60] sm:$0xff]
        %v7320 = vld [vmem:[%s558 + $0x68] sm:$0xff]
        %v7321 = vld [vmem:[%s558 + $0x70] sm:$0xff]
        %v7322 = vld [vmem:[%s558 + $0x78] sm:$0xff]
        %v7323 = vld [vmem:[%s558 + $0x80] sm:$0xff]
        %v7324 = vld [vmem:[%s558 + $0x88] sm:$0xff]
        %v7325 = vld [vmem:[%s558 + $0x90] sm:$0xff]
        %v7326 = vld [vmem:[%s558 + $0x98] sm:$0xff]
        %v7327 = vld [vmem:[%s558 + $0xa0] sm:$0xff]
        %v7328 = vld [vmem:[%s558 + $0xa8] sm:$0xff]
        %v7329 = vld [vmem:[%s558 + $0xb0] sm:$0xff]
        %v7330 = vld [vmem:[%s558 + $0xb8] sm:$0xff]
        %v7331 = vld [vmem:[%s558 + $0xc0] sm:$0xff]
        %v7332 = vld [vmem:[%s558 + $0xc8] sm:$0xff]
        %v7333 = vld [vmem:[%s558 + $0xd0] sm:$0xff]
        %v7334 = vld [vmem:[%s558 + $0xd8] sm:$0xff]
        %v7335 = vld [vmem:[%s558 + $0xe0] sm:$0xff]
        %v7336 = vld [vmem:[%s558 + $0xe8] sm:$0xff]
        %v7337 = vld [vmem:[%s558 + $0xf0] sm:$0xff]
        %v7338 = vld [vmem:[%s558 + $0xf8] sm:$0xff]
        %s7339 = scalar_lea.vmem %s558, 256 [#allocation15]
        %v7340 = vld [vmem:[%s7339] sm:$0xff]
        %v7341 = vld [vmem:[%s7339 + $0x8] sm:$0xff]
        %v7342 = vld [vmem:[%s7339 + $0x10] sm:$0xff]
        %v7343 = vld [vmem:[%s7339 + $0x18] sm:$0xff]
        %v7344 = vld [vmem:[%s7339 + $0x20] sm:$0xff]
        %v7345 = vld [vmem:[%s7339 + $0x28] sm:$0xff]
        %v7346 = vld [vmem:[%s7339 + $0x30] sm:$0xff]
        %v7347 = vld [vmem:[%s7339 + $0x38] sm:$0xff]
        %v7348 = vld [vmem:[%s7339 + $0x40] sm:$0xff]
        %v7349 = vld [vmem:[%s7339 + $0x48] sm:$0xff]
        %v7350 = vld [vmem:[%s7339 + $0x50] sm:$0xff]
        %v7351 = vld [vmem:[%s7339 + $0x58] sm:$0xff]
        %v7352 = vld [vmem:[%s7339 + $0x60] sm:$0xff]
        %v7353 = vld [vmem:[%s7339 + $0x68] sm:$0xff]
        %v7354 = vld [vmem:[%s7339 + $0x70] sm:$0xff]
        %v7355 = vld [vmem:[%s7339 + $0x78] sm:$0xff]
        %v7356 = vld [vmem:[%s7339 + $0x80] sm:$0xff]
        %v7357 = vld [vmem:[%s7339 + $0x88] sm:$0xff]
        %v7358 = vld [vmem:[%s7339 + $0x90] sm:$0xff]
        %v7359 = vld [vmem:[%s7339 + $0x98] sm:$0xff]
        %v7360 = vld [vmem:[%s7339 + $0xa0] sm:$0xff]
        %v7361 = vld [vmem:[%s7339 + $0xa8] sm:$0xff]
        %v7362 = vld [vmem:[%s7339 + $0xb0] sm:$0xff]
        %v7363 = vld [vmem:[%s7339 + $0xb8] sm:$0xff]
        %v7364 = vld [vmem:[%s7339 + $0xc0] sm:$0xff]
        %v7365 = vld [vmem:[%s7339 + $0xc8] sm:$0xff]
        %v7366 = vld [vmem:[%s7339 + $0xd0] sm:$0xff]
        %v7367 = vld [vmem:[%s7339 + $0xd8] sm:$0xff]
        %v7368 = vld [vmem:[%s7339 + $0xe0] sm:$0xff]
        %v7369 = vld [vmem:[%s7339 + $0xe8] sm:$0xff]
        %v7370 = vld [vmem:[%s7339 + $0xf0] sm:$0xff]
        %v7371 = vld [vmem:[%s7339 + $0xf8] sm:$0xff]
        %v7375 = vunpack.c.l.s4 1966171168
        %v7376 = vunpack.c.0.s8 %v7375
        %v7377 = vlaneseq
        %v7378 = vshrl.u32 %v7377, 7
        %v7379 = vsub.s32 %v7376, %v7378
        %v7380 = vrot.slane %v7305, %v7379
        %v7381 = vcombine.high %v7380, %v7380
        %v7383 = vunpack.c.l.s4 1966171168
        %v7384 = vunpack.c.0.s8 %v7383
        %v7385 = vlaneseq
        %v7386 = vshrl.u32 %v7385, 7
        %v7387 = vsub.s32 %v7384, %v7386
        %v7388 = vrot.slane %v7380, %v7387
        %v7390 = vunpack.c.l.s4 1966171168
        %v7391 = vunpack.c.0.s8 %v7390
        %v7392 = vlaneseq
        %v7393 = vshrl.u32 %v7392, 7
        %v7394 = vsub.s32 %v7391, %v7393
        %v7395 = vrot.slane %v7381, %v7394
        %v7397 = vunpack.c.l.s4 1966171168
        %v7398 = vunpack.c.0.s8 %v7397
        %v7399 = vlaneseq
        %v7400 = vshrl.u32 %v7399, 7
        %v7401 = vsub.s32 %v7398, %v7400
        %v7402 = vrot.slane %v7306, %v7401
        %v7403 = vcombine.high %v7402, %v7402
        %v7405 = vunpack.c.l.s4 1966171168
        %v7406 = vunpack.c.0.s8 %v7405
        %v7407 = vlaneseq
        %v7408 = vshrl.u32 %v7407, 7
        %v7409 = vsub.s32 %v7406, %v7408
        %v7410 = vrot.slane %v7402, %v7409
        %v7412 = vunpack.c.l.s4 1966171168
        %v7413 = vunpack.c.0.s8 %v7412
        %v7414 = vlaneseq
        %v7415 = vshrl.u32 %v7414, 7
        %v7416 = vsub.s32 %v7413, %v7415
        %v7417 = vrot.slane %v7403, %v7416
        %v7418 = vunpack.c.l.b16 %v7388
        %v7419 = vunpack.c.l.b16 %v7395
        %v7420 = vunpack.c.l.b16 %v7410
        %v7421 = vunpack.c.l.b16 %v7417
        %v7422 = vrot.slane %v7418, 1
        %vm7423 = vcmask 1041409
        %v7424 = vsel %vm7423, %v7420, %v7422
        %v7425 = vrot.slane %v7419, 1
        %v7426 = vsel %vm7423, %v7421, %v7425
        %v7427 = vpack.c.b16 %v7424, %v7424
        %v7428 = vpack.c.b16 %v7426, %v7426
        %v7463 = vunpack.c.l.b16 %v7340
        %v7464 = vunpack.c.h.b16 %v7340
        %v7465 = vunpack.c.l.b16 %v7341
        %v7466 = vunpack.c.h.b16 %v7341
        %v7467 = vunpack.c.l.b16 %v7342
        %v7468 = vunpack.c.h.b16 %v7342
        %v7469 = vunpack.c.l.b16 %v7343
        %v7470 = vunpack.c.h.b16 %v7343
        %v7471 = vunpack.c.l.b16 %v7344
        %v7472 = vunpack.c.h.b16 %v7344
        %v7473 = vunpack.c.l.b16 %v7345
        %v7474 = vunpack.c.h.b16 %v7345
        %v7475 = vunpack.c.l.b16 %v7346
        %v7476 = vunpack.c.h.b16 %v7346
        %v7477 = vunpack.c.l.b16 %v7347
        %v7478 = vunpack.c.h.b16 %v7347
        %v7479 = vunpack.c.l.b16 %v7348
        %v7480 = vunpack.c.h.b16 %v7348
        %v7481 = vunpack.c.l.b16 %v7349
        %v7482 = vunpack.c.h.b16 %v7349
        %v7483 = vunpack.c.l.b16 %v7350
        %v7484 = vunpack.c.h.b16 %v7350
        %v7485 = vunpack.c.l.b16 %v7351
        %v7486 = vunpack.c.h.b16 %v7351
        %v7487 = vunpack.c.l.b16 %v7352
        %v7488 = vunpack.c.h.b16 %v7352
        %v7489 = vunpack.c.l.b16 %v7353
        %v7490 = vunpack.c.h.b16 %v7353
        %v7491 = vunpack.c.l.b16 %v7354
        %v7492 = vunpack.c.h.b16 %v7354
        %v7493 = vunpack.c.l.b16 %v7355
        %v7494 = vunpack.c.h.b16 %v7355
        %v7495 = vunpack.c.l.b16 %v7356
        %v7496 = vunpack.c.h.b16 %v7356
        %v7497 = vunpack.c.l.b16 %v7357
        %v7498 = vunpack.c.h.b16 %v7357
        %v7499 = vunpack.c.l.b16 %v7358
        %v7500 = vunpack.c.h.b16 %v7358
        %v7501 = vunpack.c.l.b16 %v7359
        %v7502 = vunpack.c.h.b16 %v7359
        %v7503 = vunpack.c.l.b16 %v7360
        %v7504 = vunpack.c.h.b16 %v7360
        %v7505 = vunpack.c.l.b16 %v7361
        %v7506 = vunpack.c.h.b16 %v7361
        %v7507 = vunpack.c.l.b16 %v7362
        %v7508 = vunpack.c.h.b16 %v7362
        %v7509 = vunpack.c.l.b16 %v7363
        %v7510 = vunpack.c.h.b16 %v7363
        %v7511 = vunpack.c.l.b16 %v7364
        %v7512 = vunpack.c.h.b16 %v7364
        %v7513 = vunpack.c.l.b16 %v7365
        %v7514 = vunpack.c.h.b16 %v7365
        %v7515 = vunpack.c.l.b16 %v7366
        %v7516 = vunpack.c.h.b16 %v7366
        %v7517 = vunpack.c.l.b16 %v7367
        %v7518 = vunpack.c.h.b16 %v7367
        %v7519 = vunpack.c.l.b16 %v7368
        %v7520 = vunpack.c.h.b16 %v7368
        %v7521 = vunpack.c.l.b16 %v7369
        %v7522 = vunpack.c.h.b16 %v7369
        %v7523 = vunpack.c.l.b16 %v7370
        %v7524 = vunpack.c.h.b16 %v7370
        %v7525 = vunpack.c.l.b16 %v7371
        %v7526 = vunpack.c.h.b16 %v7371
        %v7527 = vpack.c.b16 %v7465, %v7463
        %v7528 = vpack.c.b16 %v7466, %v7464
        %v7529 = vpack.c.b16 %v7469, %v7467
        %v7530 = vpack.c.b16 %v7470, %v7468
        %v7531 = vpack.c.b16 %v7473, %v7471
        %v7532 = vpack.c.b16 %v7474, %v7472
        %v7533 = vpack.c.b16 %v7477, %v7475
        %v7534 = vpack.c.b16 %v7478, %v7476
        %v7535 = vpack.c.b16 %v7481, %v7479
        %v7536 = vpack.c.b16 %v7482, %v7480
        %v7537 = vpack.c.b16 %v7485, %v7483
        %v7538 = vpack.c.b16 %v7486, %v7484
        %v7539 = vpack.c.b16 %v7489, %v7487
        %v7540 = vpack.c.b16 %v7490, %v7488
        %v7541 = vpack.c.b16 %v7493, %v7491
        %v7542 = vpack.c.b16 %v7494, %v7492
        %v7543 = vpack.c.b16 %v7497, %v7495
        %v7544 = vpack.c.b16 %v7498, %v7496
        %v7545 = vpack.c.b16 %v7501, %v7499
        %v7546 = vpack.c.b16 %v7502, %v7500
        %v7547 = vpack.c.b16 %v7505, %v7503
        %v7548 = vpack.c.b16 %v7506, %v7504
        %v7549 = vpack.c.b16 %v7509, %v7507
        %v7550 = vpack.c.b16 %v7510, %v7508
        %v7551 = vpack.c.b16 %v7513, %v7511
        %v7552 = vpack.c.b16 %v7514, %v7512
        %v7553 = vpack.c.b16 %v7517, %v7515
        %v7554 = vpack.c.b16 %v7518, %v7516
        %v7555 = vpack.c.b16 %v7521, %v7519
        %v7556 = vpack.c.b16 %v7522, %v7520
        %v7557 = vpack.c.b16 %v7525, %v7523
        %v7558 = vpack.c.b16 %v7526, %v7524
        %7591 = vmatprep.subr.bf16.mxu0 %v7528
        %7592 = vmatpush1.bf16.msra.mxu0 %v7527
        %7593 = vmatprep.subr.bf16.mxu0 %v7530
        %7594 = vmatpush1.bf16.msra.mxu0 %v7529
        %7595 = vmatprep.subr.bf16.mxu0 %v7532
        %7596 = vmatpush1.bf16.msra.mxu0 %v7531
        %7597 = vmatprep.subr.bf16.mxu0 %v7534
        %7598 = vmatpush1.bf16.msra.mxu0 %v7533
        %7599 = vmatprep.subr.bf16.mxu0 %v7536
        %7600 = vmatpush1.bf16.msra.mxu0 %v7535
        %7601 = vmatprep.subr.bf16.mxu0 %v7538
        %7602 = vmatpush1.bf16.msra.mxu0 %v7537
        %7603 = vmatprep.subr.bf16.mxu0 %v7540
        %7604 = vmatpush1.bf16.msra.mxu0 %v7539
        %7605 = vmatprep.subr.bf16.mxu0 %v7542
        %7606 = vmatpush1.bf16.msra.mxu0 %v7541
        %7607 = vmatprep.subr.bf16.mxu0 %v7544
        %7608 = vmatpush1.bf16.msra.mxu0 %v7543
        %7609 = vmatprep.subr.bf16.mxu0 %v7546
        %7610 = vmatpush1.bf16.msra.mxu0 %v7545
        %7611 = vmatprep.subr.bf16.mxu0 %v7548
        %7612 = vmatpush1.bf16.msra.mxu0 %v7547
        %7613 = vmatprep.subr.bf16.mxu0 %v7550
        %7614 = vmatpush1.bf16.msra.mxu0 %v7549
        %7615 = vmatprep.subr.bf16.mxu0 %v7552
        %7616 = vmatpush1.bf16.msra.mxu0 %v7551
        %7617 = vmatprep.subr.bf16.mxu0 %v7554
        %7618 = vmatpush1.bf16.msra.mxu0 %v7553
        %7619 = vmatprep.subr.bf16.mxu0 %v7556
        %7620 = vmatpush1.bf16.msra.mxu0 %v7555
        %7621 = vmatprep.subr.bf16.mxu0 %v7558
        %7622 = vmatpush1.bf16.msra.mxu0 %v7557
        %7623 = vmatprep.mubr.bf16.mxu0 %v7428
        %7624 = vmatmul.mubr.bf16.gmra.mrb[0].mxu0 %v7427
        %v7625 = vpop.f32.mrb[0].mxu0
        %v7626 = vadd.f32 0.0, %v7625
        %v7627 = vpop.f32.mrb[0].mxu0
        %v7628 = vadd.f32 0.0, %v7627
        %v7629 = vpop.f32.mrb[0].mxu0
        %v7630 = vpop.f32.mrb[0].mxu0
        %7631 = vdwg.mxu0
        %v7632 = vrot.slane %v7420, 7
        %v7633 = vsel %vm7423, %v7632, %v7418
        %v7634 = vrot.slane %v7421, 7
        %v7635 = vsel %vm7423, %v7634, %v7419
        %v7636 = vpack.c.b16 %v7633, %v7633
        %v7637 = vpack.c.b16 %v7635, %v7635
        %v7672 = vunpack.c.l.b16 %v7307
        %v7673 = vunpack.c.h.b16 %v7307
        %v7674 = vunpack.c.l.b16 %v7308
        %v7675 = vunpack.c.h.b16 %v7308
        %v7676 = vunpack.c.l.b16 %v7309
        %v7677 = vunpack.c.h.b16 %v7309
        %v7678 = vunpack.c.l.b16 %v7310
        %v7679 = vunpack.c.h.b16 %v7310
        %v7680 = vunpack.c.l.b16 %v7311
        %v7681 = vunpack.c.h.b16 %v7311
        %v7682 = vunpack.c.l.b16 %v7312
        %v7683 = vunpack.c.h.b16 %v7312
        %v7684 = vunpack.c.l.b16 %v7313
        %v7685 = vunpack.c.h.b16 %v7313
        %v7686 = vunpack.c.l.b16 %v7314
        %v7687 = vunpack.c.h.b16 %v7314
        %v7688 = vunpack.c.l.b16 %v7315
        %v7689 = vunpack.c.h.b16 %v7315
        %v7690 = vunpack.c.l.b16 %v7316
        %v7691 = vunpack.c.h.b16 %v7316
        %v7692 = vunpack.c.l.b16 %v7317
        %v7693 = vunpack.c.h.b16 %v7317
        %v7694 = vunpack.c.l.b16 %v7318
        %v7695 = vunpack.c.h.b16 %v7318
        %v7696 = vunpack.c.l.b16 %v7319
        %v7697 = vunpack.c.h.b16 %v7319
        %v7698 = vunpack.c.l.b16 %v7320
        %v7699 = vunpack.c.h.b16 %v7320
        %v7700 = vunpack.c.l.b16 %v7321
        %v7701 = vunpack.c.h.b16 %v7321
        %v7702 = vunpack.c.l.b16 %v7322
        %v7703 = vunpack.c.h.b16 %v7322
        %v7704 = vunpack.c.l.b16 %v7323
        %v7705 = vunpack.c.h.b16 %v7323
        %v7706 = vunpack.c.l.b16 %v7324
        %v7707 = vunpack.c.h.b16 %v7324
        %v7708 = vunpack.c.l.b16 %v7325
        %v7709 = vunpack.c.h.b16 %v7325
        %v7710 = vunpack.c.l.b16 %v7326
        %v7711 = vunpack.c.h.b16 %v7326
        %v7712 = vunpack.c.l.b16 %v7327
        %v7713 = vunpack.c.h.b16 %v7327
        %v7714 = vunpack.c.l.b16 %v7328
        %v7715 = vunpack.c.h.b16 %v7328
        %v7716 = vunpack.c.l.b16 %v7329
        %v7717 = vunpack.c.h.b16 %v7329
        %v7718 = vunpack.c.l.b16 %v7330
        %v7719 = vunpack.c.h.b16 %v7330
        %v7720 = vunpack.c.l.b16 %v7331
        %v7721 = vunpack.c.h.b16 %v7331
        %v7722 = vunpack.c.l.b16 %v7332
        %v7723 = vunpack.c.h.b16 %v7332
        %v7724 = vunpack.c.l.b16 %v7333
        %v7725 = vunpack.c.h.b16 %v7333
        %v7726 = vunpack.c.l.b16 %v7334
        %v7727 = vunpack.c.h.b16 %v7334
        %v7728 = vunpack.c.l.b16 %v7335
        %v7729 = vunpack.c.h.b16 %v7335
        %v7730 = vunpack.c.l.b16 %v7336
        %v7731 = vunpack.c.h.b16 %v7336
        %v7732 = vunpack.c.l.b16 %v7337
        %v7733 = vunpack.c.h.b16 %v7337
        %v7734 = vunpack.c.l.b16 %v7338
        %v7735 = vunpack.c.h.b16 %v7338
        %v7736 = vpack.c.b16 %v7674, %v7672
        %v7737 = vpack.c.b16 %v7675, %v7673
        %v7738 = vpack.c.b16 %v7678, %v7676
        %v7739 = vpack.c.b16 %v7679, %v7677
        %v7740 = vpack.c.b16 %v7682, %v7680
        %v7741 = vpack.c.b16 %v7683, %v7681
        %v7742 = vpack.c.b16 %v7686, %v7684
        %v7743 = vpack.c.b16 %v7687, %v7685
        %v7744 = vpack.c.b16 %v7690, %v7688
        %v7745 = vpack.c.b16 %v7691, %v7689
        %v7746 = vpack.c.b16 %v7694, %v7692
        %v7747 = vpack.c.b16 %v7695, %v7693
        %v7748 = vpack.c.b16 %v7698, %v7696
        %v7749 = vpack.c.b16 %v7699, %v7697
        %v7750 = vpack.c.b16 %v7702, %v7700
        %v7751 = vpack.c.b16 %v7703, %v7701
        %v7752 = vpack.c.b16 %v7706, %v7704
        %v7753 = vpack.c.b16 %v7707, %v7705
        %v7754 = vpack.c.b16 %v7710, %v7708
        %v7755 = vpack.c.b16 %v7711, %v7709
        %v7756 = vpack.c.b16 %v7714, %v7712
        %v7757 = vpack.c.b16 %v7715, %v7713
        %v7758 = vpack.c.b16 %v7718, %v7716
        %v7759 = vpack.c.b16 %v7719, %v7717
        %v7760 = vpack.c.b16 %v7722, %v7720
        %v7761 = vpack.c.b16 %v7723, %v7721
        %v7762 = vpack.c.b16 %v7726, %v7724
        %v7763 = vpack.c.b16 %v7727, %v7725
        %v7764 = vpack.c.b16 %v7730, %v7728
        %v7765 = vpack.c.b16 %v7731, %v7729
        %v7766 = vpack.c.b16 %v7734, %v7732
        %v7767 = vpack.c.b16 %v7735, %v7733
        %7800 = vmatprep.subr.bf16.mxu0 %v7737
        %7801 = vmatpush1.bf16.msra.mxu0 %v7736
        %7802 = vmatprep.subr.bf16.mxu0 %v7739
        %7803 = vmatpush1.bf16.msra.mxu0 %v7738
        %7804 = vmatprep.subr.bf16.mxu0 %v7741
        %7805 = vmatpush1.bf16.msra.mxu0 %v7740
        %7806 = vmatprep.subr.bf16.mxu0 %v7743
        %7807 = vmatpush1.bf16.msra.mxu0 %v7742
        %7808 = vmatprep.subr.bf16.mxu0 %v7745
        %7809 = vmatpush1.bf16.msra.mxu0 %v7744
        %7810 = vmatprep.subr.bf16.mxu0 %v7747
        %7811 = vmatpush1.bf16.msra.mxu0 %v7746
        %7812 = vmatprep.subr.bf16.mxu0 %v7749
        %7813 = vmatpush1.bf16.msra.mxu0 %v7748
        %7814 = vmatprep.subr.bf16.mxu0 %v7751
        %7815 = vmatpush1.bf16.msra.mxu0 %v7750
        %7816 = vmatprep.subr.bf16.mxu0 %v7753
        %7817 = vmatpush1.bf16.msra.mxu0 %v7752
        %7818 = vmatprep.subr.bf16.mxu0 %v7755
        %7819 = vmatpush1.bf16.msra.mxu0 %v7754
        %7820 = vmatprep.subr.bf16.mxu0 %v7757
        %7821 = vmatpush1.bf16.msra.mxu0 %v7756
        %7822 = vmatprep.subr.bf16.mxu0 %v7759
        %7823 = vmatpush1.bf16.msra.mxu0 %v7758
        %7824 = vmatprep.subr.bf16.mxu0 %v7761
        %7825 = vmatpush1.bf16.msra.mxu0 %v7760
        %7826 = vmatprep.subr.bf16.mxu0 %v7763
        %7827 = vmatpush1.bf16.msra.mxu0 %v7762
        %7828 = vmatprep.subr.bf16.mxu0 %v7765
        %7829 = vmatpush1.bf16.msra.mxu0 %v7764
        %7830 = vmatprep.subr.bf16.mxu0 %v7767
        %7831 = vmatpush1.bf16.msra.mxu0 %v7766
        %7832 = vmatprep.mubr.bf16.mxu0 %v7637
        %7833 = vmatmul.mubr.bf16.gmra.mrb[0].mxu0 %v7636
        %v7834 = vpop.f32.mrb[0].mxu0
        %v7835 = vadd.f32 %v7626, %v7834
        %v7836 = vpop.f32.mrb[0].mxu0
        %v7837 = vadd.f32 %v7628, %v7836
        %v7838 = vpop.f32.mrb[0].mxu0
        %v7839 = vpop.f32.mrb[0].mxu0
        %7840 = vdwg.mxu0
        %v7841 = vld [vmem:[%s567] sm:$0x3]
        %v7843 = vlaneseq
        %v7844 = vshrl.u32 %v7843, 7
        %v7845 = vsub.s32 0, %v7844
        %v7846 = vrot.slane %v7841, %v7845
        %v7847 = vlaneseq
        %v7848 = vshrl.u32 %v7847, 7
        %v7849 = vsub.s32 1, %v7848
        %v7850 = vrot.slane %v7841, %v7849
        %v7853 = vadd.f32 %v7835, %v7846
        %v7854 = vadd.f32 %v7837, %v7850
        %v7855 = vmax.f32 %v7853, 0.0
        %v7856 = vmax.f32 %v7854, 0.0
        %v7857 = vld [vmem:[#allocation3] sm:$0xff]
        %v7858 = vld [vmem:[#allocation3 + $0x8] sm:$0xff]
        %v7859 = vpack.c.bf16 %v7855, %v7855
        %v7860 = vpack.c.bf16 %v7856, %v7856
        %v7861 = vld [vmem:[%s576] sm:$0xff]
        %v7862 = vld [vmem:[%s576 + $0x8] sm:$0xff]
        %v7863 = vld [vmem:[%s576 + $0x10] sm:$0xff]
        %v7864 = vld [vmem:[%s576 + $0x18] sm:$0xff]
        %v7865 = vld [vmem:[%s576 + $0x20] sm:$0xff]
        %v7866 = vld [vmem:[%s576 + $0x28] sm:$0xff]
        %v7867 = vld [vmem:[%s576 + $0x30] sm:$0xff]
        %v7868 = vld [vmem:[%s576 + $0x38] sm:$0xff]
        %v7869 = vld [vmem:[%s576 + $0x40] sm:$0xff]
        %v7870 = vld [vmem:[%s576 + $0x48] sm:$0xff]
        %v7871 = vld [vmem:[%s576 + $0x50] sm:$0xff]
        %v7872 = vld [vmem:[%s576 + $0x58] sm:$0xff]
        %v7873 = vld [vmem:[%s576 + $0x60] sm:$0xff]
        %v7874 = vld [vmem:[%s576 + $0x68] sm:$0xff]
        %v7875 = vld [vmem:[%s576 + $0x70] sm:$0xff]
        %v7876 = vld [vmem:[%s576 + $0x78] sm:$0xff]
        %v7877 = vld [vmem:[%s576 + $0x80] sm:$0xff]
        %v7878 = vld [vmem:[%s576 + $0x88] sm:$0xff]
        %v7879 = vld [vmem:[%s576 + $0x90] sm:$0xff]
        %v7880 = vld [vmem:[%s576 + $0x98] sm:$0xff]
        %v7881 = vld [vmem:[%s576 + $0xa0] sm:$0xff]
        %v7882 = vld [vmem:[%s576 + $0xa8] sm:$0xff]
        %v7883 = vld [vmem:[%s576 + $0xb0] sm:$0xff]
        %v7884 = vld [vmem:[%s576 + $0xb8] sm:$0xff]
        %v7885 = vld [vmem:[%s576 + $0xc0] sm:$0xff]
        %v7886 = vld [vmem:[%s576 + $0xc8] sm:$0xff]
        %v7887 = vld [vmem:[%s576 + $0xd0] sm:$0xff]
        %v7888 = vld [vmem:[%s576 + $0xd8] sm:$0xff]
        %v7889 = vld [vmem:[%s576 + $0xe0] sm:$0xff]
        %v7890 = vld [vmem:[%s576 + $0xe8] sm:$0xff]
        %v7891 = vld [vmem:[%s576 + $0xf0] sm:$0xff]
        %v7892 = vld [vmem:[%s576 + $0xf8] sm:$0xff]
        %v7893 = vld [vmem:[%s576 + $0x100] sm:$0xff]
        %v7894 = vld [vmem:[%s576 + $0x108] sm:$0xff]
        %v7895 = vld [vmem:[%s576 + $0x110] sm:$0xff]
        %v7896 = vld [vmem:[%s576 + $0x118] sm:$0xff]
        %v7897 = vld [vmem:[%s576 + $0x120] sm:$0xff]
        %v7898 = vld [vmem:[%s576 + $0x128] sm:$0xff]
        %v7899 = vld [vmem:[%s576 + $0x130] sm:$0xff]
        %v7900 = vld [vmem:[%s576 + $0x138] sm:$0xff]
        %v7901 = vld [vmem:[%s576 + $0x140] sm:$0xff]
        %v7902 = vld [vmem:[%s576 + $0x148] sm:$0xff]
        %v7903 = vld [vmem:[%s576 + $0x150] sm:$0xff]
        %v7904 = vld [vmem:[%s576 + $0x158] sm:$0xff]
        %v7905 = vld [vmem:[%s576 + $0x160] sm:$0xff]
        %v7906 = vld [vmem:[%s576 + $0x168] sm:$0xff]
        %v7907 = vld [vmem:[%s576 + $0x170] sm:$0xff]
        %v7908 = vld [vmem:[%s576 + $0x178] sm:$0xff]
        %v7909 = vld [vmem:[%s576 + $0x180] sm:$0xff]
        %v7910 = vld [vmem:[%s576 + $0x188] sm:$0xff]
        %v7911 = vld [vmem:[%s576 + $0x190] sm:$0xff]
        %v7912 = vld [vmem:[%s576 + $0x198] sm:$0xff]
        %v7913 = vld [vmem:[%s576 + $0x1a0] sm:$0xff]
        %v7914 = vld [vmem:[%s576 + $0x1a8] sm:$0xff]
        %v7915 = vld [vmem:[%s576 + $0x1b0] sm:$0xff]
        %v7916 = vld [vmem:[%s576 + $0x1b8] sm:$0xff]
        %v7917 = vld [vmem:[%s576 + $0x1c0] sm:$0xff]
        %v7918 = vld [vmem:[%s576 + $0x1c8] sm:$0xff]
        %v7919 = vld [vmem:[%s576 + $0x1d0] sm:$0xff]
        %v7920 = vld [vmem:[%s576 + $0x1d8] sm:$0xff]
        %v7921 = vld [vmem:[%s576 + $0x1e0] sm:$0xff]
        %v7922 = vld [vmem:[%s576 + $0x1e8] sm:$0xff]
        %v7923 = vld [vmem:[%s576 + $0x1f0] sm:$0xff]
        %v7924 = vld [vmem:[%s576 + $0x1f8] sm:$0xff]
        %v7925 = vld [vmem:[%s576 + $0x200] sm:$0xff]
        %v7926 = vld [vmem:[%s576 + $0x208] sm:$0xff]
        %v7927 = vld [vmem:[%s576 + $0x210] sm:$0xff]
        %v7928 = vld [vmem:[%s576 + $0x218] sm:$0xff]
        %v7929 = vld [vmem:[%s576 + $0x220] sm:$0xff]
        %v7930 = vld [vmem:[%s576 + $0x228] sm:$0xff]
        %v7931 = vld [vmem:[%s576 + $0x230] sm:$0xff]
        %v7932 = vld [vmem:[%s576 + $0x238] sm:$0xff]
        %v7933 = vld [vmem:[%s576 + $0x240] sm:$0xff]
        %v7934 = vld [vmem:[%s576 + $0x248] sm:$0xff]
        %v7935 = vld [vmem:[%s576 + $0x250] sm:$0xff]
        %v7936 = vld [vmem:[%s576 + $0x258] sm:$0xff]
        %v7937 = vld [vmem:[%s576 + $0x260] sm:$0xff]
        %v7938 = vld [vmem:[%s576 + $0x268] sm:$0xff]
        %v7939 = vld [vmem:[%s576 + $0x270] sm:$0xff]
        %v7940 = vld [vmem:[%s576 + $0x278] sm:$0xff]
        %v7941 = vld [vmem:[%s576 + $0x280] sm:$0xff]
        %v7942 = vld [vmem:[%s576 + $0x288] sm:$0xff]
        %v7943 = vld [vmem:[%s576 + $0x290] sm:$0xff]
        %v7944 = vld [vmem:[%s576 + $0x298] sm:$0xff]
        %v7945 = vld [vmem:[%s576 + $0x2a0] sm:$0xff]
        %v7946 = vld [vmem:[%s576 + $0x2a8] sm:$0xff]
        %v7947 = vld [vmem:[%s576 + $0x2b0] sm:$0xff]
        %v7948 = vld [vmem:[%s576 + $0x2b8] sm:$0xff]
        %v7949 = vld [vmem:[%s576 + $0x2c0] sm:$0xff]
        %v7950 = vld [vmem:[%s576 + $0x2c8] sm:$0xff]
        %v7951 = vld [vmem:[%s576 + $0x2d0] sm:$0xff]
        %v7952 = vld [vmem:[%s576 + $0x2d8] sm:$0xff]
        %v7953 = vld [vmem:[%s576 + $0x2e0] sm:$0xff]
        %v7954 = vld [vmem:[%s576 + $0x2e8] sm:$0xff]
        %v7955 = vld [vmem:[%s576 + $0x2f0] sm:$0xff]
        %v7956 = vld [vmem:[%s576 + $0x2f8] sm:$0xff]
        %v7957 = vld [vmem:[%s576 + $0x300] sm:$0xff]
        %v7958 = vld [vmem:[%s576 + $0x308] sm:$0xff]
        %v7959 = vld [vmem:[%s576 + $0x310] sm:$0xff]
        %v7960 = vld [vmem:[%s576 + $0x318] sm:$0xff]
        %v7961 = vld [vmem:[%s576 + $0x320] sm:$0xff]
        %v7962 = vld [vmem:[%s576 + $0x328] sm:$0xff]
        %v7963 = vld [vmem:[%s576 + $0x330] sm:$0xff]
        %v7964 = vld [vmem:[%s576 + $0x338] sm:$0xff]
        %v7965 = vld [vmem:[%s576 + $0x340] sm:$0xff]
        %v7966 = vld [vmem:[%s576 + $0x348] sm:$0xff]
        %v7967 = vld [vmem:[%s576 + $0x350] sm:$0xff]
        %v7968 = vld [vmem:[%s576 + $0x358] sm:$0xff]
        %v7969 = vld [vmem:[%s576 + $0x360] sm:$0xff]
        %v7970 = vld [vmem:[%s576 + $0x368] sm:$0xff]
        %v7971 = vld [vmem:[%s576 + $0x370] sm:$0xff]
        %v7972 = vld [vmem:[%s576 + $0x378] sm:$0xff]
        %v7973 = vld [vmem:[%s576 + $0x380] sm:$0xff]
        %v7974 = vld [vmem:[%s576 + $0x388] sm:$0xff]
        %v7975 = vld [vmem:[%s576 + $0x390] sm:$0xff]
        %v7976 = vld [vmem:[%s576 + $0x398] sm:$0xff]
        %v7977 = vld [vmem:[%s576 + $0x3a0] sm:$0xff]
        %v7978 = vld [vmem:[%s576 + $0x3a8] sm:$0xff]
        %v7979 = vld [vmem:[%s576 + $0x3b0] sm:$0xff]
        %v7980 = vld [vmem:[%s576 + $0x3b8] sm:$0xff]
        %v7981 = vld [vmem:[%s576 + $0x3c0] sm:$0xff]
        %v7982 = vld [vmem:[%s576 + $0x3c8] sm:$0xff]
        %v7983 = vld [vmem:[%s576 + $0x3d0] sm:$0xff]
        %v7984 = vld [vmem:[%s576 + $0x3d8] sm:$0xff]
        %v7985 = vld [vmem:[%s576 + $0x3e0] sm:$0xff]
        %v7986 = vld [vmem:[%s576 + $0x3e8] sm:$0xff]
        %v7987 = vld [vmem:[%s576 + $0x3f0] sm:$0xff]
        %v7988 = vld [vmem:[%s576 + $0x3f8] sm:$0xff]
        %v8117 = vunpack.c.l.b16 %v7861
        %v8118 = vunpack.c.h.b16 %v7861
        %v8119 = vunpack.c.l.b16 %v7862
        %v8120 = vunpack.c.h.b16 %v7862
        %v8121 = vunpack.c.l.b16 %v7863
        %v8122 = vunpack.c.h.b16 %v7863
        %v8123 = vunpack.c.l.b16 %v7864
        %v8124 = vunpack.c.h.b16 %v7864
        %v8125 = vunpack.c.l.b16 %v7865
        %v8126 = vunpack.c.h.b16 %v7865
        %v8127 = vunpack.c.l.b16 %v7866
        %v8128 = vunpack.c.h.b16 %v7866
        %v8129 = vunpack.c.l.b16 %v7867
        %v8130 = vunpack.c.h.b16 %v7867
        %v8131 = vunpack.c.l.b16 %v7868
        %v8132 = vunpack.c.h.b16 %v7868
        %v8133 = vunpack.c.l.b16 %v7869
        %v8134 = vunpack.c.h.b16 %v7869
        %v8135 = vunpack.c.l.b16 %v7870
        %v8136 = vunpack.c.h.b16 %v7870
        %v8137 = vunpack.c.l.b16 %v7871
        %v8138 = vunpack.c.h.b16 %v7871
        %v8139 = vunpack.c.l.b16 %v7872
        %v8140 = vunpack.c.h.b16 %v7872
        %v8141 = vunpack.c.l.b16 %v7873
        %v8142 = vunpack.c.h.b16 %v7873
        %v8143 = vunpack.c.l.b16 %v7874
        %v8144 = vunpack.c.h.b16 %v7874
        %v8145 = vunpack.c.l.b16 %v7875
        %v8146 = vunpack.c.h.b16 %v7875
        %v8147 = vunpack.c.l.b16 %v7876
        %v8148 = vunpack.c.h.b16 %v7876
        %v8149 = vunpack.c.l.b16 %v7877
        %v8150 = vunpack.c.h.b16 %v7877
        %v8151 = vunpack.c.l.b16 %v7878
        %v8152 = vunpack.c.h.b16 %v7878
        %v8153 = vunpack.c.l.b16 %v7879
        %v8154 = vunpack.c.h.b16 %v7879
        %v8155 = vunpack.c.l.b16 %v7880
        %v8156 = vunpack.c.h.b16 %v7880
        %v8157 = vunpack.c.l.b16 %v7881
        %v8158 = vunpack.c.h.b16 %v7881
        %v8159 = vunpack.c.l.b16 %v7882
        %v8160 = vunpack.c.h.b16 %v7882
        %v8161 = vunpack.c.l.b16 %v7883
        %v8162 = vunpack.c.h.b16 %v7883
        %v8163 = vunpack.c.l.b16 %v7884
        %v8164 = vunpack.c.h.b16 %v7884
        %v8165 = vunpack.c.l.b16 %v7885
        %v8166 = vunpack.c.h.b16 %v7885
        %v8167 = vunpack.c.l.b16 %v7886
        %v8168 = vunpack.c.h.b16 %v7886
        %v8169 = vunpack.c.l.b16 %v7887
        %v8170 = vunpack.c.h.b16 %v7887
        %v8171 = vunpack.c.l.b16 %v7888
        %v8172 = vunpack.c.h.b16 %v7888
        %v8173 = vunpack.c.l.b16 %v7889
        %v8174 = vunpack.c.h.b16 %v7889
        %v8175 = vunpack.c.l.b16 %v7890
        %v8176 = vunpack.c.h.b16 %v7890
        %v8177 = vunpack.c.l.b16 %v7891
        %v8178 = vunpack.c.h.b16 %v7891
        %v8179 = vunpack.c.l.b16 %v7892
        %v8180 = vunpack.c.h.b16 %v7892
        %v8181 = vunpack.c.l.b16 %v7893
        %v8182 = vunpack.c.h.b16 %v7893
        %v8183 = vunpack.c.l.b16 %v7894
        %v8184 = vunpack.c.h.b16 %v7894
        %v8185 = vunpack.c.l.b16 %v7895
        %v8186 = vunpack.c.h.b16 %v7895
        %v8187 = vunpack.c.l.b16 %v7896
        %v8188 = vunpack.c.h.b16 %v7896
        %v8189 = vunpack.c.l.b16 %v7897
        %v8190 = vunpack.c.h.b16 %v7897
        %v8191 = vunpack.c.l.b16 %v7898
        %v8192 = vunpack.c.h.b16 %v7898
        %v8193 = vunpack.c.l.b16 %v7899
        %v8194 = vunpack.c.h.b16 %v7899
        %v8195 = vunpack.c.l.b16 %v7900
        %v8196 = vunpack.c.h.b16 %v7900
        %v8197 = vunpack.c.l.b16 %v7901
        %v8198 = vunpack.c.h.b16 %v7901
        %v8199 = vunpack.c.l.b16 %v7902
        %v8200 = vunpack.c.h.b16 %v7902
        %v8201 = vunpack.c.l.b16 %v7903
        %v8202 = vunpack.c.h.b16 %v7903
        %v8203 = vunpack.c.l.b16 %v7904
        %v8204 = vunpack.c.h.b16 %v7904
        %v8205 = vunpack.c.l.b16 %v7905
        %v8206 = vunpack.c.h.b16 %v7905
        %v8207 = vunpack.c.l.b16 %v7906
        %v8208 = vunpack.c.h.b16 %v7906
        %v8209 = vunpack.c.l.b16 %v7907
        %v8210 = vunpack.c.h.b16 %v7907
        %v8211 = vunpack.c.l.b16 %v7908
        %v8212 = vunpack.c.h.b16 %v7908
        %v8213 = vunpack.c.l.b16 %v7909
        %v8214 = vunpack.c.h.b16 %v7909
        %v8215 = vunpack.c.l.b16 %v7910
        %v8216 = vunpack.c.h.b16 %v7910
        %v8217 = vunpack.c.l.b16 %v7911
        %v8218 = vunpack.c.h.b16 %v7911
        %v8219 = vunpack.c.l.b16 %v7912
        %v8220 = vunpack.c.h.b16 %v7912
        %v8221 = vunpack.c.l.b16 %v7913
        %v8222 = vunpack.c.h.b16 %v7913
        %v8223 = vunpack.c.l.b16 %v7914
        %v8224 = vunpack.c.h.b16 %v7914
        %v8225 = vunpack.c.l.b16 %v7915
        %v8226 = vunpack.c.h.b16 %v7915
        %v8227 = vunpack.c.l.b16 %v7916
        %v8228 = vunpack.c.h.b16 %v7916
        %v8229 = vunpack.c.l.b16 %v7917
        %v8230 = vunpack.c.h.b16 %v7917
        %v8231 = vunpack.c.l.b16 %v7918
        %v8232 = vunpack.c.h.b16 %v7918
        %v8233 = vunpack.c.l.b16 %v7919
        %v8234 = vunpack.c.h.b16 %v7919
        %v8235 = vunpack.c.l.b16 %v7920
        %v8236 = vunpack.c.h.b16 %v7920
        %v8237 = vunpack.c.l.b16 %v7921
        %v8238 = vunpack.c.h.b16 %v7921
        %v8239 = vunpack.c.l.b16 %v7922
        %v8240 = vunpack.c.h.b16 %v7922
        %v8241 = vunpack.c.l.b16 %v7923
        %v8242 = vunpack.c.h.b16 %v7923
        %v8243 = vunpack.c.l.b16 %v7924
        %v8244 = vunpack.c.h.b16 %v7924
        %v8245 = vunpack.c.l.b16 %v7925
        %v8246 = vunpack.c.h.b16 %v7925
        %v8247 = vunpack.c.l.b16 %v7926
        %v8248 = vunpack.c.h.b16 %v7926
        %v8249 = vunpack.c.l.b16 %v7927
        %v8250 = vunpack.c.h.b16 %v7927
        %v8251 = vunpack.c.l.b16 %v7928
        %v8252 = vunpack.c.h.b16 %v7928
        %v8253 = vunpack.c.l.b16 %v7929
        %v8254 = vunpack.c.h.b16 %v7929
        %v8255 = vunpack.c.l.b16 %v7930
        %v8256 = vunpack.c.h.b16 %v7930
        %v8257 = vunpack.c.l.b16 %v7931
        %v8258 = vunpack.c.h.b16 %v7931
        %v8259 = vunpack.c.l.b16 %v7932
        %v8260 = vunpack.c.h.b16 %v7932
        %v8261 = vunpack.c.l.b16 %v7933
        %v8262 = vunpack.c.h.b16 %v7933
        %v8263 = vunpack.c.l.b16 %v7934
        %v8264 = vunpack.c.h.b16 %v7934
        %v8265 = vunpack.c.l.b16 %v7935
        %v8266 = vunpack.c.h.b16 %v7935
        %v8267 = vunpack.c.l.b16 %v7936
        %v8268 = vunpack.c.h.b16 %v7936
        %v8269 = vunpack.c.l.b16 %v7937
        %v8270 = vunpack.c.h.b16 %v7937
        %v8271 = vunpack.c.l.b16 %v7938
        %v8272 = vunpack.c.h.b16 %v7938
        %v8273 = vunpack.c.l.b16 %v7939
        %v8274 = vunpack.c.h.b16 %v7939
        %v8275 = vunpack.c.l.b16 %v7940
        %v8276 = vunpack.c.h.b16 %v7940
        %v8277 = vunpack.c.l.b16 %v7941
        %v8278 = vunpack.c.h.b16 %v7941
        %v8279 = vunpack.c.l.b16 %v7942
        %v8280 = vunpack.c.h.b16 %v7942
        %v8281 = vunpack.c.l.b16 %v7943
        %v8282 = vunpack.c.h.b16 %v7943
        %v8283 = vunpack.c.l.b16 %v7944
        %v8284 = vunpack.c.h.b16 %v7944
        %v8285 = vunpack.c.l.b16 %v7945
        %v8286 = vunpack.c.h.b16 %v7945
        %v8287 = vunpack.c.l.b16 %v7946
        %v8288 = vunpack.c.h.b16 %v7946
        %v8289 = vunpack.c.l.b16 %v7947
        %v8290 = vunpack.c.h.b16 %v7947
        %v8291 = vunpack.c.l.b16 %v7948
        %v8292 = vunpack.c.h.b16 %v7948
        %v8293 = vunpack.c.l.b16 %v7949
        %v8294 = vunpack.c.h.b16 %v7949
        %v8295 = vunpack.c.l.b16 %v7950
        %v8296 = vunpack.c.h.b16 %v7950
        %v8297 = vunpack.c.l.b16 %v7951
        %v8298 = vunpack.c.h.b16 %v7951
        %v8299 = vunpack.c.l.b16 %v7952
        %v8300 = vunpack.c.h.b16 %v7952
        %v8301 = vunpack.c.l.b16 %v7953
        %v8302 = vunpack.c.h.b16 %v7953
        %v8303 = vunpack.c.l.b16 %v7954
        %v8304 = vunpack.c.h.b16 %v7954
        %v8305 = vunpack.c.l.b16 %v7955
        %v8306 = vunpack.c.h.b16 %v7955
        %v8307 = vunpack.c.l.b16 %v7956
        %v8308 = vunpack.c.h.b16 %v7956
        %v8309 = vunpack.c.l.b16 %v7957
        %v8310 = vunpack.c.h.b16 %v7957
        %v8311 = vunpack.c.l.b16 %v7958
        %v8312 = vunpack.c.h.b16 %v7958
        %v8313 = vunpack.c.l.b16 %v7959
        %v8314 = vunpack.c.h.b16 %v7959
        %v8315 = vunpack.c.l.b16 %v7960
        %v8316 = vunpack.c.h.b16 %v7960
        %v8317 = vunpack.c.l.b16 %v7961
        %v8318 = vunpack.c.h.b16 %v7961
        %v8319 = vunpack.c.l.b16 %v7962
        %v8320 = vunpack.c.h.b16 %v7962
        %v8321 = vunpack.c.l.b16 %v7963
        %v8322 = vunpack.c.h.b16 %v7963
        %v8323 = vunpack.c.l.b16 %v7964
        %v8324 = vunpack.c.h.b16 %v7964
        %v8325 = vunpack.c.l.b16 %v7965
        %v8326 = vunpack.c.h.b16 %v7965
        %v8327 = vunpack.c.l.b16 %v7966
        %v8328 = vunpack.c.h.b16 %v7966
        %v8329 = vunpack.c.l.b16 %v7967
        %v8330 = vunpack.c.h.b16 %v7967
        %v8331 = vunpack.c.l.b16 %v7968
        %v8332 = vunpack.c.h.b16 %v7968
        %v8333 = vunpack.c.l.b16 %v7969
        %v8334 = vunpack.c.h.b16 %v7969
        %v8335 = vunpack.c.l.b16 %v7970
        %v8336 = vunpack.c.h.b16 %v7970
        %v8337 = vunpack.c.l.b16 %v7971
        %v8338 = vunpack.c.h.b16 %v7971
        %v8339 = vunpack.c.l.b16 %v7972
        %v8340 = vunpack.c.h.b16 %v7972
        %v8341 = vunpack.c.l.b16 %v7973
        %v8342 = vunpack.c.h.b16 %v7973
        %v8343 = vunpack.c.l.b16 %v7974
        %v8344 = vunpack.c.h.b16 %v7974
        %v8345 = vunpack.c.l.b16 %v7975
        %v8346 = vunpack.c.h.b16 %v7975
        %v8347 = vunpack.c.l.b16 %v7976
        %v8348 = vunpack.c.h.b16 %v7976
        %v8349 = vunpack.c.l.b16 %v7977
        %v8350 = vunpack.c.h.b16 %v7977
        %v8351 = vunpack.c.l.b16 %v7978
        %v8352 = vunpack.c.h.b16 %v7978
        %v8353 = vunpack.c.l.b16 %v7979
        %v8354 = vunpack.c.h.b16 %v7979
        %v8355 = vunpack.c.l.b16 %v7980
        %v8356 = vunpack.c.h.b16 %v7980
        %v8357 = vunpack.c.l.b16 %v7981
        %v8358 = vunpack.c.h.b16 %v7981
        %v8359 = vunpack.c.l.b16 %v7982
        %v8360 = vunpack.c.h.b16 %v7982
        %v8361 = vunpack.c.l.b16 %v7983
        %v8362 = vunpack.c.h.b16 %v7983
        %v8363 = vunpack.c.l.b16 %v7984
        %v8364 = vunpack.c.h.b16 %v7984
        %v8365 = vunpack.c.l.b16 %v7985
        %v8366 = vunpack.c.h.b16 %v7985
        %v8367 = vunpack.c.l.b16 %v7986
        %v8368 = vunpack.c.h.b16 %v7986
        %v8369 = vunpack.c.l.b16 %v7987
        %v8370 = vunpack.c.h.b16 %v7987
        %v8371 = vunpack.c.l.b16 %v7988
        %v8372 = vunpack.c.h.b16 %v7988
        %v8373 = vpack.c.b16 %v8125, %v8117
        %v8374 = vpack.c.b16 %v8126, %v8118
        %v8375 = vpack.c.b16 %v8127, %v8119
        %v8376 = vpack.c.b16 %v8128, %v8120
        %v8377 = vpack.c.b16 %v8129, %v8121
        %v8378 = vpack.c.b16 %v8130, %v8122
        %v8379 = vpack.c.b16 %v8131, %v8123
        %v8380 = vpack.c.b16 %v8132, %v8124
        %v8381 = vpack.c.b16 %v8141, %v8133
        %v8382 = vpack.c.b16 %v8142, %v8134
        %v8383 = vpack.c.b16 %v8143, %v8135
        %v8384 = vpack.c.b16 %v8144, %v8136
        %v8385 = vpack.c.b16 %v8145, %v8137
        %v8386 = vpack.c.b16 %v8146, %v8138
        %v8387 = vpack.c.b16 %v8147, %v8139
        %v8388 = vpack.c.b16 %v8148, %v8140
        %v8389 = vpack.c.b16 %v8157, %v8149
        %v8390 = vpack.c.b16 %v8158, %v8150
        %v8391 = vpack.c.b16 %v8159, %v8151
        %v8392 = vpack.c.b16 %v8160, %v8152
        %v8393 = vpack.c.b16 %v8161, %v8153
        %v8394 = vpack.c.b16 %v8162, %v8154
        %v8395 = vpack.c.b16 %v8163, %v8155
        %v8396 = vpack.c.b16 %v8164, %v8156
        %v8397 = vpack.c.b16 %v8173, %v8165
        %v8398 = vpack.c.b16 %v8174, %v8166
        %v8399 = vpack.c.b16 %v8175, %v8167
        %v8400 = vpack.c.b16 %v8176, %v8168
        %v8401 = vpack.c.b16 %v8177, %v8169
        %v8402 = vpack.c.b16 %v8178, %v8170
        %v8403 = vpack.c.b16 %v8179, %v8171
        %v8404 = vpack.c.b16 %v8180, %v8172
        %v8405 = vpack.c.b16 %v8189, %v8181
        %v8406 = vpack.c.b16 %v8190, %v8182
        %v8407 = vpack.c.b16 %v8191, %v8183
        %v8408 = vpack.c.b16 %v8192, %v8184
        %v8409 = vpack.c.b16 %v8193, %v8185
        %v8410 = vpack.c.b16 %v8194, %v8186
        %v8411 = vpack.c.b16 %v8195, %v8187
        %v8412 = vpack.c.b16 %v8196, %v8188
        %v8413 = vpack.c.b16 %v8205, %v8197
        %v8414 = vpack.c.b16 %v8206, %v8198
        %v8415 = vpack.c.b16 %v8207, %v8199
        %v8416 = vpack.c.b16 %v8208, %v8200
        %v8417 = vpack.c.b16 %v8209, %v8201
        %v8418 = vpack.c.b16 %v8210, %v8202
        %v8419 = vpack.c.b16 %v8211, %v8203
        %v8420 = vpack.c.b16 %v8212, %v8204
        %v8421 = vpack.c.b16 %v8221, %v8213
        %v8422 = vpack.c.b16 %v8222, %v8214
        %v8423 = vpack.c.b16 %v8223, %v8215
        %v8424 = vpack.c.b16 %v8224, %v8216
        %v8425 = vpack.c.b16 %v8225, %v8217
        %v8426 = vpack.c.b16 %v8226, %v8218
        %v8427 = vpack.c.b16 %v8227, %v8219
        %v8428 = vpack.c.b16 %v8228, %v8220
        %v8429 = vpack.c.b16 %v8237, %v8229
        %v8430 = vpack.c.b16 %v8238, %v8230
        %v8431 = vpack.c.b16 %v8239, %v8231
        %v8432 = vpack.c.b16 %v8240, %v8232
        %v8433 = vpack.c.b16 %v8241, %v8233
        %v8434 = vpack.c.b16 %v8242, %v8234
        %v8435 = vpack.c.b16 %v8243, %v8235
        %v8436 = vpack.c.b16 %v8244, %v8236
        %v8437 = vpack.c.b16 %v8253, %v8245
        %v8438 = vpack.c.b16 %v8254, %v8246
        %v8439 = vpack.c.b16 %v8255, %v8247
        %v8440 = vpack.c.b16 %v8256, %v8248
        %v8441 = vpack.c.b16 %v8257, %v8249
        %v8442 = vpack.c.b16 %v8258, %v8250
        %v8443 = vpack.c.b16 %v8259, %v8251
        %v8444 = vpack.c.b16 %v8260, %v8252
        %v8445 = vpack.c.b16 %v8269, %v8261
        %v8446 = vpack.c.b16 %v8270, %v8262
        %v8447 = vpack.c.b16 %v8271, %v8263
        %v8448 = vpack.c.b16 %v8272, %v8264
        %v8449 = vpack.c.b16 %v8273, %v8265
        %v8450 = vpack.c.b16 %v8274, %v8266
        %v8451 = vpack.c.b16 %v8275, %v8267
        %v8452 = vpack.c.b16 %v8276, %v8268
        %v8453 = vpack.c.b16 %v8285, %v8277
        %v8454 = vpack.c.b16 %v8286, %v8278
        %v8455 = vpack.c.b16 %v8287, %v8279
        %v8456 = vpack.c.b16 %v8288, %v8280
        %v8457 = vpack.c.b16 %v8289, %v8281
        %v8458 = vpack.c.b16 %v8290, %v8282
        %v8459 = vpack.c.b16 %v8291, %v8283
        %v8460 = vpack.c.b16 %v8292, %v8284
        %v8461 = vpack.c.b16 %v8301, %v8293
        %v8462 = vpack.c.b16 %v8302, %v8294
        %v8463 = vpack.c.b16 %v8303, %v8295
        %v8464 = vpack.c.b16 %v8304, %v8296
        %v8465 = vpack.c.b16 %v8305, %v8297
        %v8466 = vpack.c.b16 %v8306, %v8298
        %v8467 = vpack.c.b16 %v8307, %v8299
        %v8468 = vpack.c.b16 %v8308, %v8300
        %v8469 = vpack.c.b16 %v8317, %v8309
        %v8470 = vpack.c.b16 %v8318, %v8310
        %v8471 = vpack.c.b16 %v8319, %v8311
        %v8472 = vpack.c.b16 %v8320, %v8312
        %v8473 = vpack.c.b16 %v8321, %v8313
        %v8474 = vpack.c.b16 %v8322, %v8314
        %v8475 = vpack.c.b16 %v8323, %v8315
        %v8476 = vpack.c.b16 %v8324, %v8316
        %v8477 = vpack.c.b16 %v8333, %v8325
        %v8478 = vpack.c.b16 %v8334, %v8326
        %v8479 = vpack.c.b16 %v8335, %v8327
        %v8480 = vpack.c.b16 %v8336, %v8328
        %v8481 = vpack.c.b16 %v8337, %v8329
        %v8482 = vpack.c.b16 %v8338, %v8330
        %v8483 = vpack.c.b16 %v8339, %v8331
        %v8484 = vpack.c.b16 %v8340, %v8332
        %v8485 = vpack.c.b16 %v8349, %v8341
        %v8486 = vpack.c.b16 %v8350, %v8342
        %v8487 = vpack.c.b16 %v8351, %v8343
        %v8488 = vpack.c.b16 %v8352, %v8344
        %v8489 = vpack.c.b16 %v8353, %v8345
        %v8490 = vpack.c.b16 %v8354, %v8346
        %v8491 = vpack.c.b16 %v8355, %v8347
        %v8492 = vpack.c.b16 %v8356, %v8348
        %v8493 = vpack.c.b16 %v8365, %v8357
        %v8494 = vpack.c.b16 %v8366, %v8358
        %v8495 = vpack.c.b16 %v8367, %v8359
        %v8496 = vpack.c.b16 %v8368, %v8360
        %v8497 = vpack.c.b16 %v8369, %v8361
        %v8498 = vpack.c.b16 %v8370, %v8362
        %v8499 = vpack.c.b16 %v8371, %v8363
        %v8500 = vpack.c.b16 %v8372, %v8364
        %8629 = vmatprep.subr.bf16.mxu0 %v8374
        %8630 = vmatpush1.bf16.msra.mxu0 %v8373
        %8631 = vmatprep.subr.bf16.mxu0 %v8382
        %8632 = vmatpush1.bf16.msra.mxu0 %v8381
        %8633 = vmatprep.subr.bf16.mxu0 %v8390
        %8634 = vmatpush1.bf16.msra.mxu0 %v8389
        %8635 = vmatprep.subr.bf16.mxu0 %v8398
        %8636 = vmatpush1.bf16.msra.mxu0 %v8397
        %8637 = vmatprep.subr.bf16.mxu0 %v8406
        %8638 = vmatpush1.bf16.msra.mxu0 %v8405
        %8639 = vmatprep.subr.bf16.mxu0 %v8414
        %8640 = vmatpush1.bf16.msra.mxu0 %v8413
        %8641 = vmatprep.subr.bf16.mxu0 %v8422
        %8642 = vmatpush1.bf16.msra.mxu0 %v8421
        %8643 = vmatprep.subr.bf16.mxu0 %v8430
        %8644 = vmatpush1.bf16.msra.mxu0 %v8429
        %8645 = vmatprep.subr.bf16.mxu0 %v8438
        %8646 = vmatpush1.bf16.msra.mxu0 %v8437
        %8647 = vmatprep.subr.bf16.mxu0 %v8446
        %8648 = vmatpush1.bf16.msra.mxu0 %v8445
        %8649 = vmatprep.subr.bf16.mxu0 %v8454
        %8650 = vmatpush1.bf16.msra.mxu0 %v8453
        %8651 = vmatprep.subr.bf16.mxu0 %v8462
        %8652 = vmatpush1.bf16.msra.mxu0 %v8461
        %8653 = vmatprep.subr.bf16.mxu0 %v8470
        %8654 = vmatpush1.bf16.msra.mxu0 %v8469
        %8655 = vmatprep.subr.bf16.mxu0 %v8478
        %8656 = vmatpush1.bf16.msra.mxu0 %v8477
        %8657 = vmatprep.subr.bf16.mxu0 %v8486
        %8658 = vmatpush1.bf16.msra.mxu0 %v8485
        %8659 = vmatprep.subr.bf16.mxu0 %v8494
        %8660 = vmatpush1.bf16.msra.mxu0 %v8493
        %8661 = vmatprep.mubr.bf16.mxu0 %v7860
        %8662 = vmatmul.mubr.bf16.gmra.mrb[0].mxu0 %v7859
        %v8663 = vpop.f32.mrb[0].mxu0
        %v8664 = vadd.f32 0.0, %v8663
        %v8665 = vpop.f32.mrb[0].mxu0
        %v8666 = vadd.f32 0.0, %v8665
        %v8667 = vpop.f32.mrb[0].mxu0
        %v8668 = vpop.f32.mrb[0].mxu0
        %8669 = vdwg.mxu0
        %8670 = vmatprep.subr.bf16.mxu0 %v8376
        %8671 = vmatpush1.bf16.msra.mxu0 %v8375
        %8672 = vmatprep.subr.bf16.mxu0 %v8384
        %8673 = vmatpush1.bf16.msra.mxu0 %v8383
        %8674 = vmatprep.subr.bf16.mxu0 %v8392
        %8675 = vmatpush1.bf16.msra.mxu0 %v8391
        %8676 = vmatprep.subr.bf16.mxu0 %v8400
        %8677 = vmatpush1.bf16.msra.mxu0 %v8399
        %8678 = vmatprep.subr.bf16.mxu0 %v8408
        %8679 = vmatpush1.bf16.msra.mxu0 %v8407
        %8680 = vmatprep.subr.bf16.mxu0 %v8416
        %8681 = vmatpush1.bf16.msra.mxu0 %v8415
        %8682 = vmatprep.subr.bf16.mxu0 %v8424
        %8683 = vmatpush1.bf16.msra.mxu0 %v8423
        %8684 = vmatprep.subr.bf16.mxu0 %v8432
        %8685 = vmatpush1.bf16.msra.mxu0 %v8431
        %8686 = vmatprep.subr.bf16.mxu0 %v8440
        %8687 = vmatpush1.bf16.msra.mxu0 %v8439
        %8688 = vmatprep.subr.bf16.mxu0 %v8448
        %8689 = vmatpush1.bf16.msra.mxu0 %v8447
        %8690 = vmatprep.subr.bf16.mxu0 %v8456
        %8691 = vmatpush1.bf16.msra.mxu0 %v8455
        %8692 = vmatprep.subr.bf16.mxu0 %v8464
        %8693 = vmatpush1.bf16.msra.mxu0 %v8463
        %8694 = vmatprep.subr.bf16.mxu0 %v8472
        %8695 = vmatpush1.bf16.msra.mxu0 %v8471
        %8696 = vmatprep.subr.bf16.mxu0 %v8480
        %8697 = vmatpush1.bf16.msra.mxu0 %v8479
        %8698 = vmatprep.subr.bf16.mxu0 %v8488
        %8699 = vmatpush1.bf16.msra.mxu0 %v8487
        %8700 = vmatprep.subr.bf16.mxu0 %v8496
        %8701 = vmatpush1.bf16.msra.mxu0 %v8495
        %8702 = vmatprep.mubr.bf16.mxu0 %v7860
        %8703 = vmatmul.mubr.bf16.gmra.mrb[0].mxu0 %v7859
        %v8704 = vpop.f32.mrb[0].mxu0
        %v8705 = vadd.f32 0.0, %v8704
        %v8706 = vpop.f32.mrb[0].mxu0
        %v8707 = vadd.f32 0.0, %v8706
        %v8708 = vpop.f32.mrb[0].mxu0
        %v8709 = vpop.f32.mrb[0].mxu0
        %8710 = vdwg.mxu0
        %8711 = vmatprep.subr.bf16.mxu0 %v8378
        %8712 = vmatpush1.bf16.msra.mxu0 %v8377
        %8713 = vmatprep.subr.bf16.mxu0 %v8386
        %8714 = vmatpush1.bf16.msra.mxu0 %v8385
        %8715 = vmatprep.subr.bf16.mxu0 %v8394
        %8716 = vmatpush1.bf16.msra.mxu0 %v8393
        %8717 = vmatprep.subr.bf16.mxu0 %v8402
        %8718 = vmatpush1.bf16.msra.mxu0 %v8401
        %8719 = vmatprep.subr.bf16.mxu0 %v8410
        %8720 = vmatpush1.bf16.msra.mxu0 %v8409
        %8721 = vmatprep.subr.bf16.mxu0 %v8418
        %8722 = vmatpush1.bf16.msra.mxu0 %v8417
        %8723 = vmatprep.subr.bf16.mxu0 %v8426
        %8724 = vmatpush1.bf16.msra.mxu0 %v8425
        %8725 = vmatprep.subr.bf16.mxu0 %v8434
        %8726 = vmatpush1.bf16.msra.mxu0 %v8433
        %8727 = vmatprep.subr.bf16.mxu0 %v8442
        %8728 = vmatpush1.bf16.msra.mxu0 %v8441
        %8729 = vmatprep.subr.bf16.mxu0 %v8450
        %8730 = vmatpush1.bf16.msra.mxu0 %v8449
        %8731 = vmatprep.subr.bf16.mxu0 %v8458
        %8732 = vmatpush1.bf16.msra.mxu0 %v8457
        %8733 = vmatprep.subr.bf16.mxu0 %v8466
        %8734 = vmatpush1.bf16.msra.mxu0 %v8465
        %8735 = vmatprep.subr.bf16.mxu0 %v8474
        %8736 = vmatpush1.bf16.msra.mxu0 %v8473
        %8737 = vmatprep.subr.bf16.mxu0 %v8482
        %8738 = vmatpush1.bf16.msra.mxu0 %v8481
        %8739 = vmatprep.subr.bf16.mxu0 %v8490
        %8740 = vmatpush1.bf16.msra.mxu0 %v8489
        %8741 = vmatprep.subr.bf16.mxu0 %v8498
        %8742 = vmatpush1.bf16.msra.mxu0 %v8497
        %8743 = vmatprep.mubr.bf16.mxu0 %v7860
        %8744 = vmatmul.mubr.bf16.gmra.mrb[0].mxu0 %v7859
        %v8745 = vpop.f32.mrb[0].mxu0
        %v8746 = vadd.f32 0.0, %v8745
        %v8747 = vpop.f32.mrb[0].mxu0
        %v8748 = vadd.f32 0.0, %v8747
        %v8749 = vpop.f32.mrb[0].mxu0
        %v8750 = vpop.f32.mrb[0].mxu0
        %8751 = vdwg.mxu0
        %8752 = vmatprep.subr.bf16.mxu0 %v8380
        %8753 = vmatpush1.bf16.msra.mxu0 %v8379
        %8754 = vmatprep.subr.bf16.mxu0 %v8388
        %8755 = vmatpush1.bf16.msra.mxu0 %v8387
        %8756 = vmatprep.subr.bf16.mxu0 %v8396
        %8757 = vmatpush1.bf16.msra.mxu0 %v8395
        %8758 = vmatprep.subr.bf16.mxu0 %v8404
        %8759 = vmatpush1.bf16.msra.mxu0 %v8403
        %8760 = vmatprep.subr.bf16.mxu0 %v8412
        %8761 = vmatpush1.bf16.msra.mxu0 %v8411
        %8762 = vmatprep.subr.bf16.mxu0 %v8420
        %8763 = vmatpush1.bf16.msra.mxu0 %v8419
        %8764 = vmatprep.subr.bf16.mxu0 %v8428
        %8765 = vmatpush1.bf16.msra.mxu0 %v8427
        %8766 = vmatprep.subr.bf16.mxu0 %v8436
        %8767 = vmatpush1.bf16.msra.mxu0 %v8435
        %8768 = vmatprep.subr.bf16.mxu0 %v8444
        %8769 = vmatpush1.bf16.msra.mxu0 %v8443
        %8770 = vmatprep.subr.bf16.mxu0 %v8452
        %8771 = vmatpush1.bf16.msra.mxu0 %v8451
        %8772 = vmatprep.subr.bf16.mxu0 %v8460
        %8773 = vmatpush1.bf16.msra.mxu0 %v8459
        %8774 = vmatprep.subr.bf16.mxu0 %v8468
        %8775 = vmatpush1.bf16.msra.mxu0 %v8467
        %8776 = vmatprep.subr.bf16.mxu0 %v8476
        %8777 = vmatpush1.bf16.msra.mxu0 %v8475
        %8778 = vmatprep.subr.bf16.mxu0 %v8484
        %8779 = vmatpush1.bf16.msra.mxu0 %v8483
        %8780 = vmatprep.subr.bf16.mxu0 %v8492
        %8781 = vmatpush1.bf16.msra.mxu0 %v8491
        %8782 = vmatprep.subr.bf16.mxu0 %v8500
        %8783 = vmatpush1.bf16.msra.mxu0 %v8499
        %8784 = vmatprep.mubr.bf16.mxu0 %v7860
        %8785 = vmatmul.mubr.bf16.gmra.mrb[0].mxu0 %v7859
        %v8786 = vpop.f32.mrb[0].mxu0
        %v8787 = vadd.f32 0.0, %v8786
        %v8788 = vpop.f32.mrb[0].mxu0
        %v8789 = vadd.f32 0.0, %v8788
        %v8790 = vpop.f32.mrb[0].mxu0
        %v8791 = vpop.f32.mrb[0].mxu0
        %8792 = vdwg.mxu0
        %v8801 = vcombine.low %v8664, %v8666
        %v8802 = vcombine.low %v8705, %v8707
        %v8804 = vunpack.c.l.s4 1983009808
        %v8805 = vunpack.c.0.s8 %v8804
        %v8806 = vlaneseq
        %v8807 = vshrl.u32 %v8806, 7
        %v8808 = vsub.s32 %v8805, %v8807
        %v8809 = vrot.slane %v8801, %v8808
        %v8811 = vunpack.c.l.s4 1983009808
        %v8812 = vunpack.c.0.s8 %v8811
        %v8813 = vlaneseq
        %v8814 = vshrl.u32 %v8813, 7
        %v8815 = vsub.s32 %v8812, %v8814
        %v8816 = vrot.slane %v8802, %v8815
        %v8817 = vcombine.low %v8809, %v8816
        %v8818 = vcombine.low %v8746, %v8748
        %v8819 = vcombine.low %v8787, %v8789
        %v8821 = vunpack.c.l.s4 1983009808
        %v8822 = vunpack.c.0.s8 %v8821
        %v8823 = vlaneseq
        %v8824 = vshrl.u32 %v8823, 7
        %v8825 = vsub.s32 %v8822, %v8824
        %v8826 = vrot.slane %v8818, %v8825
        %v8828 = vunpack.c.l.s4 1983009808
        %v8829 = vunpack.c.0.s8 %v8828
        %v8830 = vlaneseq
        %v8831 = vshrl.u32 %v8830, 7
        %v8832 = vsub.s32 %v8829, %v8831
        %v8833 = vrot.slane %v8819, %v8832
        %v8834 = vcombine.low %v8826, %v8833
        %v8837 = vadd.f32 %v7857, %v8817
        %v8838 = vadd.f32 %v7858, %v8834
        %8839 = vst [vmem:[#allocation3] sm:$0xff] %v8837
        %8840 = vst [vmem:[#allocation3 + $0x8] sm:$0xff] %v8838
        %p8841 = scmp.eq.s32.totalorder %s29, 3
        // Predicated region
        $region125: #{char_cnn_forward.1} parent=71 // pred_check
          %p8842 = pneg %p8841
        $region126: #{char_cnn_forward.1} parent=71 // pred_check_branch
          %8844 = sbr.rel (%p8842) target = $region128
        $region127: #{char_cnn_forward.1} parent=71 // pred_region
          %v8845 = vld [vmem:[#allocation3] sm:$0xff]
          %v8846 = vld [vmem:[#allocation3 + $0x8] sm:$0xff]
          %v8847 = vld [vmem:[#allocation18] sm:$0xff]
          %v8849 = vlaneseq
          %v8850 = vshrl.u32 %v8849, 7
          %v8851 = vsub.s32 0, %v8850
          %v8852 = vrot.slane %v8847, %v8851
          %v8853 = vlaneseq
          %v8854 = vshrl.u32 %v8853, 7
          %v8855 = vsub.s32 1, %v8854
          %v8856 = vrot.slane %v8847, %v8855
          %v8857 = vlaneseq
          %v8858 = vshrl.u32 %v8857, 7
          %v8859 = vsub.s32 2, %v8858
          %v8860 = vrot.slane %v8847, %v8859
          %v8861 = vlaneseq
          %v8862 = vshrl.u32 %v8861, 7
          %v8863 = vsub.s32 3, %v8862
          %v8864 = vrot.slane %v8847, %v8863
          %v8865 = vlaneseq
          %v8866 = vshrl.u32 %v8865, 7
          %v8867 = vsub.s32 4, %v8866
          %v8868 = vrot.slane %v8847, %v8867
          %v8869 = vlaneseq
          %v8870 = vshrl.u32 %v8869, 7
          %v8871 = vsub.s32 5, %v8870
          %v8872 = vrot.slane %v8847, %v8871
          %v8873 = vlaneseq
          %v8874 = vshrl.u32 %v8873, 7
          %v8875 = vsub.s32 6, %v8874
          %v8876 = vrot.slane %v8847, %v8875
          %v8877 = vlaneseq
          %v8878 = vshrl.u32 %v8877, 7
          %v8879 = vsub.s32 7, %v8878
          %v8880 = vrot.slane %v8847, %v8879
          %v8881 = vcombine.low %v8852, %v8856
          %v8882 = vcombine.low %v8860, %v8864
          %v8884 = vunpack.c.l.s4 1983009808
          %v8885 = vunpack.c.0.s8 %v8884
          %v8886 = vlaneseq
          %v8887 = vshrl.u32 %v8886, 7
          %v8888 = vsub.s32 %v8885, %v8887
          %v8889 = vrot.slane %v8881, %v8888
          %v8891 = vunpack.c.l.s4 1983009808
          %v8892 = vunpack.c.0.s8 %v8891
          %v8893 = vlaneseq
          %v8894 = vshrl.u32 %v8893, 7
          %v8895 = vsub.s32 %v8892, %v8894
          %v8896 = vrot.slane %v8882, %v8895
          %v8897 = vcombine.low %v8889, %v8896
          %v8898 = vcombine.low %v8868, %v8872
          %v8899 = vcombine.low %v8876, %v8880
          %v8901 = vunpack.c.l.s4 1983009808
          %v8902 = vunpack.c.0.s8 %v8901
          %v8903 = vlaneseq
          %v8904 = vshrl.u32 %v8903, 7
          %v8905 = vsub.s32 %v8902, %v8904
          %v8906 = vrot.slane %v8898, %v8905
          %v8908 = vunpack.c.l.s4 1983009808
          %v8909 = vunpack.c.0.s8 %v8908
          %v8910 = vlaneseq
          %v8911 = vshrl.u32 %v8910, 7
          %v8912 = vsub.s32 %v8909, %v8911
          %v8913 = vrot.slane %v8899, %v8912
          %v8914 = vcombine.low %v8906, %v8913
          %v8917 = vadd.f32 %v8845, %v8897
          %v8918 = vadd.f32 %v8846, %v8914
          %v8919 = vmax.f32 %v8917, 0.0
          %v8920 = vmax.f32 %v8918, 0.0
          %v8923 = vcombine.high %v8919, %v8919
          %v8925 = vunpack.c.l.s4 1983009808
          %v8926 = vunpack.c.0.s8 %v8925
          %v8927 = vlaneseq
          %v8928 = vshrl.u32 %v8927, 7
          %v8929 = vsub.s32 %v8926, %v8928
          %v8930 = vrot.slane %v8919, %v8929
          %v8932 = vunpack.c.l.s4 1983009808
          %v8933 = vunpack.c.0.s8 %v8932
          %v8934 = vlaneseq
          %v8935 = vshrl.u32 %v8934, 7
          %v8936 = vsub.s32 %v8933, %v8935
          %v8937 = vrot.slane %v8923, %v8936
          %v8938 = vcombine.high %v8930, %v8930
          %v8939 = vcombine.high %v8937, %v8937
          %v8940 = vcombine.high %v8920, %v8920
          %v8942 = vunpack.c.l.s4 1983009808
          %v8943 = vunpack.c.0.s8 %v8942
          %v8944 = vlaneseq
          %v8945 = vshrl.u32 %v8944, 7
          %v8946 = vsub.s32 %v8943, %v8945
          %v8947 = vrot.slane %v8920, %v8946
          %v8949 = vunpack.c.l.s4 1983009808
          %v8950 = vunpack.c.0.s8 %v8949
          %v8951 = vlaneseq
          %v8952 = vshrl.u32 %v8951, 7
          %v8953 = vsub.s32 %v8950, %v8952
          %v8954 = vrot.slane %v8940, %v8953
          %v8955 = vcombine.high %v8947, %v8947
          %v8956 = vcombine.high %v8954, %v8954
          %v8965 = vpack.c.bf16 %v8930, %v8930
          %v8966 = vpack.c.bf16 %v8938, %v8938
          %v8967 = vpack.c.bf16 %v8937, %v8937
          %v8968 = vpack.c.bf16 %v8939, %v8939
          %v8969 = vpack.c.bf16 %v8947, %v8947
          %v8970 = vpack.c.bf16 %v8955, %v8955
          %v8971 = vpack.c.bf16 %v8954, %v8954
          %v8972 = vpack.c.bf16 %v8956, %v8956
          %v8973 = vld [vmem:[#allocation19] sm:$0xf]
          %v8974 = vld [vmem:[#allocation19 + $0x4] sm:$0xf]
          %v8975 = vld [vmem:[#allocation19 + $0x8] sm:$0xf]
          %v8976 = vld [vmem:[#allocation19 + $0xc] sm:$0xf]
          %v8977 = vld [vmem:[#allocation19 + $0x10] sm:$0xf]
          %v8978 = vld [vmem:[#allocation19 + $0x14] sm:$0xf]
          %v8979 = vld [vmem:[#allocation19 + $0x18] sm:$0xf]
          %v8980 = vld [vmem:[#allocation19 + $0x1c] sm:$0xf]
          %v8981 = vld [vmem:[#allocation19 + $0x20] sm:$0xf]
          %v8982 = vld [vmem:[#allocation19 + $0x24] sm:$0xf]
          %v8983 = vld [vmem:[#allocation19 + $0x28] sm:$0xf]
          %v8984 = vld [vmem:[#allocation19 + $0x2c] sm:$0xf]
          %v8985 = vld [vmem:[#allocation19 + $0x30] sm:$0xf]
          %v8986 = vld [vmem:[#allocation19 + $0x34] sm:$0xf]
          %v8987 = vld [vmem:[#allocation19 + $0x38] sm:$0xf]
          %v8988 = vld [vmem:[#allocation19 + $0x3c] sm:$0xf]
          %v8989 = vld [vmem:[#allocation19 + $0x40] sm:$0xf]
          %v8990 = vld [vmem:[#allocation19 + $0x44] sm:$0xf]
          %v8991 = vld [vmem:[#allocation19 + $0x48] sm:$0xf]
          %v8992 = vld [vmem:[#allocation19 + $0x4c] sm:$0xf]
          %v8993 = vld [vmem:[#allocation19 + $0x50] sm:$0xf]
          %v8994 = vld [vmem:[#allocation19 + $0x54] sm:$0xf]
          %v8995 = vld [vmem:[#allocation19 + $0x58] sm:$0xf]
          %v8996 = vld [vmem:[#allocation19 + $0x5c] sm:$0xf]
          %v8997 = vld [vmem:[#allocation19 + $0x60] sm:$0xf]
          %v8998 = vld [vmem:[#allocation19 + $0x64] sm:$0xf]
          %v8999 = vld [vmem:[#allocation19 + $0x68] sm:$0xf]
          %v9000 = vld [vmem:[#allocation19 + $0x6c] sm:$0xf]
          %v9001 = vld [vmem:[#allocation19 + $0x70] sm:$0xf]
          %v9002 = vld [vmem:[#allocation19 + $0x74] sm:$0xf]
          %v9003 = vld [vmem:[#allocation19 + $0x78] sm:$0xf]
          %v9004 = vld [vmem:[#allocation19 + $0x7c] sm:$0xf]
          %v9005 = vld [vmem:[#allocation19 + $0x80] sm:$0xf]
          %v9006 = vld [vmem:[#allocation19 + $0x84] sm:$0xf]
          %v9007 = vld [vmem:[#allocation19 + $0x88] sm:$0xf]
          %v9008 = vld [vmem:[#allocation19 + $0x8c] sm:$0xf]
          %v9009 = vld [vmem:[#allocation19 + $0x90] sm:$0xf]
          %v9010 = vld [vmem:[#allocation19 + $0x94] sm:$0xf]
          %v9011 = vld [vmem:[#allocation19 + $0x98] sm:$0xf]
          %v9012 = vld [vmem:[#allocation19 + $0x9c] sm:$0xf]
          %v9013 = vld [vmem:[#allocation19 + $0xa0] sm:$0xf]
          %v9014 = vld [vmem:[#allocation19 + $0xa4] sm:$0xf]
          %v9015 = vld [vmem:[#allocation19 + $0xa8] sm:$0xf]
          %v9016 = vld [vmem:[#allocation19 + $0xac] sm:$0xf]
          %v9017 = vld [vmem:[#allocation19 + $0xb0] sm:$0xf]
          %v9018 = vld [vmem:[#allocation19 + $0xb4] sm:$0xf]
          %v9019 = vld [vmem:[#allocation19 + $0xb8] sm:$0xf]
          %v9020 = vld [vmem:[#allocation19 + $0xbc] sm:$0xf]
          %v9021 = vld [vmem:[#allocation19 + $0xc0] sm:$0xf]
          %v9022 = vld [vmem:[#allocation19 + $0xc4] sm:$0xf]
          %v9023 = vld [vmem:[#allocation19 + $0xc8] sm:$0xf]
          %v9024 = vld [vmem:[#allocation19 + $0xcc] sm:$0xf]
          %v9025 = vld [vmem:[#allocation19 + $0xd0] sm:$0xf]
          %v9026 = vld [vmem:[#allocation19 + $0xd4] sm:$0xf]
          %v9027 = vld [vmem:[#allocation19 + $0xd8] sm:$0xf]
          %v9028 = vld [vmem:[#allocation19 + $0xdc] sm:$0xf]
          %v9029 = vld [vmem:[#allocation19 + $0xe0] sm:$0xf]
          %v9030 = vld [vmem:[#allocation19 + $0xe4] sm:$0xf]
          %v9031 = vld [vmem:[#allocation19 + $0xe8] sm:$0xf]
          %v9032 = vld [vmem:[#allocation19 + $0xec] sm:$0xf]
          %v9033 = vld [vmem:[#allocation19 + $0xf0] sm:$0xf]
          %v9034 = vld [vmem:[#allocation19 + $0xf4] sm:$0xf]
          %v9035 = vld [vmem:[#allocation19 + $0xf8] sm:$0xf]
          %v9036 = vld [vmem:[#allocation19 + $0xfc] sm:$0xf]
          %v9037 = vld [vmem:[#allocation19 + $0x100] sm:$0xf]
          %v9038 = vld [vmem:[#allocation19 + $0x104] sm:$0xf]
          %v9039 = vld [vmem:[#allocation19 + $0x108] sm:$0xf]
          %v9040 = vld [vmem:[#allocation19 + $0x10c] sm:$0xf]
          %v9041 = vld [vmem:[#allocation19 + $0x110] sm:$0xf]
          %v9042 = vld [vmem:[#allocation19 + $0x114] sm:$0xf]
          %v9043 = vld [vmem:[#allocation19 + $0x118] sm:$0xf]
          %v9044 = vld [vmem:[#allocation19 + $0x11c] sm:$0xf]
          %v9045 = vld [vmem:[#allocation19 + $0x120] sm:$0xf]
          %v9046 = vld [vmem:[#allocation19 + $0x124] sm:$0xf]
          %v9047 = vld [vmem:[#allocation19 + $0x128] sm:$0xf]
          %v9048 = vld [vmem:[#allocation19 + $0x12c] sm:$0xf]
          %v9049 = vld [vmem:[#allocation19 + $0x130] sm:$0xf]
          %v9050 = vld [vmem:[#allocation19 + $0x134] sm:$0xf]
          %v9051 = vld [vmem:[#allocation19 + $0x138] sm:$0xf]
          %v9052 = vld [vmem:[#allocation19 + $0x13c] sm:$0xf]
          %v9053 = vld [vmem:[#allocation19 + $0x140] sm:$0xf]
          %v9054 = vld [vmem:[#allocation19 + $0x144] sm:$0xf]
          %v9055 = vld [vmem:[#allocation19 + $0x148] sm:$0xf]
          %v9056 = vld [vmem:[#allocation19 + $0x14c] sm:$0xf]
          %v9057 = vld [vmem:[#allocation19 + $0x150] sm:$0xf]
          %v9058 = vld [vmem:[#allocation19 + $0x154] sm:$0xf]
          %v9059 = vld [vmem:[#allocation19 + $0x158] sm:$0xf]
          %v9060 = vld [vmem:[#allocation19 + $0x15c] sm:$0xf]
          %v9061 = vld [vmem:[#allocation19 + $0x160] sm:$0xf]
          %v9062 = vld [vmem:[#allocation19 + $0x164] sm:$0xf]
          %v9063 = vld [vmem:[#allocation19 + $0x168] sm:$0xf]
          %v9064 = vld [vmem:[#allocation19 + $0x16c] sm:$0xf]
          %v9065 = vld [vmem:[#allocation19 + $0x170] sm:$0xf]
          %v9066 = vld [vmem:[#allocation19 + $0x174] sm:$0xf]
          %v9067 = vld [vmem:[#allocation19 + $0x178] sm:$0xf]
          %v9068 = vld [vmem:[#allocation19 + $0x17c] sm:$0xf]
          %v9069 = vld [vmem:[#allocation19 + $0x180] sm:$0xf]
          %v9070 = vld [vmem:[#allocation19 + $0x184] sm:$0xf]
          %v9071 = vld [vmem:[#allocation19 + $0x188] sm:$0xf]
          %v9072 = vld [vmem:[#allocation19 + $0x18c] sm:$0xf]
          %v9073 = vld [vmem:[#allocation19 + $0x190] sm:$0xf]
          %v9074 = vld [vmem:[#allocation19 + $0x194] sm:$0xf]
          %v9075 = vld [vmem:[#allocation19 + $0x198] sm:$0xf]
          %v9076 = vld [vmem:[#allocation19 + $0x19c] sm:$0xf]
          %v9077 = vld [vmem:[#allocation19 + $0x1a0] sm:$0xf]
          %v9078 = vld [vmem:[#allocation19 + $0x1a4] sm:$0xf]
          %v9079 = vld [vmem:[#allocation19 + $0x1a8] sm:$0xf]
          %v9080 = vld [vmem:[#allocation19 + $0x1ac] sm:$0xf]
          %v9081 = vld [vmem:[#allocation19 + $0x1b0] sm:$0xf]
          %v9082 = vld [vmem:[#allocation19 + $0x1b4] sm:$0xf]
          %v9083 = vld [vmem:[#allocation19 + $0x1b8] sm:$0xf]
          %v9084 = vld [vmem:[#allocation19 + $0x1bc] sm:$0xf]
          %v9085 = vld [vmem:[#allocation19 + $0x1c0] sm:$0xf]
          %v9086 = vld [vmem:[#allocation19 + $0x1c4] sm:$0xf]
          %v9087 = vld [vmem:[#allocation19 + $0x1c8] sm:$0xf]
          %v9088 = vld [vmem:[#allocation19 + $0x1cc] sm:$0xf]
          %v9089 = vld [vmem:[#allocation19 + $0x1d0] sm:$0xf]
          %v9090 = vld [vmem:[#allocation19 + $0x1d4] sm:$0xf]
          %v9091 = vld [vmem:[#allocation19 + $0x1d8] sm:$0xf]
          %v9092 = vld [vmem:[#allocation19 + $0x1dc] sm:$0xf]
          %v9093 = vld [vmem:[#allocation19 + $0x1e0] sm:$0xf]
          %v9094 = vld [vmem:[#allocation19 + $0x1e4] sm:$0xf]
          %v9095 = vld [vmem:[#allocation19 + $0x1e8] sm:$0xf]
          %v9096 = vld [vmem:[#allocation19 + $0x1ec] sm:$0xf]
          %v9097 = vld [vmem:[#allocation19 + $0x1f0] sm:$0xf]
          %v9098 = vld [vmem:[#allocation19 + $0x1f4] sm:$0xf]
          %v9099 = vld [vmem:[#allocation19 + $0x1f8] sm:$0xf]
          %v9100 = vld [vmem:[#allocation19 + $0x1fc] sm:$0xf]
          %v9101 = vld [vmem:[#allocation20] sm:$0x1]
          %v9103 = vlaneseq
          %v9104 = vshrl.u32 %v9103, 7
          %v9105 = vsub.s32 0, %v9104
          %v9106 = vrot.slane %v9101, %v9105
          %v9236 = vunpack.c.l.b16 %v8973
          %v9237 = vunpack.c.l.b16 %v8974
          %v9238 = vunpack.c.l.b16 %v8975
          %v9239 = vunpack.c.l.b16 %v8976
          %v9240 = vunpack.c.l.b16 %v8977
          %v9241 = vunpack.c.l.b16 %v8978
          %v9242 = vunpack.c.l.b16 %v8979
          %v9243 = vunpack.c.l.b16 %v8980
          %v9244 = vunpack.c.l.b16 %v8981
          %v9245 = vunpack.c.l.b16 %v8982
          %v9246 = vunpack.c.l.b16 %v8983
          %v9247 = vunpack.c.l.b16 %v8984
          %v9248 = vunpack.c.l.b16 %v8985
          %v9249 = vunpack.c.l.b16 %v8986
          %v9250 = vunpack.c.l.b16 %v8987
          %v9251 = vunpack.c.l.b16 %v8988
          %v9252 = vunpack.c.l.b16 %v8989
          %v9253 = vunpack.c.l.b16 %v8990
          %v9254 = vunpack.c.l.b16 %v8991
          %v9255 = vunpack.c.l.b16 %v8992
          %v9256 = vunpack.c.l.b16 %v8993
          %v9257 = vunpack.c.l.b16 %v8994
          %v9258 = vunpack.c.l.b16 %v8995
          %v9259 = vunpack.c.l.b16 %v8996
          %v9260 = vunpack.c.l.b16 %v8997
          %v9261 = vunpack.c.l.b16 %v8998
          %v9262 = vunpack.c.l.b16 %v8999
          %v9263 = vunpack.c.l.b16 %v9000
          %v9264 = vunpack.c.l.b16 %v9001
          %v9265 = vunpack.c.l.b16 %v9002
          %v9266 = vunpack.c.l.b16 %v9003
          %v9267 = vunpack.c.l.b16 %v9004
          %v9268 = vunpack.c.l.b16 %v9005
          %v9269 = vunpack.c.l.b16 %v9006
          %v9270 = vunpack.c.l.b16 %v9007
          %v9271 = vunpack.c.l.b16 %v9008
          %v9272 = vunpack.c.l.b16 %v9009
          %v9273 = vunpack.c.l.b16 %v9010
          %v9274 = vunpack.c.l.b16 %v9011
          %v9275 = vunpack.c.l.b16 %v9012
          %v9276 = vunpack.c.l.b16 %v9013
          %v9277 = vunpack.c.l.b16 %v9014
          %v9278 = vunpack.c.l.b16 %v9015
          %v9279 = vunpack.c.l.b16 %v9016
          %v9280 = vunpack.c.l.b16 %v9017
          %v9281 = vunpack.c.l.b16 %v9018
          %v9282 = vunpack.c.l.b16 %v9019
          %v9283 = vunpack.c.l.b16 %v9020
          %v9284 = vunpack.c.l.b16 %v9021
          %v9285 = vunpack.c.l.b16 %v9022
          %v9286 = vunpack.c.l.b16 %v9023
          %v9287 = vunpack.c.l.b16 %v9024
          %v9288 = vunpack.c.l.b16 %v9025
          %v9289 = vunpack.c.l.b16 %v9026
          %v9290 = vunpack.c.l.b16 %v9027
          %v9291 = vunpack.c.l.b16 %v9028
          %v9292 = vunpack.c.l.b16 %v9029
          %v9293 = vunpack.c.l.b16 %v9030
          %v9294 = vunpack.c.l.b16 %v9031
          %v9295 = vunpack.c.l.b16 %v9032
          %v9296 = vunpack.c.l.b16 %v9033
          %v9297 = vunpack.c.l.b16 %v9034
          %v9298 = vunpack.c.l.b16 %v9035
          %v9299 = vunpack.c.l.b16 %v9036
          %v9300 = vunpack.c.l.b16 %v9037
          %v9301 = vunpack.c.l.b16 %v9038
          %v9302 = vunpack.c.l.b16 %v9039
          %v9303 = vunpack.c.l.b16 %v9040
          %v9304 = vunpack.c.l.b16 %v9041
          %v9305 = vunpack.c.l.b16 %v9042
          %v9306 = vunpack.c.l.b16 %v9043
          %v9307 = vunpack.c.l.b16 %v9044
          %v9308 = vunpack.c.l.b16 %v9045
          %v9309 = vunpack.c.l.b16 %v9046
          %v9310 = vunpack.c.l.b16 %v9047
          %v9311 = vunpack.c.l.b16 %v9048
          %v9312 = vunpack.c.l.b16 %v9049
          %v9313 = vunpack.c.l.b16 %v9050
          %v9314 = vunpack.c.l.b16 %v9051
          %v9315 = vunpack.c.l.b16 %v9052
          %v9316 = vunpack.c.l.b16 %v9053
          %v9317 = vunpack.c.l.b16 %v9054
          %v9318 = vunpack.c.l.b16 %v9055
          %v9319 = vunpack.c.l.b16 %v9056
          %v9320 = vunpack.c.l.b16 %v9057
          %v9321 = vunpack.c.l.b16 %v9058
          %v9322 = vunpack.c.l.b16 %v9059
          %v9323 = vunpack.c.l.b16 %v9060
          %v9324 = vunpack.c.l.b16 %v9061
          %v9325 = vunpack.c.l.b16 %v9062
          %v9326 = vunpack.c.l.b16 %v9063
          %v9327 = vunpack.c.l.b16 %v9064
          %v9328 = vunpack.c.l.b16 %v9065
          %v9329 = vunpack.c.l.b16 %v9066
          %v9330 = vunpack.c.l.b16 %v9067
          %v9331 = vunpack.c.l.b16 %v9068
          %v9332 = vunpack.c.l.b16 %v9069
          %v9333 = vunpack.c.l.b16 %v9070
          %v9334 = vunpack.c.l.b16 %v9071
          %v9335 = vunpack.c.l.b16 %v9072
          %v9336 = vunpack.c.l.b16 %v9073
          %v9337 = vunpack.c.l.b16 %v9074
          %v9338 = vunpack.c.l.b16 %v9075
          %v9339 = vunpack.c.l.b16 %v9076
          %v9340 = vunpack.c.l.b16 %v9077
          %v9341 = vunpack.c.l.b16 %v9078
          %v9342 = vunpack.c.l.b16 %v9079
          %v9343 = vunpack.c.l.b16 %v9080
          %v9344 = vunpack.c.l.b16 %v9081
          %v9345 = vunpack.c.l.b16 %v9082
          %v9346 = vunpack.c.l.b16 %v9083
          %v9347 = vunpack.c.l.b16 %v9084
          %v9348 = vunpack.c.l.b16 %v9085
          %v9349 = vunpack.c.l.b16 %v9086
          %v9350 = vunpack.c.l.b16 %v9087
          %v9351 = vunpack.c.l.b16 %v9088
          %v9352 = vunpack.c.l.b16 %v9089
          %v9353 = vunpack.c.l.b16 %v9090
          %v9354 = vunpack.c.l.b16 %v9091
          %v9355 = vunpack.c.l.b16 %v9092
          %v9356 = vunpack.c.l.b16 %v9093
          %v9357 = vunpack.c.l.b16 %v9094
          %v9358 = vunpack.c.l.b16 %v9095
          %v9359 = vunpack.c.l.b16 %v9096
          %v9360 = vunpack.c.l.b16 %v9097
          %v9361 = vunpack.c.l.b16 %v9098
          %v9362 = vunpack.c.l.b16 %v9099
          %v9363 = vunpack.c.l.b16 %v9100
          %v9364 = vpack.c.b16 %v9237, %v9236
          %v9365 = vpack.c.b16 %v9239, %v9238
          %v9366 = vpack.c.b16 %v9241, %v9240
          %v9367 = vpack.c.b16 %v9243, %v9242
          %v9368 = vpack.c.b16 %v9245, %v9244
          %v9369 = vpack.c.b16 %v9247, %v9246
          %v9370 = vpack.c.b16 %v9249, %v9248
          %v9371 = vpack.c.b16 %v9251, %v9250
          %v9372 = vpack.c.b16 %v9253, %v9252
          %v9373 = vpack.c.b16 %v9255, %v9254
          %v9374 = vpack.c.b16 %v9257, %v9256
          %v9375 = vpack.c.b16 %v9259, %v9258
          %v9376 = vpack.c.b16 %v9261, %v9260
          %v9377 = vpack.c.b16 %v9263, %v9262
          %v9378 = vpack.c.b16 %v9265, %v9264
          %v9379 = vpack.c.b16 %v9267, %v9266
          %v9380 = vpack.c.b16 %v9269, %v9268
          %v9381 = vpack.c.b16 %v9271, %v9270
          %v9382 = vpack.c.b16 %v9273, %v9272
          %v9383 = vpack.c.b16 %v9275, %v9274
          %v9384 = vpack.c.b16 %v9277, %v9276
          %v9385 = vpack.c.b16 %v9279, %v9278
          %v9386 = vpack.c.b16 %v9281, %v9280
          %v9387 = vpack.c.b16 %v9283, %v9282
          %v9388 = vpack.c.b16 %v9285, %v9284
          %v9389 = vpack.c.b16 %v9287, %v9286
          %v9390 = vpack.c.b16 %v9289, %v9288
          %v9391 = vpack.c.b16 %v9291, %v9290
          %v9392 = vpack.c.b16 %v9293, %v9292
          %v9393 = vpack.c.b16 %v9295, %v9294
          %v9394 = vpack.c.b16 %v9297, %v9296
          %v9395 = vpack.c.b16 %v9299, %v9298
          %v9396 = vpack.c.b16 %v9301, %v9300
          %v9397 = vpack.c.b16 %v9303, %v9302
          %v9398 = vpack.c.b16 %v9305, %v9304
          %v9399 = vpack.c.b16 %v9307, %v9306
          %v9400 = vpack.c.b16 %v9309, %v9308
          %v9401 = vpack.c.b16 %v9311, %v9310
          %v9402 = vpack.c.b16 %v9313, %v9312
          %v9403 = vpack.c.b16 %v9315, %v9314
          %v9404 = vpack.c.b16 %v9317, %v9316
          %v9405 = vpack.c.b16 %v9319, %v9318
          %v9406 = vpack.c.b16 %v9321, %v9320
          %v9407 = vpack.c.b16 %v9323, %v9322
          %v9408 = vpack.c.b16 %v9325, %v9324
          %v9409 = vpack.c.b16 %v9327, %v9326
          %v9410 = vpack.c.b16 %v9329, %v9328
          %v9411 = vpack.c.b16 %v9331, %v9330
          %v9412 = vpack.c.b16 %v9333, %v9332
          %v9413 = vpack.c.b16 %v9335, %v9334
          %v9414 = vpack.c.b16 %v9337, %v9336
          %v9415 = vpack.c.b16 %v9339, %v9338
          %v9416 = vpack.c.b16 %v9341, %v9340
          %v9417 = vpack.c.b16 %v9343, %v9342
          %v9418 = vpack.c.b16 %v9345, %v9344
          %v9419 = vpack.c.b16 %v9347, %v9346
          %v9420 = vpack.c.b16 %v9349, %v9348
          %v9421 = vpack.c.b16 %v9351, %v9350
          %v9422 = vpack.c.b16 %v9353, %v9352
          %v9423 = vpack.c.b16 %v9355, %v9354
          %v9424 = vpack.c.b16 %v9357, %v9356
          %v9425 = vpack.c.b16 %v9359, %v9358
          %v9426 = vpack.c.b16 %v9361, %v9360
          %v9427 = vpack.c.b16 %v9363, %v9362
          %9492 = vmatprep.subr.bf16.mxu0 0
          %9493 = vmatpush1.bf16.msra.mxu0 %v9364
          %9494 = vmatprep.subr.bf16.mxu0 0
          %9495 = vmatpush1.bf16.msra.mxu0 %v9365
          %9496 = vmatprep.subr.bf16.mxu0 0
          %9497 = vmatpush1.bf16.msra.mxu0 %v9366
          %9498 = vmatprep.subr.bf16.mxu0 0
          %9499 = vmatpush1.bf16.msra.mxu0 %v9367
          %9500 = vmatprep.subr.bf16.mxu0 0
          %9501 = vmatpush1.bf16.msra.mxu0 %v9368
          %9502 = vmatprep.subr.bf16.mxu0 0
          %9503 = vmatpush1.bf16.msra.mxu0 %v9369
          %9504 = vmatprep.subr.bf16.mxu0 0
          %9505 = vmatpush1.bf16.msra.mxu0 %v9370
          %9506 = vmatprep.subr.bf16.mxu0 0
          %9507 = vmatpush1.bf16.msra.mxu0 %v9371
          %9508 = vmatprep.subr.bf16.mxu0 0
          %9509 = vmatpush1.bf16.msra.mxu0 %v9372
          %9510 = vmatprep.subr.bf16.mxu0 0
          %9511 = vmatpush1.bf16.msra.mxu0 %v9373
          %9512 = vmatprep.subr.bf16.mxu0 0
          %9513 = vmatpush1.bf16.msra.mxu0 %v9374
          %9514 = vmatprep.subr.bf16.mxu0 0
          %9515 = vmatpush1.bf16.msra.mxu0 %v9375
          %9516 = vmatprep.subr.bf16.mxu0 0
          %9517 = vmatpush1.bf16.msra.mxu0 %v9376
          %9518 = vmatprep.subr.bf16.mxu0 0
          %9519 = vmatpush1.bf16.msra.mxu0 %v9377
          %9520 = vmatprep.subr.bf16.mxu0 0
          %9521 = vmatpush1.bf16.msra.mxu0 %v9378
          %9522 = vmatprep.subr.bf16.mxu0 0
          %9523 = vmatpush1.bf16.msra.mxu0 %v9379
          %9524 = vmatprep.mubr.bf16.mxu0 %v8966
          %9525 = vmatmul.mubr.bf16.gmra.mrb[0].mxu0 %v8965
          %v9526 = vpop.f32.mrb[0].mxu0
          %v9527 = vadd.f32 %v9106, %v9526
          %v9528 = vpop.f32.mrb[0].mxu0
          %v9529 = vpop.f32.mrb[0].mxu0
          %v9530 = vpop.f32.mrb[0].mxu0
          %9531 = vdwg.mxu0
          %9532 = vmatprep.subr.bf16.mxu0 0
          %9533 = vmatpush1.bf16.msra.mxu0 %v9380
          %9534 = vmatprep.subr.bf16.mxu0 0
          %9535 = vmatpush1.bf16.msra.mxu0 %v9381
          %9536 = vmatprep.subr.bf16.mxu0 0
          %9537 = vmatpush1.bf16.msra.mxu0 %v9382
          %9538 = vmatprep.subr.bf16.mxu0 0
          %9539 = vmatpush1.bf16.msra.mxu0 %v9383
          %9540 = vmatprep.subr.bf16.mxu0 0
          %9541 = vmatpush1.bf16.msra.mxu0 %v9384
          %9542 = vmatprep.subr.bf16.mxu0 0
          %9543 = vmatpush1.bf16.msra.mxu0 %v9385
          %9544 = vmatprep.subr.bf16.mxu0 0
          %9545 = vmatpush1.bf16.msra.mxu0 %v9386
          %9546 = vmatprep.subr.bf16.mxu0 0
          %9547 = vmatpush1.bf16.msra.mxu0 %v9387
          %9548 = vmatprep.subr.bf16.mxu0 0
          %9549 = vmatpush1.bf16.msra.mxu0 %v9388
          %9550 = vmatprep.subr.bf16.mxu0 0
          %9551 = vmatpush1.bf16.msra.mxu0 %v9389
          %9552 = vmatprep.subr.bf16.mxu0 0
          %9553 = vmatpush1.bf16.msra.mxu0 %v9390
          %9554 = vmatprep.subr.bf16.mxu0 0
          %9555 = vmatpush1.bf16.msra.mxu0 %v9391
          %9556 = vmatprep.subr.bf16.mxu0 0
          %9557 = vmatpush1.bf16.msra.mxu0 %v9392
          %9558 = vmatprep.subr.bf16.mxu0 0
          %9559 = vmatpush1.bf16.msra.mxu0 %v9393
          %9560 = vmatprep.subr.bf16.mxu0 0
          %9561 = vmatpush1.bf16.msra.mxu0 %v9394
          %9562 = vmatprep.subr.bf16.mxu0 0
          %9563 = vmatpush1.bf16.msra.mxu0 %v9395
          %9564 = vmatprep.mubr.bf16.mxu0 %v8968
          %9565 = vmatmul.mubr.bf16.gmra.mrb[0].mxu0 %v8967
          %v9566 = vpop.f32.mrb[0].mxu0
          %v9567 = vadd.f32 %v9527, %v9566
          %v9568 = vpop.f32.mrb[0].mxu0
          %v9569 = vpop.f32.mrb[0].mxu0
          %v9570 = vpop.f32.mrb[0].mxu0
          %9571 = vdwg.mxu0
          %9572 = vmatprep.subr.bf16.mxu0 0
          %9573 = vmatpush1.bf16.msra.mxu0 %v9396
          %9574 = vmatprep.subr.bf16.mxu0 0
          %9575 = vmatpush1.bf16.msra.mxu0 %v9397
          %9576 = vmatprep.subr.bf16.mxu0 0
          %9577 = vmatpush1.bf16.msra.mxu0 %v9398
          %9578 = vmatprep.subr.bf16.mxu0 0
          %9579 = vmatpush1.bf16.msra.mxu0 %v9399
          %9580 = vmatprep.subr.bf16.mxu0 0
          %9581 = vmatpush1.bf16.msra.mxu0 %v9400
          %9582 = vmatprep.subr.bf16.mxu0 0
          %9583 = vmatpush1.bf16.msra.mxu0 %v9401
          %9584 = vmatprep.subr.bf16.mxu0 0
          %9585 = vmatpush1.bf16.msra.mxu0 %v9402
          %9586 = vmatprep.subr.bf16.mxu0 0
          %9587 = vmatpush1.bf16.msra.mxu0 %v9403
          %9588 = vmatprep.subr.bf16.mxu0 0
          %9589 = vmatpush1.bf16.msra.mxu0 %v9404
          %9590 = vmatprep.subr.bf16.mxu0 0
          %9591 = vmatpush1.bf16.msra.mxu0 %v9405
          %9592 = vmatprep.subr.bf16.mxu0 0
          %9593 = vmatpush1.bf16.msra.mxu0 %v9406
          %9594 = vmatprep.subr.bf16.mxu0 0
          %9595 = vmatpush1.bf16.msra.mxu0 %v9407
          %9596 = vmatprep.subr.bf16.mxu0 0
          %9597 = vmatpush1.bf16.msra.mxu0 %v9408
          %9598 = vmatprep.subr.bf16.mxu0 0
          %9599 = vmatpush1.bf16.msra.mxu0 %v9409
          %9600 = vmatprep.subr.bf16.mxu0 0
          %9601 = vmatpush1.bf16.msra.mxu0 %v9410
          %9602 = vmatprep.subr.bf16.mxu0 0
          %9603 = vmatpush1.bf16.msra.mxu0 %v9411
          %9604 = vmatprep.mubr.bf16.mxu0 %v8970
          %9605 = vmatmul.mubr.bf16.gmra.mrb[0].mxu0 %v8969
          %v9606 = vpop.f32.mrb[0].mxu0
          %v9607 = vadd.f32 %v9567, %v9606
          %v9608 = vpop.f32.mrb[0].mxu0
          %v9609 = vpop.f32.mrb[0].mxu0
          %v9610 = vpop.f32.mrb[0].mxu0
          %9611 = vdwg.mxu0
          %9612 = vmatprep.subr.bf16.mxu0 0
          %9613 = vmatpush1.bf16.msra.mxu0 %v9412
          %9614 = vmatprep.subr.bf16.mxu0 0
          %9615 = vmatpush1.bf16.msra.mxu0 %v9413
          %9616 = vmatprep.subr.bf16.mxu0 0
          %9617 = vmatpush1.bf16.msra.mxu0 %v9414
          %9618 = vmatprep.subr.bf16.mxu0 0
          %9619 = vmatpush1.bf16.msra.mxu0 %v9415
          %9620 = vmatprep.subr.bf16.mxu0 0
          %9621 = vmatpush1.bf16.msra.mxu0 %v9416
          %9622 = vmatprep.subr.bf16.mxu0 0
          %9623 = vmatpush1.bf16.msra.mxu0 %v9417
          %9624 = vmatprep.subr.bf16.mxu0 0
          %9625 = vmatpush1.bf16.msra.mxu0 %v9418
          %9626 = vmatprep.subr.bf16.mxu0 0
          %9627 = vmatpush1.bf16.msra.mxu0 %v9419
          %9628 = vmatprep.subr.bf16.mxu0 0
          %9629 = vmatpush1.bf16.msra.mxu0 %v9420
          %9630 = vmatprep.subr.bf16.mxu0 0
          %9631 = vmatpush1.bf16.msra.mxu0 %v9421
          %9632 = vmatprep.subr.bf16.mxu0 0
          %9633 = vmatpush1.bf16.msra.mxu0 %v9422
          %9634 = vmatprep.subr.bf16.mxu0 0
          %9635 = vmatpush1.bf16.msra.mxu0 %v9423
          %9636 = vmatprep.subr.bf16.mxu0 0
          %9637 = vmatpush1.bf16.msra.mxu0 %v9424
          %9638 = vmatprep.subr.bf16.mxu0 0
          %9639 = vmatpush1.bf16.msra.mxu0 %v9425
          %9640 = vmatprep.subr.bf16.mxu0 0
          %9641 = vmatpush1.bf16.msra.mxu0 %v9426
          %9642 = vmatprep.subr.bf16.mxu0 0
          %9643 = vmatpush1.bf16.msra.mxu0 %v9427
          %9644 = vmatprep.mubr.bf16.mxu0 %v8972
          %9645 = vmatmul.mubr.bf16.gmra.mrb[0].mxu0 %v8971
          %v9646 = vpop.f32.mrb[0].mxu0
          %v9647 = vadd.f32 %v9607, %v9646
          %v9648 = vpop.f32.mrb[0].mxu0
          %v9649 = vpop.f32.mrb[0].mxu0
          %v9650 = vpop.f32.mrb[0].mxu0
          %9651 = vdwg.mxu0
          %9652 = vst [vmem:[#allocation21] sm:$0x3] %v9647
        $region128: #{char_cnn_forward.1} parent=71 // pred_fallthru
          _
        // Predicated region
        $region129: #{char_cnn_forward.1} parent=71 // pred_check
          %p9653 = pneg %p330
        $region130: #{char_cnn_forward.1} parent=71 // pred_check_branch
          %9655 = sbr.rel (%p9653) target = $region132
        $region131: #{char_cnn_forward.1} parent=71 // pred_region
          %s9657 = ssub.s32 32, 32
          %9658 = vsyncadd [#allocation6], %s9657
          %s9660 = sshll.u32 [#allocation21], 4
          %s9661 = int_to_ptr.vmem [resolvable:$true] %s9660
          %9663 = dma.vmem_to_hbm [thread:$0]  %s9661, 32, %s13, [#allocation6]
        $region132: #{char_cnn_forward.1} parent=71 // pred_fallthru
          _
        // Predicated region
        $region133: #{char_cnn_forward.1} parent=71 // pred_check
          %p9664 = pneg %p330
        $region134: #{char_cnn_forward.1} parent=71 // pred_check_branch
          %9666 = sbr.rel (%p9664) target = $region136
        $region135: #{char_cnn_forward.1} parent=71 // pred_region
          %9667 = dma.done [#allocation6], 32
        $region136: #{char_cnn_forward.1} parent=71 // pred_fallthru
          _
      $region72: #{char_cnn_forward.1} parent=5 // pred_fallthru
        _
      %p9668 = scmp.le.s32.totalorder 2, %s24
      // Predicated region
      $region137: #{char_cnn_forward.1} parent=5 // pred_check
        %p9669 = pneg %p9668
      $region138: #{char_cnn_forward.1} parent=5 // pred_check_branch
        %9671 = sbr.rel (%p9669) target = $region140
      $region139: #{char_cnn_forward.1} parent=5 // pred_region
        %s9672 = ssub.s32 %s24, 2
      $region140: #{char_cnn_forward.1} parent=5 // pred_fallthru
        _
    $region6: #{char_cnn_forward.1} parent=1 // loop_footer
      %s28 = sadd.s32 1, %s24
    $region7: #{char_cnn_forward.1} parent=1 // loop_footer_branch
      %23 = sbr.rel target = $region3
    $region8: #{char_cnn_forward.1} parent=1 // loop_exit
      _
    %9673 = vsyncpa [#allocation5], 1
    %s9674 = scalar_lea.sflag [#allocation5], 1
    %9675 = vsyncpa %s9674, 1
    %9676 = vsyncpa [#allocation8], 1
    %9677 = vsyncpa [#allocation11], 1
    %9678 = vsyncpa [#allocation14], 1
    %9679 = vsyncpa [#allocation6], 1
    %s9680 = scalar_lea.sflag [#allocation6], 1
    %9681 = vsyncpa %s9680, 1

</llo_original>
